<compile_context>
chip_gen: v6e
topology: v6e:2x2x1
jax: 0.10.0
libtpu: 0.0.40
codegen_flags: <defaults>
</compile_context>

<pallas_src>
import numpy as np

import jax
import jax.numpy as jnp
from jax.experimental import pallas as pl
from jax.experimental.pallas import tpu as pltpu


LP = 128  # lane-padding width for all internal activations / kh blocks


# ----------------------------------------------------------------------------
# Offline (numpy) constant packing: fold taps / padding / stride / dilation
# into band matrices so the kernel only ever does plain 2-D matmuls.
# ----------------------------------------------------------------------------
def _band_conv(win, wout, stride):
    b = np.zeros((win, wout, 3), np.float32)
    for v in range(wout):
        for k in range(3):
            w = stride * v + k - 1
            if 0 <= w < win:
                b[w, v, k] = 1.0
    return b


def _band_tconv(win, wout):
    # ConvTranspose2d(k=3, s=2, p=1, op=1): ow = 2*j - 1 + kw
    b = np.zeros((win, wout, 3), np.float32)
    for j in range(win):
        for k in range(3):
            v = 2 * j - 1 + k
            if 0 <= v < wout:
                b[j, v, k] = 1.0
    return b


def _sel_conv(hin, hout, stride):
    s = np.zeros((3, hout, hin), np.float32)
    for k in range(3):
        for h in range(hout):
            r = stride * h + k - 1
            if 0 <= r < hin:
                s[k, h, r] = 1.0
    return s


def _sel_tconv(hin, hout):
    s = np.zeros((3, hout, hin), np.float32)
    for k in range(3):
        for oh in range(hout):
            num = oh + 1 - k          # oh = 2*i - 1 + k
            if num % 2 == 0:
                i = num // 2
                if 0 <= i < hin:
                    s[k, oh, i] = 1.0
    return s


def _fold_conv(w, win, wout, stride):
    """PyTorch Conv2d weight (Cout, Cin, 3, 3) -> (3, Win*Cin, Wo*Cout)."""
    w = np.asarray(w, np.float32)
    co, ci = w.shape[0], w.shape[1]
    b = _band_conv(win, wout, stride)
    wb = np.einsum('wvx,ochx->hwcvo', b, w)
    return wb.reshape(3, win * ci, wout * co)


def _fold_tconv(wt, win, wout):
    """PyTorch ConvTranspose2d weight (Cin, Cout, 3, 3) -> (3, Win*Cin, Wo*Cout)."""
    wt = np.asarray(wt, np.float32)
    ci, co = wt.shape[0], wt.shape[1]
    b = _band_tconv(win, wout)
    wb = np.einsum('jvx,cohx->hjcvo', b, wt)
    return wb.reshape(3, win * ci, wout * co)


def _pack_kh(w3, kpad):
    """(3, K, Ncols) -> (kpad, 3*128): kh blocks concatenated along columns,
    each padded to a 128-lane boundary; K padded with zero rows to kpad."""
    k, nc = w3.shape[1], w3.shape[2]
    out = np.zeros((kpad, 3 * LP), np.float32)
    for kh in range(3):
        out[:k, kh * LP:kh * LP + nc] = w3[kh]
    return out


def _gmat(wout, c):
    """Group-sum matrix (128,128): col c sums lane positions w*c+ch == channel."""
    g = np.zeros((LP, LP), np.float32)
    for w in range(wout):
        for ch in range(c):
            g[w * c + ch, ch] = 1.0
    return g


def prepare_unet_constants(params, H=16, W=16):
    """One-time packing into two VMEM-friendly buffers + static config."""
    assert H % 4 == 0 and W % 4 == 0
    H1, W1, H2, W2 = H // 2, W // 2, H // 4, W // 4
    cin = params["d1_w"].shape[1]     # 4
    c1 = params["d1_w"].shape[0]      # 8
    c2 = params["d2_w"].shape[0]      # 16
    c3 = params["bt_w"].shape[0]      # 32
    cu2 = params["u2_w"].shape[1]     # 8
    cout = params["u1_w"].shape[1]    # 3

    # ---- band-weight buffer: 7 fused-kh blocks stacked along rows -----------
    blocks = [
        _pack_kh(_fold_conv(params["d1_w"], W, W1, 2), W * cin),    # (64, 384)
        _pack_kh(_fold_conv(params["d2_w"], W1, W2, 2), LP),        # (128,384)
        _pack_kh(_fold_conv(params["bt_w"], W2, W2, 1), LP),
        _pack_kh(_fold_tconv(params["u2_w"][:c2], W2, W1), LP),     # u2 part a (d2)
        _pack_kh(_fold_tconv(params["u2_w"][c2:], W2, W1), LP),     # u2 part b (bt)
        _pack_kh(_fold_tconv(params["u1_w"][:c1], W1, W), LP),      # u1 part a (d1)
        _pack_kh(_fold_tconv(params["u1_w"][c1:], W1, W), LP),      # u1 part b (u2)
    ]
    wrows, off = [], 0
    for blk in blocks:
        wrows.append((off, blk.shape[0]))
        off += blk.shape[0]
    wband = np.concatenate(blocks, axis=0)                           # (832, 384)

    # ---- aux buffer (R, 128): group-sum, row-selection, bias ----------------
    g_blocks = [_gmat(W1, c1), _gmat(W2, c2), _gmat(W2, c3), _gmat(W1, cu2)]
    sels = [_sel_conv(H, H1, 2), _sel_conv(H1, H2, 2), _sel_conv(H2, H2, 1),
            _sel_tconv(H2, H1), _sel_tconv(H1, H)]

    SEL_BLK = 16
    G_OFF = 0
    GT_OFF = G_OFF + 4 * LP
    SEL_OFF = GT_OFF + 4 * LP
    BIAS_OFF = SEL_OFF + len(sels) * 3 * SEL_BLK
    R = BIAS_OFF + 8                                                # sublane-pad

    aux = np.zeros((R, LP), np.float32)
    for i, g in enumerate(g_blocks):
        aux[G_OFF + i * LP:G_OFF + (i + 1) * LP, :] = g
        aux[GT_OFF + i * LP:GT_OFF + (i + 1) * LP, :] = g.T
    for l, s3 in enumerate(sels):
        ho, hi = s3.shape[1], s3.shape[2]
        for kh in range(3):
            r0 = SEL_OFF + (l * 3 + kh) * SEL_BLK
            aux[r0:r0 + ho, :hi] = s3[kh]
    aux[BIAS_OFF, :W * cout] = np.tile(np.asarray(params["u1_b"], np.float32), W)

    cfg = dict(
        H=H, W=W, cin=cin, cout=cout,
        wrows=tuple(wrows),
        sel_dims=tuple((s3.shape[1], s3.shape[2]) for s3 in sels),
        inv_hw=(1.0 / (H1 * W1), 1.0 / (H2 * W2), 1.0 / (H2 * W2), 1.0 / (H1 * W1)),
        G_OFF=G_OFF, GT_OFF=GT_OFF, SEL_OFF=SEL_OFF, SEL_BLK=SEL_BLK,
        BIAS_OFF=BIAS_OFF,
    )
    return jnp.asarray(wband), jnp.asarray(aux), cfg


# ----------------------------------------------------------------------------
# Fused Pallas kernel: whole batch, whole network, one grid step.
# ----------------------------------------------------------------------------
def _make_kernel(cfg):
    wrows = cfg["wrows"]
    sel_dims = cfg["sel_dims"]
    inv_hw = cfg["inv_hw"]
    G_OFF, GT_OFF = cfg["G_OFF"], cfg["GT_OFF"]
    SEL_OFF, SEL_BLK = cfg["SEL_OFF"], cfg["SEL_BLK"]
    BIAS_OFF = cfg["BIAS_OFF"]

    def kernel(x_ref, wband_ref, aux_ref, out_ref):
        def mm(a, b):
            return jnp.dot(a, b, preferred_element_type=jnp.float32)

        def conv(parts, widx, sel_l):
            """(Transposed) conv: 1 fused band matmul per input part + 3 small
            row-selection matmuls.  Output (Ho, 128), padded cols exactly 0."""
            hout, hin = sel_dims[sel_l]
            p = None
            for xp, wi in zip(parts, widx):
                r0, k = wrows[wi]
                t = mm(xp, wband_ref[r0:r0 + k, :])           # (Hin, 3*128)
                p = t if p is None else p + t
            base = SEL_OFF + sel_l * 3 * SEL_BLK
            out = None
            for kh in range(3):
                sel = aux_ref[base + kh * SEL_BLK:
                              base + kh * SEL_BLK + hout, 0:hin]
                t = mm(sel, p[:, kh * LP:(kh + 1) * LP])      # 128-aligned slice
                out = t if out is None else out + t
            return out

        def inorm_relu(z, gi):
            """InstanceNorm2d(affine=False, eps=1e-5) + ReLU on (Ho, 128)."""
            g = aux_ref[G_OFF + gi * LP:G_OFF + (gi + 1) * LP, :]
            gt = aux_ref[GT_OFF + gi * LP:GT_OFF + (gi + 1) * LP, :]
            s1 = jnp.sum(z, axis=0, keepdims=True)
            s2 = jnp.sum(z * z, axis=0, keepdims=True)
            stats = jnp.concatenate([s1, s2], axis=0)          # (2, 128)
            sg = mm(stats, g) * inv_hw[gi]                     # one stat matmul
            mean, ex2 = sg[0:1, :], sg[1:2, :]
            var = jnp.maximum(ex2 - mean * mean, 0.0)
            inv = jax.lax.rsqrt(var + 1e-5)
            mi = jnp.concatenate([mean, inv], axis=0)          # (2, C-padded)
            bc = mm(mi, gt)                                    # one broadcast matmul
            return jnp.maximum((z - bc[0:1, :]) * bc[1:2, :], 0.0)

        bias = aux_ref[BIAS_OFF:BIAS_OFF + 1, :]               # (1, 128)

        # Unrolled loop over samples: independent chains -> ILP on the MXU.
        for n in range(x_ref.shape[0]):
            x2 = x_ref[n]                                      # (H, W*Cin)
            d1 = inorm_relu(conv([x2], [0], 0), 0)             # (H/2, 128)
            d2 = inorm_relu(conv([d1], [1], 1), 1)             # (H/4, 128)
            bt = inorm_relu(conv([d2], [2], 2), 2)             # (H/4, 128)
            # skip concat cat[d2, bt] folded into split weights
            u2 = inorm_relu(conv([d2, bt], [3, 4], 3), 3)      # (H/2, 128)
            # skip concat cat[d1, u2] folded into split weights; conv + bias only
            z = conv([d1, u2], [5, 6], 4) + bias               # (H, 128)
            # sigmoid on the EUP (exp + approx reciprocal); padded cols -> 0.5,
            # sliced off outside the kernel.
            out_ref[n] = pl.reciprocal(1.0 + jnp.exp(-z), approx=True)

    return kernel


# ----------------------------------------------------------------------------
# Forward: one pallas_call (single grid step, whole batch) + fused XLA layout
# plumbing on the tiny NCHW tensors.
# ----------------------------------------------------------------------------
def make_forward(cfg):
    kernel = _make_kernel(cfg)
    H, W, cin, cout = cfg["H"], cfg["W"], cfg["cin"], cfg["cout"]

    @jax.jit
    def fwd(x_nchw, wband, aux):
        x = x_nchw.astype(jnp.float32)
        N = x.shape[0]
        # NCHW -> (N, H, W*Cin), w-major / c-minor (fuses; negligible size)
        x2 = jnp.transpose(x, (0, 2, 3, 1)).reshape(N, H, W * cin)
        slab = pl.pallas_call(
            kernel,
            out_shape=jax.ShapeDtypeStruct((N, H, LP), jnp.float32),
            grid=(1,),
            in_specs=[
                pl.BlockSpec((N, H, W * cin), lambda i: (0, 0, 0)),
                pl.BlockSpec(wband.shape, lambda i: (0, 0)),
                pl.BlockSpec(aux.shape, lambda i: (0, 0)),
            ],
            out_specs=pl.BlockSpec((N, H, LP), lambda i: (0, 0, 0)),
            compiler_params=pltpu.CompilerParams(
                dimension_semantics=("arbitrary",)),
        )(x2, wband, aux)
        # lane-dense (N, H, 128) slab -> NCHW (drop the zero-padded lanes)
        y = slab[:, :, :W * cout].reshape(N, H, W, cout)
        return jnp.transpose(y, (0, 3, 1, 2))

    return fwd


# ----------------------------------------------------------------------------
# Pure-JAX (XLA) reference for the correctness cross-check
# ----------------------------------------------------------------------------
def _reference_forward(x, params):
    dn = ("NCHW", "OIHW", "NCHW")
    hp = jax.lax.Precision.HIGHEST

    def conv(x, w, b, stride):
        y = jax.lax.conv_general_dilated(
            x, w, (stride, stride), ((1, 1), (1, 1)),
            dimension_numbers=dn, precision=hp)
        return y + b.reshape(1, -1, 1, 1)

    def tconv(x, wt, b):
        w = jnp.transpose(wt, (1, 0, 2, 3))[:, :, ::-1, ::-1]
        y = jax.lax.conv_general_dilated(
            x, w, (1, 1), ((1, 2), (1, 2)), lhs_dilation=(2, 2),
            dimension_numbers=dn, precision=hp)
        return y + b.reshape(1, -1, 1, 1)

    def inorm_relu(x):
        m = jnp.mean(x, axis=(2, 3), keepdims=True)
        v = jnp.mean(jnp.square(x - m), axis=(2, 3), keepdims=True)
        return jnp.maximum((x - m) * jax.lax.rsqrt(v + 1e-5), 0.0)

    d1 = inorm_relu(conv(x, params["d1_w"], params["d1_b"], 2))
    d2 = inorm_relu(conv(d1, params["d2_w"], params["d2_b"], 2))
    bt = inorm_relu(conv(d2, params["bt_w"], params["bt_b"], 1))
    u2 = inorm_relu(tconv(jnp.concatenate([d2, bt], axis=1),
                          params["u2_w"], params["u2_b"]))
    u1 = tconv(jnp.concatenate([d1, u2], axis=1),
               params["u1_w"], params["u1_b"])
    return jax.nn.sigmoid(u1)


def init_params(key):
    ks = jax.random.split(key, 10)
    s = 0.1

    def w(k, shape):
        return jax.random.normal(k, shape, jnp.float32) * s

    return {
        # down 1: Conv2d(4 -> 8, k3, s2, p1)
        "d1_w": w(ks[0], (8, 4, 3, 3)),   "d1_b": w(ks[1], (8,)),
        # down 2: Conv2d(8 -> 16, k3, s2, p1)
        "d2_w": w(ks[2], (16, 8, 3, 3)),  "d2_b": w(ks[3], (16,)),
        # bottom: Conv2d(16 -> 32, k3, s1, p1)
        "bt_w": w(ks[4], (32, 16, 3, 3)), "bt_b": w(ks[5], (32,)),
        # up (inner): ConvTranspose2d(48 -> 8, k3, s2, p1, op1)  (Cin, Cout, k, k)
        "u2_w": w(ks[6], (48, 8, 3, 3)),  "u2_b": w(ks[7], (8,)),
        # up (top, conv only): ConvTranspose2d(16 -> 3, k3, s2, p1, op1)
        "u1_w": w(ks[8], (16, 3, 3, 3)),  "u1_b": w(ks[9], (3,)),
    }


if __name__ == "__main__":
    key = jax.random.PRNGKey(0)
    k_x, k_p = jax.random.split(key)

    N, C, H, W = 2, 4, 16, 16
    x = jax.random.normal(k_x, (N, C, H, W), jnp.float32)
    params = init_params(k_p)

    wband, aux, cfg = prepare_unet_constants(params, H, W)   # one-time packing
    fwd = make_forward(cfg)
    out = jax.block_until_ready(fwd(x, wband, aux))

    assert out.shape == (N, 3, H, W), out.shape
    assert bool(jnp.all(jnp.isfinite(out)))
    # sigmoid range; approx reciprocal can overshoot 1.0 by ~1e-4 relative
    assert bool(jnp.all((out >= 0.0) & (out <= 1.0 + 1e-3)))

    ref = _reference_forward(x, params)
    max_err = float(jnp.max(jnp.abs(out - ref)))
    assert max_err < 2e-2, f"mismatch vs XLA reference: {max_err}"

    print("KERNEL_OK")
</pallas_src>

<mosaic_0001>
module attributes {stable_mosaic.version = 11 : i64} {
  func.func @kernel(%arg0: i32, %arg1: memref<2x16x64xf32, #tpu.memory_space<vmem>>, %arg2: memref<832x384xf32, #tpu.memory_space<vmem>>, %arg3: memref<1272x128xf32, #tpu.memory_space<vmem>>, %arg4: memref<2x16x128xf32, #tpu.memory_space<vmem>>) attributes {dimension_semantics = [#tpu.dimension_semantics<arbitrary>], iteration_bounds = array<i64: 1>, scalar_prefetch = 0 : i64, scratch_operands = 0 : i64, tpu.core_type = #tpu.core_type<tc>, window_params = [{pipeline_mode = #tpu.pipeline_mode<synchronous>, transform_indices = @transform_0, window_bounds = array<i64: 2, 16, 64>}, {pipeline_mode = #tpu.pipeline_mode<synchronous>, transform_indices = @transform_1, window_bounds = array<i64: 832, 384>}, {pipeline_mode = #tpu.pipeline_mode<synchronous>, transform_indices = @transform_2, window_bounds = array<i64: 1272, 128>}, {pipeline_mode = #tpu.pipeline_mode<synchronous>, transform_indices = @transform_3, window_bounds = array<i64: 2, 16, 128>}]} {
    %c1264 = arith.constant 1264 : index
    %c0 = arith.constant 0 : index
    %0 = vector.load %arg3[%c1264, %c0] : memref<1272x128xf32, #tpu.memory_space<vmem>>, vector<1x128xf32>
    %c0_0 = arith.constant 0 : index
    %c0_1 = arith.constant 0 : index
    %c0_2 = arith.constant 0 : index
    %1 = vector.load %arg1[%c0_0, %c0_1, %c0_2] : memref<2x16x64xf32, #tpu.memory_space<vmem>>, vector<1x16x64xf32>
    %2 = vector.shape_cast %1 : vector<1x16x64xf32> to vector<16x64xf32>
    %c0_3 = arith.constant 0 : index
    %c0_4 = arith.constant 0 : index
    %3 = vector.load %arg2[%c0_3, %c0_4] : memref<832x384xf32, #tpu.memory_space<vmem>>, vector<64x384xf32>
    %cst = arith.constant dense<0.000000e+00> : vector<16x384xf32>
    %4 = tpu.matmul %2, %3, %cst {dimension_numbers = #tpu.dot_dimension_numbers<[1], [0], [0], [1], [0, 0, 1, 1], [], []>} : vector<16x64xf32>, vector<64x384xf32>, vector<16x384xf32> -> vector<16x384xf32>
    %c1024 = arith.constant 1024 : index
    %c0_5 = arith.constant 0 : index
    %5 = vector.load %arg3[%c1024, %c0_5] : memref<1272x128xf32, #tpu.memory_space<vmem>>, vector<8x16xf32>
    %6 = vector.extract_strided_slice %4 {offsets = [0, 0], sizes = [16, 128], strides = [1, 1]} : vector<16x384xf32> to vector<16x128xf32>
    %cst_6 = arith.constant dense<0.000000e+00> : vector<8x128xf32>
    %7 = tpu.matmul %5, %6, %cst_6 {dimension_numbers = #tpu.dot_dimension_numbers<[1], [0], [0], [1], [0, 0, 1, 1], [], []>} : vector<8x16xf32>, vector<16x128xf32>, vector<8x128xf32> -> vector<8x128xf32>
    %c1040 = arith.constant 1040 : index
    %c0_7 = arith.constant 0 : index
    %8 = vector.load %arg3[%c1040, %c0_7] : memref<1272x128xf32, #tpu.memory_space<vmem>>, vector<8x16xf32>
    %9 = vector.extract_strided_slice %4 {offsets = [0, 128], sizes = [16, 128], strides = [1, 1]} : vector<16x384xf32> to vector<16x128xf32>
    %cst_8 = arith.constant dense<0.000000e+00> : vector<8x128xf32>
    %10 = tpu.matmul %8, %9, %cst_8 {dimension_numbers = #tpu.dot_dimension_numbers<[1], [0], [0], [1], [0, 0, 1, 1], [], []>} : vector<8x16xf32>, vector<16x128xf32>, vector<8x128xf32> -> vector<8x128xf32>
    %11 = arith.addf %7, %10 : vector<8x128xf32>
    %c1056 = arith.constant 1056 : index
    %c0_9 = arith.constant 0 : index
    %12 = vector.load %arg3[%c1056, %c0_9] : memref<1272x128xf32, #tpu.memory_space<vmem>>, vector<8x16xf32>
    %13 = vector.extract_strided_slice %4 {offsets = [0, 256], sizes = [16, 128], strides = [1, 1]} : vector<16x384xf32> to vector<16x128xf32>
    %cst_10 = arith.constant dense<0.000000e+00> : vector<8x128xf32>
    %14 = tpu.matmul %12, %13, %cst_10 {dimension_numbers = #tpu.dot_dimension_numbers<[1], [0], [0], [1], [0, 0, 1, 1], [], []>} : vector<8x16xf32>, vector<16x128xf32>, vector<8x128xf32> -> vector<8x128xf32>
    %15 = arith.addf %11, %14 : vector<8x128xf32>
    %c0_11 = arith.constant 0 : index
    %c0_12 = arith.constant 0 : index
    %16 = vector.load %arg3[%c0_11, %c0_12] : memref<1272x128xf32, #tpu.memory_space<vmem>>, vector<128x128xf32>
    %c512 = arith.constant 512 : index
    %c0_13 = arith.constant 0 : index
    %17 = vector.load %arg3[%c512, %c0_13] : memref<1272x128xf32, #tpu.memory_space<vmem>>, vector<128x128xf32>
    %cst_14 = arith.constant dense<0.000000e+00> : vector<128xf32>
    %18 = vector.multi_reduction <add>, %15, %cst_14 [0] : vector<8x128xf32> to vector<128xf32>
    %19 = vector.shape_cast %18 : vector<128xf32> to vector<1x128xf32>
    %20 = arith.mulf %15, %15 : vector<8x128xf32>
    %cst_15 = arith.constant dense<0.000000e+00> : vector<128xf32>
    %21 = vector.multi_reduction <add>, %20, %cst_15 [0] : vector<8x128xf32> to vector<128xf32>
    %22 = vector.shape_cast %21 : vector<128xf32> to vector<1x128xf32>
    %23 = tpu.concatenate %19, %22 in 0 : vector<1x128xf32>, vector<1x128xf32> -> vector<2x128xf32>
    %cst_16 = arith.constant dense<0.000000e+00> : vector<2x128xf32>
    %24 = tpu.matmul %23, %16, %cst_16 {dimension_numbers = #tpu.dot_dimension_numbers<[1], [0], [0], [1], [0, 0, 1, 1], [], []>} : vector<2x128xf32>, vector<128x128xf32>, vector<2x128xf32> -> vector<2x128xf32>
    %cst_17 = arith.constant 1.562500e-02 : f32
    %25 = vector.broadcast %cst_17 : f32 to vector<2x128xf32>
    %26 = arith.mulf %24, %25 : vector<2x128xf32>
    %27 = vector.extract_strided_slice %26 {offsets = [0, 0], sizes = [1, 128], strides = [1, 1]} : vector<2x128xf32> to vector<1x128xf32>
    %28 = vector.extract_strided_slice %26 {offsets = [1, 0], sizes = [1, 128], strides = [1, 1]} : vector<2x128xf32> to vector<1x128xf32>
    %29 = arith.mulf %27, %27 : vector<1x128xf32>
    %30 = arith.subf %28, %29 : vector<1x128xf32>
    %cst_18 = arith.constant 0.000000e+00 : f32
    %31 = vector.broadcast %cst_18 : f32 to vector<1x128xf32>
    %32 = arith.maximumf %30, %31 : vector<1x128xf32>
    %cst_19 = arith.constant 9.99999974E-6 : f32
    %33 = vector.broadcast %cst_19 : f32 to vector<1x128xf32>
    %34 = arith.addf %32, %33 : vector<1x128xf32>
    %35 = math.rsqrt %34 : vector<1x128xf32>
    %36 = tpu.concatenate %27, %35 in 0 : vector<1x128xf32>, vector<1x128xf32> -> vector<2x128xf32>
    %cst_20 = arith.constant dense<0.000000e+00> : vector<2x128xf32>
    %37 = tpu.matmul %36, %17, %cst_20 {dimension_numbers = #tpu.dot_dimension_numbers<[1], [0], [0], [1], [0, 0, 1, 1], [], []>} : vector<2x128xf32>, vector<128x128xf32>, vector<2x128xf32> -> vector<2x128xf32>
    %38 = vector.extract_strided_slice %37 {offsets = [0, 0], sizes = [1, 128], strides = [1, 1]} : vector<2x128xf32> to vector<1x128xf32>
    %39 = vector.broadcast %38 : vector<1x128xf32> to vector<8x128xf32>
    %40 = arith.subf %15, %39 : vector<8x128xf32>
    %41 = vector.extract_strided_slice %37 {offsets = [1, 0], sizes = [1, 128], strides = [1, 1]} : vector<2x128xf32> to vector<1x128xf32>
    %42 = vector.broadcast %41 : vector<1x128xf32> to vector<8x128xf32>
    %43 = arith.mulf %40, %42 : vector<8x128xf32>
    %cst_21 = arith.constant 0.000000e+00 : f32
    %44 = vector.broadcast %cst_21 : f32 to vector<8x128xf32>
    %45 = arith.maximumf %43, %44 : vector<8x128xf32>
    %c64 = arith.constant 64 : index
    %c0_22 = arith.constant 0 : index
    %46 = vector.load %arg2[%c64, %c0_22] : memref<832x384xf32, #tpu.memory_space<vmem>>, vector<128x384xf32>
    %cst_23 = arith.constant dense<0.000000e+00> : vector<8x384xf32>
    %47 = tpu.matmul %45, %46, %cst_23 {dimension_numbers = #tpu.dot_dimension_numbers<[1], [0], [0], [1], [0, 0, 1, 1], [], []>} : vector<8x128xf32>, vector<128x384xf32>, vector<8x384xf32> -> vector<8x384xf32>
    %c1072 = arith.constant 1072 : index
    %c0_24 = arith.constant 0 : index
    %48 = vector.load %arg3[%c1072, %c0_24] : memref<1272x128xf32, #tpu.memory_space<vmem>>, vector<4x8xf32>
    %49 = vector.extract_strided_slice %47 {offsets = [0, 0], sizes = [8, 128], strides = [1, 1]} : vector<8x384xf32> to vector<8x128xf32>
    %cst_25 = arith.constant dense<0.000000e+00> : vector<4x128xf32>
    %50 = tpu.matmul %48, %49, %cst_25 {dimension_numbers = #tpu.dot_dimension_numbers<[1], [0], [0], [1], [0, 0, 1, 1], [], []>} : vector<4x8xf32>, vector<8x128xf32>, vector<4x128xf32> -> vector<4x128xf32>
    %c1088 = arith.constant 1088 : index
    %c0_26 = arith.constant 0 : index
    %51 = vector.load %arg3[%c1088, %c0_26] : memref<1272x128xf32, #tpu.memory_space<vmem>>, vector<4x8xf32>
    %52 = vector.extract_strided_slice %47 {offsets = [0, 128], sizes = [8, 128], strides = [1, 1]} : vector<8x384xf32> to vector<8x128xf32>
    %cst_27 = arith.constant dense<0.000000e+00> : vector<4x128xf32>
    %53 = tpu.matmul %51, %52, %cst_27 {dimension_numbers = #tpu.dot_dimension_numbers<[1], [0], [0], [1], [0, 0, 1, 1], [], []>} : vector<4x8xf32>, vector<8x128xf32>, vector<4x128xf32> -> vector<4x128xf32>
    %54 = arith.addf %50, %53 : vector<4x128xf32>
    %c1104 = arith.constant 1104 : index
    %c0_28 = arith.constant 0 : index
    %55 = vector.load %arg3[%c1104, %c0_28] : memref<1272x128xf32, #tpu.memory_space<vmem>>, vector<4x8xf32>
    %56 = vector.extract_strided_slice %47 {offsets = [0, 256], sizes = [8, 128], strides = [1, 1]} : vector<8x384xf32> to vector<8x128xf32>
    %cst_29 = arith.constant dense<0.000000e+00> : vector<4x128xf32>
    %57 = tpu.matmul %55, %56, %cst_29 {dimension_numbers = #tpu.dot_dimension_numbers<[1], [0], [0], [1], [0, 0, 1, 1], [], []>} : vector<4x8xf32>, vector<8x128xf32>, vector<4x128xf32> -> vector<4x128xf32>
    %58 = arith.addf %54, %57 : vector<4x128xf32>
    %c128 = arith.constant 128 : index
    %c0_30 = arith.constant 0 : index
    %59 = vector.load %arg3[%c128, %c0_30] : memref<1272x128xf32, #tpu.memory_space<vmem>>, vector<128x128xf32>
    %c640 = arith.constant 640 : index
    %c0_31 = arith.constant 0 : index
    %60 = vector.load %arg3[%c640, %c0_31] : memref<1272x128xf32, #tpu.memory_space<vmem>>, vector<128x128xf32>
    %cst_32 = arith.constant dense<0.000000e+00> : vector<128xf32>
    %61 = vector.multi_reduction <add>, %58, %cst_32 [0] : vector<4x128xf32> to vector<128xf32>
    %62 = vector.shape_cast %61 : vector<128xf32> to vector<1x128xf32>
    %63 = arith.mulf %58, %58 : vector<4x128xf32>
    %cst_33 = arith.constant dense<0.000000e+00> : vector<128xf32>
    %64 = vector.multi_reduction <add>, %63, %cst_33 [0] : vector<4x128xf32> to vector<128xf32>
    %65 = vector.shape_cast %64 : vector<128xf32> to vector<1x128xf32>
    %66 = tpu.concatenate %62, %65 in 0 : vector<1x128xf32>, vector<1x128xf32> -> vector<2x128xf32>
    %cst_34 = arith.constant dense<0.000000e+00> : vector<2x128xf32>
    %67 = tpu.matmul %66, %59, %cst_34 {dimension_numbers = #tpu.dot_dimension_numbers<[1], [0], [0], [1], [0, 0, 1, 1], [], []>} : vector<2x128xf32>, vector<128x128xf32>, vector<2x128xf32> -> vector<2x128xf32>
    %cst_35 = arith.constant 6.250000e-02 : f32
    %68 = vector.broadcast %cst_35 : f32 to vector<2x128xf32>
    %69 = arith.mulf %67, %68 : vector<2x128xf32>
    %70 = vector.extract_strided_slice %69 {offsets = [0, 0], sizes = [1, 128], strides = [1, 1]} : vector<2x128xf32> to vector<1x128xf32>
    %71 = vector.extract_strided_slice %69 {offsets = [1, 0], sizes = [1, 128], strides = [1, 1]} : vector<2x128xf32> to vector<1x128xf32>
    %72 = arith.mulf %70, %70 : vector<1x128xf32>
    %73 = arith.subf %71, %72 : vector<1x128xf32>
    %cst_36 = arith.constant 0.000000e+00 : f32
    %74 = vector.broadcast %cst_36 : f32 to vector<1x128xf32>
    %75 = arith.maximumf %73, %74 : vector<1x128xf32>
    %cst_37 = arith.constant 9.99999974E-6 : f32
    %76 = vector.broadcast %cst_37 : f32 to vector<1x128xf32>
    %77 = arith.addf %75, %76 : vector<1x128xf32>
    %78 = math.rsqrt %77 : vector<1x128xf32>
    %79 = tpu.concatenate %70, %78 in 0 : vector<1x128xf32>, vector<1x128xf32> -> vector<2x128xf32>
    %cst_38 = arith.constant dense<0.000000e+00> : vector<2x128xf32>
    %80 = tpu.matmul %79, %60, %cst_38 {dimension_numbers = #tpu.dot_dimension_numbers<[1], [0], [0], [1], [0, 0, 1, 1], [], []>} : vector<2x128xf32>, vector<128x128xf32>, vector<2x128xf32> -> vector<2x128xf32>
    %81 = vector.extract_strided_slice %80 {offsets = [0, 0], sizes = [1, 128], strides = [1, 1]} : vector<2x128xf32> to vector<1x128xf32>
    %82 = vector.broadcast %81 : vector<1x128xf32> to vector<4x128xf32>
    %83 = arith.subf %58, %82 : vector<4x128xf32>
    %84 = vector.extract_strided_slice %80 {offsets = [1, 0], sizes = [1, 128], strides = [1, 1]} : vector<2x128xf32> to vector<1x128xf32>
    %85 = vector.broadcast %84 : vector<1x128xf32> to vector<4x128xf32>
    %86 = arith.mulf %83, %85 : vector<4x128xf32>
    %cst_39 = arith.constant 0.000000e+00 : f32
    %87 = vector.broadcast %cst_39 : f32 to vector<4x128xf32>
    %88 = arith.maximumf %86, %87 : vector<4x128xf32>
    %c192 = arith.constant 192 : index
    %c0_40 = arith.constant 0 : index
    %89 = vector.load %arg2[%c192, %c0_40] : memref<832x384xf32, #tpu.memory_space<vmem>>, vector<128x384xf32>
    %cst_41 = arith.constant dense<0.000000e+00> : vector<4x384xf32>
    %90 = tpu.matmul %88, %89, %cst_41 {dimension_numbers = #tpu.dot_dimension_numbers<[1], [0], [0], [1], [0, 0, 1, 1], [], []>} : vector<4x128xf32>, vector<128x384xf32>, vector<4x384xf32> -> vector<4x384xf32>
    %c1120 = arith.constant 1120 : index
    %c0_42 = arith.constant 0 : index
    %91 = vector.load %arg3[%c1120, %c0_42] : memref<1272x128xf32, #tpu.memory_space<vmem>>, vector<4x4xf32>
    %92 = vector.extract_strided_slice %90 {offsets = [0, 0], sizes = [4, 128], strides = [1, 1]} : vector<4x384xf32> to vector<4x128xf32>
    %cst_43 = arith.constant dense<0.000000e+00> : vector<4x128xf32>
    %93 = tpu.matmul %91, %92, %cst_43 {dimension_numbers = #tpu.dot_dimension_numbers<[1], [0], [0], [1], [0, 0, 1, 1], [], []>} : vector<4x4xf32>, vector<4x128xf32>, vector<4x128xf32> -> vector<4x128xf32>
    %c1136 = arith.constant 1136 : index
    %c0_44 = arith.constant 0 : index
    %94 = vector.load %arg3[%c1136, %c0_44] : memref<1272x128xf32, #tpu.memory_space<vmem>>, vector<4x4xf32>
    %95 = vector.extract_strided_slice %90 {offsets = [0, 128], sizes = [4, 128], strides = [1, 1]} : vector<4x384xf32> to vector<4x128xf32>
    %cst_45 = arith.constant dense<0.000000e+00> : vector<4x128xf32>
    %96 = tpu.matmul %94, %95, %cst_45 {dimension_numbers = #tpu.dot_dimension_numbers<[1], [0], [0], [1], [0, 0, 1, 1], [], []>} : vector<4x4xf32>, vector<4x128xf32>, vector<4x128xf32> -> vector<4x128xf32>
    %97 = arith.addf %93, %96 : vector<4x128xf32>
    %c1152 = arith.constant 1152 : index
    %c0_46 = arith.constant 0 : index
    %98 = vector.load %arg3[%c1152, %c0_46] : memref<1272x128xf32, #tpu.memory_space<vmem>>, vector<4x4xf32>
    %99 = vector.extract_strided_slice %90 {offsets = [0, 256], sizes = [4, 128], strides = [1, 1]} : vector<4x384xf32> to vector<4x128xf32>
    %cst_47 = arith.constant dense<0.000000e+00> : vector<4x128xf32>
    %100 = tpu.matmul %98, %99, %cst_47 {dimension_numbers = #tpu.dot_dimension_numbers<[1], [0], [0], [1], [0, 0, 1, 1], [], []>} : vector<4x4xf32>, vector<4x128xf32>, vector<4x128xf32> -> vector<4x128xf32>
    %101 = arith.addf %97, %100 : vector<4x128xf32>
    %c256 = arith.constant 256 : index
    %c0_48 = arith.constant 0 : index
    %102 = vector.load %arg3[%c256, %c0_48] : memref<1272x128xf32, #tpu.memory_space<vmem>>, vector<128x128xf32>
    %c768 = arith.constant 768 : index
    %c0_49 = arith.constant 0 : index
    %103 = vector.load %arg3[%c768, %c0_49] : memref<1272x128xf32, #tpu.memory_space<vmem>>, vector<128x128xf32>
    %cst_50 = arith.constant dense<0.000000e+00> : vector<128xf32>
    %104 = vector.multi_reduction <add>, %101, %cst_50 [0] : vector<4x128xf32> to vector<128xf32>
    %105 = vector.shape_cast %104 : vector<128xf32> to vector<1x128xf32>
    %106 = arith.mulf %101, %101 : vector<4x128xf32>
    %cst_51 = arith.constant dense<0.000000e+00> : vector<128xf32>
    %107 = vector.multi_reduction <add>, %106, %cst_51 [0] : vector<4x128xf32> to vector<128xf32>
    %108 = vector.shape_cast %107 : vector<128xf32> to vector<1x128xf32>
    %109 = tpu.concatenate %105, %108 in 0 : vector<1x128xf32>, vector<1x128xf32> -> vector<2x128xf32>
    %cst_52 = arith.constant dense<0.000000e+00> : vector<2x128xf32>
    %110 = tpu.matmul %109, %102, %cst_52 {dimension_numbers = #tpu.dot_dimension_numbers<[1], [0], [0], [1], [0, 0, 1, 1], [], []>} : vector<2x128xf32>, vector<128x128xf32>, vector<2x128xf32> -> vector<2x128xf32>
    %cst_53 = arith.constant 6.250000e-02 : f32
    %111 = vector.broadcast %cst_53 : f32 to vector<2x128xf32>
    %112 = arith.mulf %110, %111 : vector<2x128xf32>
    %113 = vector.extract_strided_slice %112 {offsets = [0, 0], sizes = [1, 128], strides = [1, 1]} : vector<2x128xf32> to vector<1x128xf32>
    %114 = vector.extract_strided_slice %112 {offsets = [1, 0], sizes = [1, 128], strides = [1, 1]} : vector<2x128xf32> to vector<1x128xf32>
    %115 = arith.mulf %113, %113 : vector<1x128xf32>
    %116 = arith.subf %114, %115 : vector<1x128xf32>
    %cst_54 = arith.constant 0.000000e+00 : f32
    %117 = vector.broadcast %cst_54 : f32 to vector<1x128xf32>
    %118 = arith.maximumf %116, %117 : vector<1x128xf32>
    %cst_55 = arith.constant 9.99999974E-6 : f32
    %119 = vector.broadcast %cst_55 : f32 to vector<1x128xf32>
    %120 = arith.addf %118, %119 : vector<1x128xf32>
    %121 = math.rsqrt %120 : vector<1x128xf32>
    %122 = tpu.concatenate %113, %121 in 0 : vector<1x128xf32>, vector<1x128xf32> -> vector<2x128xf32>
    %cst_56 = arith.constant dense<0.000000e+00> : vector<2x128xf32>
    %123 = tpu.matmul %122, %103, %cst_56 {dimension_numbers = #tpu.dot_dimension_numbers<[1], [0], [0], [1], [0, 0, 1, 1], [], []>} : vector<2x128xf32>, vector<128x128xf32>, vector<2x128xf32> -> vector<2x128xf32>
    %124 = vector.extract_strided_slice %123 {offsets = [0, 0], sizes = [1, 128], strides = [1, 1]} : vector<2x128xf32> to vector<1x128xf32>
    %125 = vector.broadcast %124 : vector<1x128xf32> to vector<4x128xf32>
    %126 = arith.subf %101, %125 : vector<4x128xf32>
    %127 = vector.extract_strided_slice %123 {offsets = [1, 0], sizes = [1, 128], strides = [1, 1]} : vector<2x128xf32> to vector<1x128xf32>
    %128 = vector.broadcast %127 : vector<1x128xf32> to vector<4x128xf32>
    %129 = arith.mulf %126, %128 : vector<4x128xf32>
    %cst_57 = arith.constant 0.000000e+00 : f32
    %130 = vector.broadcast %cst_57 : f32 to vector<4x128xf32>
    %131 = arith.maximumf %129, %130 : vector<4x128xf32>
    %c320 = arith.constant 320 : index
    %c0_58 = arith.constant 0 : index
    %132 = vector.load %arg2[%c320, %c0_58] : memref<832x384xf32, #tpu.memory_space<vmem>>, vector<128x384xf32>
    %cst_59 = arith.constant dense<0.000000e+00> : vector<4x384xf32>
    %133 = tpu.matmul %88, %132, %cst_59 {dimension_numbers = #tpu.dot_dimension_numbers<[1], [0], [0], [1], [0, 0, 1, 1], [], []>} : vector<4x128xf32>, vector<128x384xf32>, vector<4x384xf32> -> vector<4x384xf32>
    %c448 = arith.constant 448 : index
    %c0_60 = arith.constant 0 : index
    %134 = vector.load %arg2[%c448, %c0_60] : memref<832x384xf32, #tpu.memory_space<vmem>>, vector<128x384xf32>
    %cst_61 = arith.constant dense<0.000000e+00> : vector<4x384xf32>
    %135 = tpu.matmul %131, %134, %cst_61 {dimension_numbers = #tpu.dot_dimension_numbers<[1], [0], [0], [1], [0, 0, 1, 1], [], []>} : vector<4x128xf32>, vector<128x384xf32>, vector<4x384xf32> -> vector<4x384xf32>
    %136 = arith.addf %133, %135 : vector<4x384xf32>
    %c1168 = arith.constant 1168 : index
    %c0_62 = arith.constant 0 : index
    %137 = vector.load %arg3[%c1168, %c0_62] : memref<1272x128xf32, #tpu.memory_space<vmem>>, vector<8x4xf32>
    %138 = vector.extract_strided_slice %136 {offsets = [0, 0], sizes = [4, 128], strides = [1, 1]} : vector<4x384xf32> to vector<4x128xf32>
    %cst_63 = arith.constant dense<0.000000e+00> : vector<8x128xf32>
    %139 = tpu.matmul %137, %138, %cst_63 {dimension_numbers = #tpu.dot_dimension_numbers<[1], [0], [0], [1], [0, 0, 1, 1], [], []>} : vector<8x4xf32>, vector<4x128xf32>, vector<8x128xf32> -> vector<8x128xf32>
    %c1184 = arith.constant 1184 : index
    %c0_64 = arith.constant 0 : index
    %140 = vector.load %arg3[%c1184, %c0_64] : memref<1272x128xf32, #tpu.memory_space<vmem>>, vector<8x4xf32>
    %141 = vector.extract_strided_slice %136 {offsets = [0, 128], sizes = [4, 128], strides = [1, 1]} : vector<4x384xf32> to vector<4x128xf32>
    %cst_65 = arith.constant dense<0.000000e+00> : vector<8x128xf32>
    %142 = tpu.matmul %140, %141, %cst_65 {dimension_numbers = #tpu.dot_dimension_numbers<[1], [0], [0], [1], [0, 0, 1, 1], [], []>} : vector<8x4xf32>, vector<4x128xf32>, vector<8x128xf32> -> vector<8x128xf32>
    %143 = arith.addf %139, %142 : vector<8x128xf32>
    %c1200 = arith.constant 1200 : index
    %c0_66 = arith.constant 0 : index
    %144 = vector.load %arg3[%c1200, %c0_66] : memref<1272x128xf32, #tpu.memory_space<vmem>>, vector<8x4xf32>
    %145 = vector.extract_strided_slice %136 {offsets = [0, 256], sizes = [4, 128], strides = [1, 1]} : vector<4x384xf32> to vector<4x128xf32>
    %cst_67 = arith.constant dense<0.000000e+00> : vector<8x128xf32>
    %146 = tpu.matmul %144, %145, %cst_67 {dimension_numbers = #tpu.dot_dimension_numbers<[1], [0], [0], [1], [0, 0, 1, 1], [], []>} : vector<8x4xf32>, vector<4x128xf32>, vector<8x128xf32> -> vector<8x128xf32>
    %147 = arith.addf %143, %146 : vector<8x128xf32>
    %c384 = arith.constant 384 : index
    %c0_68 = arith.constant 0 : index
    %148 = vector.load %arg3[%c384, %c0_68] : memref<1272x128xf32, #tpu.memory_space<vmem>>, vector<128x128xf32>
    %c896 = arith.constant 896 : index
    %c0_69 = arith.constant 0 : index
    %149 = vector.load %arg3[%c896, %c0_69] : memref<1272x128xf32, #tpu.memory_space<vmem>>, vector<128x128xf32>
    %cst_70 = arith.constant dense<0.000000e+00> : vector<128xf32>
    %150 = vector.multi_reduction <add>, %147, %cst_70 [0] : vector<8x128xf32> to vector<128xf32>
    %151 = vector.shape_cast %150 : vector<128xf32> to vector<1x128xf32>
    %152 = arith.mulf %147, %147 : vector<8x128xf32>
    %cst_71 = arith.constant dense<0.000000e+00> : vector<128xf32>
    %153 = vector.multi_reduction <add>, %152, %cst_71 [0] : vector<8x128xf32> to vector<128xf32>
    %154 = vector.shape_cast %153 : vector<128xf32> to vector<1x128xf32>
    %155 = tpu.concatenate %151, %154 in 0 : vector<1x128xf32>, vector<1x128xf32> -> vector<2x128xf32>
    %cst_72 = arith.constant dense<0.000000e+00> : vector<2x128xf32>
    %156 = tpu.matmul %155, %148, %cst_72 {dimension_numbers = #tpu.dot_dimension_numbers<[1], [0], [0], [1], [0, 0, 1, 1], [], []>} : vector<2x128xf32>, vector<128x128xf32>, vector<2x128xf32> -> vector<2x128xf32>
    %cst_73 = arith.constant 1.562500e-02 : f32
    %157 = vector.broadcast %cst_73 : f32 to vector<2x128xf32>
    %158 = arith.mulf %156, %157 : vector<2x128xf32>
    %159 = vector.extract_strided_slice %158 {offsets = [0, 0], sizes = [1, 128], strides = [1, 1]} : vector<2x128xf32> to vector<1x128xf32>
    %160 = vector.extract_strided_slice %158 {offsets = [1, 0], sizes = [1, 128], strides = [1, 1]} : vector<2x128xf32> to vector<1x128xf32>
    %161 = arith.mulf %159, %159 : vector<1x128xf32>
    %162 = arith.subf %160, %161 : vector<1x128xf32>
    %cst_74 = arith.constant 0.000000e+00 : f32
    %163 = vector.broadcast %cst_74 : f32 to vector<1x128xf32>
    %164 = arith.maximumf %162, %163 : vector<1x128xf32>
    %cst_75 = arith.constant 9.99999974E-6 : f32
    %165 = vector.broadcast %cst_75 : f32 to vector<1x128xf32>
    %166 = arith.addf %164, %165 : vector<1x128xf32>
    %167 = math.rsqrt %166 : vector<1x128xf32>
    %168 = tpu.concatenate %159, %167 in 0 : vector<1x128xf32>, vector<1x128xf32> -> vector<2x128xf32>
    %cst_76 = arith.constant dense<0.000000e+00> : vector<2x128xf32>
    %169 = tpu.matmul %168, %149, %cst_76 {dimension_numbers = #tpu.dot_dimension_numbers<[1], [0], [0], [1], [0, 0, 1, 1], [], []>} : vector<2x128xf32>, vector<128x128xf32>, vector<2x128xf32> -> vector<2x128xf32>
    %170 = vector.extract_strided_slice %169 {offsets = [0, 0], sizes = [1, 128], strides = [1, 1]} : vector<2x128xf32> to vector<1x128xf32>
    %171 = vector.broadcast %170 : vector<1x128xf32> to vector<8x128xf32>
    %172 = arith.subf %147, %171 : vector<8x128xf32>
    %173 = vector.extract_strided_slice %169 {offsets = [1, 0], sizes = [1, 128], strides = [1, 1]} : vector<2x128xf32> to vector<1x128xf32>
    %174 = vector.broadcast %173 : vector<1x128xf32> to vector<8x128xf32>
    %175 = arith.mulf %172, %174 : vector<8x128xf32>
    %cst_77 = arith.constant 0.000000e+00 : f32
    %176 = vector.broadcast %cst_77 : f32 to vector<8x128xf32>
    %177 = arith.maximumf %175, %176 : vector<8x128xf32>
    %c576 = arith.constant 576 : index
    %c0_78 = arith.constant 0 : index
    %178 = vector.load %arg2[%c576, %c0_78] : memref<832x384xf32, #tpu.memory_space<vmem>>, vector<128x384xf32>
    %cst_79 = arith.constant dense<0.000000e+00> : vector<8x384xf32>
    %179 = tpu.matmul %45, %178, %cst_79 {dimension_numbers = #tpu.dot_dimension_numbers<[1], [0], [0], [1], [0, 0, 1, 1], [], []>} : vector<8x128xf32>, vector<128x384xf32>, vector<8x384xf32> -> vector<8x384xf32>
    %c704 = arith.constant 704 : index
    %c0_80 = arith.constant 0 : index
    %180 = vector.load %arg2[%c704, %c0_80] : memref<832x384xf32, #tpu.memory_space<vmem>>, vector<128x384xf32>
    %cst_81 = arith.constant dense<0.000000e+00> : vector<8x384xf32>
    %181 = tpu.matmul %177, %180, %cst_81 {dimension_numbers = #tpu.dot_dimension_numbers<[1], [0], [0], [1], [0, 0, 1, 1], [], []>} : vector<8x128xf32>, vector<128x384xf32>, vector<8x384xf32> -> vector<8x384xf32>
    %182 = arith.addf %179, %181 : vector<8x384xf32>
    %c1216 = arith.constant 1216 : index
    %c0_82 = arith.constant 0 : index
    %183 = vector.load %arg3[%c1216, %c0_82] : memref<1272x128xf32, #tpu.memory_space<vmem>>, vector<16x8xf32>
    %184 = vector.extract_strided_slice %182 {offsets = [0, 0], sizes = [8, 128], strides = [1, 1]} : vector<8x384xf32> to vector<8x128xf32>
    %cst_83 = arith.constant dense<0.000000e+00> : vector<16x128xf32>
    %185 = tpu.matmul %183, %184, %cst_83 {dimension_numbers = #tpu.dot_dimension_numbers<[1], [0], [0], [1], [0, 0, 1, 1], [], []>} : vector<16x8xf32>, vector<8x128xf32>, vector<16x128xf32> -> vector<16x128xf32>
    %c1232 = arith.constant 1232 : index
    %c0_84 = arith.constant 0 : index
    %186 = vector.load %arg3[%c1232, %c0_84] : memref<1272x128xf32, #tpu.memory_space<vmem>>, vector<16x8xf32>
    %187 = vector.extract_strided_slice %182 {offsets = [0, 128], sizes = [8, 128], strides = [1, 1]} : vector<8x384xf32> to vector<8x128xf32>
    %cst_85 = arith.constant dense<0.000000e+00> : vector<16x128xf32>
    %188 = tpu.matmul %186, %187, %cst_85 {dimension_numbers = #tpu.dot_dimension_numbers<[1], [0], [0], [1], [0, 0, 1, 1], [], []>} : vector<16x8xf32>, vector<8x128xf32>, vector<16x128xf32> -> vector<16x128xf32>
    %189 = arith.addf %185, %188 : vector<16x128xf32>
    %c1248 = arith.constant 1248 : index
    %c0_86 = arith.constant 0 : index
    %190 = vector.load %arg3[%c1248, %c0_86] : memref<1272x128xf32, #tpu.memory_space<vmem>>, vector<16x8xf32>
    %191 = vector.extract_strided_slice %182 {offsets = [0, 256], sizes = [8, 128], strides = [1, 1]} : vector<8x384xf32> to vector<8x128xf32>
    %cst_87 = arith.constant dense<0.000000e+00> : vector<16x128xf32>
    %192 = tpu.matmul %190, %191, %cst_87 {dimension_numbers = #tpu.dot_dimension_numbers<[1], [0], [0], [1], [0, 0, 1, 1], [], []>} : vector<16x8xf32>, vector<8x128xf32>, vector<16x128xf32> -> vector<16x128xf32>
    %193 = arith.addf %189, %192 : vector<16x128xf32>
    %194 = vector.broadcast %0 : vector<1x128xf32> to vector<16x128xf32>
    %195 = arith.addf %193, %194 : vector<16x128xf32>
    %cst_88 = arith.constant 0.000000e+00 : f32
    %196 = vector.broadcast %cst_88 : f32 to vector<16x128xf32>
    %197 = arith.subf %196, %195 : vector<16x128xf32>
    %198 = math.exp %197 : vector<16x128xf32>
    %cst_89 = arith.constant 1.000000e+00 : f32
    %199 = vector.broadcast %cst_89 : f32 to vector<16x128xf32>
    %200 = arith.addf %199, %198 : vector<16x128xf32>
    %201 = tpu.reciprocal %200 {approx = true} : vector<16x128xf32> -> vector<16x128xf32>
    %c0_90 = arith.constant 0 : index
    %c0_91 = arith.constant 0 : index
    %c0_92 = arith.constant 0 : index
    %202 = vector.load %arg4[%c0_90, %c0_91, %c0_92] : memref<2x16x128xf32, #tpu.memory_space<vmem>>, vector<1x16x128xf32>
    %203 = vector.shape_cast %202 : vector<1x16x128xf32> to vector<16x128xf32>
    %204 = vector.shape_cast %201 : vector<16x128xf32> to vector<1x16x128xf32>
    tpu.vector_store %arg4[%c0_90, %c0_91, %c0_92], %204 {strides = array<i32>} : memref<2x16x128xf32, #tpu.memory_space<vmem>>, vector<1x16x128xf32>,
    %c1 = arith.constant 1 : index
    %c0_93 = arith.constant 0 : index
    %c0_94 = arith.constant 0 : index
    %205 = vector.load %arg1[%c1, %c0_93, %c0_94] : memref<2x16x64xf32, #tpu.memory_space<vmem>>, vector<1x16x64xf32>
    %206 = vector.shape_cast %205 : vector<1x16x64xf32> to vector<16x64xf32>
    %c0_95 = arith.constant 0 : index
    %c0_96 = arith.constant 0 : index
    %207 = vector.load %arg2[%c0_95, %c0_96] : memref<832x384xf32, #tpu.memory_space<vmem>>, vector<64x384xf32>
    %cst_97 = arith.constant dense<0.000000e+00> : vector<16x384xf32>
    %208 = tpu.matmul %206, %207, %cst_97 {dimension_numbers = #tpu.dot_dimension_numbers<[1], [0], [0], [1], [0, 0, 1, 1], [], []>} : vector<16x64xf32>, vector<64x384xf32>, vector<16x384xf32> -> vector<16x384xf32>
    %c1024_98 = arith.constant 1024 : index
    %c0_99 = arith.constant 0 : index
    %209 = vector.load %arg3[%c1024_98, %c0_99] : memref<1272x128xf32, #tpu.memory_space<vmem>>, vector<8x16xf32>
    %210 = vector.extract_strided_slice %208 {offsets = [0, 0], sizes = [16, 128], strides = [1, 1]} : vector<16x384xf32> to vector<16x128xf32>
    %cst_100 = arith.constant dense<0.000000e+00> : vector<8x128xf32>
    %211 = tpu.matmul %209, %210, %cst_100 {dimension_numbers = #tpu.dot_dimension_numbers<[1], [0], [0], [1], [0, 0, 1, 1], [], []>} : vector<8x16xf32>, vector<16x128xf32>, vector<8x128xf32> -> vector<8x128xf32>
    %c1040_101 = arith.constant 1040 : index
    %c0_102 = arith.constant 0 : index
    %212 = vector.load %arg3[%c1040_101, %c0_102] : memref<1272x128xf32, #tpu.memory_space<vmem>>, vector<8x16xf32>
    %213 = vector.extract_strided_slice %208 {offsets = [0, 128], sizes = [16, 128], strides = [1, 1]} : vector<16x384xf32> to vector<16x128xf32>
    %cst_103 = arith.constant dense<0.000000e+00> : vector<8x128xf32>
    %214 = tpu.matmul %212, %213, %cst_103 {dimension_numbers = #tpu.dot_dimension_numbers<[1], [0], [0], [1], [0, 0, 1, 1], [], []>} : vector<8x16xf32>, vector<16x128xf32>, vector<8x128xf32> -> vector<8x128xf32>
    %215 = arith.addf %211, %214 : vector<8x128xf32>
    %c1056_104 = arith.constant 1056 : index
    %c0_105 = arith.constant 0 : index
    %216 = vector.load %arg3[%c1056_104, %c0_105] : memref<1272x128xf32, #tpu.memory_space<vmem>>, vector<8x16xf32>
    %217 = vector.extract_strided_slice %208 {offsets = [0, 256], sizes = [16, 128], strides = [1, 1]} : vector<16x384xf32> to vector<16x128xf32>
    %cst_106 = arith.constant dense<0.000000e+00> : vector<8x128xf32>
    %218 = tpu.matmul %216, %217, %cst_106 {dimension_numbers = #tpu.dot_dimension_numbers<[1], [0], [0], [1], [0, 0, 1, 1], [], []>} : vector<8x16xf32>, vector<16x128xf32>, vector<8x128xf32> -> vector<8x128xf32>
    %219 = arith.addf %215, %218 : vector<8x128xf32>
    %c0_107 = arith.constant 0 : index
    %c0_108 = arith.constant 0 : index
    %220 = vector.load %arg3[%c0_107, %c0_108] : memref<1272x128xf32, #tpu.memory_space<vmem>>, vector<128x128xf32>
    %c512_109 = arith.constant 512 : index
    %c0_110 = arith.constant 0 : index
    %221 = vector.load %arg3[%c512_109, %c0_110] : memref<1272x128xf32, #tpu.memory_space<vmem>>, vector<128x128xf32>
    %cst_111 = arith.constant dense<0.000000e+00> : vector<128xf32>
    %222 = vector.multi_reduction <add>, %219, %cst_111 [0] : vector<8x128xf32> to vector<128xf32>
    %223 = vector.shape_cast %222 : vector<128xf32> to vector<1x128xf32>
    %224 = arith.mulf %219, %219 : vector<8x128xf32>
    %cst_112 = arith.constant dense<0.000000e+00> : vector<128xf32>
    %225 = vector.multi_reduction <add>, %224, %cst_112 [0] : vector<8x128xf32> to vector<128xf32>
    %226 = vector.shape_cast %225 : vector<128xf32> to vector<1x128xf32>
    %227 = tpu.concatenate %223, %226 in 0 : vector<1x128xf32>, vector<1x128xf32> -> vector<2x128xf32>
    %cst_113 = arith.constant dense<0.000000e+00> : vector<2x128xf32>
    %228 = tpu.matmul %227, %220, %cst_113 {dimension_numbers = #tpu.dot_dimension_numbers<[1], [0], [0], [1], [0, 0, 1, 1], [], []>} : vector<2x128xf32>, vector<128x128xf32>, vector<2x128xf32> -> vector<2x128xf32>
    %cst_114 = arith.constant 1.562500e-02 : f32
    %229 = vector.broadcast %cst_114 : f32 to vector<2x128xf32>
    %230 = arith.mulf %228, %229 : vector<2x128xf32>
    %231 = vector.extract_strided_slice %230 {offsets = [0, 0], sizes = [1, 128], strides = [1, 1]} : vector<2x128xf32> to vector<1x128xf32>
    %232 = vector.extract_strided_slice %230 {offsets = [1, 0], sizes = [1, 128], strides = [1, 1]} : vector<2x128xf32> to vector<1x128xf32>
    %233 = arith.mulf %231, %231 : vector<1x128xf32>
    %234 = arith.subf %232, %233 : vector<1x128xf32>
    %cst_115 = arith.constant 0.000000e+00 : f32
    %235 = vector.broadcast %cst_115 : f32 to vector<1x128xf32>
    %236 = arith.maximumf %234, %235 : vector<1x128xf32>
    %cst_116 = arith.constant 9.99999974E-6 : f32
    %237 = vector.broadcast %cst_116 : f32 to vector<1x128xf32>
    %238 = arith.addf %236, %237 : vector<1x128xf32>
    %239 = math.rsqrt %238 : vector<1x128xf32>
    %240 = tpu.concatenate %231, %239 in 0 : vector<1x128xf32>, vector<1x128xf32> -> vector<2x128xf32>
    %cst_117 = arith.constant dense<0.000000e+00> : vector<2x128xf32>
    %241 = tpu.matmul %240, %221, %cst_117 {dimension_numbers = #tpu.dot_dimension_numbers<[1], [0], [0], [1], [0, 0, 1, 1], [], []>} : vector<2x128xf32>, vector<128x128xf32>, vector<2x128xf32> -> vector<2x128xf32>
    %242 = vector.extract_strided_slice %241 {offsets = [0, 0], sizes = [1, 128], strides = [1, 1]} : vector<2x128xf32> to vector<1x128xf32>
    %243 = vector.broadcast %242 : vector<1x128xf32> to vector<8x128xf32>
    %244 = arith.subf %219, %243 : vector<8x128xf32>
    %245 = vector.extract_strided_slice %241 {offsets = [1, 0], sizes = [1, 128], strides = [1, 1]} : vector<2x128xf32> to vector<1x128xf32>
    %246 = vector.broadcast %245 : vector<1x128xf32> to vector<8x128xf32>
    %247 = arith.mulf %244, %246 : vector<8x128xf32>
    %cst_118 = arith.constant 0.000000e+00 : f32
    %248 = vector.broadcast %cst_118 : f32 to vector<8x128xf32>
    %249 = arith.maximumf %247, %248 : vector<8x128xf32>
    %c64_119 = arith.constant 64 : index
    %c0_120 = arith.constant 0 : index
    %250 = vector.load %arg2[%c64_119, %c0_120] : memref<832x384xf32, #tpu.memory_space<vmem>>, vector<128x384xf32>
    %cst_121 = arith.constant dense<0.000000e+00> : vector<8x384xf32>
    %251 = tpu.matmul %249, %250, %cst_121 {dimension_numbers = #tpu.dot_dimension_numbers<[1], [0], [0], [1], [0, 0, 1, 1], [], []>} : vector<8x128xf32>, vector<128x384xf32>, vector<8x384xf32> -> vector<8x384xf32>
    %c1072_122 = arith.constant 1072 : index
    %c0_123 = arith.constant 0 : index
    %252 = vector.load %arg3[%c1072_122, %c0_123] : memref<1272x128xf32, #tpu.memory_space<vmem>>, vector<4x8xf32>
    %253 = vector.extract_strided_slice %251 {offsets = [0, 0], sizes = [8, 128], strides = [1, 1]} : vector<8x384xf32> to vector<8x128xf32>
    %cst_124 = arith.constant dense<0.000000e+00> : vector<4x128xf32>
    %254 = tpu.matmul %252, %253, %cst_124 {dimension_numbers = #tpu.dot_dimension_numbers<[1], [0], [0], [1], [0, 0, 1, 1], [], []>} : vector<4x8xf32>, vector<8x128xf32>, vector<4x128xf32> -> vector<4x128xf32>
    %c1088_125 = arith.constant 1088 : index
    %c0_126 = arith.constant 0 : index
    %255 = vector.load %arg3[%c1088_125, %c0_126] : memref<1272x128xf32, #tpu.memory_space<vmem>>, vector<4x8xf32>
    %256 = vector.extract_strided_slice %251 {offsets = [0, 128], sizes = [8, 128], strides = [1, 1]} : vector<8x384xf32> to vector<8x128xf32>
    %cst_127 = arith.constant dense<0.000000e+00> : vector<4x128xf32>
    %257 = tpu.matmul %255, %256, %cst_127 {dimension_numbers = #tpu.dot_dimension_numbers<[1], [0], [0], [1], [0, 0, 1, 1], [], []>} : vector<4x8xf32>, vector<8x128xf32>, vector<4x128xf32> -> vector<4x128xf32>
    %258 = arith.addf %254, %257 : vector<4x128xf32>
    %c1104_128 = arith.constant 1104 : index
    %c0_129 = arith.constant 0 : index
    %259 = vector.load %arg3[%c1104_128, %c0_129] : memref<1272x128xf32, #tpu.memory_space<vmem>>, vector<4x8xf32>
    %260 = vector.extract_strided_slice %251 {offsets = [0, 256], sizes = [8, 128], strides = [1, 1]} : vector<8x384xf32> to vector<8x128xf32>
    %cst_130 = arith.constant dense<0.000000e+00> : vector<4x128xf32>
    %261 = tpu.matmul %259, %260, %cst_130 {dimension_numbers = #tpu.dot_dimension_numbers<[1], [0], [0], [1], [0, 0, 1, 1], [], []>} : vector<4x8xf32>, vector<8x128xf32>, vector<4x128xf32> -> vector<4x128xf32>
    %262 = arith.addf %258, %261 : vector<4x128xf32>
    %c128_131 = arith.constant 128 : index
    %c0_132 = arith.constant 0 : index
    %263 = vector.load %arg3[%c128_131, %c0_132] : memref<1272x128xf32, #tpu.memory_space<vmem>>, vector<128x128xf32>
    %c640_133 = arith.constant 640 : index
    %c0_134 = arith.constant 0 : index
    %264 = vector.load %arg3[%c640_133, %c0_134] : memref<1272x128xf32, #tpu.memory_space<vmem>>, vector<128x128xf32>
    %cst_135 = arith.constant dense<0.000000e+00> : vector<128xf32>
    %265 = vector.multi_reduction <add>, %262, %cst_135 [0] : vector<4x128xf32> to vector<128xf32>
    %266 = vector.shape_cast %265 : vector<128xf32> to vector<1x128xf32>
    %267 = arith.mulf %262, %262 : vector<4x128xf32>
    %cst_136 = arith.constant dense<0.000000e+00> : vector<128xf32>
    %268 = vector.multi_reduction <add>, %267, %cst_136 [0] : vector<4x128xf32> to vector<128xf32>
    %269 = vector.shape_cast %268 : vector<128xf32> to vector<1x128xf32>
    %270 = tpu.concatenate %266, %269 in 0 : vector<1x128xf32>, vector<1x128xf32> -> vector<2x128xf32>
    %cst_137 = arith.constant dense<0.000000e+00> : vector<2x128xf32>
    %271 = tpu.matmul %270, %263, %cst_137 {dimension_numbers = #tpu.dot_dimension_numbers<[1], [0], [0], [1], [0, 0, 1, 1], [], []>} : vector<2x128xf32>, vector<128x128xf32>, vector<2x128xf32> -> vector<2x128xf32>
    %cst_138 = arith.constant 6.250000e-02 : f32
    %272 = vector.broadcast %cst_138 : f32 to vector<2x128xf32>
    %273 = arith.mulf %271, %272 : vector<2x128xf32>
    %274 = vector.extract_strided_slice %273 {offsets = [0, 0], sizes = [1, 128], strides = [1, 1]} : vector<2x128xf32> to vector<1x128xf32>
    %275 = vector.extract_strided_slice %273 {offsets = [1, 0], sizes = [1, 128], strides = [1, 1]} : vector<2x128xf32> to vector<1x128xf32>
    %276 = arith.mulf %274, %274 : vector<1x128xf32>
    %277 = arith.subf %275, %276 : vector<1x128xf32>
    %cst_139 = arith.constant 0.000000e+00 : f32
    %278 = vector.broadcast %cst_139 : f32 to vector<1x128xf32>
    %279 = arith.maximumf %277, %278 : vector<1x128xf32>
    %cst_140 = arith.constant 9.99999974E-6 : f32
    %280 = vector.broadcast %cst_140 : f32 to vector<1x128xf32>
    %281 = arith.addf %279, %280 : vector<1x128xf32>
    %282 = math.rsqrt %281 : vector<1x128xf32>
    %283 = tpu.concatenate %274, %282 in 0 : vector<1x128xf32>, vector<1x128xf32> -> vector<2x128xf32>
    %cst_141 = arith.constant dense<0.000000e+00> : vector<2x128xf32>
    %284 = tpu.matmul %283, %264, %cst_141 {dimension_numbers = #tpu.dot_dimension_numbers<[1], [0], [0], [1], [0, 0, 1, 1], [], []>} : vector<2x128xf32>, vector<128x128xf32>, vector<2x128xf32> -> vector<2x128xf32>
    %285 = vector.extract_strided_slice %284 {offsets = [0, 0], sizes = [1, 128], strides = [1, 1]} : vector<2x128xf32> to vector<1x128xf32>
    %286 = vector.broadcast %285 : vector<1x128xf32> to vector<4x128xf32>
    %287 = arith.subf %262, %286 : vector<4x128xf32>
    %288 = vector.extract_strided_slice %284 {offsets = [1, 0], sizes = [1, 128], strides = [1, 1]} : vector<2x128xf32> to vector<1x128xf32>
    %289 = vector.broadcast %288 : vector<1x128xf32> to vector<4x128xf32>
    %290 = arith.mulf %287, %289 : vector<4x128xf32>
    %cst_142 = arith.constant 0.000000e+00 : f32
    %291 = vector.broadcast %cst_142 : f32 to vector<4x128xf32>
    %292 = arith.maximumf %290, %291 : vector<4x128xf32>
    %c192_143 = arith.constant 192 : index
    %c0_144 = arith.constant 0 : index
    %293 = vector.load %arg2[%c192_143, %c0_144] : memref<832x384xf32, #tpu.memory_space<vmem>>, vector<128x384xf32>
    %cst_145 = arith.constant dense<0.000000e+00> : vector<4x384xf32>
    %294 = tpu.matmul %292, %293, %cst_145 {dimension_numbers = #tpu.dot_dimension_numbers<[1], [0], [0], [1], [0, 0, 1, 1], [], []>} : vector<4x128xf32>, vector<128x384xf32>, vector<4x384xf32> -> vector<4x384xf32>
    %c1120_146 = arith.constant 1120 : index
    %c0_147 = arith.constant 0 : index
    %295 = vector.load %arg3[%c1120_146, %c0_147] : memref<1272x128xf32, #tpu.memory_space<vmem>>, vector<4x4xf32>
    %296 = vector.extract_strided_slice %294 {offsets = [0, 0], sizes = [4, 128], strides = [1, 1]} : vector<4x384xf32> to vector<4x128xf32>
    %cst_148 = arith.constant dense<0.000000e+00> : vector<4x128xf32>
    %297 = tpu.matmul %295, %296, %cst_148 {dimension_numbers = #tpu.dot_dimension_numbers<[1], [0], [0], [1], [0, 0, 1, 1], [], []>} : vector<4x4xf32>, vector<4x128xf32>, vector<4x128xf32> -> vector<4x128xf32>
    %c1136_149 = arith.constant 1136 : index
    %c0_150 = arith.constant 0 : index
    %298 = vector.load %arg3[%c1136_149, %c0_150] : memref<1272x128xf32, #tpu.memory_space<vmem>>, vector<4x4xf32>
    %299 = vector.extract_strided_slice %294 {offsets = [0, 128], sizes = [4, 128], strides = [1, 1]} : vector<4x384xf32> to vector<4x128xf32>
    %cst_151 = arith.constant dense<0.000000e+00> : vector<4x128xf32>
    %300 = tpu.matmul %298, %299, %cst_151 {dimension_numbers = #tpu.dot_dimension_numbers<[1], [0], [0], [1], [0, 0, 1, 1], [], []>} : vector<4x4xf32>, vector<4x128xf32>, vector<4x128xf32> -> vector<4x128xf32>
    %301 = arith.addf %297, %300 : vector<4x128xf32>
    %c1152_152 = arith.constant 1152 : index
    %c0_153 = arith.constant 0 : index
    %302 = vector.load %arg3[%c1152_152, %c0_153] : memref<1272x128xf32, #tpu.memory_space<vmem>>, vector<4x4xf32>
    %303 = vector.extract_strided_slice %294 {offsets = [0, 256], sizes = [4, 128], strides = [1, 1]} : vector<4x384xf32> to vector<4x128xf32>
    %cst_154 = arith.constant dense<0.000000e+00> : vector<4x128xf32>
    %304 = tpu.matmul %302, %303, %cst_154 {dimension_numbers = #tpu.dot_dimension_numbers<[1], [0], [0], [1], [0, 0, 1, 1], [], []>} : vector<4x4xf32>, vector<4x128xf32>, vector<4x128xf32> -> vector<4x128xf32>
    %305 = arith.addf %301, %304 : vector<4x128xf32>
    %c256_155 = arith.constant 256 : index
    %c0_156 = arith.constant 0 : index
    %306 = vector.load %arg3[%c256_155, %c0_156] : memref<1272x128xf32, #tpu.memory_space<vmem>>, vector<128x128xf32>
    %c768_157 = arith.constant 768 : index
    %c0_158 = arith.constant 0 : index
    %307 = vector.load %arg3[%c768_157, %c0_158] : memref<1272x128xf32, #tpu.memory_space<vmem>>, vector<128x128xf32>
    %cst_159 = arith.constant dense<0.000000e+00> : vector<128xf32>
    %308 = vector.multi_reduction <add>, %305, %cst_159 [0] : vector<4x128xf32> to vector<128xf32>
    %309 = vector.shape_cast %308 : vector<128xf32> to vector<1x128xf32>
    %310 = arith.mulf %305, %305 : vector<4x128xf32>
    %cst_160 = arith.constant dense<0.000000e+00> : vector<128xf32>
    %311 = vector.multi_reduction <add>, %310, %cst_160 [0] : vector<4x128xf32> to vector<128xf32>
    %312 = vector.shape_cast %311 : vector<128xf32> to vector<1x128xf32>
    %313 = tpu.concatenate %309, %312 in 0 : vector<1x128xf32>, vector<1x128xf32> -> vector<2x128xf32>
    %cst_161 = arith.constant dense<0.000000e+00> : vector<2x128xf32>
    %314 = tpu.matmul %313, %306, %cst_161 {dimension_numbers = #tpu.dot_dimension_numbers<[1], [0], [0], [1], [0, 0, 1, 1], [], []>} : vector<2x128xf32>, vector<128x128xf32>, vector<2x128xf32> -> vector<2x128xf32>
    %cst_162 = arith.constant 6.250000e-02 : f32
    %315 = vector.broadcast %cst_162 : f32 to vector<2x128xf32>
    %316 = arith.mulf %314, %315 : vector<2x128xf32>
    %317 = vector.extract_strided_slice %316 {offsets = [0, 0], sizes = [1, 128], strides = [1, 1]} : vector<2x128xf32> to vector<1x128xf32>
    %318 = vector.extract_strided_slice %316 {offsets = [1, 0], sizes = [1, 128], strides = [1, 1]} : vector<2x128xf32> to vector<1x128xf32>
    %319 = arith.mulf %317, %317 : vector<1x128xf32>
    %320 = arith.subf %318, %319 : vector<1x128xf32>
    %cst_163 = arith.constant 0.000000e+00 : f32
    %321 = vector.broadcast %cst_163 : f32 to vector<1x128xf32>
    %322 = arith.maximumf %320, %321 : vector<1x128xf32>
    %cst_164 = arith.constant 9.99999974E-6 : f32
    %323 = vector.broadcast %cst_164 : f32 to vector<1x128xf32>
    %324 = arith.addf %322, %323 : vector<1x128xf32>
    %325 = math.rsqrt %324 : vector<1x128xf32>
    %326 = tpu.concatenate %317, %325 in 0 : vector<1x128xf32>, vector<1x128xf32> -> vector<2x128xf32>
    %cst_165 = arith.constant dense<0.000000e+00> : vector<2x128xf32>
    %327 = tpu.matmul %326, %307, %cst_165 {dimension_numbers = #tpu.dot_dimension_numbers<[1], [0], [0], [1], [0, 0, 1, 1], [], []>} : vector<2x128xf32>, vector<128x128xf32>, vector<2x128xf32> -> vector<2x128xf32>
    %328 = vector.extract_strided_slice %327 {offsets = [0, 0], sizes = [1, 128], strides = [1, 1]} : vector<2x128xf32> to vector<1x128xf32>
    %329 = vector.broadcast %328 : vector<1x128xf32> to vector<4x128xf32>
    %330 = arith.subf %305, %329 : vector<4x128xf32>
    %331 = vector.extract_strided_slice %327 {offsets = [1, 0], sizes = [1, 128], strides = [1, 1]} : vector<2x128xf32> to vector<1x128xf32>
    %332 = vector.broadcast %331 : vector<1x128xf32> to vector<4x128xf32>
    %333 = arith.mulf %330, %332 : vector<4x128xf32>
    %cst_166 = arith.constant 0.000000e+00 : f32
    %334 = vector.broadcast %cst_166 : f32 to vector<4x128xf32>
    %335 = arith.maximumf %333, %334 : vector<4x128xf32>
    %c320_167 = arith.constant 320 : index
    %c0_168 = arith.constant 0 : index
    %336 = vector.load %arg2[%c320_167, %c0_168] : memref<832x384xf32, #tpu.memory_space<vmem>>, vector<128x384xf32>
    %cst_169 = arith.constant dense<0.000000e+00> : vector<4x384xf32>
    %337 = tpu.matmul %292, %336, %cst_169 {dimension_numbers = #tpu.dot_dimension_numbers<[1], [0], [0], [1], [0, 0, 1, 1], [], []>} : vector<4x128xf32>, vector<128x384xf32>, vector<4x384xf32> -> vector<4x384xf32>
    %c448_170 = arith.constant 448 : index
    %c0_171 = arith.constant 0 : index
    %338 = vector.load %arg2[%c448_170, %c0_171] : memref<832x384xf32, #tpu.memory_space<vmem>>, vector<128x384xf32>
    %cst_172 = arith.constant dense<0.000000e+00> : vector<4x384xf32>
    %339 = tpu.matmul %335, %338, %cst_172 {dimension_numbers = #tpu.dot_dimension_numbers<[1], [0], [0], [1], [0, 0, 1, 1], [], []>} : vector<4x128xf32>, vector<128x384xf32>, vector<4x384xf32> -> vector<4x384xf32>
    %340 = arith.addf %337, %339 : vector<4x384xf32>
    %c1168_173 = arith.constant 1168 : index
    %c0_174 = arith.constant 0 : index
    %341 = vector.load %arg3[%c1168_173, %c0_174] : memref<1272x128xf32, #tpu.memory_space<vmem>>, vector<8x4xf32>
    %342 = vector.extract_strided_slice %340 {offsets = [0, 0], sizes = [4, 128], strides = [1, 1]} : vector<4x384xf32> to vector<4x128xf32>
    %cst_175 = arith.constant dense<0.000000e+00> : vector<8x128xf32>
    %343 = tpu.matmul %341, %342, %cst_175 {dimension_numbers = #tpu.dot_dimension_numbers<[1], [0], [0], [1], [0, 0, 1, 1], [], []>} : vector<8x4xf32>, vector<4x128xf32>, vector<8x128xf32> -> vector<8x128xf32>
    %c1184_176 = arith.constant 1184 : index
    %c0_177 = arith.constant 0 : index
    %344 = vector.load %arg3[%c1184_176, %c0_177] : memref<1272x128xf32, #tpu.memory_space<vmem>>, vector<8x4xf32>
    %345 = vector.extract_strided_slice %340 {offsets = [0, 128], sizes = [4, 128], strides = [1, 1]} : vector<4x384xf32> to vector<4x128xf32>
    %cst_178 = arith.constant dense<0.000000e+00> : vector<8x128xf32>
    %346 = tpu.matmul %344, %345, %cst_178 {dimension_numbers = #tpu.dot_dimension_numbers<[1], [0], [0], [1], [0, 0, 1, 1], [], []>} : vector<8x4xf32>, vector<4x128xf32>, vector<8x128xf32> -> vector<8x128xf32>
    %347 = arith.addf %343, %346 : vector<8x128xf32>
    %c1200_179 = arith.constant 1200 : index
    %c0_180 = arith.constant 0 : index
    %348 = vector.load %arg3[%c1200_179, %c0_180] : memref<1272x128xf32, #tpu.memory_space<vmem>>, vector<8x4xf32>
    %349 = vector.extract_strided_slice %340 {offsets = [0, 256], sizes = [4, 128], strides = [1, 1]} : vector<4x384xf32> to vector<4x128xf32>
    %cst_181 = arith.constant dense<0.000000e+00> : vector<8x128xf32>
    %350 = tpu.matmul %348, %349, %cst_181 {dimension_numbers = #tpu.dot_dimension_numbers<[1], [0], [0], [1], [0, 0, 1, 1], [], []>} : vector<8x4xf32>, vector<4x128xf32>, vector<8x128xf32> -> vector<8x128xf32>
    %351 = arith.addf %347, %350 : vector<8x128xf32>
    %c384_182 = arith.constant 384 : index
    %c0_183 = arith.constant 0 : index
    %352 = vector.load %arg3[%c384_182, %c0_183] : memref<1272x128xf32, #tpu.memory_space<vmem>>, vector<128x128xf32>
    %c896_184 = arith.constant 896 : index
    %c0_185 = arith.constant 0 : index
    %353 = vector.load %arg3[%c896_184, %c0_185] : memref<1272x128xf32, #tpu.memory_space<vmem>>, vector<128x128xf32>
    %cst_186 = arith.constant dense<0.000000e+00> : vector<128xf32>
    %354 = vector.multi_reduction <add>, %351, %cst_186 [0] : vector<8x128xf32> to vector<128xf32>
    %355 = vector.shape_cast %354 : vector<128xf32> to vector<1x128xf32>
    %356 = arith.mulf %351, %351 : vector<8x128xf32>
    %cst_187 = arith.constant dense<0.000000e+00> : vector<128xf32>
    %357 = vector.multi_reduction <add>, %356, %cst_187 [0] : vector<8x128xf32> to vector<128xf32>
    %358 = vector.shape_cast %357 : vector<128xf32> to vector<1x128xf32>
    %359 = tpu.concatenate %355, %358 in 0 : vector<1x128xf32>, vector<1x128xf32> -> vector<2x128xf32>
    %cst_188 = arith.constant dense<0.000000e+00> : vector<2x128xf32>
    %360 = tpu.matmul %359, %352, %cst_188 {dimension_numbers = #tpu.dot_dimension_numbers<[1], [0], [0], [1], [0, 0, 1, 1], [], []>} : vector<2x128xf32>, vector<128x128xf32>, vector<2x128xf32> -> vector<2x128xf32>
    %cst_189 = arith.constant 1.562500e-02 : f32
    %361 = vector.broadcast %cst_189 : f32 to vector<2x128xf32>
    %362 = arith.mulf %360, %361 : vector<2x128xf32>
    %363 = vector.extract_strided_slice %362 {offsets = [0, 0], sizes = [1, 128], strides = [1, 1]} : vector<2x128xf32> to vector<1x128xf32>
    %364 = vector.extract_strided_slice %362 {offsets = [1, 0], sizes = [1, 128], strides = [1, 1]} : vector<2x128xf32> to vector<1x128xf32>
    %365 = arith.mulf %363, %363 : vector<1x128xf32>
    %366 = arith.subf %364, %365 : vector<1x128xf32>
    %cst_190 = arith.constant 0.000000e+00 : f32
    %367 = vector.broadcast %cst_190 : f32 to vector<1x128xf32>
    %368 = arith.maximumf %366, %367 : vector<1x128xf32>
    %cst_191 = arith.constant 9.99999974E-6 : f32
    %369 = vector.broadcast %cst_191 : f32 to vector<1x128xf32>
    %370 = arith.addf %368, %369 : vector<1x128xf32>
    %371 = math.rsqrt %370 : vector<1x128xf32>
    %372 = tpu.concatenate %363, %371 in 0 : vector<1x128xf32>, vector<1x128xf32> -> vector<2x128xf32>
    %cst_192 = arith.constant dense<0.000000e+00> : vector<2x128xf32>
    %373 = tpu.matmul %372, %353, %cst_192 {dimension_numbers = #tpu.dot_dimension_numbers<[1], [0], [0], [1], [0, 0, 1, 1], [], []>} : vector<2x128xf32>, vector<128x128xf32>, vector<2x128xf32> -> vector<2x128xf32>
    %374 = vector.extract_strided_slice %373 {offsets = [0, 0], sizes = [1, 128], strides = [1, 1]} : vector<2x128xf32> to vector<1x128xf32>
    %375 = vector.broadcast %374 : vector<1x128xf32> to vector<8x128xf32>
    %376 = arith.subf %351, %375 : vector<8x128xf32>
    %377 = vector.extract_strided_slice %373 {offsets = [1, 0], sizes = [1, 128], strides = [1, 1]} : vector<2x128xf32> to vector<1x128xf32>
    %378 = vector.broadcast %377 : vector<1x128xf32> to vector<8x128xf32>
    %379 = arith.mulf %376, %378 : vector<8x128xf32>
    %cst_193 = arith.constant 0.000000e+00 : f32
    %380 = vector.broadcast %cst_193 : f32 to vector<8x128xf32>
    %381 = arith.maximumf %379, %380 : vector<8x128xf32>
    %c576_194 = arith.constant 576 : index
    %c0_195 = arith.constant 0 : index
    %382 = vector.load %arg2[%c576_194, %c0_195] : memref<832x384xf32, #tpu.memory_space<vmem>>, vector<128x384xf32>
    %cst_196 = arith.constant dense<0.000000e+00> : vector<8x384xf32>
    %383 = tpu.matmul %249, %382, %cst_196 {dimension_numbers = #tpu.dot_dimension_numbers<[1], [0], [0], [1], [0, 0, 1, 1], [], []>} : vector<8x128xf32>, vector<128x384xf32>, vector<8x384xf32> -> vector<8x384xf32>
    %c704_197 = arith.constant 704 : index
    %c0_198 = arith.constant 0 : index
    %384 = vector.load %arg2[%c704_197, %c0_198] : memref<832x384xf32, #tpu.memory_space<vmem>>, vector<128x384xf32>
    %cst_199 = arith.constant dense<0.000000e+00> : vector<8x384xf32>
    %385 = tpu.matmul %381, %384, %cst_199 {dimension_numbers = #tpu.dot_dimension_numbers<[1], [0], [0], [1], [0, 0, 1, 1], [], []>} : vector<8x128xf32>, vector<128x384xf32>, vector<8x384xf32> -> vector<8x384xf32>
    %386 = arith.addf %383, %385 : vector<8x384xf32>
    %c1216_200 = arith.constant 1216 : index
    %c0_201 = arith.constant 0 : index
    %387 = vector.load %arg3[%c1216_200, %c0_201] : memref<1272x128xf32, #tpu.memory_space<vmem>>, vector<16x8xf32>
    %388 = vector.extract_strided_slice %386 {offsets = [0, 0], sizes = [8, 128], strides = [1, 1]} : vector<8x384xf32> to vector<8x128xf32>
    %cst_202 = arith.constant dense<0.000000e+00> : vector<16x128xf32>
    %389 = tpu.matmul %387, %388, %cst_202 {dimension_numbers = #tpu.dot_dimension_numbers<[1], [0], [0], [1], [0, 0, 1, 1], [], []>} : vector<16x8xf32>, vector<8x128xf32>, vector<16x128xf32> -> vector<16x128xf32>
    %c1232_203 = arith.constant 1232 : index
    %c0_204 = arith.constant 0 : index
    %390 = vector.load %arg3[%c1232_203, %c0_204] : memref<1272x128xf32, #tpu.memory_space<vmem>>, vector<16x8xf32>
    %391 = vector.extract_strided_slice %386 {offsets = [0, 128], sizes = [8, 128], strides = [1, 1]} : vector<8x384xf32> to vector<8x128xf32>
    %cst_205 = arith.constant dense<0.000000e+00> : vector<16x128xf32>
    %392 = tpu.matmul %390, %391, %cst_205 {dimension_numbers = #tpu.dot_dimension_numbers<[1], [0], [0], [1], [0, 0, 1, 1], [], []>} : vector<16x8xf32>, vector<8x128xf32>, vector<16x128xf32> -> vector<16x128xf32>
    %393 = arith.addf %389, %392 : vector<16x128xf32>
    %c1248_206 = arith.constant 1248 : index
    %c0_207 = arith.constant 0 : index
    %394 = vector.load %arg3[%c1248_206, %c0_207] : memref<1272x128xf32, #tpu.memory_space<vmem>>, vector<16x8xf32>
    %395 = vector.extract_strided_slice %386 {offsets = [0, 256], sizes = [8, 128], strides = [1, 1]} : vector<8x384xf32> to vector<8x128xf32>
    %cst_208 = arith.constant dense<0.000000e+00> : vector<16x128xf32>
    %396 = tpu.matmul %394, %395, %cst_208 {dimension_numbers = #tpu.dot_dimension_numbers<[1], [0], [0], [1], [0, 0, 1, 1], [], []>} : vector<16x8xf32>, vector<8x128xf32>, vector<16x128xf32> -> vector<16x128xf32>
    %397 = arith.addf %393, %396 : vector<16x128xf32>
    %398 = vector.broadcast %0 : vector<1x128xf32> to vector<16x128xf32>
    %399 = arith.addf %397, %398 : vector<16x128xf32>
    %cst_209 = arith.constant 0.000000e+00 : f32
    %400 = vector.broadcast %cst_209 : f32 to vector<16x128xf32>
    %401 = arith.subf %400, %399 : vector<16x128xf32>
    %402 = math.exp %401 : vector<16x128xf32>
    %cst_210 = arith.constant 1.000000e+00 : f32
    %403 = vector.broadcast %cst_210 : f32 to vector<16x128xf32>
    %404 = arith.addf %403, %402 : vector<16x128xf32>
    %405 = tpu.reciprocal %404 {approx = true} : vector<16x128xf32> -> vector<16x128xf32>
    %c1_211 = arith.constant 1 : index
    %c0_212 = arith.constant 0 : index
    %c0_213 = arith.constant 0 : index
    %406 = vector.load %arg4[%c1_211, %c0_212, %c0_213] : memref<2x16x128xf32, #tpu.memory_space<vmem>>, vector<1x16x128xf32>
    %407 = vector.shape_cast %406 : vector<1x16x128xf32> to vector<16x128xf32>
    %408 = vector.shape_cast %405 : vector<16x128xf32> to vector<1x16x128xf32>
    tpu.vector_store %arg4[%c1_211, %c0_212, %c0_213], %408 {strides = array<i32>} : memref<2x16x128xf32, #tpu.memory_space<vmem>>, vector<1x16x128xf32>,
    return
  }
  func.func @transform_0(%arg0: i32) -> (i32, i32, i32) {
    %c0_i32 = arith.constant 0 : i32
    %c0_i32_0 = arith.constant 0 : i32
    %c0_i32_1 = arith.constant 0 : i32
    %c0_i32_2 = arith.constant 0 : i32
    return %c0_i32, %c0_i32_0, %c0_i32_1 : i32, i32, i32
  }
  func.func @transform_1(%arg0: i32) -> (i32, i32) {
    %c0_i32 = arith.constant 0 : i32
    %c0_i32_0 = arith.constant 0 : i32
    %c0_i32_1 = arith.constant 0 : i32
    return %c0_i32, %c0_i32_0 : i32, i32
  }
  func.func @transform_2(%arg0: i32) -> (i32, i32) {
    %c0_i32 = arith.constant 0 : i32
    %c0_i32_0 = arith.constant 0 : i32
    %c0_i32_1 = arith.constant 0 : i32
    return %c0_i32, %c0_i32_0 : i32, i32
  }
  func.func @transform_3(%arg0: i32) -> (i32, i32, i32) {
    %c0_i32 = arith.constant 0 : i32
    %c0_i32_0 = arith.constant 0 : i32
    %c0_i32_1 = arith.constant 0 : i32
    %c0_i32_2 = arith.constant 0 : i32
    return %c0_i32, %c0_i32_0, %c0_i32_1 : i32, i32, i32
  }
}

</mosaic_0001>

<llo_original>
// kernel: fwd.1
$region0: #{fwd.1}
  #allocation0 [shape = 'u32[]', space=smem, size = 0x4, offset = 0x4, fixed_abs, tag = 'smem constant byte address 0x4 - core index']
  #allocation1 [shape = 'u32[144,128]{1,0:T(1,128)}', space=vmem, size = 0x12000, scoped, tag = 'internal scratch']
  %s0 = inlined_call_operand.vmem [shape: f32[2,16,64], index: 0, kind: input, shape index: {}]
  %s1 = inlined_call_operand.hbm [shape: f32[832,384], index: 1, kind: input, shape index: {}]
  %s2 = inlined_call_operand.hbm [shape: f32[1272,128], index: 2, kind: input, shape index: {}]
  %s3 = inlined_call_operand.vmem [shape: f32[2,16,128], index: 3, kind: output, shape index: {}]
  %s4 = sld [smem:[#allocation0]]
  $region30: #{fwd.1} parent=0
    _
  %s6 = ssub.s32 1, %s4
  %s7 = scalar_select 0, %s6, %s4
  $region1: #{fwd.1} parent=0
    #allocation2 [shape = 'u8[1277952]{0}', space=vmem, size = 0x138000, scoped, tag = 'input window, operand 1, single buffered']
    #allocation3 [shape = 's32[1]{0}', space=sflag, size = 0x4, scoped, tag = 'scoped memory for fwd.1']
    #allocation4 [shape = 'u8[651264]{0}', space=vmem, size = 0x9f000, scoped, tag = 'input window, operand 2, single buffered']
    #allocation5 [shape = 's32[1]{0}', space=sflag, size = 0x4, scoped, tag = 'scoped memory for fwd.1']
    %8 = vsyncpa [#allocation3], 0
    %9 = vsyncpa [#allocation5], 0
    // Predicated region
    $region2: #{fwd.1} parent=1 // pred_check
      _
    $region3: #{fwd.1} parent=1 // pred_check_branch
      %11 = sbr.rel (0) target = $region5
    $region4: #{fwd.1} parent=1 // pred_region
      _
    $region5: #{fwd.1} parent=1 // pred_fallthru
      _
    // Predicated region
    $region6: #{fwd.1} parent=1 // pred_check
      _
    $region7: #{fwd.1} parent=1 // pred_check_branch
      %13 = sbr.rel (0) target = $region9
    $region8: #{fwd.1} parent=1 // pred_region
      %s15 = ssub.s32 39936, 39936
      %16 = vsyncadd [#allocation3], %s15
      %s17 = sshll.u32 [#allocation2], 4
      %s18 = int_to_ptr.vmem [resolvable:$true] %s17
      %23 = dma.hbm_to_vmem [thread:$0]  %s1, 39936, %s18, [#allocation3], 384, 384, 24
    $region9: #{fwd.1} parent=1 // pred_fallthru
      _
    // Predicated region
    $region10: #{fwd.1} parent=1 // pred_check
      _
    $region11: #{fwd.1} parent=1 // pred_check_branch
      %25 = sbr.rel (0) target = $region13
    $region12: #{fwd.1} parent=1 // pred_region
      %s27 = ssub.s32 20352, 20352
      %28 = vsyncadd [#allocation5], %s27
      %s29 = sshll.u32 [#allocation4], 4
      %s30 = int_to_ptr.vmem [resolvable:$true] %s29
      %35 = dma.hbm_to_vmem [thread:$0]  %s2, 20352, %s30, [#allocation5], 128, 128, 8
    $region13: #{fwd.1} parent=1 // pred_fallthru
      _
    // Predicated region
    $region14: #{fwd.1} parent=1 // pred_check
      _
    $region15: #{fwd.1} parent=1 // pred_check_branch
      %37 = sbr.rel (0) target = $region17
    $region16: #{fwd.1} parent=1 // pred_region
      %38 = dma.done [#allocation3], 39936
    $region17: #{fwd.1} parent=1 // pred_fallthru
      _
    // Predicated region
    $region18: #{fwd.1} parent=1 // pred_check
      _
    $region19: #{fwd.1} parent=1 // pred_check_branch
      %40 = sbr.rel (0) target = $region21
    $region20: #{fwd.1} parent=1 // pred_region
      %41 = dma.done [#allocation5], 20352
    $region21: #{fwd.1} parent=1 // pred_fallthru
      _
    %v42 = vld [vmem:[#allocation4 + $0x4f0] sm:$0x1]
    %v43 = vld [vmem:[%s0] sm:$0xff]
    %v44 = vld [vmem:[%s0 + $0x8] sm:$0xff]
    %v45 = vld [vmem:[#allocation2] sm:$0xff]
    %v46 = vld [vmem:[#allocation2 + $0x8] sm:$0xff]
    %v47 = vld [vmem:[#allocation2 + $0x10] sm:$0xff]
    %v48 = vld [vmem:[#allocation2 + $0x18] sm:$0xff]
    %v49 = vld [vmem:[#allocation2 + $0x20] sm:$0xff]
    %v50 = vld [vmem:[#allocation2 + $0x28] sm:$0xff]
    %v51 = vld [vmem:[#allocation2 + $0x30] sm:$0xff]
    %v52 = vld [vmem:[#allocation2 + $0x38] sm:$0xff]
    %v53 = vld [vmem:[#allocation2 + $0x40] sm:$0xff]
    %v54 = vld [vmem:[#allocation2 + $0x48] sm:$0xff]
    %v55 = vld [vmem:[#allocation2 + $0x50] sm:$0xff]
    %v56 = vld [vmem:[#allocation2 + $0x58] sm:$0xff]
    %v57 = vld [vmem:[#allocation2 + $0x60] sm:$0xff]
    %v58 = vld [vmem:[#allocation2 + $0x68] sm:$0xff]
    %v59 = vld [vmem:[#allocation2 + $0x70] sm:$0xff]
    %v60 = vld [vmem:[#allocation2 + $0x78] sm:$0xff]
    %v61 = vld [vmem:[#allocation2 + $0x80] sm:$0xff]
    %v62 = vld [vmem:[#allocation2 + $0x88] sm:$0xff]
    %v63 = vld [vmem:[#allocation2 + $0x90] sm:$0xff]
    %v64 = vld [vmem:[#allocation2 + $0x98] sm:$0xff]
    %v65 = vld [vmem:[#allocation2 + $0xa0] sm:$0xff]
    %v66 = vld [vmem:[#allocation2 + $0xa8] sm:$0xff]
    %v67 = vld [vmem:[#allocation2 + $0xb0] sm:$0xff]
    %v68 = vld [vmem:[#allocation2 + $0xb8] sm:$0xff]
    %vm69 = vcmask 523264
    %v71 = vsel %vm69, %v43, 0
    %v74 = vsel %vm69, %v44, 0
    %76 = vmatprep.subr.mxu0 0.0
    %77 = vmatpush1.msra.mxu0 0.0
    %78 = vmatprep.subr.mxu0 0.0
    %79 = vmatpush1.msra.mxu0 0.0
    %80 = vmatprep.subr.mxu0 0.0
    %81 = vmatpush1.msra.mxu0 0.0
    %82 = vmatprep.subr.mxu0 0.0
    %83 = vmatpush1.msra.mxu0 0.0
    %84 = vmatprep.subr.mxu0 0.0
    %85 = vmatpush1.msra.mxu0 0.0
    %86 = vmatprep.subr.mxu0 0.0
    %87 = vmatpush1.msra.mxu0 0.0
    %88 = vmatprep.subr.mxu0 0.0
    %89 = vmatpush1.msra.mxu0 0.0
    %90 = vmatprep.subr.mxu0 0.0
    %91 = vmatpush1.msra.mxu0 0.0
    %92 = vmatprep.subr.mxu0 %v67
    %93 = vmatpush1.msra.mxu0 %v66
    %94 = vmatprep.subr.mxu0 %v64
    %95 = vmatpush1.msra.mxu0 %v63
    %96 = vmatprep.subr.mxu0 %v61
    %97 = vmatpush1.msra.mxu0 %v60
    %98 = vmatprep.subr.mxu0 %v58
    %99 = vmatpush1.msra.mxu0 %v57
    %100 = vmatprep.subr.mxu0 %v55
    %101 = vmatpush1.msra.mxu0 %v54
    %102 = vmatprep.subr.mxu0 %v52
    %103 = vmatpush1.msra.mxu0 %v51
    %104 = vmatprep.subr.mxu0 %v49
    %105 = vmatpush1.msra.mxu0 %v48
    %106 = vmatprep.subr.mxu0 %v46
    %107 = vmatpush1.msra.mxu0 %v45
    %108 = vmatprep.subr.mxu0 0.0
    %109 = vmatpush2.msra.mxu0 0.0
    %110 = vmatprep.subr.mxu0 0.0
    %111 = vmatpush2.msra.mxu0 0.0
    %112 = vmatprep.subr.mxu0 0.0
    %113 = vmatpush2.msra.mxu0 0.0
    %114 = vmatprep.subr.mxu0 0.0
    %115 = vmatpush2.msra.mxu0 0.0
    %116 = vmatprep.subr.mxu0 0.0
    %117 = vmatpush2.msra.mxu0 0.0
    %118 = vmatprep.subr.mxu0 0.0
    %119 = vmatpush2.msra.mxu0 0.0
    %120 = vmatprep.subr.mxu0 0.0
    %121 = vmatpush2.msra.mxu0 0.0
    %122 = vmatprep.subr.mxu0 0.0
    %123 = vmatpush2.msra.mxu0 0.0
    %124 = vmatprep.subr.mxu0 0.0
    %125 = vmatpush2.msra.mxu0 0.0
    %126 = vmatprep.subr.mxu0 0.0
    %127 = vmatpush2.msra.mxu0 0.0
    %128 = vmatprep.subr.mxu0 0.0
    %129 = vmatpush2.msra.mxu0 0.0
    %130 = vmatprep.subr.mxu0 0.0
    %131 = vmatpush2.msra.mxu0 0.0
    %132 = vmatprep.subr.mxu0 0.0
    %133 = vmatpush2.msra.mxu0 0.0
    %134 = vmatprep.subr.mxu0 0.0
    %135 = vmatpush2.msra.mxu0 0.0
    %136 = vmatprep.subr.mxu0 0.0
    %137 = vmatpush2.msra.mxu0 0.0
    %138 = vmatprep.subr.mxu0 0.0
    %139 = vmatpush2.msra.mxu0 0.0
    %140 = vmatprep.mubr.f32.mxu0 0.0
    %141 = vmatmul.mubr.f32.gmra.mxu0 %v71
    %v142 = vpop.f32.mrf.mxu0
    %v143 = vadd.f32 0.0, %v142
    %v144 = vpop.f32.mrf.mxu0
    %v145 = vadd.f32 0.0, %v144
    %146 = vmatprep.mubr.f32.mxu0 0.0
    %147 = vmatmul.mubr.f32.gmra.mxu0 %v74
    %v148 = vpop.f32.mrf.mxu0
    %v149 = vadd.f32 0.0, %v148
    %v150 = vpop.f32.mrf.mxu0
    %v151 = vadd.f32 0.0, %v150
    %152 = vdwg.mxu0
    %153 = vmatprep.subr.mxu0 0.0
    %154 = vmatpush1.msra.mxu0 0.0
    %155 = vmatprep.subr.mxu0 0.0
    %156 = vmatpush1.msra.mxu0 0.0
    %157 = vmatprep.subr.mxu0 0.0
    %158 = vmatpush1.msra.mxu0 0.0
    %159 = vmatprep.subr.mxu0 0.0
    %160 = vmatpush1.msra.mxu0 0.0
    %161 = vmatprep.subr.mxu0 0.0
    %162 = vmatpush1.msra.mxu0 0.0
    %163 = vmatprep.subr.mxu0 0.0
    %164 = vmatpush1.msra.mxu0 0.0
    %165 = vmatprep.subr.mxu0 0.0
    %166 = vmatpush1.msra.mxu0 0.0
    %167 = vmatprep.subr.mxu0 0.0
    %168 = vmatpush1.msra.mxu0 0.0
    %169 = vmatprep.subr.mxu0 0.0
    %170 = vmatpush1.msra.mxu0 %v68
    %171 = vmatprep.subr.mxu0 0.0
    %172 = vmatpush1.msra.mxu0 %v65
    %173 = vmatprep.subr.mxu0 0.0
    %174 = vmatpush1.msra.mxu0 %v62
    %175 = vmatprep.subr.mxu0 0.0
    %176 = vmatpush1.msra.mxu0 %v59
    %177 = vmatprep.subr.mxu0 0.0
    %178 = vmatpush1.msra.mxu0 %v56
    %179 = vmatprep.subr.mxu0 0.0
    %180 = vmatpush1.msra.mxu0 %v53
    %181 = vmatprep.subr.mxu0 0.0
    %182 = vmatpush1.msra.mxu0 %v50
    %183 = vmatprep.subr.mxu0 0.0
    %184 = vmatpush1.msra.mxu0 %v47
    %185 = vmatprep.subr.mxu0 0.0
    %186 = vmatpush2.msra.mxu0 0.0
    %187 = vmatprep.subr.mxu0 0.0
    %188 = vmatpush2.msra.mxu0 0.0
    %189 = vmatprep.subr.mxu0 0.0
    %190 = vmatpush2.msra.mxu0 0.0
    %191 = vmatprep.subr.mxu0 0.0
    %192 = vmatpush2.msra.mxu0 0.0
    %193 = vmatprep.subr.mxu0 0.0
    %194 = vmatpush2.msra.mxu0 0.0
    %195 = vmatprep.subr.mxu0 0.0
    %196 = vmatpush2.msra.mxu0 0.0
    %197 = vmatprep.subr.mxu0 0.0
    %198 = vmatpush2.msra.mxu0 0.0
    %199 = vmatprep.subr.mxu0 0.0
    %200 = vmatpush2.msra.mxu0 0.0
    %201 = vmatprep.subr.mxu0 0.0
    %202 = vmatpush2.msra.mxu0 0.0
    %203 = vmatprep.subr.mxu0 0.0
    %204 = vmatpush2.msra.mxu0 0.0
    %205 = vmatprep.subr.mxu0 0.0
    %206 = vmatpush2.msra.mxu0 0.0
    %207 = vmatprep.subr.mxu0 0.0
    %208 = vmatpush2.msra.mxu0 0.0
    %209 = vmatprep.subr.mxu0 0.0
    %210 = vmatpush2.msra.mxu0 0.0
    %211 = vmatprep.subr.mxu0 0.0
    %212 = vmatpush2.msra.mxu0 0.0
    %213 = vmatprep.subr.mxu0 0.0
    %214 = vmatpush2.msra.mxu0 0.0
    %215 = vmatprep.subr.mxu0 0.0
    %216 = vmatpush2.msra.mxu0 0.0
    %217 = vmatprep.mubr.f32.mxu0 0.0
    %218 = vmatmul.mubr.f32.gmra.mxu0 %v71
    %v219 = vpop.f32.mrf.mxu0
    %v220 = vadd.f32 0.0, %v219
    %v221 = vpop.f32.mrf.mxu0
    %222 = vmatprep.mubr.f32.mxu0 0.0
    %223 = vmatmul.mubr.f32.gmra.mxu0 %v74
    %v224 = vpop.f32.mrf.mxu0
    %v225 = vadd.f32 0.0, %v224
    %v226 = vpop.f32.mrf.mxu0
    %227 = vdwg.mxu0
    %v228 = vld [vmem:[#allocation4 + $0x400] sm:$0xff]
    %v229 = vld [vmem:[#allocation4 + $0x410] sm:$0xff]
    %vm230 = vcmask 130048
    %v232 = vsel %vm230, %v229, 0
    %234 = vmatprep.subr.mxu0 0.0
    %235 = vmatpush1.msra.mxu0 0.0
    %236 = vmatprep.subr.mxu0 0.0
    %237 = vmatpush1.msra.mxu0 0.0
    %238 = vmatprep.subr.mxu0 0.0
    %239 = vmatpush1.msra.mxu0 0.0
    %240 = vmatprep.subr.mxu0 0.0
    %241 = vmatpush1.msra.mxu0 0.0
    %242 = vmatprep.subr.mxu0 0.0
    %243 = vmatpush1.msra.mxu0 0.0
    %244 = vmatprep.subr.mxu0 0.0
    %245 = vmatpush1.msra.mxu0 0.0
    %246 = vmatprep.subr.mxu0 0.0
    %247 = vmatpush1.msra.mxu0 0.0
    %248 = vmatprep.subr.mxu0 0.0
    %249 = vmatpush1.msra.mxu0 0.0
    %250 = vmatprep.subr.mxu0 0.0
    %251 = vmatpush1.msra.mxu0 0.0
    %252 = vmatprep.subr.mxu0 0.0
    %253 = vmatpush1.msra.mxu0 0.0
    %254 = vmatprep.subr.mxu0 0.0
    %255 = vmatpush1.msra.mxu0 0.0
    %256 = vmatprep.subr.mxu0 0.0
    %257 = vmatpush1.msra.mxu0 0.0
    %258 = vmatprep.subr.mxu0 0.0
    %259 = vmatpush1.msra.mxu0 0.0
    %260 = vmatprep.subr.mxu0 0.0
    %261 = vmatpush1.msra.mxu0 0.0
    %262 = vmatprep.subr.mxu0 0.0
    %263 = vmatpush1.msra.mxu0 %v151
    %264 = vmatprep.subr.mxu0 0.0
    %265 = vmatpush1.msra.mxu0 %v145
    %266 = vmatprep.subr.mxu0 0.0
    %267 = vmatpush2.msra.mxu0 0.0
    %268 = vmatprep.subr.mxu0 0.0
    %269 = vmatpush2.msra.mxu0 0.0
    %270 = vmatprep.subr.mxu0 0.0
    %271 = vmatpush2.msra.mxu0 0.0
    %272 = vmatprep.subr.mxu0 0.0
    %273 = vmatpush2.msra.mxu0 0.0
    %274 = vmatprep.subr.mxu0 0.0
    %275 = vmatpush2.msra.mxu0 0.0
    %276 = vmatprep.subr.mxu0 0.0
    %277 = vmatpush2.msra.mxu0 0.0
    %278 = vmatprep.subr.mxu0 0.0
    %279 = vmatpush2.msra.mxu0 0.0
    %280 = vmatprep.subr.mxu0 0.0
    %281 = vmatpush2.msra.mxu0 0.0
    %282 = vmatprep.subr.mxu0 0.0
    %283 = vmatpush2.msra.mxu0 0.0
    %284 = vmatprep.subr.mxu0 0.0
    %285 = vmatpush2.msra.mxu0 0.0
    %286 = vmatprep.subr.mxu0 0.0
    %287 = vmatpush2.msra.mxu0 0.0
    %288 = vmatprep.subr.mxu0 0.0
    %289 = vmatpush2.msra.mxu0 0.0
    %290 = vmatprep.subr.mxu0 0.0
    %291 = vmatpush2.msra.mxu0 0.0
    %292 = vmatprep.subr.mxu0 0.0
    %293 = vmatpush2.msra.mxu0 0.0
    %294 = vmatprep.subr.mxu0 0.0
    %295 = vmatpush2.msra.mxu0 0.0
    %296 = vmatprep.subr.mxu0 0.0
    %297 = vmatpush2.msra.mxu0 0.0
    %298 = vmatprep.mubr.f32.mxu0 0.0
    %299 = vmatmul.mubr.f32.gmra.mxu0 %v232
    %v300 = vpop.f32.mrf.mxu0
    %v301 = vadd.f32 0.0, %v300
    %v302 = vpop.f32.mrf.mxu0
    %303 = vdwg.mxu0
    %v305 = vsel %vm230, %v228, 0
    %307 = vmatprep.subr.mxu0 0.0
    %308 = vmatpush1.msra.mxu0 0.0
    %309 = vmatprep.subr.mxu0 0.0
    %310 = vmatpush1.msra.mxu0 0.0
    %311 = vmatprep.subr.mxu0 0.0
    %312 = vmatpush1.msra.mxu0 0.0
    %313 = vmatprep.subr.mxu0 0.0
    %314 = vmatpush1.msra.mxu0 0.0
    %315 = vmatprep.subr.mxu0 0.0
    %316 = vmatpush1.msra.mxu0 0.0
    %317 = vmatprep.subr.mxu0 0.0
    %318 = vmatpush1.msra.mxu0 0.0
    %319 = vmatprep.subr.mxu0 0.0
    %320 = vmatpush1.msra.mxu0 0.0
    %321 = vmatprep.subr.mxu0 0.0
    %322 = vmatpush1.msra.mxu0 0.0
    %323 = vmatprep.subr.mxu0 0.0
    %324 = vmatpush1.msra.mxu0 0.0
    %325 = vmatprep.subr.mxu0 0.0
    %326 = vmatpush1.msra.mxu0 0.0
    %327 = vmatprep.subr.mxu0 0.0
    %328 = vmatpush1.msra.mxu0 0.0
    %329 = vmatprep.subr.mxu0 0.0
    %330 = vmatpush1.msra.mxu0 0.0
    %331 = vmatprep.subr.mxu0 0.0
    %332 = vmatpush1.msra.mxu0 0.0
    %333 = vmatprep.subr.mxu0 0.0
    %334 = vmatpush1.msra.mxu0 0.0
    %335 = vmatprep.subr.mxu0 0.0
    %336 = vmatpush1.msra.mxu0 %v149
    %337 = vmatprep.subr.mxu0 0.0
    %338 = vmatpush1.msra.mxu0 %v143
    %339 = vmatprep.subr.mxu0 0.0
    %340 = vmatpush2.msra.mxu0 0.0
    %341 = vmatprep.subr.mxu0 0.0
    %342 = vmatpush2.msra.mxu0 0.0
    %343 = vmatprep.subr.mxu0 0.0
    %344 = vmatpush2.msra.mxu0 0.0
    %345 = vmatprep.subr.mxu0 0.0
    %346 = vmatpush2.msra.mxu0 0.0
    %347 = vmatprep.subr.mxu0 0.0
    %348 = vmatpush2.msra.mxu0 0.0
    %349 = vmatprep.subr.mxu0 0.0
    %350 = vmatpush2.msra.mxu0 0.0
    %351 = vmatprep.subr.mxu0 0.0
    %352 = vmatpush2.msra.mxu0 0.0
    %353 = vmatprep.subr.mxu0 0.0
    %354 = vmatpush2.msra.mxu0 0.0
    %355 = vmatprep.subr.mxu0 0.0
    %356 = vmatpush2.msra.mxu0 0.0
    %357 = vmatprep.subr.mxu0 0.0
    %358 = vmatpush2.msra.mxu0 0.0
    %359 = vmatprep.subr.mxu0 0.0
    %360 = vmatpush2.msra.mxu0 0.0
    %361 = vmatprep.subr.mxu0 0.0
    %362 = vmatpush2.msra.mxu0 0.0
    %363 = vmatprep.subr.mxu0 0.0
    %364 = vmatpush2.msra.mxu0 0.0
    %365 = vmatprep.subr.mxu0 0.0
    %366 = vmatpush2.msra.mxu0 0.0
    %367 = vmatprep.subr.mxu0 0.0
    %368 = vmatpush2.msra.mxu0 0.0
    %369 = vmatprep.subr.mxu0 0.0
    %370 = vmatpush2.msra.mxu0 0.0
    %371 = vmatprep.mubr.f32.mxu0 0.0
    %372 = vmatmul.mubr.f32.gmra.mxu0 %v305
    %v373 = vpop.f32.mrf.mxu0
    %v374 = vadd.f32 %v301, %v373
    %v375 = vpop.f32.mrf.mxu0
    %376 = vdwg.mxu0
    %v377 = vld [vmem:[#allocation4 + $0x420] sm:$0xff]
    %v379 = vsel %vm230, %v377, 0
    %381 = vmatprep.subr.mxu0 0.0
    %382 = vmatpush1.msra.mxu0 0.0
    %383 = vmatprep.subr.mxu0 0.0
    %384 = vmatpush1.msra.mxu0 0.0
    %385 = vmatprep.subr.mxu0 0.0
    %386 = vmatpush1.msra.mxu0 0.0
    %387 = vmatprep.subr.mxu0 0.0
    %388 = vmatpush1.msra.mxu0 0.0
    %389 = vmatprep.subr.mxu0 0.0
    %390 = vmatpush1.msra.mxu0 0.0
    %391 = vmatprep.subr.mxu0 0.0
    %392 = vmatpush1.msra.mxu0 0.0
    %393 = vmatprep.subr.mxu0 0.0
    %394 = vmatpush1.msra.mxu0 0.0
    %395 = vmatprep.subr.mxu0 0.0
    %396 = vmatpush1.msra.mxu0 0.0
    %397 = vmatprep.subr.mxu0 0.0
    %398 = vmatpush1.msra.mxu0 0.0
    %399 = vmatprep.subr.mxu0 0.0
    %400 = vmatpush1.msra.mxu0 0.0
    %401 = vmatprep.subr.mxu0 0.0
    %402 = vmatpush1.msra.mxu0 0.0
    %403 = vmatprep.subr.mxu0 0.0
    %404 = vmatpush1.msra.mxu0 0.0
    %405 = vmatprep.subr.mxu0 0.0
    %406 = vmatpush1.msra.mxu0 0.0
    %407 = vmatprep.subr.mxu0 0.0
    %408 = vmatpush1.msra.mxu0 0.0
    %409 = vmatprep.subr.mxu0 0.0
    %410 = vmatpush1.msra.mxu0 %v225
    %411 = vmatprep.subr.mxu0 0.0
    %412 = vmatpush1.msra.mxu0 %v220
    %413 = vmatprep.subr.mxu0 0.0
    %414 = vmatpush2.msra.mxu0 0.0
    %415 = vmatprep.subr.mxu0 0.0
    %416 = vmatpush2.msra.mxu0 0.0
    %417 = vmatprep.subr.mxu0 0.0
    %418 = vmatpush2.msra.mxu0 0.0
    %419 = vmatprep.subr.mxu0 0.0
    %420 = vmatpush2.msra.mxu0 0.0
    %421 = vmatprep.subr.mxu0 0.0
    %422 = vmatpush2.msra.mxu0 0.0
    %423 = vmatprep.subr.mxu0 0.0
    %424 = vmatpush2.msra.mxu0 0.0
    %425 = vmatprep.subr.mxu0 0.0
    %426 = vmatpush2.msra.mxu0 0.0
    %427 = vmatprep.subr.mxu0 0.0
    %428 = vmatpush2.msra.mxu0 0.0
    %429 = vmatprep.subr.mxu0 0.0
    %430 = vmatpush2.msra.mxu0 0.0
    %431 = vmatprep.subr.mxu0 0.0
    %432 = vmatpush2.msra.mxu0 0.0
    %433 = vmatprep.subr.mxu0 0.0
    %434 = vmatpush2.msra.mxu0 0.0
    %435 = vmatprep.subr.mxu0 0.0
    %436 = vmatpush2.msra.mxu0 0.0
    %437 = vmatprep.subr.mxu0 0.0
    %438 = vmatpush2.msra.mxu0 0.0
    %439 = vmatprep.subr.mxu0 0.0
    %440 = vmatpush2.msra.mxu0 0.0
    %441 = vmatprep.subr.mxu0 0.0
    %442 = vmatpush2.msra.mxu0 0.0
    %443 = vmatprep.subr.mxu0 0.0
    %444 = vmatpush2.msra.mxu0 0.0
    %445 = vmatprep.mubr.f32.mxu0 0.0
    %446 = vmatmul.mubr.f32.gmra.mxu0 %v379
    %v447 = vpop.f32.mrf.mxu0
    %v448 = vadd.f32 0.0, %v447
    %v449 = vpop.f32.mrf.mxu0
    %450 = vdwg.mxu0
    %v451 = vadd.f32 %v374, %v448
    %v452 = vld [vmem:[#allocation4] sm:$0xff]
    %v453 = vld [vmem:[#allocation4 + $0x8] sm:$0xff]
    %v454 = vld [vmem:[#allocation4 + $0x10] sm:$0xff]
    %v455 = vld [vmem:[#allocation4 + $0x18] sm:$0xff]
    %v456 = vld [vmem:[#allocation4 + $0x20] sm:$0xff]
    %v457 = vld [vmem:[#allocation4 + $0x28] sm:$0xff]
    %v458 = vld [vmem:[#allocation4 + $0x30] sm:$0xff]
    %v459 = vld [vmem:[#allocation4 + $0x38] sm:$0xff]
    %v460 = vld [vmem:[#allocation4 + $0x40] sm:$0xff]
    %v461 = vld [vmem:[#allocation4 + $0x48] sm:$0xff]
    %v462 = vld [vmem:[#allocation4 + $0x50] sm:$0xff]
    %v463 = vld [vmem:[#allocation4 + $0x58] sm:$0xff]
    %v464 = vld [vmem:[#allocation4 + $0x60] sm:$0xff]
    %v465 = vld [vmem:[#allocation4 + $0x68] sm:$0xff]
    %v466 = vld [vmem:[#allocation4 + $0x70] sm:$0xff]
    %v467 = vld [vmem:[#allocation4 + $0x78] sm:$0xff]
    %v468 = vld [vmem:[#allocation4 + $0x200] sm:$0xff]
    %v469 = vld [vmem:[#allocation4 + $0x208] sm:$0xff]
    %v470 = vld [vmem:[#allocation4 + $0x210] sm:$0xff]
    %v471 = vld [vmem:[#allocation4 + $0x218] sm:$0xff]
    %v472 = vld [vmem:[#allocation4 + $0x220] sm:$0xff]
    %v473 = vld [vmem:[#allocation4 + $0x228] sm:$0xff]
    %v474 = vld [vmem:[#allocation4 + $0x230] sm:$0xff]
    %v475 = vld [vmem:[#allocation4 + $0x238] sm:$0xff]
    %v476 = vld [vmem:[#allocation4 + $0x240] sm:$0xff]
    %v477 = vld [vmem:[#allocation4 + $0x248] sm:$0xff]
    %v478 = vld [vmem:[#allocation4 + $0x250] sm:$0xff]
    %v479 = vld [vmem:[#allocation4 + $0x258] sm:$0xff]
    %v480 = vld [vmem:[#allocation4 + $0x260] sm:$0xff]
    %v481 = vld [vmem:[#allocation4 + $0x268] sm:$0xff]
    %v482 = vld [vmem:[#allocation4 + $0x270] sm:$0xff]
    %v483 = vld [vmem:[#allocation4 + $0x278] sm:$0xff]
    %v484 = vrot.slane %v451, 4
    %v485 = vadd.f32 %v451, %v484
    %v486 = vrot.slane %v485, 2
    %v487 = vadd.f32 %v485, %v486
    %v488 = vrot.slane %v487, 1
    %v489 = vadd.f32 %v487, %v488
    %v490 = vmul.f32 %v451, %v451
    %v491 = vrot.slane %v490, 4
    %v492 = vadd.f32 %v490, %v491
    %v493 = vrot.slane %v492, 2
    %v494 = vadd.f32 %v492, %v493
    %v495 = vrot.slane %v494, 1
    %v496 = vadd.f32 %v494, %v495
    %vm497 = vcmask 1040384
    %v498 = vsel %vm497, %v489, %v496
    %499 = vmatprep.subr.mxu0 0.0
    %500 = vmatpush1.msra.mxu0 %v467
    %501 = vmatprep.subr.mxu0 0.0
    %502 = vmatpush1.msra.mxu0 %v466
    %503 = vmatprep.subr.mxu0 0.0
    %504 = vmatpush1.msra.mxu0 %v465
    %505 = vmatprep.subr.mxu0 0.0
    %506 = vmatpush1.msra.mxu0 %v464
    %507 = vmatprep.subr.mxu0 0.0
    %508 = vmatpush1.msra.mxu0 %v463
    %509 = vmatprep.subr.mxu0 0.0
    %510 = vmatpush1.msra.mxu0 %v462
    %511 = vmatprep.subr.mxu0 0.0
    %512 = vmatpush1.msra.mxu0 %v461
    %513 = vmatprep.subr.mxu0 0.0
    %514 = vmatpush1.msra.mxu0 %v460
    %515 = vmatprep.subr.mxu0 0.0
    %516 = vmatpush1.msra.mxu0 %v459
    %517 = vmatprep.subr.mxu0 0.0
    %518 = vmatpush1.msra.mxu0 %v458
    %519 = vmatprep.subr.mxu0 0.0
    %520 = vmatpush1.msra.mxu0 %v457
    %521 = vmatprep.subr.mxu0 0.0
    %522 = vmatpush1.msra.mxu0 %v456
    %523 = vmatprep.subr.mxu0 0.0
    %524 = vmatpush1.msra.mxu0 %v455
    %525 = vmatprep.subr.mxu0 0.0
    %526 = vmatpush1.msra.mxu0 %v454
    %527 = vmatprep.subr.mxu0 0.0
    %528 = vmatpush1.msra.mxu0 %v453
    %529 = vmatprep.subr.mxu0 0.0
    %530 = vmatpush1.msra.mxu0 %v452
    %531 = vmatprep.subr.mxu0 0.0
    %532 = vmatpush2.msra.mxu0 0.0
    %533 = vmatprep.subr.mxu0 0.0
    %534 = vmatpush2.msra.mxu0 0.0
    %535 = vmatprep.subr.mxu0 0.0
    %536 = vmatpush2.msra.mxu0 0.0
    %537 = vmatprep.subr.mxu0 0.0
    %538 = vmatpush2.msra.mxu0 0.0
    %539 = vmatprep.subr.mxu0 0.0
    %540 = vmatpush2.msra.mxu0 0.0
    %541 = vmatprep.subr.mxu0 0.0
    %542 = vmatpush2.msra.mxu0 0.0
    %543 = vmatprep.subr.mxu0 0.0
    %544 = vmatpush2.msra.mxu0 0.0
    %545 = vmatprep.subr.mxu0 0.0
    %546 = vmatpush2.msra.mxu0 0.0
    %547 = vmatprep.subr.mxu0 0.0
    %548 = vmatpush2.msra.mxu0 0.0
    %549 = vmatprep.subr.mxu0 0.0
    %550 = vmatpush2.msra.mxu0 0.0
    %551 = vmatprep.subr.mxu0 0.0
    %552 = vmatpush2.msra.mxu0 0.0
    %553 = vmatprep.subr.mxu0 0.0
    %554 = vmatpush2.msra.mxu0 0.0
    %555 = vmatprep.subr.mxu0 0.0
    %556 = vmatpush2.msra.mxu0 0.0
    %557 = vmatprep.subr.mxu0 0.0
    %558 = vmatpush2.msra.mxu0 0.0
    %559 = vmatprep.subr.mxu0 0.0
    %560 = vmatpush2.msra.mxu0 0.0
    %561 = vmatprep.subr.mxu0 0.0
    %562 = vmatpush2.msra.mxu0 0.0
    %563 = vmatprep.mubr.f32.mxu0 0.0
    %564 = vmatmul.mubr.f32.gmra.mxu0 %v498
    %v565 = vpop.f32.mrf.mxu0
    %v566 = vadd.f32 0.0, %v565
    %v567 = vpop.f32.mrf.mxu0
    %568 = vdwg.mxu0
    %v569 = vmul.f32 %v566, 0.015625
    %v570 = vmul.f32 %v569, %v569
    %v572 = vrot.slane %v570, 7
    %v574 = vsub.f32 %v569, %v572
    %v575 = vmax.f32 %v574, 0.0
    %v576 = vadd.f32 %v575, 1e-05
    %v577 = vrsqrt.pop %v576
    %v578 = vsel %vm497, %v569, %v577
    %579 = vmatprep.subr.mxu0 0.0
    %580 = vmatpush1.msra.mxu0 %v483
    %581 = vmatprep.subr.mxu0 0.0
    %582 = vmatpush1.msra.mxu0 %v482
    %583 = vmatprep.subr.mxu0 0.0
    %584 = vmatpush1.msra.mxu0 %v481
    %585 = vmatprep.subr.mxu0 0.0
    %586 = vmatpush1.msra.mxu0 %v480
    %587 = vmatprep.subr.mxu0 0.0
    %588 = vmatpush1.msra.mxu0 %v479
    %589 = vmatprep.subr.mxu0 0.0
    %590 = vmatpush1.msra.mxu0 %v478
    %591 = vmatprep.subr.mxu0 0.0
    %592 = vmatpush1.msra.mxu0 %v477
    %593 = vmatprep.subr.mxu0 0.0
    %594 = vmatpush1.msra.mxu0 %v476
    %595 = vmatprep.subr.mxu0 0.0
    %596 = vmatpush1.msra.mxu0 %v475
    %597 = vmatprep.subr.mxu0 0.0
    %598 = vmatpush1.msra.mxu0 %v474
    %599 = vmatprep.subr.mxu0 0.0
    %600 = vmatpush1.msra.mxu0 %v473
    %601 = vmatprep.subr.mxu0 0.0
    %602 = vmatpush1.msra.mxu0 %v472
    %603 = vmatprep.subr.mxu0 0.0
    %604 = vmatpush1.msra.mxu0 %v471
    %605 = vmatprep.subr.mxu0 0.0
    %606 = vmatpush1.msra.mxu0 %v470
    %607 = vmatprep.subr.mxu0 0.0
    %608 = vmatpush1.msra.mxu0 %v469
    %609 = vmatprep.subr.mxu0 0.0
    %610 = vmatpush1.msra.mxu0 %v468
    %611 = vmatprep.subr.mxu0 0.0
    %612 = vmatpush2.msra.mxu0 0.0
    %613 = vmatprep.subr.mxu0 0.0
    %614 = vmatpush2.msra.mxu0 0.0
    %615 = vmatprep.subr.mxu0 0.0
    %616 = vmatpush2.msra.mxu0 0.0
    %617 = vmatprep.subr.mxu0 0.0
    %618 = vmatpush2.msra.mxu0 0.0
    %619 = vmatprep.subr.mxu0 0.0
    %620 = vmatpush2.msra.mxu0 0.0
    %621 = vmatprep.subr.mxu0 0.0
    %622 = vmatpush2.msra.mxu0 0.0
    %623 = vmatprep.subr.mxu0 0.0
    %624 = vmatpush2.msra.mxu0 0.0
    %625 = vmatprep.subr.mxu0 0.0
    %626 = vmatpush2.msra.mxu0 0.0
    %627 = vmatprep.subr.mxu0 0.0
    %628 = vmatpush2.msra.mxu0 0.0
    %629 = vmatprep.subr.mxu0 0.0
    %630 = vmatpush2.msra.mxu0 0.0
    %631 = vmatprep.subr.mxu0 0.0
    %632 = vmatpush2.msra.mxu0 0.0
    %633 = vmatprep.subr.mxu0 0.0
    %634 = vmatpush2.msra.mxu0 0.0
    %635 = vmatprep.subr.mxu0 0.0
    %636 = vmatpush2.msra.mxu0 0.0
    %637 = vmatprep.subr.mxu0 0.0
    %638 = vmatpush2.msra.mxu0 0.0
    %639 = vmatprep.subr.mxu0 0.0
    %640 = vmatpush2.msra.mxu0 0.0
    %641 = vmatprep.subr.mxu0 0.0
    %642 = vmatpush2.msra.mxu0 0.0
    %643 = vmatprep.mubr.f32.mxu0 0.0
    %644 = vmatmul.mubr.f32.gmra.mxu0 %v578
    %v645 = vpop.f32.mrf.mxu0
    %v646 = vadd.f32 0.0, %v645
    %v647 = vpop.f32.mrf.mxu0
    %648 = vdwg.mxu0
    %v649 = vlaneseq
    %v650 = vshrl.u32 %v649, 7
    %v651 = vsub.s32 0, %v650
    %v652 = vrot.slane %v646, %v651
    %v653 = vsub.f32 %v451, %v652
    %v654 = vlaneseq
    %v655 = vshrl.u32 %v654, 7
    %v656 = vsub.s32 1, %v655
    %v657 = vrot.slane %v646, %v656
    %v658 = vmul.f32 %v653, %v657
    %v659 = vmax.f32 %v658, 0.0
    %v660 = vld [vmem:[#allocation2 + $0xc0] sm:$0xff]
    %v661 = vld [vmem:[#allocation2 + $0xc8] sm:$0xff]
    %v662 = vld [vmem:[#allocation2 + $0xd0] sm:$0xff]
    %v663 = vld [vmem:[#allocation2 + $0xd8] sm:$0xff]
    %v664 = vld [vmem:[#allocation2 + $0xe0] sm:$0xff]
    %v665 = vld [vmem:[#allocation2 + $0xe8] sm:$0xff]
    %v666 = vld [vmem:[#allocation2 + $0xf0] sm:$0xff]
    %v667 = vld [vmem:[#allocation2 + $0xf8] sm:$0xff]
    %v668 = vld [vmem:[#allocation2 + $0x100] sm:$0xff]
    %v669 = vld [vmem:[#allocation2 + $0x108] sm:$0xff]
    %v670 = vld [vmem:[#allocation2 + $0x110] sm:$0xff]
    %v671 = vld [vmem:[#allocation2 + $0x118] sm:$0xff]
    %v672 = vld [vmem:[#allocation2 + $0x120] sm:$0xff]
    %v673 = vld [vmem:[#allocation2 + $0x128] sm:$0xff]
    %v674 = vld [vmem:[#allocation2 + $0x130] sm:$0xff]
    %v675 = vld [vmem:[#allocation2 + $0x138] sm:$0xff]
    %v676 = vld [vmem:[#allocation2 + $0x140] sm:$0xff]
    %v677 = vld [vmem:[#allocation2 + $0x148] sm:$0xff]
    %v678 = vld [vmem:[#allocation2 + $0x150] sm:$0xff]
    %v679 = vld [vmem:[#allocation2 + $0x158] sm:$0xff]
    %v680 = vld [vmem:[#allocation2 + $0x160] sm:$0xff]
    %v681 = vld [vmem:[#allocation2 + $0x168] sm:$0xff]
    %v682 = vld [vmem:[#allocation2 + $0x170] sm:$0xff]
    %v683 = vld [vmem:[#allocation2 + $0x178] sm:$0xff]
    %v684 = vld [vmem:[#allocation2 + $0x180] sm:$0xff]
    %v685 = vld [vmem:[#allocation2 + $0x188] sm:$0xff]
    %v686 = vld [vmem:[#allocation2 + $0x190] sm:$0xff]
    %v687 = vld [vmem:[#allocation2 + $0x198] sm:$0xff]
    %v688 = vld [vmem:[#allocation2 + $0x1a0] sm:$0xff]
    %v689 = vld [vmem:[#allocation2 + $0x1a8] sm:$0xff]
    %v690 = vld [vmem:[#allocation2 + $0x1b0] sm:$0xff]
    %v691 = vld [vmem:[#allocation2 + $0x1b8] sm:$0xff]
    %v692 = vld [vmem:[#allocation2 + $0x1c0] sm:$0xff]
    %v693 = vld [vmem:[#allocation2 + $0x1c8] sm:$0xff]
    %v694 = vld [vmem:[#allocation2 + $0x1d0] sm:$0xff]
    %v695 = vld [vmem:[#allocation2 + $0x1d8] sm:$0xff]
    %v696 = vld [vmem:[#allocation2 + $0x1e0] sm:$0xff]
    %v697 = vld [vmem:[#allocation2 + $0x1e8] sm:$0xff]
    %v698 = vld [vmem:[#allocation2 + $0x1f0] sm:$0xff]
    %v699 = vld [vmem:[#allocation2 + $0x1f8] sm:$0xff]
    %v700 = vld [vmem:[#allocation2 + $0x200] sm:$0xff]
    %v701 = vld [vmem:[#allocation2 + $0x208] sm:$0xff]
    %v702 = vld [vmem:[#allocation2 + $0x210] sm:$0xff]
    %v703 = vld [vmem:[#allocation2 + $0x218] sm:$0xff]
    %v704 = vld [vmem:[#allocation2 + $0x220] sm:$0xff]
    %v705 = vld [vmem:[#allocation2 + $0x228] sm:$0xff]
    %v706 = vld [vmem:[#allocation2 + $0x230] sm:$0xff]
    %v707 = vld [vmem:[#allocation2 + $0x238] sm:$0xff]
    %708 = vmatprep.subr.mxu0 %v706
    %709 = vmatpush1.msra.mxu0 %v705
    %710 = vmatprep.subr.mxu0 %v703
    %711 = vmatpush1.msra.mxu0 %v702
    %712 = vmatprep.subr.mxu0 %v700
    %713 = vmatpush1.msra.mxu0 %v699
    %714 = vmatprep.subr.mxu0 %v697
    %715 = vmatpush1.msra.mxu0 %v696
    %716 = vmatprep.subr.mxu0 %v694
    %717 = vmatpush1.msra.mxu0 %v693
    %718 = vmatprep.subr.mxu0 %v691
    %719 = vmatpush1.msra.mxu0 %v690
    %720 = vmatprep.subr.mxu0 %v688
    %721 = vmatpush1.msra.mxu0 %v687
    %722 = vmatprep.subr.mxu0 %v685
    %723 = vmatpush1.msra.mxu0 %v684
    %724 = vmatprep.subr.mxu0 %v682
    %725 = vmatpush1.msra.mxu0 %v681
    %726 = vmatprep.subr.mxu0 %v679
    %727 = vmatpush1.msra.mxu0 %v678
    %728 = vmatprep.subr.mxu0 %v676
    %729 = vmatpush1.msra.mxu0 %v675
    %730 = vmatprep.subr.mxu0 %v673
    %731 = vmatpush1.msra.mxu0 %v672
    %732 = vmatprep.subr.mxu0 %v670
    %733 = vmatpush1.msra.mxu0 %v669
    %734 = vmatprep.subr.mxu0 %v667
    %735 = vmatpush1.msra.mxu0 %v666
    %736 = vmatprep.subr.mxu0 %v664
    %737 = vmatpush1.msra.mxu0 %v663
    %738 = vmatprep.subr.mxu0 %v661
    %739 = vmatpush1.msra.mxu0 %v660
    %740 = vmatprep.subr.mxu0 0.0
    %741 = vmatpush2.msra.mxu0 0.0
    %742 = vmatprep.subr.mxu0 0.0
    %743 = vmatpush2.msra.mxu0 0.0
    %744 = vmatprep.subr.mxu0 0.0
    %745 = vmatpush2.msra.mxu0 0.0
    %746 = vmatprep.subr.mxu0 0.0
    %747 = vmatpush2.msra.mxu0 0.0
    %748 = vmatprep.subr.mxu0 0.0
    %749 = vmatpush2.msra.mxu0 0.0
    %750 = vmatprep.subr.mxu0 0.0
    %751 = vmatpush2.msra.mxu0 0.0
    %752 = vmatprep.subr.mxu0 0.0
    %753 = vmatpush2.msra.mxu0 0.0
    %754 = vmatprep.subr.mxu0 0.0
    %755 = vmatpush2.msra.mxu0 0.0
    %756 = vmatprep.subr.mxu0 0.0
    %757 = vmatpush2.msra.mxu0 0.0
    %758 = vmatprep.subr.mxu0 0.0
    %759 = vmatpush2.msra.mxu0 0.0
    %760 = vmatprep.subr.mxu0 0.0
    %761 = vmatpush2.msra.mxu0 0.0
    %762 = vmatprep.subr.mxu0 0.0
    %763 = vmatpush2.msra.mxu0 0.0
    %764 = vmatprep.subr.mxu0 0.0
    %765 = vmatpush2.msra.mxu0 0.0
    %766 = vmatprep.subr.mxu0 0.0
    %767 = vmatpush2.msra.mxu0 0.0
    %768 = vmatprep.subr.mxu0 0.0
    %769 = vmatpush2.msra.mxu0 0.0
    %770 = vmatprep.subr.mxu0 0.0
    %771 = vmatpush2.msra.mxu0 0.0
    %772 = vmatprep.mubr.f32.mxu0 0.0
    %773 = vmatmul.mubr.f32.gmra.mxu0 %v659
    %v774 = vpop.f32.mrf.mxu0
    %v775 = vadd.f32 0.0, %v774
    %v776 = vpop.f32.mrf.mxu0
    %v777 = vadd.f32 0.0, %v776
    %778 = vdwg.mxu0
    %779 = vmatprep.subr.mxu0 0.0
    %780 = vmatpush1.msra.mxu0 %v707
    %781 = vmatprep.subr.mxu0 0.0
    %782 = vmatpush1.msra.mxu0 %v704
    %783 = vmatprep.subr.mxu0 0.0
    %784 = vmatpush1.msra.mxu0 %v701
    %785 = vmatprep.subr.mxu0 0.0
    %786 = vmatpush1.msra.mxu0 %v698
    %787 = vmatprep.subr.mxu0 0.0
    %788 = vmatpush1.msra.mxu0 %v695
    %789 = vmatprep.subr.mxu0 0.0
    %790 = vmatpush1.msra.mxu0 %v692
    %791 = vmatprep.subr.mxu0 0.0
    %792 = vmatpush1.msra.mxu0 %v689
    %793 = vmatprep.subr.mxu0 0.0
    %794 = vmatpush1.msra.mxu0 %v686
    %795 = vmatprep.subr.mxu0 0.0
    %796 = vmatpush1.msra.mxu0 %v683
    %797 = vmatprep.subr.mxu0 0.0
    %798 = vmatpush1.msra.mxu0 %v680
    %799 = vmatprep.subr.mxu0 0.0
    %800 = vmatpush1.msra.mxu0 %v677
    %801 = vmatprep.subr.mxu0 0.0
    %802 = vmatpush1.msra.mxu0 %v674
    %803 = vmatprep.subr.mxu0 0.0
    %804 = vmatpush1.msra.mxu0 %v671
    %805 = vmatprep.subr.mxu0 0.0
    %806 = vmatpush1.msra.mxu0 %v668
    %807 = vmatprep.subr.mxu0 0.0
    %808 = vmatpush1.msra.mxu0 %v665
    %809 = vmatprep.subr.mxu0 0.0
    %810 = vmatpush1.msra.mxu0 %v662
    %811 = vmatprep.subr.mxu0 0.0
    %812 = vmatpush2.msra.mxu0 0.0
    %813 = vmatprep.subr.mxu0 0.0
    %814 = vmatpush2.msra.mxu0 0.0
    %815 = vmatprep.subr.mxu0 0.0
    %816 = vmatpush2.msra.mxu0 0.0
    %817 = vmatprep.subr.mxu0 0.0
    %818 = vmatpush2.msra.mxu0 0.0
    %819 = vmatprep.subr.mxu0 0.0
    %820 = vmatpush2.msra.mxu0 0.0
    %821 = vmatprep.subr.mxu0 0.0
    %822 = vmatpush2.msra.mxu0 0.0
    %823 = vmatprep.subr.mxu0 0.0
    %824 = vmatpush2.msra.mxu0 0.0
    %825 = vmatprep.subr.mxu0 0.0
    %826 = vmatpush2.msra.mxu0 0.0
    %827 = vmatprep.subr.mxu0 0.0
    %828 = vmatpush2.msra.mxu0 0.0
    %829 = vmatprep.subr.mxu0 0.0
    %830 = vmatpush2.msra.mxu0 0.0
    %831 = vmatprep.subr.mxu0 0.0
    %832 = vmatpush2.msra.mxu0 0.0
    %833 = vmatprep.subr.mxu0 0.0
    %834 = vmatpush2.msra.mxu0 0.0
    %835 = vmatprep.subr.mxu0 0.0
    %836 = vmatpush2.msra.mxu0 0.0
    %837 = vmatprep.subr.mxu0 0.0
    %838 = vmatpush2.msra.mxu0 0.0
    %839 = vmatprep.subr.mxu0 0.0
    %840 = vmatpush2.msra.mxu0 0.0
    %841 = vmatprep.subr.mxu0 0.0
    %842 = vmatpush2.msra.mxu0 0.0
    %843 = vmatprep.mubr.f32.mxu0 0.0
    %844 = vmatmul.mubr.f32.gmra.mxu0 %v659
    %v845 = vpop.f32.mrf.mxu0
    %v846 = vadd.f32 0.0, %v845
    %v847 = vpop.f32.mrf.mxu0
    %848 = vdwg.mxu0
    %v849 = vld [vmem:[#allocation4 + $0x430] sm:$0xf]
    %v850 = vld [vmem:[#allocation4 + $0x440] sm:$0xf]
    %vm851 = vcmask 64512
    %v853 = vsel %vm851, %v850, 0
    %855 = vmatprep.subr.mxu0 0.0
    %856 = vmatpush1.msra.mxu0 0.0
    %857 = vmatprep.subr.mxu0 0.0
    %858 = vmatpush1.msra.mxu0 0.0
    %859 = vmatprep.subr.mxu0 0.0
    %860 = vmatpush1.msra.mxu0 0.0
    %861 = vmatprep.subr.mxu0 0.0
    %862 = vmatpush1.msra.mxu0 0.0
    %863 = vmatprep.subr.mxu0 0.0
    %864 = vmatpush1.msra.mxu0 0.0
    %865 = vmatprep.subr.mxu0 0.0
    %866 = vmatpush1.msra.mxu0 0.0
    %867 = vmatprep.subr.mxu0 0.0
    %868 = vmatpush1.msra.mxu0 0.0
    %869 = vmatprep.subr.mxu0 0.0
    %870 = vmatpush1.msra.mxu0 0.0
    %871 = vmatprep.subr.mxu0 0.0
    %872 = vmatpush1.msra.mxu0 0.0
    %873 = vmatprep.subr.mxu0 0.0
    %874 = vmatpush1.msra.mxu0 0.0
    %875 = vmatprep.subr.mxu0 0.0
    %876 = vmatpush1.msra.mxu0 0.0
    %877 = vmatprep.subr.mxu0 0.0
    %878 = vmatpush1.msra.mxu0 0.0
    %879 = vmatprep.subr.mxu0 0.0
    %880 = vmatpush1.msra.mxu0 0.0
    %881 = vmatprep.subr.mxu0 0.0
    %882 = vmatpush1.msra.mxu0 0.0
    %883 = vmatprep.subr.mxu0 0.0
    %884 = vmatpush1.msra.mxu0 0.0
    %885 = vmatprep.subr.mxu0 0.0
    %886 = vmatpush1.msra.mxu0 %v777
    %887 = vmatprep.subr.mxu0 0.0
    %888 = vmatpush2.msra.mxu0 0.0
    %889 = vmatprep.subr.mxu0 0.0
    %890 = vmatpush2.msra.mxu0 0.0
    %891 = vmatprep.subr.mxu0 0.0
    %892 = vmatpush2.msra.mxu0 0.0
    %893 = vmatprep.subr.mxu0 0.0
    %894 = vmatpush2.msra.mxu0 0.0
    %895 = vmatprep.subr.mxu0 0.0
    %896 = vmatpush2.msra.mxu0 0.0
    %897 = vmatprep.subr.mxu0 0.0
    %898 = vmatpush2.msra.mxu0 0.0
    %899 = vmatprep.subr.mxu0 0.0
    %900 = vmatpush2.msra.mxu0 0.0
    %901 = vmatprep.subr.mxu0 0.0
    %902 = vmatpush2.msra.mxu0 0.0
    %903 = vmatprep.subr.mxu0 0.0
    %904 = vmatpush2.msra.mxu0 0.0
    %905 = vmatprep.subr.mxu0 0.0
    %906 = vmatpush2.msra.mxu0 0.0
    %907 = vmatprep.subr.mxu0 0.0
    %908 = vmatpush2.msra.mxu0 0.0
    %909 = vmatprep.subr.mxu0 0.0
    %910 = vmatpush2.msra.mxu0 0.0
    %911 = vmatprep.subr.mxu0 0.0
    %912 = vmatpush2.msra.mxu0 0.0
    %913 = vmatprep.subr.mxu0 0.0
    %914 = vmatpush2.msra.mxu0 0.0
    %915 = vmatprep.subr.mxu0 0.0
    %916 = vmatpush2.msra.mxu0 0.0
    %917 = vmatprep.subr.mxu0 0.0
    %918 = vmatpush2.msra.mxu0 0.0
    %919 = vmatprep.mubr.f32.mxu0 0.0
    %920 = vmatmul.mubr.f32.gmra.mxu0 %v853
    %v921 = vpop.f32.mrf.mxu0
    %v922 = vadd.f32 0.0, %v921
    %v923 = vpop.f32.mrf.mxu0
    %924 = vdwg.mxu0
    %v926 = vsel %vm851, %v849, 0
    %928 = vmatprep.subr.mxu0 0.0
    %929 = vmatpush1.msra.mxu0 0.0
    %930 = vmatprep.subr.mxu0 0.0
    %931 = vmatpush1.msra.mxu0 0.0
    %932 = vmatprep.subr.mxu0 0.0
    %933 = vmatpush1.msra.mxu0 0.0
    %934 = vmatprep.subr.mxu0 0.0
    %935 = vmatpush1.msra.mxu0 0.0
    %936 = vmatprep.subr.mxu0 0.0
    %937 = vmatpush1.msra.mxu0 0.0
    %938 = vmatprep.subr.mxu0 0.0
    %939 = vmatpush1.msra.mxu0 0.0
    %940 = vmatprep.subr.mxu0 0.0
    %941 = vmatpush1.msra.mxu0 0.0
    %942 = vmatprep.subr.mxu0 0.0
    %943 = vmatpush1.msra.mxu0 0.0
    %944 = vmatprep.subr.mxu0 0.0
    %945 = vmatpush1.msra.mxu0 0.0
    %946 = vmatprep.subr.mxu0 0.0
    %947 = vmatpush1.msra.mxu0 0.0
    %948 = vmatprep.subr.mxu0 0.0
    %949 = vmatpush1.msra.mxu0 0.0
    %950 = vmatprep.subr.mxu0 0.0
    %951 = vmatpush1.msra.mxu0 0.0
    %952 = vmatprep.subr.mxu0 0.0
    %953 = vmatpush1.msra.mxu0 0.0
    %954 = vmatprep.subr.mxu0 0.0
    %955 = vmatpush1.msra.mxu0 0.0
    %956 = vmatprep.subr.mxu0 0.0
    %957 = vmatpush1.msra.mxu0 0.0
    %958 = vmatprep.subr.mxu0 0.0
    %959 = vmatpush1.msra.mxu0 %v775
    %960 = vmatprep.subr.mxu0 0.0
    %961 = vmatpush2.msra.mxu0 0.0
    %962 = vmatprep.subr.mxu0 0.0
    %963 = vmatpush2.msra.mxu0 0.0
    %964 = vmatprep.subr.mxu0 0.0
    %965 = vmatpush2.msra.mxu0 0.0
    %966 = vmatprep.subr.mxu0 0.0
    %967 = vmatpush2.msra.mxu0 0.0
    %968 = vmatprep.subr.mxu0 0.0
    %969 = vmatpush2.msra.mxu0 0.0
    %970 = vmatprep.subr.mxu0 0.0
    %971 = vmatpush2.msra.mxu0 0.0
    %972 = vmatprep.subr.mxu0 0.0
    %973 = vmatpush2.msra.mxu0 0.0
    %974 = vmatprep.subr.mxu0 0.0
    %975 = vmatpush2.msra.mxu0 0.0
    %976 = vmatprep.subr.mxu0 0.0
    %977 = vmatpush2.msra.mxu0 0.0
    %978 = vmatprep.subr.mxu0 0.0
    %979 = vmatpush2.msra.mxu0 0.0
    %980 = vmatprep.subr.mxu0 0.0
    %981 = vmatpush2.msra.mxu0 0.0
    %982 = vmatprep.subr.mxu0 0.0
    %983 = vmatpush2.msra.mxu0 0.0
    %984 = vmatprep.subr.mxu0 0.0
    %985 = vmatpush2.msra.mxu0 0.0
    %986 = vmatprep.subr.mxu0 0.0
    %987 = vmatpush2.msra.mxu0 0.0
    %988 = vmatprep.subr.mxu0 0.0
    %989 = vmatpush2.msra.mxu0 0.0
    %990 = vmatprep.subr.mxu0 0.0
    %991 = vmatpush2.msra.mxu0 0.0
    %992 = vmatprep.mubr.f32.mxu0 0.0
    %993 = vmatmul.mubr.f32.gmra.mxu0 %v926
    %v994 = vpop.f32.mrf.mxu0
    %v995 = vadd.f32 %v922, %v994
    %v996 = vpop.f32.mrf.mxu0
    %997 = vdwg.mxu0
    %v998 = vld [vmem:[#allocation4 + $0x450] sm:$0xf]
    %v1000 = vsel %vm851, %v998, 0
    %1002 = vmatprep.subr.mxu0 0.0
    %1003 = vmatpush1.msra.mxu0 0.0
    %1004 = vmatprep.subr.mxu0 0.0
    %1005 = vmatpush1.msra.mxu0 0.0
    %1006 = vmatprep.subr.mxu0 0.0
    %1007 = vmatpush1.msra.mxu0 0.0
    %1008 = vmatprep.subr.mxu0 0.0
    %1009 = vmatpush1.msra.mxu0 0.0
    %1010 = vmatprep.subr.mxu0 0.0
    %1011 = vmatpush1.msra.mxu0 0.0
    %1012 = vmatprep.subr.mxu0 0.0
    %1013 = vmatpush1.msra.mxu0 0.0
    %1014 = vmatprep.subr.mxu0 0.0
    %1015 = vmatpush1.msra.mxu0 0.0
    %1016 = vmatprep.subr.mxu0 0.0
    %1017 = vmatpush1.msra.mxu0 0.0
    %1018 = vmatprep.subr.mxu0 0.0
    %1019 = vmatpush1.msra.mxu0 0.0
    %1020 = vmatprep.subr.mxu0 0.0
    %1021 = vmatpush1.msra.mxu0 0.0
    %1022 = vmatprep.subr.mxu0 0.0
    %1023 = vmatpush1.msra.mxu0 0.0
    %1024 = vmatprep.subr.mxu0 0.0
    %1025 = vmatpush1.msra.mxu0 0.0
    %1026 = vmatprep.subr.mxu0 0.0
    %1027 = vmatpush1.msra.mxu0 0.0
    %1028 = vmatprep.subr.mxu0 0.0
    %1029 = vmatpush1.msra.mxu0 0.0
    %1030 = vmatprep.subr.mxu0 0.0
    %1031 = vmatpush1.msra.mxu0 0.0
    %1032 = vmatprep.subr.mxu0 0.0
    %1033 = vmatpush1.msra.mxu0 %v846
    %1034 = vmatprep.subr.mxu0 0.0
    %1035 = vmatpush2.msra.mxu0 0.0
    %1036 = vmatprep.subr.mxu0 0.0
    %1037 = vmatpush2.msra.mxu0 0.0
    %1038 = vmatprep.subr.mxu0 0.0
    %1039 = vmatpush2.msra.mxu0 0.0
    %1040 = vmatprep.subr.mxu0 0.0
    %1041 = vmatpush2.msra.mxu0 0.0
    %1042 = vmatprep.subr.mxu0 0.0
    %1043 = vmatpush2.msra.mxu0 0.0
    %1044 = vmatprep.subr.mxu0 0.0
    %1045 = vmatpush2.msra.mxu0 0.0
    %1046 = vmatprep.subr.mxu0 0.0
    %1047 = vmatpush2.msra.mxu0 0.0
    %1048 = vmatprep.subr.mxu0 0.0
    %1049 = vmatpush2.msra.mxu0 0.0
    %1050 = vmatprep.subr.mxu0 0.0
    %1051 = vmatpush2.msra.mxu0 0.0
    %1052 = vmatprep.subr.mxu0 0.0
    %1053 = vmatpush2.msra.mxu0 0.0
    %1054 = vmatprep.subr.mxu0 0.0
    %1055 = vmatpush2.msra.mxu0 0.0
    %1056 = vmatprep.subr.mxu0 0.0
    %1057 = vmatpush2.msra.mxu0 0.0
    %1058 = vmatprep.subr.mxu0 0.0
    %1059 = vmatpush2.msra.mxu0 0.0
    %1060 = vmatprep.subr.mxu0 0.0
    %1061 = vmatpush2.msra.mxu0 0.0
    %1062 = vmatprep.subr.mxu0 0.0
    %1063 = vmatpush2.msra.mxu0 0.0
    %1064 = vmatprep.subr.mxu0 0.0
    %1065 = vmatpush2.msra.mxu0 0.0
    %1066 = vmatprep.mubr.f32.mxu0 0.0
    %1067 = vmatmul.mubr.f32.gmra.mxu0 %v1000
    %v1068 = vpop.f32.mrf.mxu0
    %v1069 = vadd.f32 0.0, %v1068
    %v1070 = vpop.f32.mrf.mxu0
    %1071 = vdwg.mxu0
    %v1072 = vadd.f32 %v995, %v1069
    %v1073 = vld [vmem:[#allocation4 + $0x80] sm:$0xff]
    %v1074 = vld [vmem:[#allocation4 + $0x88] sm:$0xff]
    %v1075 = vld [vmem:[#allocation4 + $0x90] sm:$0xff]
    %v1076 = vld [vmem:[#allocation4 + $0x98] sm:$0xff]
    %v1077 = vld [vmem:[#allocation4 + $0xa0] sm:$0xff]
    %v1078 = vld [vmem:[#allocation4 + $0xa8] sm:$0xff]
    %v1079 = vld [vmem:[#allocation4 + $0xb0] sm:$0xff]
    %v1080 = vld [vmem:[#allocation4 + $0xb8] sm:$0xff]
    %v1081 = vld [vmem:[#allocation4 + $0xc0] sm:$0xff]
    %v1082 = vld [vmem:[#allocation4 + $0xc8] sm:$0xff]
    %v1083 = vld [vmem:[#allocation4 + $0xd0] sm:$0xff]
    %v1084 = vld [vmem:[#allocation4 + $0xd8] sm:$0xff]
    %v1085 = vld [vmem:[#allocation4 + $0xe0] sm:$0xff]
    %v1086 = vld [vmem:[#allocation4 + $0xe8] sm:$0xff]
    %v1087 = vld [vmem:[#allocation4 + $0xf0] sm:$0xff]
    %v1088 = vld [vmem:[#allocation4 + $0xf8] sm:$0xff]
    %v1089 = vld [vmem:[#allocation4 + $0x280] sm:$0xff]
    %v1090 = vld [vmem:[#allocation4 + $0x288] sm:$0xff]
    %v1091 = vld [vmem:[#allocation4 + $0x290] sm:$0xff]
    %v1092 = vld [vmem:[#allocation4 + $0x298] sm:$0xff]
    %v1093 = vld [vmem:[#allocation4 + $0x2a0] sm:$0xff]
    %v1094 = vld [vmem:[#allocation4 + $0x2a8] sm:$0xff]
    %v1095 = vld [vmem:[#allocation4 + $0x2b0] sm:$0xff]
    %v1096 = vld [vmem:[#allocation4 + $0x2b8] sm:$0xff]
    %v1097 = vld [vmem:[#allocation4 + $0x2c0] sm:$0xff]
    %v1098 = vld [vmem:[#allocation4 + $0x2c8] sm:$0xff]
    %v1099 = vld [vmem:[#allocation4 + $0x2d0] sm:$0xff]
    %v1100 = vld [vmem:[#allocation4 + $0x2d8] sm:$0xff]
    %v1101 = vld [vmem:[#allocation4 + $0x2e0] sm:$0xff]
    %v1102 = vld [vmem:[#allocation4 + $0x2e8] sm:$0xff]
    %v1103 = vld [vmem:[#allocation4 + $0x2f0] sm:$0xff]
    %v1104 = vld [vmem:[#allocation4 + $0x2f8] sm:$0xff]
    %vm1105 = vcmask 1043456
    %v1106 = vsel %vm1105, %v1072, 0.0
    %v1107 = vrot.slane %v1106, 4
    %v1108 = vadd.f32 %v1106, %v1107
    %v1109 = vrot.slane %v1108, 2
    %v1110 = vadd.f32 %v1108, %v1109
    %v1111 = vrot.slane %v1110, 1
    %v1112 = vadd.f32 %v1110, %v1111
    %v1113 = vmul.f32 %v1072, %v1072
    %v1114 = vsel %vm1105, %v1113, 0.0
    %v1115 = vrot.slane %v1114, 4
    %v1116 = vadd.f32 %v1114, %v1115
    %v1117 = vrot.slane %v1116, 2
    %v1118 = vadd.f32 %v1116, %v1117
    %v1119 = vrot.slane %v1118, 1
    %v1120 = vadd.f32 %v1118, %v1119
    %v1121 = vsel %vm497, %v1112, %v1120
    %1122 = vmatprep.subr.mxu0 0.0
    %1123 = vmatpush1.msra.mxu0 %v1088
    %1124 = vmatprep.subr.mxu0 0.0
    %1125 = vmatpush1.msra.mxu0 %v1087
    %1126 = vmatprep.subr.mxu0 0.0
    %1127 = vmatpush1.msra.mxu0 %v1086
    %1128 = vmatprep.subr.mxu0 0.0
    %1129 = vmatpush1.msra.mxu0 %v1085
    %1130 = vmatprep.subr.mxu0 0.0
    %1131 = vmatpush1.msra.mxu0 %v1084
    %1132 = vmatprep.subr.mxu0 0.0
    %1133 = vmatpush1.msra.mxu0 %v1083
    %1134 = vmatprep.subr.mxu0 0.0
    %1135 = vmatpush1.msra.mxu0 %v1082
    %1136 = vmatprep.subr.mxu0 0.0
    %1137 = vmatpush1.msra.mxu0 %v1081
    %1138 = vmatprep.subr.mxu0 0.0
    %1139 = vmatpush1.msra.mxu0 %v1080
    %1140 = vmatprep.subr.mxu0 0.0
    %1141 = vmatpush1.msra.mxu0 %v1079
    %1142 = vmatprep.subr.mxu0 0.0
    %1143 = vmatpush1.msra.mxu0 %v1078
    %1144 = vmatprep.subr.mxu0 0.0
    %1145 = vmatpush1.msra.mxu0 %v1077
    %1146 = vmatprep.subr.mxu0 0.0
    %1147 = vmatpush1.msra.mxu0 %v1076
    %1148 = vmatprep.subr.mxu0 0.0
    %1149 = vmatpush1.msra.mxu0 %v1075
    %1150 = vmatprep.subr.mxu0 0.0
    %1151 = vmatpush1.msra.mxu0 %v1074
    %1152 = vmatprep.subr.mxu0 0.0
    %1153 = vmatpush1.msra.mxu0 %v1073
    %1154 = vmatprep.subr.mxu0 0.0
    %1155 = vmatpush2.msra.mxu0 0.0
    %1156 = vmatprep.subr.mxu0 0.0
    %1157 = vmatpush2.msra.mxu0 0.0
    %1158 = vmatprep.subr.mxu0 0.0
    %1159 = vmatpush2.msra.mxu0 0.0
    %1160 = vmatprep.subr.mxu0 0.0
    %1161 = vmatpush2.msra.mxu0 0.0
    %1162 = vmatprep.subr.mxu0 0.0
    %1163 = vmatpush2.msra.mxu0 0.0
    %1164 = vmatprep.subr.mxu0 0.0
    %1165 = vmatpush2.msra.mxu0 0.0
    %1166 = vmatprep.subr.mxu0 0.0
    %1167 = vmatpush2.msra.mxu0 0.0
    %1168 = vmatprep.subr.mxu0 0.0
    %1169 = vmatpush2.msra.mxu0 0.0
    %1170 = vmatprep.subr.mxu0 0.0
    %1171 = vmatpush2.msra.mxu0 0.0
    %1172 = vmatprep.subr.mxu0 0.0
    %1173 = vmatpush2.msra.mxu0 0.0
    %1174 = vmatprep.subr.mxu0 0.0
    %1175 = vmatpush2.msra.mxu0 0.0
    %1176 = vmatprep.subr.mxu0 0.0
    %1177 = vmatpush2.msra.mxu0 0.0
    %1178 = vmatprep.subr.mxu0 0.0
    %1179 = vmatpush2.msra.mxu0 0.0
    %1180 = vmatprep.subr.mxu0 0.0
    %1181 = vmatpush2.msra.mxu0 0.0
    %1182 = vmatprep.subr.mxu0 0.0
    %1183 = vmatpush2.msra.mxu0 0.0
    %1184 = vmatprep.subr.mxu0 0.0
    %1185 = vmatpush2.msra.mxu0 0.0
    %1186 = vmatprep.mubr.f32.mxu0 0.0
    %1187 = vmatmul.mubr.f32.gmra.mxu0 %v1121
    %v1188 = vpop.f32.mrf.mxu0
    %v1189 = vadd.f32 0.0, %v1188
    %v1190 = vpop.f32.mrf.mxu0
    %1191 = vdwg.mxu0
    %v1192 = vmul.f32 %v1189, 0.0625
    %v1193 = vmul.f32 %v1192, %v1192
    %v1195 = vrot.slane %v1193, 7
    %v1197 = vsub.f32 %v1192, %v1195
    %v1198 = vmax.f32 %v1197, 0.0
    %v1199 = vadd.f32 %v1198, 1e-05
    %v1200 = vrsqrt.pop %v1199
    %v1201 = vsel %vm497, %v1192, %v1200
    %1202 = vmatprep.subr.mxu0 0.0
    %1203 = vmatpush1.msra.mxu0 %v1104
    %1204 = vmatprep.subr.mxu0 0.0
    %1205 = vmatpush1.msra.mxu0 %v1103
    %1206 = vmatprep.subr.mxu0 0.0
    %1207 = vmatpush1.msra.mxu0 %v1102
    %1208 = vmatprep.subr.mxu0 0.0
    %1209 = vmatpush1.msra.mxu0 %v1101
    %1210 = vmatprep.subr.mxu0 0.0
    %1211 = vmatpush1.msra.mxu0 %v1100
    %1212 = vmatprep.subr.mxu0 0.0
    %1213 = vmatpush1.msra.mxu0 %v1099
    %1214 = vmatprep.subr.mxu0 0.0
    %1215 = vmatpush1.msra.mxu0 %v1098
    %1216 = vmatprep.subr.mxu0 0.0
    %1217 = vmatpush1.msra.mxu0 %v1097
    %1218 = vmatprep.subr.mxu0 0.0
    %1219 = vmatpush1.msra.mxu0 %v1096
    %1220 = vmatprep.subr.mxu0 0.0
    %1221 = vmatpush1.msra.mxu0 %v1095
    %1222 = vmatprep.subr.mxu0 0.0
    %1223 = vmatpush1.msra.mxu0 %v1094
    %1224 = vmatprep.subr.mxu0 0.0
    %1225 = vmatpush1.msra.mxu0 %v1093
    %1226 = vmatprep.subr.mxu0 0.0
    %1227 = vmatpush1.msra.mxu0 %v1092
    %1228 = vmatprep.subr.mxu0 0.0
    %1229 = vmatpush1.msra.mxu0 %v1091
    %1230 = vmatprep.subr.mxu0 0.0
    %1231 = vmatpush1.msra.mxu0 %v1090
    %1232 = vmatprep.subr.mxu0 0.0
    %1233 = vmatpush1.msra.mxu0 %v1089
    %1234 = vmatprep.subr.mxu0 0.0
    %1235 = vmatpush2.msra.mxu0 0.0
    %1236 = vmatprep.subr.mxu0 0.0
    %1237 = vmatpush2.msra.mxu0 0.0
    %1238 = vmatprep.subr.mxu0 0.0
    %1239 = vmatpush2.msra.mxu0 0.0
    %1240 = vmatprep.subr.mxu0 0.0
    %1241 = vmatpush2.msra.mxu0 0.0
    %1242 = vmatprep.subr.mxu0 0.0
    %1243 = vmatpush2.msra.mxu0 0.0
    %1244 = vmatprep.subr.mxu0 0.0
    %1245 = vmatpush2.msra.mxu0 0.0
    %1246 = vmatprep.subr.mxu0 0.0
    %1247 = vmatpush2.msra.mxu0 0.0
    %1248 = vmatprep.subr.mxu0 0.0
    %1249 = vmatpush2.msra.mxu0 0.0
    %1250 = vmatprep.subr.mxu0 0.0
    %1251 = vmatpush2.msra.mxu0 0.0
    %1252 = vmatprep.subr.mxu0 0.0
    %1253 = vmatpush2.msra.mxu0 0.0
    %1254 = vmatprep.subr.mxu0 0.0
    %1255 = vmatpush2.msra.mxu0 0.0
    %1256 = vmatprep.subr.mxu0 0.0
    %1257 = vmatpush2.msra.mxu0 0.0
    %1258 = vmatprep.subr.mxu0 0.0
    %1259 = vmatpush2.msra.mxu0 0.0
    %1260 = vmatprep.subr.mxu0 0.0
    %1261 = vmatpush2.msra.mxu0 0.0
    %1262 = vmatprep.subr.mxu0 0.0
    %1263 = vmatpush2.msra.mxu0 0.0
    %1264 = vmatprep.subr.mxu0 0.0
    %1265 = vmatpush2.msra.mxu0 0.0
    %1266 = vmatprep.mubr.f32.mxu0 0.0
    %1267 = vmatmul.mubr.f32.gmra.mxu0 %v1201
    %v1268 = vpop.f32.mrf.mxu0
    %v1269 = vadd.f32 0.0, %v1268
    %v1270 = vpop.f32.mrf.mxu0
    %1271 = vdwg.mxu0
    %v1272 = vlaneseq
    %v1273 = vshrl.u32 %v1272, 7
    %v1274 = vsub.s32 0, %v1273
    %v1275 = vrot.slane %v1269, %v1274
    %v1276 = vsub.f32 %v1072, %v1275
    %v1277 = vlaneseq
    %v1278 = vshrl.u32 %v1277, 7
    %v1279 = vsub.s32 1, %v1278
    %v1280 = vrot.slane %v1269, %v1279
    %v1281 = vmul.f32 %v1276, %v1280
    %v1282 = vmax.f32 %v1281, 0.0
    %v1283 = vld [vmem:[#allocation2 + $0x240] sm:$0xff]
    %v1284 = vld [vmem:[#allocation2 + $0x248] sm:$0xff]
    %v1285 = vld [vmem:[#allocation2 + $0x250] sm:$0xff]
    %v1286 = vld [vmem:[#allocation2 + $0x258] sm:$0xff]
    %v1287 = vld [vmem:[#allocation2 + $0x260] sm:$0xff]
    %v1288 = vld [vmem:[#allocation2 + $0x268] sm:$0xff]
    %v1289 = vld [vmem:[#allocation2 + $0x270] sm:$0xff]
    %v1290 = vld [vmem:[#allocation2 + $0x278] sm:$0xff]
    %v1291 = vld [vmem:[#allocation2 + $0x280] sm:$0xff]
    %v1292 = vld [vmem:[#allocation2 + $0x288] sm:$0xff]
    %v1293 = vld [vmem:[#allocation2 + $0x290] sm:$0xff]
    %v1294 = vld [vmem:[#allocation2 + $0x298] sm:$0xff]
    %v1295 = vld [vmem:[#allocation2 + $0x2a0] sm:$0xff]
    %v1296 = vld [vmem:[#allocation2 + $0x2a8] sm:$0xff]
    %v1297 = vld [vmem:[#allocation2 + $0x2b0] sm:$0xff]
    %v1298 = vld [vmem:[#allocation2 + $0x2b8] sm:$0xff]
    %v1299 = vld [vmem:[#allocation2 + $0x2c0] sm:$0xff]
    %v1300 = vld [vmem:[#allocation2 + $0x2c8] sm:$0xff]
    %v1301 = vld [vmem:[#allocation2 + $0x2d0] sm:$0xff]
    %v1302 = vld [vmem:[#allocation2 + $0x2d8] sm:$0xff]
    %v1303 = vld [vmem:[#allocation2 + $0x2e0] sm:$0xff]
    %v1304 = vld [vmem:[#allocation2 + $0x2e8] sm:$0xff]
    %v1305 = vld [vmem:[#allocation2 + $0x2f0] sm:$0xff]
    %v1306 = vld [vmem:[#allocation2 + $0x2f8] sm:$0xff]
    %v1307 = vld [vmem:[#allocation2 + $0x300] sm:$0xff]
    %v1308 = vld [vmem:[#allocation2 + $0x308] sm:$0xff]
    %v1309 = vld [vmem:[#allocation2 + $0x310] sm:$0xff]
    %v1310 = vld [vmem:[#allocation2 + $0x318] sm:$0xff]
    %v1311 = vld [vmem:[#allocation2 + $0x320] sm:$0xff]
    %v1312 = vld [vmem:[#allocation2 + $0x328] sm:$0xff]
    %v1313 = vld [vmem:[#allocation2 + $0x330] sm:$0xff]
    %v1314 = vld [vmem:[#allocation2 + $0x338] sm:$0xff]
    %v1315 = vld [vmem:[#allocation2 + $0x340] sm:$0xff]
    %v1316 = vld [vmem:[#allocation2 + $0x348] sm:$0xff]
    %v1317 = vld [vmem:[#allocation2 + $0x350] sm:$0xff]
    %v1318 = vld [vmem:[#allocation2 + $0x358] sm:$0xff]
    %v1319 = vld [vmem:[#allocation2 + $0x360] sm:$0xff]
    %v1320 = vld [vmem:[#allocation2 + $0x368] sm:$0xff]
    %v1321 = vld [vmem:[#allocation2 + $0x370] sm:$0xff]
    %v1322 = vld [vmem:[#allocation2 + $0x378] sm:$0xff]
    %v1323 = vld [vmem:[#allocation2 + $0x380] sm:$0xff]
    %v1324 = vld [vmem:[#allocation2 + $0x388] sm:$0xff]
    %v1325 = vld [vmem:[#allocation2 + $0x390] sm:$0xff]
    %v1326 = vld [vmem:[#allocation2 + $0x398] sm:$0xff]
    %v1327 = vld [vmem:[#allocation2 + $0x3a0] sm:$0xff]
    %v1328 = vld [vmem:[#allocation2 + $0x3a8] sm:$0xff]
    %v1329 = vld [vmem:[#allocation2 + $0x3b0] sm:$0xff]
    %v1330 = vld [vmem:[#allocation2 + $0x3b8] sm:$0xff]
    %1331 = vmatprep.subr.mxu0 %v1329
    %1332 = vmatpush1.msra.mxu0 %v1328
    %1333 = vmatprep.subr.mxu0 %v1326
    %1334 = vmatpush1.msra.mxu0 %v1325
    %1335 = vmatprep.subr.mxu0 %v1323
    %1336 = vmatpush1.msra.mxu0 %v1322
    %1337 = vmatprep.subr.mxu0 %v1320
    %1338 = vmatpush1.msra.mxu0 %v1319
    %1339 = vmatprep.subr.mxu0 %v1317
    %1340 = vmatpush1.msra.mxu0 %v1316
    %1341 = vmatprep.subr.mxu0 %v1314
    %1342 = vmatpush1.msra.mxu0 %v1313
    %1343 = vmatprep.subr.mxu0 %v1311
    %1344 = vmatpush1.msra.mxu0 %v1310
    %1345 = vmatprep.subr.mxu0 %v1308
    %1346 = vmatpush1.msra.mxu0 %v1307
    %1347 = vmatprep.subr.mxu0 %v1305
    %1348 = vmatpush1.msra.mxu0 %v1304
    %1349 = vmatprep.subr.mxu0 %v1302
    %1350 = vmatpush1.msra.mxu0 %v1301
    %1351 = vmatprep.subr.mxu0 %v1299
    %1352 = vmatpush1.msra.mxu0 %v1298
    %1353 = vmatprep.subr.mxu0 %v1296
    %1354 = vmatpush1.msra.mxu0 %v1295
    %1355 = vmatprep.subr.mxu0 %v1293
    %1356 = vmatpush1.msra.mxu0 %v1292
    %1357 = vmatprep.subr.mxu0 %v1290
    %1358 = vmatpush1.msra.mxu0 %v1289
    %1359 = vmatprep.subr.mxu0 %v1287
    %1360 = vmatpush1.msra.mxu0 %v1286
    %1361 = vmatprep.subr.mxu0 %v1284
    %1362 = vmatpush1.msra.mxu0 %v1283
    %1363 = vmatprep.subr.mxu0 0.0
    %1364 = vmatpush2.msra.mxu0 0.0
    %1365 = vmatprep.subr.mxu0 0.0
    %1366 = vmatpush2.msra.mxu0 0.0
    %1367 = vmatprep.subr.mxu0 0.0
    %1368 = vmatpush2.msra.mxu0 0.0
    %1369 = vmatprep.subr.mxu0 0.0
    %1370 = vmatpush2.msra.mxu0 0.0
    %1371 = vmatprep.subr.mxu0 0.0
    %1372 = vmatpush2.msra.mxu0 0.0
    %1373 = vmatprep.subr.mxu0 0.0
    %1374 = vmatpush2.msra.mxu0 0.0
    %1375 = vmatprep.subr.mxu0 0.0
    %1376 = vmatpush2.msra.mxu0 0.0
    %1377 = vmatprep.subr.mxu0 0.0
    %1378 = vmatpush2.msra.mxu0 0.0
    %1379 = vmatprep.subr.mxu0 0.0
    %1380 = vmatpush2.msra.mxu0 0.0
    %1381 = vmatprep.subr.mxu0 0.0
    %1382 = vmatpush2.msra.mxu0 0.0
    %1383 = vmatprep.subr.mxu0 0.0
    %1384 = vmatpush2.msra.mxu0 0.0
    %1385 = vmatprep.subr.mxu0 0.0
    %1386 = vmatpush2.msra.mxu0 0.0
    %1387 = vmatprep.subr.mxu0 0.0
    %1388 = vmatpush2.msra.mxu0 0.0
    %1389 = vmatprep.subr.mxu0 0.0
    %1390 = vmatpush2.msra.mxu0 0.0
    %1391 = vmatprep.subr.mxu0 0.0
    %1392 = vmatpush2.msra.mxu0 0.0
    %1393 = vmatprep.subr.mxu0 0.0
    %1394 = vmatpush2.msra.mxu0 0.0
    %1395 = vmatprep.mubr.f32.mxu0 0.0
    %1396 = vmatmul.mubr.f32.gmra.mxu0 %v1282
    %v1397 = vpop.f32.mrf.mxu0
    %v1398 = vadd.f32 0.0, %v1397
    %v1399 = vpop.f32.mrf.mxu0
    %v1400 = vadd.f32 0.0, %v1399
    %1401 = vdwg.mxu0
    %1402 = vmatprep.subr.mxu0 0.0
    %1403 = vmatpush1.msra.mxu0 %v1330
    %1404 = vmatprep.subr.mxu0 0.0
    %1405 = vmatpush1.msra.mxu0 %v1327
    %1406 = vmatprep.subr.mxu0 0.0
    %1407 = vmatpush1.msra.mxu0 %v1324
    %1408 = vmatprep.subr.mxu0 0.0
    %1409 = vmatpush1.msra.mxu0 %v1321
    %1410 = vmatprep.subr.mxu0 0.0
    %1411 = vmatpush1.msra.mxu0 %v1318
    %1412 = vmatprep.subr.mxu0 0.0
    %1413 = vmatpush1.msra.mxu0 %v1315
    %1414 = vmatprep.subr.mxu0 0.0
    %1415 = vmatpush1.msra.mxu0 %v1312
    %1416 = vmatprep.subr.mxu0 0.0
    %1417 = vmatpush1.msra.mxu0 %v1309
    %1418 = vmatprep.subr.mxu0 0.0
    %1419 = vmatpush1.msra.mxu0 %v1306
    %1420 = vmatprep.subr.mxu0 0.0
    %1421 = vmatpush1.msra.mxu0 %v1303
    %1422 = vmatprep.subr.mxu0 0.0
    %1423 = vmatpush1.msra.mxu0 %v1300
    %1424 = vmatprep.subr.mxu0 0.0
    %1425 = vmatpush1.msra.mxu0 %v1297
    %1426 = vmatprep.subr.mxu0 0.0
    %1427 = vmatpush1.msra.mxu0 %v1294
    %1428 = vmatprep.subr.mxu0 0.0
    %1429 = vmatpush1.msra.mxu0 %v1291
    %1430 = vmatprep.subr.mxu0 0.0
    %1431 = vmatpush1.msra.mxu0 %v1288
    %1432 = vmatprep.subr.mxu0 0.0
    %1433 = vmatpush1.msra.mxu0 %v1285
    %1434 = vmatprep.subr.mxu0 0.0
    %1435 = vmatpush2.msra.mxu0 0.0
    %1436 = vmatprep.subr.mxu0 0.0
    %1437 = vmatpush2.msra.mxu0 0.0
    %1438 = vmatprep.subr.mxu0 0.0
    %1439 = vmatpush2.msra.mxu0 0.0
    %1440 = vmatprep.subr.mxu0 0.0
    %1441 = vmatpush2.msra.mxu0 0.0
    %1442 = vmatprep.subr.mxu0 0.0
    %1443 = vmatpush2.msra.mxu0 0.0
    %1444 = vmatprep.subr.mxu0 0.0
    %1445 = vmatpush2.msra.mxu0 0.0
    %1446 = vmatprep.subr.mxu0 0.0
    %1447 = vmatpush2.msra.mxu0 0.0
    %1448 = vmatprep.subr.mxu0 0.0
    %1449 = vmatpush2.msra.mxu0 0.0
    %1450 = vmatprep.subr.mxu0 0.0
    %1451 = vmatpush2.msra.mxu0 0.0
    %1452 = vmatprep.subr.mxu0 0.0
    %1453 = vmatpush2.msra.mxu0 0.0
    %1454 = vmatprep.subr.mxu0 0.0
    %1455 = vmatpush2.msra.mxu0 0.0
    %1456 = vmatprep.subr.mxu0 0.0
    %1457 = vmatpush2.msra.mxu0 0.0
    %1458 = vmatprep.subr.mxu0 0.0
    %1459 = vmatpush2.msra.mxu0 0.0
    %1460 = vmatprep.subr.mxu0 0.0
    %1461 = vmatpush2.msra.mxu0 0.0
    %1462 = vmatprep.subr.mxu0 0.0
    %1463 = vmatpush2.msra.mxu0 0.0
    %1464 = vmatprep.subr.mxu0 0.0
    %1465 = vmatpush2.msra.mxu0 0.0
    %1466 = vmatprep.mubr.f32.mxu0 0.0
    %1467 = vmatmul.mubr.f32.gmra.mxu0 %v1282
    %v1468 = vpop.f32.mrf.mxu0
    %v1469 = vadd.f32 0.0, %v1468
    %v1470 = vpop.f32.mrf.mxu0
    %1471 = vdwg.mxu0
    %v1472 = vld [vmem:[#allocation4 + $0x460] sm:$0xf]
    %v1473 = vld [vmem:[#allocation4 + $0x470] sm:$0xf]
    %vm1474 = vcmask 31744
    %v1476 = vsel %vm1474, %v1473, 0
    %v1479 = vsel %vm1105, %v1400, 0
    %1481 = vmatprep.subr.mxu0 0.0
    %1482 = vmatpush1.msra.mxu0 0.0
    %1483 = vmatprep.subr.mxu0 0.0
    %1484 = vmatpush1.msra.mxu0 0.0
    %1485 = vmatprep.subr.mxu0 0.0
    %1486 = vmatpush1.msra.mxu0 0.0
    %1487 = vmatprep.subr.mxu0 0.0
    %1488 = vmatpush1.msra.mxu0 0.0
    %1489 = vmatprep.subr.mxu0 0.0
    %1490 = vmatpush1.msra.mxu0 0.0
    %1491 = vmatprep.subr.mxu0 0.0
    %1492 = vmatpush1.msra.mxu0 0.0
    %1493 = vmatprep.subr.mxu0 0.0
    %1494 = vmatpush1.msra.mxu0 0.0
    %1495 = vmatprep.subr.mxu0 0.0
    %1496 = vmatpush1.msra.mxu0 0.0
    %1497 = vmatprep.subr.mxu0 0.0
    %1498 = vmatpush1.msra.mxu0 0.0
    %1499 = vmatprep.subr.mxu0 0.0
    %1500 = vmatpush1.msra.mxu0 0.0
    %1501 = vmatprep.subr.mxu0 0.0
    %1502 = vmatpush1.msra.mxu0 0.0
    %1503 = vmatprep.subr.mxu0 0.0
    %1504 = vmatpush1.msra.mxu0 0.0
    %1505 = vmatprep.subr.mxu0 0.0
    %1506 = vmatpush1.msra.mxu0 0.0
    %1507 = vmatprep.subr.mxu0 0.0
    %1508 = vmatpush1.msra.mxu0 0.0
    %1509 = vmatprep.subr.mxu0 0.0
    %1510 = vmatpush1.msra.mxu0 0.0
    %1511 = vmatprep.subr.mxu0 0.0
    %1512 = vmatpush1.msra.mxu0 %v1479
    %1513 = vmatprep.subr.mxu0 0.0
    %1514 = vmatpush2.msra.mxu0 0.0
    %1515 = vmatprep.subr.mxu0 0.0
    %1516 = vmatpush2.msra.mxu0 0.0
    %1517 = vmatprep.subr.mxu0 0.0
    %1518 = vmatpush2.msra.mxu0 0.0
    %1519 = vmatprep.subr.mxu0 0.0
    %1520 = vmatpush2.msra.mxu0 0.0
    %1521 = vmatprep.subr.mxu0 0.0
    %1522 = vmatpush2.msra.mxu0 0.0
    %1523 = vmatprep.subr.mxu0 0.0
    %1524 = vmatpush2.msra.mxu0 0.0
    %1525 = vmatprep.subr.mxu0 0.0
    %1526 = vmatpush2.msra.mxu0 0.0
    %1527 = vmatprep.subr.mxu0 0.0
    %1528 = vmatpush2.msra.mxu0 0.0
    %1529 = vmatprep.subr.mxu0 0.0
    %1530 = vmatpush2.msra.mxu0 0.0
    %1531 = vmatprep.subr.mxu0 0.0
    %1532 = vmatpush2.msra.mxu0 0.0
    %1533 = vmatprep.subr.mxu0 0.0
    %1534 = vmatpush2.msra.mxu0 0.0
    %1535 = vmatprep.subr.mxu0 0.0
    %1536 = vmatpush2.msra.mxu0 0.0
    %1537 = vmatprep.subr.mxu0 0.0
    %1538 = vmatpush2.msra.mxu0 0.0
    %1539 = vmatprep.subr.mxu0 0.0
    %1540 = vmatpush2.msra.mxu0 0.0
    %1541 = vmatprep.subr.mxu0 0.0
    %1542 = vmatpush2.msra.mxu0 0.0
    %1543 = vmatprep.subr.mxu0 0.0
    %1544 = vmatpush2.msra.mxu0 0.0
    %1545 = vmatprep.mubr.f32.mxu0 0.0
    %1546 = vmatmul.mubr.f32.gmra.mxu0 %v1476
    %v1547 = vpop.f32.mrf.mxu0
    %v1548 = vadd.f32 0.0, %v1547
    %v1549 = vpop.f32.mrf.mxu0
    %1550 = vdwg.mxu0
    %v1552 = vsel %vm1474, %v1472, 0
    %v1555 = vsel %vm1105, %v1398, 0
    %1557 = vmatprep.subr.mxu0 0.0
    %1558 = vmatpush1.msra.mxu0 0.0
    %1559 = vmatprep.subr.mxu0 0.0
    %1560 = vmatpush1.msra.mxu0 0.0
    %1561 = vmatprep.subr.mxu0 0.0
    %1562 = vmatpush1.msra.mxu0 0.0
    %1563 = vmatprep.subr.mxu0 0.0
    %1564 = vmatpush1.msra.mxu0 0.0
    %1565 = vmatprep.subr.mxu0 0.0
    %1566 = vmatpush1.msra.mxu0 0.0
    %1567 = vmatprep.subr.mxu0 0.0
    %1568 = vmatpush1.msra.mxu0 0.0
    %1569 = vmatprep.subr.mxu0 0.0
    %1570 = vmatpush1.msra.mxu0 0.0
    %1571 = vmatprep.subr.mxu0 0.0
    %1572 = vmatpush1.msra.mxu0 0.0
    %1573 = vmatprep.subr.mxu0 0.0
    %1574 = vmatpush1.msra.mxu0 0.0
    %1575 = vmatprep.subr.mxu0 0.0
    %1576 = vmatpush1.msra.mxu0 0.0
    %1577 = vmatprep.subr.mxu0 0.0
    %1578 = vmatpush1.msra.mxu0 0.0
    %1579 = vmatprep.subr.mxu0 0.0
    %1580 = vmatpush1.msra.mxu0 0.0
    %1581 = vmatprep.subr.mxu0 0.0
    %1582 = vmatpush1.msra.mxu0 0.0
    %1583 = vmatprep.subr.mxu0 0.0
    %1584 = vmatpush1.msra.mxu0 0.0
    %1585 = vmatprep.subr.mxu0 0.0
    %1586 = vmatpush1.msra.mxu0 0.0
    %1587 = vmatprep.subr.mxu0 0.0
    %1588 = vmatpush1.msra.mxu0 %v1555
    %1589 = vmatprep.subr.mxu0 0.0
    %1590 = vmatpush2.msra.mxu0 0.0
    %1591 = vmatprep.subr.mxu0 0.0
    %1592 = vmatpush2.msra.mxu0 0.0
    %1593 = vmatprep.subr.mxu0 0.0
    %1594 = vmatpush2.msra.mxu0 0.0
    %1595 = vmatprep.subr.mxu0 0.0
    %1596 = vmatpush2.msra.mxu0 0.0
    %1597 = vmatprep.subr.mxu0 0.0
    %1598 = vmatpush2.msra.mxu0 0.0
    %1599 = vmatprep.subr.mxu0 0.0
    %1600 = vmatpush2.msra.mxu0 0.0
    %1601 = vmatprep.subr.mxu0 0.0
    %1602 = vmatpush2.msra.mxu0 0.0
    %1603 = vmatprep.subr.mxu0 0.0
    %1604 = vmatpush2.msra.mxu0 0.0
    %1605 = vmatprep.subr.mxu0 0.0
    %1606 = vmatpush2.msra.mxu0 0.0
    %1607 = vmatprep.subr.mxu0 0.0
    %1608 = vmatpush2.msra.mxu0 0.0
    %1609 = vmatprep.subr.mxu0 0.0
    %1610 = vmatpush2.msra.mxu0 0.0
    %1611 = vmatprep.subr.mxu0 0.0
    %1612 = vmatpush2.msra.mxu0 0.0
    %1613 = vmatprep.subr.mxu0 0.0
    %1614 = vmatpush2.msra.mxu0 0.0
    %1615 = vmatprep.subr.mxu0 0.0
    %1616 = vmatpush2.msra.mxu0 0.0
    %1617 = vmatprep.subr.mxu0 0.0
    %1618 = vmatpush2.msra.mxu0 0.0
    %1619 = vmatprep.subr.mxu0 0.0
    %1620 = vmatpush2.msra.mxu0 0.0
    %1621 = vmatprep.mubr.f32.mxu0 0.0
    %1622 = vmatmul.mubr.f32.gmra.mxu0 %v1552
    %v1623 = vpop.f32.mrf.mxu0
    %v1624 = vadd.f32 %v1548, %v1623
    %v1625 = vpop.f32.mrf.mxu0
    %1626 = vdwg.mxu0
    %v1627 = vld [vmem:[#allocation4 + $0x480] sm:$0xf]
    %v1629 = vsel %vm1474, %v1627, 0
    %v1632 = vsel %vm1105, %v1469, 0
    %1634 = vmatprep.subr.mxu0 0.0
    %1635 = vmatpush1.msra.mxu0 0.0
    %1636 = vmatprep.subr.mxu0 0.0
    %1637 = vmatpush1.msra.mxu0 0.0
    %1638 = vmatprep.subr.mxu0 0.0
    %1639 = vmatpush1.msra.mxu0 0.0
    %1640 = vmatprep.subr.mxu0 0.0
    %1641 = vmatpush1.msra.mxu0 0.0
    %1642 = vmatprep.subr.mxu0 0.0
    %1643 = vmatpush1.msra.mxu0 0.0
    %1644 = vmatprep.subr.mxu0 0.0
    %1645 = vmatpush1.msra.mxu0 0.0
    %1646 = vmatprep.subr.mxu0 0.0
    %1647 = vmatpush1.msra.mxu0 0.0
    %1648 = vmatprep.subr.mxu0 0.0
    %1649 = vmatpush1.msra.mxu0 0.0
    %1650 = vmatprep.subr.mxu0 0.0
    %1651 = vmatpush1.msra.mxu0 0.0
    %1652 = vmatprep.subr.mxu0 0.0
    %1653 = vmatpush1.msra.mxu0 0.0
    %1654 = vmatprep.subr.mxu0 0.0
    %1655 = vmatpush1.msra.mxu0 0.0
    %1656 = vmatprep.subr.mxu0 0.0
    %1657 = vmatpush1.msra.mxu0 0.0
    %1658 = vmatprep.subr.mxu0 0.0
    %1659 = vmatpush1.msra.mxu0 0.0
    %1660 = vmatprep.subr.mxu0 0.0
    %1661 = vmatpush1.msra.mxu0 0.0
    %1662 = vmatprep.subr.mxu0 0.0
    %1663 = vmatpush1.msra.mxu0 0.0
    %1664 = vmatprep.subr.mxu0 0.0
    %1665 = vmatpush1.msra.mxu0 %v1632
    %1666 = vmatprep.subr.mxu0 0.0
    %1667 = vmatpush2.msra.mxu0 0.0
    %1668 = vmatprep.subr.mxu0 0.0
    %1669 = vmatpush2.msra.mxu0 0.0
    %1670 = vmatprep.subr.mxu0 0.0
    %1671 = vmatpush2.msra.mxu0 0.0
    %1672 = vmatprep.subr.mxu0 0.0
    %1673 = vmatpush2.msra.mxu0 0.0
    %1674 = vmatprep.subr.mxu0 0.0
    %1675 = vmatpush2.msra.mxu0 0.0
    %1676 = vmatprep.subr.mxu0 0.0
    %1677 = vmatpush2.msra.mxu0 0.0
    %1678 = vmatprep.subr.mxu0 0.0
    %1679 = vmatpush2.msra.mxu0 0.0
    %1680 = vmatprep.subr.mxu0 0.0
    %1681 = vmatpush2.msra.mxu0 0.0
    %1682 = vmatprep.subr.mxu0 0.0
    %1683 = vmatpush2.msra.mxu0 0.0
    %1684 = vmatprep.subr.mxu0 0.0
    %1685 = vmatpush2.msra.mxu0 0.0
    %1686 = vmatprep.subr.mxu0 0.0
    %1687 = vmatpush2.msra.mxu0 0.0
    %1688 = vmatprep.subr.mxu0 0.0
    %1689 = vmatpush2.msra.mxu0 0.0
    %1690 = vmatprep.subr.mxu0 0.0
    %1691 = vmatpush2.msra.mxu0 0.0
    %1692 = vmatprep.subr.mxu0 0.0
    %1693 = vmatpush2.msra.mxu0 0.0
    %1694 = vmatprep.subr.mxu0 0.0
    %1695 = vmatpush2.msra.mxu0 0.0
    %1696 = vmatprep.subr.mxu0 0.0
    %1697 = vmatpush2.msra.mxu0 0.0
    %1698 = vmatprep.mubr.f32.mxu0 0.0
    %1699 = vmatmul.mubr.f32.gmra.mxu0 %v1629
    %v1700 = vpop.f32.mrf.mxu0
    %v1701 = vadd.f32 0.0, %v1700
    %v1702 = vpop.f32.mrf.mxu0
    %1703 = vdwg.mxu0
    %v1704 = vadd.f32 %v1624, %v1701
    %v1705 = vld [vmem:[#allocation4 + $0x100] sm:$0xff]
    %v1706 = vld [vmem:[#allocation4 + $0x108] sm:$0xff]
    %v1707 = vld [vmem:[#allocation4 + $0x110] sm:$0xff]
    %v1708 = vld [vmem:[#allocation4 + $0x118] sm:$0xff]
    %v1709 = vld [vmem:[#allocation4 + $0x120] sm:$0xff]
    %v1710 = vld [vmem:[#allocation4 + $0x128] sm:$0xff]
    %v1711 = vld [vmem:[#allocation4 + $0x130] sm:$0xff]
    %v1712 = vld [vmem:[#allocation4 + $0x138] sm:$0xff]
    %v1713 = vld [vmem:[#allocation4 + $0x140] sm:$0xff]
    %v1714 = vld [vmem:[#allocation4 + $0x148] sm:$0xff]
    %v1715 = vld [vmem:[#allocation4 + $0x150] sm:$0xff]
    %v1716 = vld [vmem:[#allocation4 + $0x158] sm:$0xff]
    %v1717 = vld [vmem:[#allocation4 + $0x160] sm:$0xff]
    %v1718 = vld [vmem:[#allocation4 + $0x168] sm:$0xff]
    %v1719 = vld [vmem:[#allocation4 + $0x170] sm:$0xff]
    %v1720 = vld [vmem:[#allocation4 + $0x178] sm:$0xff]
    %v1721 = vld [vmem:[#allocation4 + $0x300] sm:$0xff]
    %v1722 = vld [vmem:[#allocation4 + $0x308] sm:$0xff]
    %v1723 = vld [vmem:[#allocation4 + $0x310] sm:$0xff]
    %v1724 = vld [vmem:[#allocation4 + $0x318] sm:$0xff]
    %v1725 = vld [vmem:[#allocation4 + $0x320] sm:$0xff]
    %v1726 = vld [vmem:[#allocation4 + $0x328] sm:$0xff]
    %v1727 = vld [vmem:[#allocation4 + $0x330] sm:$0xff]
    %v1728 = vld [vmem:[#allocation4 + $0x338] sm:$0xff]
    %v1729 = vld [vmem:[#allocation4 + $0x340] sm:$0xff]
    %v1730 = vld [vmem:[#allocation4 + $0x348] sm:$0xff]
    %v1731 = vld [vmem:[#allocation4 + $0x350] sm:$0xff]
    %v1732 = vld [vmem:[#allocation4 + $0x358] sm:$0xff]
    %v1733 = vld [vmem:[#allocation4 + $0x360] sm:$0xff]
    %v1734 = vld [vmem:[#allocation4 + $0x368] sm:$0xff]
    %v1735 = vld [vmem:[#allocation4 + $0x370] sm:$0xff]
    %v1736 = vld [vmem:[#allocation4 + $0x378] sm:$0xff]
    %v1737 = vsel %vm1105, %v1704, 0.0
    %v1738 = vrot.slane %v1737, 4
    %v1739 = vadd.f32 %v1737, %v1738
    %v1740 = vrot.slane %v1739, 2
    %v1741 = vadd.f32 %v1739, %v1740
    %v1742 = vrot.slane %v1741, 1
    %v1743 = vadd.f32 %v1741, %v1742
    %v1744 = vmul.f32 %v1704, %v1704
    %v1745 = vsel %vm1105, %v1744, 0.0
    %v1746 = vrot.slane %v1745, 4
    %v1747 = vadd.f32 %v1745, %v1746
    %v1748 = vrot.slane %v1747, 2
    %v1749 = vadd.f32 %v1747, %v1748
    %v1750 = vrot.slane %v1749, 1
    %v1751 = vadd.f32 %v1749, %v1750
    %v1752 = vsel %vm497, %v1743, %v1751
    %1753 = vmatprep.subr.mxu0 0.0
    %1754 = vmatpush1.msra.mxu0 %v1720
    %1755 = vmatprep.subr.mxu0 0.0
    %1756 = vmatpush1.msra.mxu0 %v1719
    %1757 = vmatprep.subr.mxu0 0.0
    %1758 = vmatpush1.msra.mxu0 %v1718
    %1759 = vmatprep.subr.mxu0 0.0
    %1760 = vmatpush1.msra.mxu0 %v1717
    %1761 = vmatprep.subr.mxu0 0.0
    %1762 = vmatpush1.msra.mxu0 %v1716
    %1763 = vmatprep.subr.mxu0 0.0
    %1764 = vmatpush1.msra.mxu0 %v1715
    %1765 = vmatprep.subr.mxu0 0.0
    %1766 = vmatpush1.msra.mxu0 %v1714
    %1767 = vmatprep.subr.mxu0 0.0
    %1768 = vmatpush1.msra.mxu0 %v1713
    %1769 = vmatprep.subr.mxu0 0.0
    %1770 = vmatpush1.msra.mxu0 %v1712
    %1771 = vmatprep.subr.mxu0 0.0
    %1772 = vmatpush1.msra.mxu0 %v1711
    %1773 = vmatprep.subr.mxu0 0.0
    %1774 = vmatpush1.msra.mxu0 %v1710
    %1775 = vmatprep.subr.mxu0 0.0
    %1776 = vmatpush1.msra.mxu0 %v1709
    %1777 = vmatprep.subr.mxu0 0.0
    %1778 = vmatpush1.msra.mxu0 %v1708
    %1779 = vmatprep.subr.mxu0 0.0
    %1780 = vmatpush1.msra.mxu0 %v1707
    %1781 = vmatprep.subr.mxu0 0.0
    %1782 = vmatpush1.msra.mxu0 %v1706
    %1783 = vmatprep.subr.mxu0 0.0
    %1784 = vmatpush1.msra.mxu0 %v1705
    %1785 = vmatprep.subr.mxu0 0.0
    %1786 = vmatpush2.msra.mxu0 0.0
    %1787 = vmatprep.subr.mxu0 0.0
    %1788 = vmatpush2.msra.mxu0 0.0
    %1789 = vmatprep.subr.mxu0 0.0
    %1790 = vmatpush2.msra.mxu0 0.0
    %1791 = vmatprep.subr.mxu0 0.0
    %1792 = vmatpush2.msra.mxu0 0.0
    %1793 = vmatprep.subr.mxu0 0.0
    %1794 = vmatpush2.msra.mxu0 0.0
    %1795 = vmatprep.subr.mxu0 0.0
    %1796 = vmatpush2.msra.mxu0 0.0
    %1797 = vmatprep.subr.mxu0 0.0
    %1798 = vmatpush2.msra.mxu0 0.0
    %1799 = vmatprep.subr.mxu0 0.0
    %1800 = vmatpush2.msra.mxu0 0.0
    %1801 = vmatprep.subr.mxu0 0.0
    %1802 = vmatpush2.msra.mxu0 0.0
    %1803 = vmatprep.subr.mxu0 0.0
    %1804 = vmatpush2.msra.mxu0 0.0
    %1805 = vmatprep.subr.mxu0 0.0
    %1806 = vmatpush2.msra.mxu0 0.0
    %1807 = vmatprep.subr.mxu0 0.0
    %1808 = vmatpush2.msra.mxu0 0.0
    %1809 = vmatprep.subr.mxu0 0.0
    %1810 = vmatpush2.msra.mxu0 0.0
    %1811 = vmatprep.subr.mxu0 0.0
    %1812 = vmatpush2.msra.mxu0 0.0
    %1813 = vmatprep.subr.mxu0 0.0
    %1814 = vmatpush2.msra.mxu0 0.0
    %1815 = vmatprep.subr.mxu0 0.0
    %1816 = vmatpush2.msra.mxu0 0.0
    %1817 = vmatprep.mubr.f32.mxu0 0.0
    %1818 = vmatmul.mubr.f32.gmra.mxu0 %v1752
    %v1819 = vpop.f32.mrf.mxu0
    %v1820 = vadd.f32 0.0, %v1819
    %v1821 = vpop.f32.mrf.mxu0
    %1822 = vdwg.mxu0
    %v1823 = vmul.f32 %v1820, 0.0625
    %v1824 = vmul.f32 %v1823, %v1823
    %v1826 = vrot.slane %v1824, 7
    %v1828 = vsub.f32 %v1823, %v1826
    %v1829 = vmax.f32 %v1828, 0.0
    %v1830 = vadd.f32 %v1829, 1e-05
    %v1831 = vrsqrt.pop %v1830
    %v1832 = vsel %vm497, %v1823, %v1831
    %1833 = vmatprep.subr.mxu0 0.0
    %1834 = vmatpush1.msra.mxu0 %v1736
    %1835 = vmatprep.subr.mxu0 0.0
    %1836 = vmatpush1.msra.mxu0 %v1735
    %1837 = vmatprep.subr.mxu0 0.0
    %1838 = vmatpush1.msra.mxu0 %v1734
    %1839 = vmatprep.subr.mxu0 0.0
    %1840 = vmatpush1.msra.mxu0 %v1733
    %1841 = vmatprep.subr.mxu0 0.0
    %1842 = vmatpush1.msra.mxu0 %v1732
    %1843 = vmatprep.subr.mxu0 0.0
    %1844 = vmatpush1.msra.mxu0 %v1731
    %1845 = vmatprep.subr.mxu0 0.0
    %1846 = vmatpush1.msra.mxu0 %v1730
    %1847 = vmatprep.subr.mxu0 0.0
    %1848 = vmatpush1.msra.mxu0 %v1729
    %1849 = vmatprep.subr.mxu0 0.0
    %1850 = vmatpush1.msra.mxu0 %v1728
    %1851 = vmatprep.subr.mxu0 0.0
    %1852 = vmatpush1.msra.mxu0 %v1727
    %1853 = vmatprep.subr.mxu0 0.0
    %1854 = vmatpush1.msra.mxu0 %v1726
    %1855 = vmatprep.subr.mxu0 0.0
    %1856 = vmatpush1.msra.mxu0 %v1725
    %1857 = vmatprep.subr.mxu0 0.0
    %1858 = vmatpush1.msra.mxu0 %v1724
    %1859 = vmatprep.subr.mxu0 0.0
    %1860 = vmatpush1.msra.mxu0 %v1723
    %1861 = vmatprep.subr.mxu0 0.0
    %1862 = vmatpush1.msra.mxu0 %v1722
    %1863 = vmatprep.subr.mxu0 0.0
    %1864 = vmatpush1.msra.mxu0 %v1721
    %1865 = vmatprep.subr.mxu0 0.0
    %1866 = vmatpush2.msra.mxu0 0.0
    %1867 = vmatprep.subr.mxu0 0.0
    %1868 = vmatpush2.msra.mxu0 0.0
    %1869 = vmatprep.subr.mxu0 0.0
    %1870 = vmatpush2.msra.mxu0 0.0
    %1871 = vmatprep.subr.mxu0 0.0
    %1872 = vmatpush2.msra.mxu0 0.0
    %1873 = vmatprep.subr.mxu0 0.0
    %1874 = vmatpush2.msra.mxu0 0.0
    %1875 = vmatprep.subr.mxu0 0.0
    %1876 = vmatpush2.msra.mxu0 0.0
    %1877 = vmatprep.subr.mxu0 0.0
    %1878 = vmatpush2.msra.mxu0 0.0
    %1879 = vmatprep.subr.mxu0 0.0
    %1880 = vmatpush2.msra.mxu0 0.0
    %1881 = vmatprep.subr.mxu0 0.0
    %1882 = vmatpush2.msra.mxu0 0.0
    %1883 = vmatprep.subr.mxu0 0.0
    %1884 = vmatpush2.msra.mxu0 0.0
    %1885 = vmatprep.subr.mxu0 0.0
    %1886 = vmatpush2.msra.mxu0 0.0
    %1887 = vmatprep.subr.mxu0 0.0
    %1888 = vmatpush2.msra.mxu0 0.0
    %1889 = vmatprep.subr.mxu0 0.0
    %1890 = vmatpush2.msra.mxu0 0.0
    %1891 = vmatprep.subr.mxu0 0.0
    %1892 = vmatpush2.msra.mxu0 0.0
    %1893 = vmatprep.subr.mxu0 0.0
    %1894 = vmatpush2.msra.mxu0 0.0
    %1895 = vmatprep.subr.mxu0 0.0
    %1896 = vmatpush2.msra.mxu0 0.0
    %1897 = vmatprep.mubr.f32.mxu0 0.0
    %1898 = vmatmul.mubr.f32.gmra.mxu0 %v1832
    %v1899 = vpop.f32.mrf.mxu0
    %v1900 = vadd.f32 0.0, %v1899
    %v1901 = vpop.f32.mrf.mxu0
    %1902 = vdwg.mxu0
    %v1903 = vlaneseq
    %v1904 = vshrl.u32 %v1903, 7
    %v1905 = vsub.s32 0, %v1904
    %v1906 = vrot.slane %v1900, %v1905
    %v1907 = vsub.f32 %v1704, %v1906
    %v1908 = vlaneseq
    %v1909 = vshrl.u32 %v1908, 7
    %v1910 = vsub.s32 1, %v1909
    %v1911 = vrot.slane %v1900, %v1910
    %v1912 = vmul.f32 %v1907, %v1911
    %v1913 = vmax.f32 %v1912, 0.0
    %v1914 = vld [vmem:[#allocation2 + $0x3c0] sm:$0xff]
    %v1915 = vld [vmem:[#allocation2 + $0x3c8] sm:$0xff]
    %v1916 = vld [vmem:[#allocation2 + $0x3d0] sm:$0xff]
    %v1917 = vld [vmem:[#allocation2 + $0x3d8] sm:$0xff]
    %v1918 = vld [vmem:[#allocation2 + $0x3e0] sm:$0xff]
    %v1919 = vld [vmem:[#allocation2 + $0x3e8] sm:$0xff]
    %v1920 = vld [vmem:[#allocation2 + $0x3f0] sm:$0xff]
    %v1921 = vld [vmem:[#allocation2 + $0x3f8] sm:$0xff]
    %v1922 = vld [vmem:[#allocation2 + $0x400] sm:$0xff]
    %v1923 = vld [vmem:[#allocation2 + $0x408] sm:$0xff]
    %v1924 = vld [vmem:[#allocation2 + $0x410] sm:$0xff]
    %v1925 = vld [vmem:[#allocation2 + $0x418] sm:$0xff]
    %v1926 = vld [vmem:[#allocation2 + $0x420] sm:$0xff]
    %v1927 = vld [vmem:[#allocation2 + $0x428] sm:$0xff]
    %v1928 = vld [vmem:[#allocation2 + $0x430] sm:$0xff]
    %v1929 = vld [vmem:[#allocation2 + $0x438] sm:$0xff]
    %v1930 = vld [vmem:[#allocation2 + $0x440] sm:$0xff]
    %v1931 = vld [vmem:[#allocation2 + $0x448] sm:$0xff]
    %v1932 = vld [vmem:[#allocation2 + $0x450] sm:$0xff]
    %v1933 = vld [vmem:[#allocation2 + $0x458] sm:$0xff]
    %v1934 = vld [vmem:[#allocation2 + $0x460] sm:$0xff]
    %v1935 = vld [vmem:[#allocation2 + $0x468] sm:$0xff]
    %v1936 = vld [vmem:[#allocation2 + $0x470] sm:$0xff]
    %v1937 = vld [vmem:[#allocation2 + $0x478] sm:$0xff]
    %v1938 = vld [vmem:[#allocation2 + $0x480] sm:$0xff]
    %v1939 = vld [vmem:[#allocation2 + $0x488] sm:$0xff]
    %v1940 = vld [vmem:[#allocation2 + $0x490] sm:$0xff]
    %v1941 = vld [vmem:[#allocation2 + $0x498] sm:$0xff]
    %v1942 = vld [vmem:[#allocation2 + $0x4a0] sm:$0xff]
    %v1943 = vld [vmem:[#allocation2 + $0x4a8] sm:$0xff]
    %v1944 = vld [vmem:[#allocation2 + $0x4b0] sm:$0xff]
    %v1945 = vld [vmem:[#allocation2 + $0x4b8] sm:$0xff]
    %v1946 = vld [vmem:[#allocation2 + $0x4c0] sm:$0xff]
    %v1947 = vld [vmem:[#allocation2 + $0x4c8] sm:$0xff]
    %v1948 = vld [vmem:[#allocation2 + $0x4d0] sm:$0xff]
    %v1949 = vld [vmem:[#allocation2 + $0x4d8] sm:$0xff]
    %v1950 = vld [vmem:[#allocation2 + $0x4e0] sm:$0xff]
    %v1951 = vld [vmem:[#allocation2 + $0x4e8] sm:$0xff]
    %v1952 = vld [vmem:[#allocation2 + $0x4f0] sm:$0xff]
    %v1953 = vld [vmem:[#allocation2 + $0x4f8] sm:$0xff]
    %v1954 = vld [vmem:[#allocation2 + $0x500] sm:$0xff]
    %v1955 = vld [vmem:[#allocation2 + $0x508] sm:$0xff]
    %v1956 = vld [vmem:[#allocation2 + $0x510] sm:$0xff]
    %v1957 = vld [vmem:[#allocation2 + $0x518] sm:$0xff]
    %v1958 = vld [vmem:[#allocation2 + $0x520] sm:$0xff]
    %v1959 = vld [vmem:[#allocation2 + $0x528] sm:$0xff]
    %v1960 = vld [vmem:[#allocation2 + $0x530] sm:$0xff]
    %v1961 = vld [vmem:[#allocation2 + $0x538] sm:$0xff]
    %v1962 = vld [vmem:[#allocation2 + $0x540] sm:$0xff]
    %v1963 = vld [vmem:[#allocation2 + $0x548] sm:$0xff]
    %v1964 = vld [vmem:[#allocation2 + $0x550] sm:$0xff]
    %v1965 = vld [vmem:[#allocation2 + $0x558] sm:$0xff]
    %v1966 = vld [vmem:[#allocation2 + $0x560] sm:$0xff]
    %v1967 = vld [vmem:[#allocation2 + $0x568] sm:$0xff]
    %v1968 = vld [vmem:[#allocation2 + $0x570] sm:$0xff]
    %v1969 = vld [vmem:[#allocation2 + $0x578] sm:$0xff]
    %v1970 = vld [vmem:[#allocation2 + $0x580] sm:$0xff]
    %v1971 = vld [vmem:[#allocation2 + $0x588] sm:$0xff]
    %v1972 = vld [vmem:[#allocation2 + $0x590] sm:$0xff]
    %v1973 = vld [vmem:[#allocation2 + $0x598] sm:$0xff]
    %v1974 = vld [vmem:[#allocation2 + $0x5a0] sm:$0xff]
    %v1975 = vld [vmem:[#allocation2 + $0x5a8] sm:$0xff]
    %v1976 = vld [vmem:[#allocation2 + $0x5b0] sm:$0xff]
    %v1977 = vld [vmem:[#allocation2 + $0x5b8] sm:$0xff]
    %v1978 = vld [vmem:[#allocation2 + $0x5c0] sm:$0xff]
    %v1979 = vld [vmem:[#allocation2 + $0x5c8] sm:$0xff]
    %v1980 = vld [vmem:[#allocation2 + $0x5d0] sm:$0xff]
    %v1981 = vld [vmem:[#allocation2 + $0x5d8] sm:$0xff]
    %v1982 = vld [vmem:[#allocation2 + $0x5e0] sm:$0xff]
    %v1983 = vld [vmem:[#allocation2 + $0x5e8] sm:$0xff]
    %v1984 = vld [vmem:[#allocation2 + $0x5f0] sm:$0xff]
    %v1985 = vld [vmem:[#allocation2 + $0x5f8] sm:$0xff]
    %v1986 = vld [vmem:[#allocation2 + $0x600] sm:$0xff]
    %v1987 = vld [vmem:[#allocation2 + $0x608] sm:$0xff]
    %v1988 = vld [vmem:[#allocation2 + $0x610] sm:$0xff]
    %v1989 = vld [vmem:[#allocation2 + $0x618] sm:$0xff]
    %v1990 = vld [vmem:[#allocation2 + $0x620] sm:$0xff]
    %v1991 = vld [vmem:[#allocation2 + $0x628] sm:$0xff]
    %v1992 = vld [vmem:[#allocation2 + $0x630] sm:$0xff]
    %v1993 = vld [vmem:[#allocation2 + $0x638] sm:$0xff]
    %v1994 = vld [vmem:[#allocation2 + $0x640] sm:$0xff]
    %v1995 = vld [vmem:[#allocation2 + $0x648] sm:$0xff]
    %v1996 = vld [vmem:[#allocation2 + $0x650] sm:$0xff]
    %v1997 = vld [vmem:[#allocation2 + $0x658] sm:$0xff]
    %v1998 = vld [vmem:[#allocation2 + $0x660] sm:$0xff]
    %v1999 = vld [vmem:[#allocation2 + $0x668] sm:$0xff]
    %v2000 = vld [vmem:[#allocation2 + $0x670] sm:$0xff]
    %v2001 = vld [vmem:[#allocation2 + $0x678] sm:$0xff]
    %v2002 = vld [vmem:[#allocation2 + $0x680] sm:$0xff]
    %v2003 = vld [vmem:[#allocation2 + $0x688] sm:$0xff]
    %v2004 = vld [vmem:[#allocation2 + $0x690] sm:$0xff]
    %v2005 = vld [vmem:[#allocation2 + $0x698] sm:$0xff]
    %v2006 = vld [vmem:[#allocation2 + $0x6a0] sm:$0xff]
    %v2007 = vld [vmem:[#allocation2 + $0x6a8] sm:$0xff]
    %v2008 = vld [vmem:[#allocation2 + $0x6b0] sm:$0xff]
    %v2009 = vld [vmem:[#allocation2 + $0x6b8] sm:$0xff]
    %2010 = vmatprep.subr.mxu0 %v2008
    %2011 = vmatpush1.msra.mxu0 %v2007
    %2012 = vmatprep.subr.mxu0 %v2005
    %2013 = vmatpush1.msra.mxu0 %v2004
    %2014 = vmatprep.subr.mxu0 %v2002
    %2015 = vmatpush1.msra.mxu0 %v2001
    %2016 = vmatprep.subr.mxu0 %v1999
    %2017 = vmatpush1.msra.mxu0 %v1998
    %2018 = vmatprep.subr.mxu0 %v1996
    %2019 = vmatpush1.msra.mxu0 %v1995
    %2020 = vmatprep.subr.mxu0 %v1993
    %2021 = vmatpush1.msra.mxu0 %v1992
    %2022 = vmatprep.subr.mxu0 %v1990
    %2023 = vmatpush1.msra.mxu0 %v1989
    %2024 = vmatprep.subr.mxu0 %v1987
    %2025 = vmatpush1.msra.mxu0 %v1986
    %2026 = vmatprep.subr.mxu0 %v1984
    %2027 = vmatpush1.msra.mxu0 %v1983
    %2028 = vmatprep.subr.mxu0 %v1981
    %2029 = vmatpush1.msra.mxu0 %v1980
    %2030 = vmatprep.subr.mxu0 %v1978
    %2031 = vmatpush1.msra.mxu0 %v1977
    %2032 = vmatprep.subr.mxu0 %v1975
    %2033 = vmatpush1.msra.mxu0 %v1974
    %2034 = vmatprep.subr.mxu0 %v1972
    %2035 = vmatpush1.msra.mxu0 %v1971
    %2036 = vmatprep.subr.mxu0 %v1969
    %2037 = vmatpush1.msra.mxu0 %v1968
    %2038 = vmatprep.subr.mxu0 %v1966
    %2039 = vmatpush1.msra.mxu0 %v1965
    %2040 = vmatprep.subr.mxu0 %v1963
    %2041 = vmatpush1.msra.mxu0 %v1962
    %2042 = vmatprep.subr.mxu0 0.0
    %2043 = vmatpush2.msra.mxu0 0.0
    %2044 = vmatprep.subr.mxu0 0.0
    %2045 = vmatpush2.msra.mxu0 0.0
    %2046 = vmatprep.subr.mxu0 0.0
    %2047 = vmatpush2.msra.mxu0 0.0
    %2048 = vmatprep.subr.mxu0 0.0
    %2049 = vmatpush2.msra.mxu0 0.0
    %2050 = vmatprep.subr.mxu0 0.0
    %2051 = vmatpush2.msra.mxu0 0.0
    %2052 = vmatprep.subr.mxu0 0.0
    %2053 = vmatpush2.msra.mxu0 0.0
    %2054 = vmatprep.subr.mxu0 0.0
    %2055 = vmatpush2.msra.mxu0 0.0
    %2056 = vmatprep.subr.mxu0 0.0
    %2057 = vmatpush2.msra.mxu0 0.0
    %2058 = vmatprep.subr.mxu0 0.0
    %2059 = vmatpush2.msra.mxu0 0.0
    %2060 = vmatprep.subr.mxu0 0.0
    %2061 = vmatpush2.msra.mxu0 0.0
    %2062 = vmatprep.subr.mxu0 0.0
    %2063 = vmatpush2.msra.mxu0 0.0
    %2064 = vmatprep.subr.mxu0 0.0
    %2065 = vmatpush2.msra.mxu0 0.0
    %2066 = vmatprep.subr.mxu0 0.0
    %2067 = vmatpush2.msra.mxu0 0.0
    %2068 = vmatprep.subr.mxu0 0.0
    %2069 = vmatpush2.msra.mxu0 0.0
    %2070 = vmatprep.subr.mxu0 0.0
    %2071 = vmatpush2.msra.mxu0 0.0
    %2072 = vmatprep.subr.mxu0 0.0
    %2073 = vmatpush2.msra.mxu0 0.0
    %2074 = vmatprep.mubr.f32.mxu0 0.0
    %2075 = vmatmul.mubr.f32.gmra.mxu0 %v1913
    %v2076 = vpop.f32.mrf.mxu0
    %v2077 = vadd.f32 0.0, %v2076
    %v2078 = vpop.f32.mrf.mxu0
    %v2079 = vadd.f32 0.0, %v2078
    %2080 = vdwg.mxu0
    %2081 = vmatprep.subr.mxu0 0.0
    %2082 = vmatpush1.msra.mxu0 %v2009
    %2083 = vmatprep.subr.mxu0 0.0
    %2084 = vmatpush1.msra.mxu0 %v2006
    %2085 = vmatprep.subr.mxu0 0.0
    %2086 = vmatpush1.msra.mxu0 %v2003
    %2087 = vmatprep.subr.mxu0 0.0
    %2088 = vmatpush1.msra.mxu0 %v2000
    %2089 = vmatprep.subr.mxu0 0.0
    %2090 = vmatpush1.msra.mxu0 %v1997
    %2091 = vmatprep.subr.mxu0 0.0
    %2092 = vmatpush1.msra.mxu0 %v1994
    %2093 = vmatprep.subr.mxu0 0.0
    %2094 = vmatpush1.msra.mxu0 %v1991
    %2095 = vmatprep.subr.mxu0 0.0
    %2096 = vmatpush1.msra.mxu0 %v1988
    %2097 = vmatprep.subr.mxu0 0.0
    %2098 = vmatpush1.msra.mxu0 %v1985
    %2099 = vmatprep.subr.mxu0 0.0
    %2100 = vmatpush1.msra.mxu0 %v1982
    %2101 = vmatprep.subr.mxu0 0.0
    %2102 = vmatpush1.msra.mxu0 %v1979
    %2103 = vmatprep.subr.mxu0 0.0
    %2104 = vmatpush1.msra.mxu0 %v1976
    %2105 = vmatprep.subr.mxu0 0.0
    %2106 = vmatpush1.msra.mxu0 %v1973
    %2107 = vmatprep.subr.mxu0 0.0
    %2108 = vmatpush1.msra.mxu0 %v1970
    %2109 = vmatprep.subr.mxu0 0.0
    %2110 = vmatpush1.msra.mxu0 %v1967
    %2111 = vmatprep.subr.mxu0 0.0
    %2112 = vmatpush1.msra.mxu0 %v1964
    %2113 = vmatprep.subr.mxu0 0.0
    %2114 = vmatpush2.msra.mxu0 0.0
    %2115 = vmatprep.subr.mxu0 0.0
    %2116 = vmatpush2.msra.mxu0 0.0
    %2117 = vmatprep.subr.mxu0 0.0
    %2118 = vmatpush2.msra.mxu0 0.0
    %2119 = vmatprep.subr.mxu0 0.0
    %2120 = vmatpush2.msra.mxu0 0.0
    %2121 = vmatprep.subr.mxu0 0.0
    %2122 = vmatpush2.msra.mxu0 0.0
    %2123 = vmatprep.subr.mxu0 0.0
    %2124 = vmatpush2.msra.mxu0 0.0
    %2125 = vmatprep.subr.mxu0 0.0
    %2126 = vmatpush2.msra.mxu0 0.0
    %2127 = vmatprep.subr.mxu0 0.0
    %2128 = vmatpush2.msra.mxu0 0.0
    %2129 = vmatprep.subr.mxu0 0.0
    %2130 = vmatpush2.msra.mxu0 0.0
    %2131 = vmatprep.subr.mxu0 0.0
    %2132 = vmatpush2.msra.mxu0 0.0
    %2133 = vmatprep.subr.mxu0 0.0
    %2134 = vmatpush2.msra.mxu0 0.0
    %2135 = vmatprep.subr.mxu0 0.0
    %2136 = vmatpush2.msra.mxu0 0.0
    %2137 = vmatprep.subr.mxu0 0.0
    %2138 = vmatpush2.msra.mxu0 0.0
    %2139 = vmatprep.subr.mxu0 0.0
    %2140 = vmatpush2.msra.mxu0 0.0
    %2141 = vmatprep.subr.mxu0 0.0
    %2142 = vmatpush2.msra.mxu0 0.0
    %2143 = vmatprep.subr.mxu0 0.0
    %2144 = vmatpush2.msra.mxu0 0.0
    %2145 = vmatprep.mubr.f32.mxu0 0.0
    %2146 = vmatmul.mubr.f32.gmra.mxu0 %v1913
    %v2147 = vpop.f32.mrf.mxu0
    %v2148 = vadd.f32 0.0, %v2147
    %v2149 = vpop.f32.mrf.mxu0
    %2150 = vdwg.mxu0
    %2151 = vmatprep.subr.mxu0 %v1960
    %2152 = vmatpush1.msra.mxu0 %v1959
    %2153 = vmatprep.subr.mxu0 %v1957
    %2154 = vmatpush1.msra.mxu0 %v1956
    %2155 = vmatprep.subr.mxu0 %v1954
    %2156 = vmatpush1.msra.mxu0 %v1953
    %2157 = vmatprep.subr.mxu0 %v1951
    %2158 = vmatpush1.msra.mxu0 %v1950
    %2159 = vmatprep.subr.mxu0 %v1948
    %2160 = vmatpush1.msra.mxu0 %v1947
    %2161 = vmatprep.subr.mxu0 %v1945
    %2162 = vmatpush1.msra.mxu0 %v1944
    %2163 = vmatprep.subr.mxu0 %v1942
    %2164 = vmatpush1.msra.mxu0 %v1941
    %2165 = vmatprep.subr.mxu0 %v1939
    %2166 = vmatpush1.msra.mxu0 %v1938
    %2167 = vmatprep.subr.mxu0 %v1936
    %2168 = vmatpush1.msra.mxu0 %v1935
    %2169 = vmatprep.subr.mxu0 %v1933
    %2170 = vmatpush1.msra.mxu0 %v1932
    %2171 = vmatprep.subr.mxu0 %v1930
    %2172 = vmatpush1.msra.mxu0 %v1929
    %2173 = vmatprep.subr.mxu0 %v1927
    %2174 = vmatpush1.msra.mxu0 %v1926
    %2175 = vmatprep.subr.mxu0 %v1924
    %2176 = vmatpush1.msra.mxu0 %v1923
    %2177 = vmatprep.subr.mxu0 %v1921
    %2178 = vmatpush1.msra.mxu0 %v1920
    %2179 = vmatprep.subr.mxu0 %v1918
    %2180 = vmatpush1.msra.mxu0 %v1917
    %2181 = vmatprep.subr.mxu0 %v1915
    %2182 = vmatpush1.msra.mxu0 %v1914
    %2183 = vmatprep.subr.mxu0 0.0
    %2184 = vmatpush2.msra.mxu0 0.0
    %2185 = vmatprep.subr.mxu0 0.0
    %2186 = vmatpush2.msra.mxu0 0.0
    %2187 = vmatprep.subr.mxu0 0.0
    %2188 = vmatpush2.msra.mxu0 0.0
    %2189 = vmatprep.subr.mxu0 0.0
    %2190 = vmatpush2.msra.mxu0 0.0
    %2191 = vmatprep.subr.mxu0 0.0
    %2192 = vmatpush2.msra.mxu0 0.0
    %2193 = vmatprep.subr.mxu0 0.0
    %2194 = vmatpush2.msra.mxu0 0.0
    %2195 = vmatprep.subr.mxu0 0.0
    %2196 = vmatpush2.msra.mxu0 0.0
    %2197 = vmatprep.subr.mxu0 0.0
    %2198 = vmatpush2.msra.mxu0 0.0
    %2199 = vmatprep.subr.mxu0 0.0
    %2200 = vmatpush2.msra.mxu0 0.0
    %2201 = vmatprep.subr.mxu0 0.0
    %2202 = vmatpush2.msra.mxu0 0.0
    %2203 = vmatprep.subr.mxu0 0.0
    %2204 = vmatpush2.msra.mxu0 0.0
    %2205 = vmatprep.subr.mxu0 0.0
    %2206 = vmatpush2.msra.mxu0 0.0
    %2207 = vmatprep.subr.mxu0 0.0
    %2208 = vmatpush2.msra.mxu0 0.0
    %2209 = vmatprep.subr.mxu0 0.0
    %2210 = vmatpush2.msra.mxu0 0.0
    %2211 = vmatprep.subr.mxu0 0.0
    %2212 = vmatpush2.msra.mxu0 0.0
    %2213 = vmatprep.subr.mxu0 0.0
    %2214 = vmatpush2.msra.mxu0 0.0
    %2215 = vmatprep.mubr.f32.mxu0 0.0
    %2216 = vmatmul.mubr.f32.gmra.mxu0 %v1282
    %v2217 = vpop.f32.mrf.mxu0
    %v2218 = vadd.f32 %v2077, %v2217
    %v2219 = vpop.f32.mrf.mxu0
    %v2220 = vadd.f32 %v2079, %v2219
    %2221 = vdwg.mxu0
    %2222 = vmatprep.subr.mxu0 0.0
    %2223 = vmatpush1.msra.mxu0 %v1961
    %2224 = vmatprep.subr.mxu0 0.0
    %2225 = vmatpush1.msra.mxu0 %v1958
    %2226 = vmatprep.subr.mxu0 0.0
    %2227 = vmatpush1.msra.mxu0 %v1955
    %2228 = vmatprep.subr.mxu0 0.0
    %2229 = vmatpush1.msra.mxu0 %v1952
    %2230 = vmatprep.subr.mxu0 0.0
    %2231 = vmatpush1.msra.mxu0 %v1949
    %2232 = vmatprep.subr.mxu0 0.0
    %2233 = vmatpush1.msra.mxu0 %v1946
    %2234 = vmatprep.subr.mxu0 0.0
    %2235 = vmatpush1.msra.mxu0 %v1943
    %2236 = vmatprep.subr.mxu0 0.0
    %2237 = vmatpush1.msra.mxu0 %v1940
    %2238 = vmatprep.subr.mxu0 0.0
    %2239 = vmatpush1.msra.mxu0 %v1937
    %2240 = vmatprep.subr.mxu0 0.0
    %2241 = vmatpush1.msra.mxu0 %v1934
    %2242 = vmatprep.subr.mxu0 0.0
    %2243 = vmatpush1.msra.mxu0 %v1931
    %2244 = vmatprep.subr.mxu0 0.0
    %2245 = vmatpush1.msra.mxu0 %v1928
    %2246 = vmatprep.subr.mxu0 0.0
    %2247 = vmatpush1.msra.mxu0 %v1925
    %2248 = vmatprep.subr.mxu0 0.0
    %2249 = vmatpush1.msra.mxu0 %v1922
    %2250 = vmatprep.subr.mxu0 0.0
    %2251 = vmatpush1.msra.mxu0 %v1919
    %2252 = vmatprep.subr.mxu0 0.0
    %2253 = vmatpush1.msra.mxu0 %v1916
    %2254 = vmatprep.subr.mxu0 0.0
    %2255 = vmatpush2.msra.mxu0 0.0
    %2256 = vmatprep.subr.mxu0 0.0
    %2257 = vmatpush2.msra.mxu0 0.0
    %2258 = vmatprep.subr.mxu0 0.0
    %2259 = vmatpush2.msra.mxu0 0.0
    %2260 = vmatprep.subr.mxu0 0.0
    %2261 = vmatpush2.msra.mxu0 0.0
    %2262 = vmatprep.subr.mxu0 0.0
    %2263 = vmatpush2.msra.mxu0 0.0
    %2264 = vmatprep.subr.mxu0 0.0
    %2265 = vmatpush2.msra.mxu0 0.0
    %2266 = vmatprep.subr.mxu0 0.0
    %2267 = vmatpush2.msra.mxu0 0.0
    %2268 = vmatprep.subr.mxu0 0.0
    %2269 = vmatpush2.msra.mxu0 0.0
    %2270 = vmatprep.subr.mxu0 0.0
    %2271 = vmatpush2.msra.mxu0 0.0
    %2272 = vmatprep.subr.mxu0 0.0
    %2273 = vmatpush2.msra.mxu0 0.0
    %2274 = vmatprep.subr.mxu0 0.0
    %2275 = vmatpush2.msra.mxu0 0.0
    %2276 = vmatprep.subr.mxu0 0.0
    %2277 = vmatpush2.msra.mxu0 0.0
    %2278 = vmatprep.subr.mxu0 0.0
    %2279 = vmatpush2.msra.mxu0 0.0
    %2280 = vmatprep.subr.mxu0 0.0
    %2281 = vmatpush2.msra.mxu0 0.0
    %2282 = vmatprep.subr.mxu0 0.0
    %2283 = vmatpush2.msra.mxu0 0.0
    %2284 = vmatprep.subr.mxu0 0.0
    %2285 = vmatpush2.msra.mxu0 0.0
    %2286 = vmatprep.mubr.f32.mxu0 0.0
    %2287 = vmatmul.mubr.f32.gmra.mxu0 %v1282
    %v2288 = vpop.f32.mrf.mxu0
    %v2289 = vadd.f32 %v2148, %v2288
    %v2290 = vpop.f32.mrf.mxu0
    %2291 = vdwg.mxu0
    %v2292 = vld [vmem:[#allocation4 + $0x490] sm:$0xff]
    %v2293 = vld [vmem:[#allocation4 + $0x4a0] sm:$0xff]
    %v2295 = vsel %vm1474, %v2293, 0
    %v2298 = vsel %vm1105, %v2220, 0
    %2300 = vmatprep.subr.mxu0 0.0
    %2301 = vmatpush1.msra.mxu0 0.0
    %2302 = vmatprep.subr.mxu0 0.0
    %2303 = vmatpush1.msra.mxu0 0.0
    %2304 = vmatprep.subr.mxu0 0.0
    %2305 = vmatpush1.msra.mxu0 0.0
    %2306 = vmatprep.subr.mxu0 0.0
    %2307 = vmatpush1.msra.mxu0 0.0
    %2308 = vmatprep.subr.mxu0 0.0
    %2309 = vmatpush1.msra.mxu0 0.0
    %2310 = vmatprep.subr.mxu0 0.0
    %2311 = vmatpush1.msra.mxu0 0.0
    %2312 = vmatprep.subr.mxu0 0.0
    %2313 = vmatpush1.msra.mxu0 0.0
    %2314 = vmatprep.subr.mxu0 0.0
    %2315 = vmatpush1.msra.mxu0 0.0
    %2316 = vmatprep.subr.mxu0 0.0
    %2317 = vmatpush1.msra.mxu0 0.0
    %2318 = vmatprep.subr.mxu0 0.0
    %2319 = vmatpush1.msra.mxu0 0.0
    %2320 = vmatprep.subr.mxu0 0.0
    %2321 = vmatpush1.msra.mxu0 0.0
    %2322 = vmatprep.subr.mxu0 0.0
    %2323 = vmatpush1.msra.mxu0 0.0
    %2324 = vmatprep.subr.mxu0 0.0
    %2325 = vmatpush1.msra.mxu0 0.0
    %2326 = vmatprep.subr.mxu0 0.0
    %2327 = vmatpush1.msra.mxu0 0.0
    %2328 = vmatprep.subr.mxu0 0.0
    %2329 = vmatpush1.msra.mxu0 0.0
    %2330 = vmatprep.subr.mxu0 0.0
    %2331 = vmatpush1.msra.mxu0 %v2298
    %2332 = vmatprep.subr.mxu0 0.0
    %2333 = vmatpush2.msra.mxu0 0.0
    %2334 = vmatprep.subr.mxu0 0.0
    %2335 = vmatpush2.msra.mxu0 0.0
    %2336 = vmatprep.subr.mxu0 0.0
    %2337 = vmatpush2.msra.mxu0 0.0
    %2338 = vmatprep.subr.mxu0 0.0
    %2339 = vmatpush2.msra.mxu0 0.0
    %2340 = vmatprep.subr.mxu0 0.0
    %2341 = vmatpush2.msra.mxu0 0.0
    %2342 = vmatprep.subr.mxu0 0.0
    %2343 = vmatpush2.msra.mxu0 0.0
    %2344 = vmatprep.subr.mxu0 0.0
    %2345 = vmatpush2.msra.mxu0 0.0
    %2346 = vmatprep.subr.mxu0 0.0
    %2347 = vmatpush2.msra.mxu0 0.0
    %2348 = vmatprep.subr.mxu0 0.0
    %2349 = vmatpush2.msra.mxu0 0.0
    %2350 = vmatprep.subr.mxu0 0.0
    %2351 = vmatpush2.msra.mxu0 0.0
    %2352 = vmatprep.subr.mxu0 0.0
    %2353 = vmatpush2.msra.mxu0 0.0
    %2354 = vmatprep.subr.mxu0 0.0
    %2355 = vmatpush2.msra.mxu0 0.0
    %2356 = vmatprep.subr.mxu0 0.0
    %2357 = vmatpush2.msra.mxu0 0.0
    %2358 = vmatprep.subr.mxu0 0.0
    %2359 = vmatpush2.msra.mxu0 0.0
    %2360 = vmatprep.subr.mxu0 0.0
    %2361 = vmatpush2.msra.mxu0 0.0
    %2362 = vmatprep.subr.mxu0 0.0
    %2363 = vmatpush2.msra.mxu0 0.0
    %2364 = vmatprep.mubr.f32.mxu0 0.0
    %2365 = vmatmul.mubr.f32.gmra.mxu0 %v2295
    %v2366 = vpop.f32.mrf.mxu0
    %v2367 = vadd.f32 0.0, %v2366
    %v2368 = vpop.f32.mrf.mxu0
    %2369 = vdwg.mxu0
    %v2371 = vsel %vm1474, %v2292, 0
    %v2374 = vsel %vm1105, %v2218, 0
    %2376 = vmatprep.subr.mxu0 0.0
    %2377 = vmatpush1.msra.mxu0 0.0
    %2378 = vmatprep.subr.mxu0 0.0
    %2379 = vmatpush1.msra.mxu0 0.0
    %2380 = vmatprep.subr.mxu0 0.0
    %2381 = vmatpush1.msra.mxu0 0.0
    %2382 = vmatprep.subr.mxu0 0.0
    %2383 = vmatpush1.msra.mxu0 0.0
    %2384 = vmatprep.subr.mxu0 0.0
    %2385 = vmatpush1.msra.mxu0 0.0
    %2386 = vmatprep.subr.mxu0 0.0
    %2387 = vmatpush1.msra.mxu0 0.0
    %2388 = vmatprep.subr.mxu0 0.0
    %2389 = vmatpush1.msra.mxu0 0.0
    %2390 = vmatprep.subr.mxu0 0.0
    %2391 = vmatpush1.msra.mxu0 0.0
    %2392 = vmatprep.subr.mxu0 0.0
    %2393 = vmatpush1.msra.mxu0 0.0
    %2394 = vmatprep.subr.mxu0 0.0
    %2395 = vmatpush1.msra.mxu0 0.0
    %2396 = vmatprep.subr.mxu0 0.0
    %2397 = vmatpush1.msra.mxu0 0.0
    %2398 = vmatprep.subr.mxu0 0.0
    %2399 = vmatpush1.msra.mxu0 0.0
    %2400 = vmatprep.subr.mxu0 0.0
    %2401 = vmatpush1.msra.mxu0 0.0
    %2402 = vmatprep.subr.mxu0 0.0
    %2403 = vmatpush1.msra.mxu0 0.0
    %2404 = vmatprep.subr.mxu0 0.0
    %2405 = vmatpush1.msra.mxu0 0.0
    %2406 = vmatprep.subr.mxu0 0.0
    %2407 = vmatpush1.msra.mxu0 %v2374
    %2408 = vmatprep.subr.mxu0 0.0
    %2409 = vmatpush2.msra.mxu0 0.0
    %2410 = vmatprep.subr.mxu0 0.0
    %2411 = vmatpush2.msra.mxu0 0.0
    %2412 = vmatprep.subr.mxu0 0.0
    %2413 = vmatpush2.msra.mxu0 0.0
    %2414 = vmatprep.subr.mxu0 0.0
    %2415 = vmatpush2.msra.mxu0 0.0
    %2416 = vmatprep.subr.mxu0 0.0
    %2417 = vmatpush2.msra.mxu0 0.0
    %2418 = vmatprep.subr.mxu0 0.0
    %2419 = vmatpush2.msra.mxu0 0.0
    %2420 = vmatprep.subr.mxu0 0.0
    %2421 = vmatpush2.msra.mxu0 0.0
    %2422 = vmatprep.subr.mxu0 0.0
    %2423 = vmatpush2.msra.mxu0 0.0
    %2424 = vmatprep.subr.mxu0 0.0
    %2425 = vmatpush2.msra.mxu0 0.0
    %2426 = vmatprep.subr.mxu0 0.0
    %2427 = vmatpush2.msra.mxu0 0.0
    %2428 = vmatprep.subr.mxu0 0.0
    %2429 = vmatpush2.msra.mxu0 0.0
    %2430 = vmatprep.subr.mxu0 0.0
    %2431 = vmatpush2.msra.mxu0 0.0
    %2432 = vmatprep.subr.mxu0 0.0
    %2433 = vmatpush2.msra.mxu0 0.0
    %2434 = vmatprep.subr.mxu0 0.0
    %2435 = vmatpush2.msra.mxu0 0.0
    %2436 = vmatprep.subr.mxu0 0.0
    %2437 = vmatpush2.msra.mxu0 0.0
    %2438 = vmatprep.subr.mxu0 0.0
    %2439 = vmatpush2.msra.mxu0 0.0
    %2440 = vmatprep.mubr.f32.mxu0 0.0
    %2441 = vmatmul.mubr.f32.gmra.mxu0 %v2371
    %v2442 = vpop.f32.mrf.mxu0
    %v2443 = vadd.f32 %v2367, %v2442
    %v2444 = vpop.f32.mrf.mxu0
    %2445 = vdwg.mxu0
    %v2446 = vld [vmem:[#allocation4 + $0x4b0] sm:$0xff]
    %v2448 = vsel %vm1474, %v2446, 0
    %v2451 = vsel %vm1105, %v2289, 0
    %2453 = vmatprep.subr.mxu0 0.0
    %2454 = vmatpush1.msra.mxu0 0.0
    %2455 = vmatprep.subr.mxu0 0.0
    %2456 = vmatpush1.msra.mxu0 0.0
    %2457 = vmatprep.subr.mxu0 0.0
    %2458 = vmatpush1.msra.mxu0 0.0
    %2459 = vmatprep.subr.mxu0 0.0
    %2460 = vmatpush1.msra.mxu0 0.0
    %2461 = vmatprep.subr.mxu0 0.0
    %2462 = vmatpush1.msra.mxu0 0.0
    %2463 = vmatprep.subr.mxu0 0.0
    %2464 = vmatpush1.msra.mxu0 0.0
    %2465 = vmatprep.subr.mxu0 0.0
    %2466 = vmatpush1.msra.mxu0 0.0
    %2467 = vmatprep.subr.mxu0 0.0
    %2468 = vmatpush1.msra.mxu0 0.0
    %2469 = vmatprep.subr.mxu0 0.0
    %2470 = vmatpush1.msra.mxu0 0.0
    %2471 = vmatprep.subr.mxu0 0.0
    %2472 = vmatpush1.msra.mxu0 0.0
    %2473 = vmatprep.subr.mxu0 0.0
    %2474 = vmatpush1.msra.mxu0 0.0
    %2475 = vmatprep.subr.mxu0 0.0
    %2476 = vmatpush1.msra.mxu0 0.0
    %2477 = vmatprep.subr.mxu0 0.0
    %2478 = vmatpush1.msra.mxu0 0.0
    %2479 = vmatprep.subr.mxu0 0.0
    %2480 = vmatpush1.msra.mxu0 0.0
    %2481 = vmatprep.subr.mxu0 0.0
    %2482 = vmatpush1.msra.mxu0 0.0
    %2483 = vmatprep.subr.mxu0 0.0
    %2484 = vmatpush1.msra.mxu0 %v2451
    %2485 = vmatprep.subr.mxu0 0.0
    %2486 = vmatpush2.msra.mxu0 0.0
    %2487 = vmatprep.subr.mxu0 0.0
    %2488 = vmatpush2.msra.mxu0 0.0
    %2489 = vmatprep.subr.mxu0 0.0
    %2490 = vmatpush2.msra.mxu0 0.0
    %2491 = vmatprep.subr.mxu0 0.0
    %2492 = vmatpush2.msra.mxu0 0.0
    %2493 = vmatprep.subr.mxu0 0.0
    %2494 = vmatpush2.msra.mxu0 0.0
    %2495 = vmatprep.subr.mxu0 0.0
    %2496 = vmatpush2.msra.mxu0 0.0
    %2497 = vmatprep.subr.mxu0 0.0
    %2498 = vmatpush2.msra.mxu0 0.0
    %2499 = vmatprep.subr.mxu0 0.0
    %2500 = vmatpush2.msra.mxu0 0.0
    %2501 = vmatprep.subr.mxu0 0.0
    %2502 = vmatpush2.msra.mxu0 0.0
    %2503 = vmatprep.subr.mxu0 0.0
    %2504 = vmatpush2.msra.mxu0 0.0
    %2505 = vmatprep.subr.mxu0 0.0
    %2506 = vmatpush2.msra.mxu0 0.0
    %2507 = vmatprep.subr.mxu0 0.0
    %2508 = vmatpush2.msra.mxu0 0.0
    %2509 = vmatprep.subr.mxu0 0.0
    %2510 = vmatpush2.msra.mxu0 0.0
    %2511 = vmatprep.subr.mxu0 0.0
    %2512 = vmatpush2.msra.mxu0 0.0
    %2513 = vmatprep.subr.mxu0 0.0
    %2514 = vmatpush2.msra.mxu0 0.0
    %2515 = vmatprep.subr.mxu0 0.0
    %2516 = vmatpush2.msra.mxu0 0.0
    %2517 = vmatprep.mubr.f32.mxu0 0.0
    %2518 = vmatmul.mubr.f32.gmra.mxu0 %v2448
    %v2519 = vpop.f32.mrf.mxu0
    %v2520 = vadd.f32 0.0, %v2519
    %v2521 = vpop.f32.mrf.mxu0
    %2522 = vdwg.mxu0
    %v2523 = vadd.f32 %v2443, %v2520
    %v2524 = vld [vmem:[#allocation4 + $0x180] sm:$0xff]
    %v2525 = vld [vmem:[#allocation4 + $0x188] sm:$0xff]
    %v2526 = vld [vmem:[#allocation4 + $0x190] sm:$0xff]
    %v2527 = vld [vmem:[#allocation4 + $0x198] sm:$0xff]
    %v2528 = vld [vmem:[#allocation4 + $0x1a0] sm:$0xff]
    %v2529 = vld [vmem:[#allocation4 + $0x1a8] sm:$0xff]
    %v2530 = vld [vmem:[#allocation4 + $0x1b0] sm:$0xff]
    %v2531 = vld [vmem:[#allocation4 + $0x1b8] sm:$0xff]
    %v2532 = vld [vmem:[#allocation4 + $0x1c0] sm:$0xff]
    %v2533 = vld [vmem:[#allocation4 + $0x1c8] sm:$0xff]
    %v2534 = vld [vmem:[#allocation4 + $0x1d0] sm:$0xff]
    %v2535 = vld [vmem:[#allocation4 + $0x1d8] sm:$0xff]
    %v2536 = vld [vmem:[#allocation4 + $0x1e0] sm:$0xff]
    %v2537 = vld [vmem:[#allocation4 + $0x1e8] sm:$0xff]
    %v2538 = vld [vmem:[#allocation4 + $0x1f0] sm:$0xff]
    %v2539 = vld [vmem:[#allocation4 + $0x1f8] sm:$0xff]
    %v2540 = vld [vmem:[#allocation4 + $0x380] sm:$0xff]
    %v2541 = vld [vmem:[#allocation4 + $0x388] sm:$0xff]
    %v2542 = vld [vmem:[#allocation4 + $0x390] sm:$0xff]
    %v2543 = vld [vmem:[#allocation4 + $0x398] sm:$0xff]
    %v2544 = vld [vmem:[#allocation4 + $0x3a0] sm:$0xff]
    %v2545 = vld [vmem:[#allocation4 + $0x3a8] sm:$0xff]
    %v2546 = vld [vmem:[#allocation4 + $0x3b0] sm:$0xff]
    %v2547 = vld [vmem:[#allocation4 + $0x3b8] sm:$0xff]
    %v2548 = vld [vmem:[#allocation4 + $0x3c0] sm:$0xff]
    %v2549 = vld [vmem:[#allocation4 + $0x3c8] sm:$0xff]
    %v2550 = vld [vmem:[#allocation4 + $0x3d0] sm:$0xff]
    %v2551 = vld [vmem:[#allocation4 + $0x3d8] sm:$0xff]
    %v2552 = vld [vmem:[#allocation4 + $0x3e0] sm:$0xff]
    %v2553 = vld [vmem:[#allocation4 + $0x3e8] sm:$0xff]
    %v2554 = vld [vmem:[#allocation4 + $0x3f0] sm:$0xff]
    %v2555 = vld [vmem:[#allocation4 + $0x3f8] sm:$0xff]
    %v2556 = vrot.slane %v2523, 4
    %v2557 = vadd.f32 %v2523, %v2556
    %v2558 = vrot.slane %v2557, 2
    %v2559 = vadd.f32 %v2557, %v2558
    %v2560 = vrot.slane %v2559, 1
    %v2561 = vadd.f32 %v2559, %v2560
    %v2562 = vmul.f32 %v2523, %v2523
    %v2563 = vrot.slane %v2562, 4
    %v2564 = vadd.f32 %v2562, %v2563
    %v2565 = vrot.slane %v2564, 2
    %v2566 = vadd.f32 %v2564, %v2565
    %v2567 = vrot.slane %v2566, 1
    %v2568 = vadd.f32 %v2566, %v2567
    %v2569 = vsel %vm497, %v2561, %v2568
    %2570 = vmatprep.subr.mxu0 0.0
    %2571 = vmatpush1.msra.mxu0 %v2539
    %2572 = vmatprep.subr.mxu0 0.0
    %2573 = vmatpush1.msra.mxu0 %v2538
    %2574 = vmatprep.subr.mxu0 0.0
    %2575 = vmatpush1.msra.mxu0 %v2537
    %2576 = vmatprep.subr.mxu0 0.0
    %2577 = vmatpush1.msra.mxu0 %v2536
    %2578 = vmatprep.subr.mxu0 0.0
    %2579 = vmatpush1.msra.mxu0 %v2535
    %2580 = vmatprep.subr.mxu0 0.0
    %2581 = vmatpush1.msra.mxu0 %v2534
    %2582 = vmatprep.subr.mxu0 0.0
    %2583 = vmatpush1.msra.mxu0 %v2533
    %2584 = vmatprep.subr.mxu0 0.0
    %2585 = vmatpush1.msra.mxu0 %v2532
    %2586 = vmatprep.subr.mxu0 0.0
    %2587 = vmatpush1.msra.mxu0 %v2531
    %2588 = vmatprep.subr.mxu0 0.0
    %2589 = vmatpush1.msra.mxu0 %v2530
    %2590 = vmatprep.subr.mxu0 0.0
    %2591 = vmatpush1.msra.mxu0 %v2529
    %2592 = vmatprep.subr.mxu0 0.0
    %2593 = vmatpush1.msra.mxu0 %v2528
    %2594 = vmatprep.subr.mxu0 0.0
    %2595 = vmatpush1.msra.mxu0 %v2527
    %2596 = vmatprep.subr.mxu0 0.0
    %2597 = vmatpush1.msra.mxu0 %v2526
    %2598 = vmatprep.subr.mxu0 0.0
    %2599 = vmatpush1.msra.mxu0 %v2525
    %2600 = vmatprep.subr.mxu0 0.0
    %2601 = vmatpush1.msra.mxu0 %v2524
    %2602 = vmatprep.subr.mxu0 0.0
    %2603 = vmatpush2.msra.mxu0 0.0
    %2604 = vmatprep.subr.mxu0 0.0
    %2605 = vmatpush2.msra.mxu0 0.0
    %2606 = vmatprep.subr.mxu0 0.0
    %2607 = vmatpush2.msra.mxu0 0.0
    %2608 = vmatprep.subr.mxu0 0.0
    %2609 = vmatpush2.msra.mxu0 0.0
    %2610 = vmatprep.subr.mxu0 0.0
    %2611 = vmatpush2.msra.mxu0 0.0
    %2612 = vmatprep.subr.mxu0 0.0
    %2613 = vmatpush2.msra.mxu0 0.0
    %2614 = vmatprep.subr.mxu0 0.0
    %2615 = vmatpush2.msra.mxu0 0.0
    %2616 = vmatprep.subr.mxu0 0.0
    %2617 = vmatpush2.msra.mxu0 0.0
    %2618 = vmatprep.subr.mxu0 0.0
    %2619 = vmatpush2.msra.mxu0 0.0
    %2620 = vmatprep.subr.mxu0 0.0
    %2621 = vmatpush2.msra.mxu0 0.0
    %2622 = vmatprep.subr.mxu0 0.0
    %2623 = vmatpush2.msra.mxu0 0.0
    %2624 = vmatprep.subr.mxu0 0.0
    %2625 = vmatpush2.msra.mxu0 0.0
    %2626 = vmatprep.subr.mxu0 0.0
    %2627 = vmatpush2.msra.mxu0 0.0
    %2628 = vmatprep.subr.mxu0 0.0
    %2629 = vmatpush2.msra.mxu0 0.0
    %2630 = vmatprep.subr.mxu0 0.0
    %2631 = vmatpush2.msra.mxu0 0.0
    %2632 = vmatprep.subr.mxu0 0.0
    %2633 = vmatpush2.msra.mxu0 0.0
    %2634 = vmatprep.mubr.f32.mxu0 0.0
    %2635 = vmatmul.mubr.f32.gmra.mxu0 %v2569
    %v2636 = vpop.f32.mrf.mxu0
    %v2637 = vadd.f32 0.0, %v2636
    %v2638 = vpop.f32.mrf.mxu0
    %2639 = vdwg.mxu0
    %v2640 = vmul.f32 %v2637, 0.015625
    %v2641 = vmul.f32 %v2640, %v2640
    %v2643 = vrot.slane %v2641, 7
    %v2645 = vsub.f32 %v2640, %v2643
    %v2646 = vmax.f32 %v2645, 0.0
    %v2647 = vadd.f32 %v2646, 1e-05
    %v2648 = vrsqrt.pop %v2647
    %v2649 = vsel %vm497, %v2640, %v2648
    %2650 = vmatprep.subr.mxu0 0.0
    %2651 = vmatpush1.msra.mxu0 %v2555
    %2652 = vmatprep.subr.mxu0 0.0
    %2653 = vmatpush1.msra.mxu0 %v2554
    %2654 = vmatprep.subr.mxu0 0.0
    %2655 = vmatpush1.msra.mxu0 %v2553
    %2656 = vmatprep.subr.mxu0 0.0
    %2657 = vmatpush1.msra.mxu0 %v2552
    %2658 = vmatprep.subr.mxu0 0.0
    %2659 = vmatpush1.msra.mxu0 %v2551
    %2660 = vmatprep.subr.mxu0 0.0
    %2661 = vmatpush1.msra.mxu0 %v2550
    %2662 = vmatprep.subr.mxu0 0.0
    %2663 = vmatpush1.msra.mxu0 %v2549
    %2664 = vmatprep.subr.mxu0 0.0
    %2665 = vmatpush1.msra.mxu0 %v2548
    %2666 = vmatprep.subr.mxu0 0.0
    %2667 = vmatpush1.msra.mxu0 %v2547
    %2668 = vmatprep.subr.mxu0 0.0
    %2669 = vmatpush1.msra.mxu0 %v2546
    %2670 = vmatprep.subr.mxu0 0.0
    %2671 = vmatpush1.msra.mxu0 %v2545
    %2672 = vmatprep.subr.mxu0 0.0
    %2673 = vmatpush1.msra.mxu0 %v2544
    %2674 = vmatprep.subr.mxu0 0.0
    %2675 = vmatpush1.msra.mxu0 %v2543
    %2676 = vmatprep.subr.mxu0 0.0
    %2677 = vmatpush1.msra.mxu0 %v2542
    %2678 = vmatprep.subr.mxu0 0.0
    %2679 = vmatpush1.msra.mxu0 %v2541
    %2680 = vmatprep.subr.mxu0 0.0
    %2681 = vmatpush1.msra.mxu0 %v2540
    %2682 = vmatprep.subr.mxu0 0.0
    %2683 = vmatpush2.msra.mxu0 0.0
    %2684 = vmatprep.subr.mxu0 0.0
    %2685 = vmatpush2.msra.mxu0 0.0
    %2686 = vmatprep.subr.mxu0 0.0
    %2687 = vmatpush2.msra.mxu0 0.0
    %2688 = vmatprep.subr.mxu0 0.0
    %2689 = vmatpush2.msra.mxu0 0.0
    %2690 = vmatprep.subr.mxu0 0.0
    %2691 = vmatpush2.msra.mxu0 0.0
    %2692 = vmatprep.subr.mxu0 0.0
    %2693 = vmatpush2.msra.mxu0 0.0
    %2694 = vmatprep.subr.mxu0 0.0
    %2695 = vmatpush2.msra.mxu0 0.0
    %2696 = vmatprep.subr.mxu0 0.0
    %2697 = vmatpush2.msra.mxu0 0.0
    %2698 = vmatprep.subr.mxu0 0.0
    %2699 = vmatpush2.msra.mxu0 0.0
    %2700 = vmatprep.subr.mxu0 0.0
    %2701 = vmatpush2.msra.mxu0 0.0
    %2702 = vmatprep.subr.mxu0 0.0
    %2703 = vmatpush2.msra.mxu0 0.0
    %2704 = vmatprep.subr.mxu0 0.0
    %2705 = vmatpush2.msra.mxu0 0.0
    %2706 = vmatprep.subr.mxu0 0.0
    %2707 = vmatpush2.msra.mxu0 0.0
    %2708 = vmatprep.subr.mxu0 0.0
    %2709 = vmatpush2.msra.mxu0 0.0
    %2710 = vmatprep.subr.mxu0 0.0
    %2711 = vmatpush2.msra.mxu0 0.0
    %2712 = vmatprep.subr.mxu0 0.0
    %2713 = vmatpush2.msra.mxu0 0.0
    %2714 = vmatprep.mubr.f32.mxu0 0.0
    %2715 = vmatmul.mubr.f32.gmra.mxu0 %v2649
    %v2716 = vpop.f32.mrf.mxu0
    %v2717 = vadd.f32 0.0, %v2716
    %v2718 = vpop.f32.mrf.mxu0
    %2719 = vdwg.mxu0
    %v2720 = vlaneseq
    %v2721 = vshrl.u32 %v2720, 7
    %v2722 = vsub.s32 0, %v2721
    %v2723 = vrot.slane %v2717, %v2722
    %v2724 = vsub.f32 %v2523, %v2723
    %v2725 = vlaneseq
    %v2726 = vshrl.u32 %v2725, 7
    %v2727 = vsub.s32 1, %v2726
    %v2728 = vrot.slane %v2717, %v2727
    %v2729 = vmul.f32 %v2724, %v2728
    %v2730 = vmax.f32 %v2729, 0.0
    %v2731 = vld [vmem:[#allocation2 + $0x6c0] sm:$0xff]
    %v2732 = vld [vmem:[#allocation2 + $0x6c8] sm:$0xff]
    %v2733 = vld [vmem:[#allocation2 + $0x6d0] sm:$0xff]
    %v2734 = vld [vmem:[#allocation2 + $0x6d8] sm:$0xff]
    %v2735 = vld [vmem:[#allocation2 + $0x6e0] sm:$0xff]
    %v2736 = vld [vmem:[#allocation2 + $0x6e8] sm:$0xff]
    %v2737 = vld [vmem:[#allocation2 + $0x6f0] sm:$0xff]
    %v2738 = vld [vmem:[#allocation2 + $0x6f8] sm:$0xff]
    %v2739 = vld [vmem:[#allocation2 + $0x700] sm:$0xff]
    %v2740 = vld [vmem:[#allocation2 + $0x708] sm:$0xff]
    %v2741 = vld [vmem:[#allocation2 + $0x710] sm:$0xff]
    %v2742 = vld [vmem:[#allocation2 + $0x718] sm:$0xff]
    %v2743 = vld [vmem:[#allocation2 + $0x720] sm:$0xff]
    %v2744 = vld [vmem:[#allocation2 + $0x728] sm:$0xff]
    %v2745 = vld [vmem:[#allocation2 + $0x730] sm:$0xff]
    %v2746 = vld [vmem:[#allocation2 + $0x738] sm:$0xff]
    %v2747 = vld [vmem:[#allocation2 + $0x740] sm:$0xff]
    %v2748 = vld [vmem:[#allocation2 + $0x748] sm:$0xff]
    %v2749 = vld [vmem:[#allocation2 + $0x750] sm:$0xff]
    %v2750 = vld [vmem:[#allocation2 + $0x758] sm:$0xff]
    %v2751 = vld [vmem:[#allocation2 + $0x760] sm:$0xff]
    %v2752 = vld [vmem:[#allocation2 + $0x768] sm:$0xff]
    %v2753 = vld [vmem:[#allocation2 + $0x770] sm:$0xff]
    %v2754 = vld [vmem:[#allocation2 + $0x778] sm:$0xff]
    %v2755 = vld [vmem:[#allocation2 + $0x780] sm:$0xff]
    %v2756 = vld [vmem:[#allocation2 + $0x788] sm:$0xff]
    %v2757 = vld [vmem:[#allocation2 + $0x790] sm:$0xff]
    %v2758 = vld [vmem:[#allocation2 + $0x798] sm:$0xff]
    %v2759 = vld [vmem:[#allocation2 + $0x7a0] sm:$0xff]
    %v2760 = vld [vmem:[#allocation2 + $0x7a8] sm:$0xff]
    %v2761 = vld [vmem:[#allocation2 + $0x7b0] sm:$0xff]
    %v2762 = vld [vmem:[#allocation2 + $0x7b8] sm:$0xff]
    %v2763 = vld [vmem:[#allocation2 + $0x7c0] sm:$0xff]
    %v2764 = vld [vmem:[#allocation2 + $0x7c8] sm:$0xff]
    %v2765 = vld [vmem:[#allocation2 + $0x7d0] sm:$0xff]
    %v2766 = vld [vmem:[#allocation2 + $0x7d8] sm:$0xff]
    %v2767 = vld [vmem:[#allocation2 + $0x7e0] sm:$0xff]
    %v2768 = vld [vmem:[#allocation2 + $0x7e8] sm:$0xff]
    %v2769 = vld [vmem:[#allocation2 + $0x7f0] sm:$0xff]
    %v2770 = vld [vmem:[#allocation2 + $0x7f8] sm:$0xff]
    %v2771 = vld [vmem:[#allocation2 + $0x800] sm:$0xff]
    %v2772 = vld [vmem:[#allocation2 + $0x808] sm:$0xff]
    %v2773 = vld [vmem:[#allocation2 + $0x810] sm:$0xff]
    %v2774 = vld [vmem:[#allocation2 + $0x818] sm:$0xff]
    %v2775 = vld [vmem:[#allocation2 + $0x820] sm:$0xff]
    %v2776 = vld [vmem:[#allocation2 + $0x828] sm:$0xff]
    %v2777 = vld [vmem:[#allocation2 + $0x830] sm:$0xff]
    %v2778 = vld [vmem:[#allocation2 + $0x838] sm:$0xff]
    %v2779 = vld [vmem:[#allocation2 + $0x840] sm:$0xff]
    %v2780 = vld [vmem:[#allocation2 + $0x848] sm:$0xff]
    %v2781 = vld [vmem:[#allocation2 + $0x850] sm:$0xff]
    %v2782 = vld [vmem:[#allocation2 + $0x858] sm:$0xff]
    %v2783 = vld [vmem:[#allocation2 + $0x860] sm:$0xff]
    %v2784 = vld [vmem:[#allocation2 + $0x868] sm:$0xff]
    %v2785 = vld [vmem:[#allocation2 + $0x870] sm:$0xff]
    %v2786 = vld [vmem:[#allocation2 + $0x878] sm:$0xff]
    %v2787 = vld [vmem:[#allocation2 + $0x880] sm:$0xff]
    %v2788 = vld [vmem:[#allocation2 + $0x888] sm:$0xff]
    %v2789 = vld [vmem:[#allocation2 + $0x890] sm:$0xff]
    %v2790 = vld [vmem:[#allocation2 + $0x898] sm:$0xff]
    %v2791 = vld [vmem:[#allocation2 + $0x8a0] sm:$0xff]
    %v2792 = vld [vmem:[#allocation2 + $0x8a8] sm:$0xff]
    %v2793 = vld [vmem:[#allocation2 + $0x8b0] sm:$0xff]
    %v2794 = vld [vmem:[#allocation2 + $0x8b8] sm:$0xff]
    %v2795 = vld [vmem:[#allocation2 + $0x8c0] sm:$0xff]
    %v2796 = vld [vmem:[#allocation2 + $0x8c8] sm:$0xff]
    %v2797 = vld [vmem:[#allocation2 + $0x8d0] sm:$0xff]
    %v2798 = vld [vmem:[#allocation2 + $0x8d8] sm:$0xff]
    %v2799 = vld [vmem:[#allocation2 + $0x8e0] sm:$0xff]
    %v2800 = vld [vmem:[#allocation2 + $0x8e8] sm:$0xff]
    %v2801 = vld [vmem:[#allocation2 + $0x8f0] sm:$0xff]
    %v2802 = vld [vmem:[#allocation2 + $0x8f8] sm:$0xff]
    %v2803 = vld [vmem:[#allocation2 + $0x900] sm:$0xff]
    %v2804 = vld [vmem:[#allocation2 + $0x908] sm:$0xff]
    %v2805 = vld [vmem:[#allocation2 + $0x910] sm:$0xff]
    %v2806 = vld [vmem:[#allocation2 + $0x918] sm:$0xff]
    %v2807 = vld [vmem:[#allocation2 + $0x920] sm:$0xff]
    %v2808 = vld [vmem:[#allocation2 + $0x928] sm:$0xff]
    %v2809 = vld [vmem:[#allocation2 + $0x930] sm:$0xff]
    %v2810 = vld [vmem:[#allocation2 + $0x938] sm:$0xff]
    %v2811 = vld [vmem:[#allocation2 + $0x940] sm:$0xff]
    %v2812 = vld [vmem:[#allocation2 + $0x948] sm:$0xff]
    %v2813 = vld [vmem:[#allocation2 + $0x950] sm:$0xff]
    %v2814 = vld [vmem:[#allocation2 + $0x958] sm:$0xff]
    %v2815 = vld [vmem:[#allocation2 + $0x960] sm:$0xff]
    %v2816 = vld [vmem:[#allocation2 + $0x968] sm:$0xff]
    %v2817 = vld [vmem:[#allocation2 + $0x970] sm:$0xff]
    %v2818 = vld [vmem:[#allocation2 + $0x978] sm:$0xff]
    %v2819 = vld [vmem:[#allocation2 + $0x980] sm:$0xff]
    %v2820 = vld [vmem:[#allocation2 + $0x988] sm:$0xff]
    %v2821 = vld [vmem:[#allocation2 + $0x990] sm:$0xff]
    %v2822 = vld [vmem:[#allocation2 + $0x998] sm:$0xff]
    %v2823 = vld [vmem:[#allocation2 + $0x9a0] sm:$0xff]
    %v2824 = vld [vmem:[#allocation2 + $0x9a8] sm:$0xff]
    %v2825 = vld [vmem:[#allocation2 + $0x9b0] sm:$0xff]
    %v2826 = vld [vmem:[#allocation2 + $0x9b8] sm:$0xff]
    %2827 = vmatprep.subr.mxu0 %v2825
    %2828 = vmatpush1.msra.mxu0 %v2824
    %2829 = vmatprep.subr.mxu0 %v2822
    %2830 = vmatpush1.msra.mxu0 %v2821
    %2831 = vmatprep.subr.mxu0 %v2819
    %2832 = vmatpush1.msra.mxu0 %v2818
    %2833 = vmatprep.subr.mxu0 %v2816
    %2834 = vmatpush1.msra.mxu0 %v2815
    %2835 = vmatprep.subr.mxu0 %v2813
    %2836 = vmatpush1.msra.mxu0 %v2812
    %2837 = vmatprep.subr.mxu0 %v2810
    %2838 = vmatpush1.msra.mxu0 %v2809
    %2839 = vmatprep.subr.mxu0 %v2807
    %2840 = vmatpush1.msra.mxu0 %v2806
    %2841 = vmatprep.subr.mxu0 %v2804
    %2842 = vmatpush1.msra.mxu0 %v2803
    %2843 = vmatprep.subr.mxu0 %v2801
    %2844 = vmatpush1.msra.mxu0 %v2800
    %2845 = vmatprep.subr.mxu0 %v2798
    %2846 = vmatpush1.msra.mxu0 %v2797
    %2847 = vmatprep.subr.mxu0 %v2795
    %2848 = vmatpush1.msra.mxu0 %v2794
    %2849 = vmatprep.subr.mxu0 %v2792
    %2850 = vmatpush1.msra.mxu0 %v2791
    %2851 = vmatprep.subr.mxu0 %v2789
    %2852 = vmatpush1.msra.mxu0 %v2788
    %2853 = vmatprep.subr.mxu0 %v2786
    %2854 = vmatpush1.msra.mxu0 %v2785
    %2855 = vmatprep.subr.mxu0 %v2783
    %2856 = vmatpush1.msra.mxu0 %v2782
    %2857 = vmatprep.subr.mxu0 %v2780
    %2858 = vmatpush1.msra.mxu0 %v2779
    %2859 = vmatprep.subr.mxu0 0.0
    %2860 = vmatpush2.msra.mxu0 0.0
    %2861 = vmatprep.subr.mxu0 0.0
    %2862 = vmatpush2.msra.mxu0 0.0
    %2863 = vmatprep.subr.mxu0 0.0
    %2864 = vmatpush2.msra.mxu0 0.0
    %2865 = vmatprep.subr.mxu0 0.0
    %2866 = vmatpush2.msra.mxu0 0.0
    %2867 = vmatprep.subr.mxu0 0.0
    %2868 = vmatpush2.msra.mxu0 0.0
    %2869 = vmatprep.subr.mxu0 0.0
    %2870 = vmatpush2.msra.mxu0 0.0
    %2871 = vmatprep.subr.mxu0 0.0
    %2872 = vmatpush2.msra.mxu0 0.0
    %2873 = vmatprep.subr.mxu0 0.0
    %2874 = vmatpush2.msra.mxu0 0.0
    %2875 = vmatprep.subr.mxu0 0.0
    %2876 = vmatpush2.msra.mxu0 0.0
    %2877 = vmatprep.subr.mxu0 0.0
    %2878 = vmatpush2.msra.mxu0 0.0
    %2879 = vmatprep.subr.mxu0 0.0
    %2880 = vmatpush2.msra.mxu0 0.0
    %2881 = vmatprep.subr.mxu0 0.0
    %2882 = vmatpush2.msra.mxu0 0.0
    %2883 = vmatprep.subr.mxu0 0.0
    %2884 = vmatpush2.msra.mxu0 0.0
    %2885 = vmatprep.subr.mxu0 0.0
    %2886 = vmatpush2.msra.mxu0 0.0
    %2887 = vmatprep.subr.mxu0 0.0
    %2888 = vmatpush2.msra.mxu0 0.0
    %2889 = vmatprep.subr.mxu0 0.0
    %2890 = vmatpush2.msra.mxu0 0.0
    %2891 = vmatprep.mubr.f32.mxu0 0.0
    %2892 = vmatmul.mubr.f32.gmra.mxu0 %v2730
    %v2893 = vpop.f32.mrf.mxu0
    %v2894 = vadd.f32 0.0, %v2893
    %v2895 = vpop.f32.mrf.mxu0
    %v2896 = vadd.f32 0.0, %v2895
    %2897 = vdwg.mxu0
    %2898 = vmatprep.subr.mxu0 0.0
    %2899 = vmatpush1.msra.mxu0 %v2826
    %2900 = vmatprep.subr.mxu0 0.0
    %2901 = vmatpush1.msra.mxu0 %v2823
    %2902 = vmatprep.subr.mxu0 0.0
    %2903 = vmatpush1.msra.mxu0 %v2820
    %2904 = vmatprep.subr.mxu0 0.0
    %2905 = vmatpush1.msra.mxu0 %v2817
    %2906 = vmatprep.subr.mxu0 0.0
    %2907 = vmatpush1.msra.mxu0 %v2814
    %2908 = vmatprep.subr.mxu0 0.0
    %2909 = vmatpush1.msra.mxu0 %v2811
    %2910 = vmatprep.subr.mxu0 0.0
    %2911 = vmatpush1.msra.mxu0 %v2808
    %2912 = vmatprep.subr.mxu0 0.0
    %2913 = vmatpush1.msra.mxu0 %v2805
    %2914 = vmatprep.subr.mxu0 0.0
    %2915 = vmatpush1.msra.mxu0 %v2802
    %2916 = vmatprep.subr.mxu0 0.0
    %2917 = vmatpush1.msra.mxu0 %v2799
    %2918 = vmatprep.subr.mxu0 0.0
    %2919 = vmatpush1.msra.mxu0 %v2796
    %2920 = vmatprep.subr.mxu0 0.0
    %2921 = vmatpush1.msra.mxu0 %v2793
    %2922 = vmatprep.subr.mxu0 0.0
    %2923 = vmatpush1.msra.mxu0 %v2790
    %2924 = vmatprep.subr.mxu0 0.0
    %2925 = vmatpush1.msra.mxu0 %v2787
    %2926 = vmatprep.subr.mxu0 0.0
    %2927 = vmatpush1.msra.mxu0 %v2784
    %2928 = vmatprep.subr.mxu0 0.0
    %2929 = vmatpush1.msra.mxu0 %v2781
    %2930 = vmatprep.subr.mxu0 0.0
    %2931 = vmatpush2.msra.mxu0 0.0
    %2932 = vmatprep.subr.mxu0 0.0
    %2933 = vmatpush2.msra.mxu0 0.0
    %2934 = vmatprep.subr.mxu0 0.0
    %2935 = vmatpush2.msra.mxu0 0.0
    %2936 = vmatprep.subr.mxu0 0.0
    %2937 = vmatpush2.msra.mxu0 0.0
    %2938 = vmatprep.subr.mxu0 0.0
    %2939 = vmatpush2.msra.mxu0 0.0
    %2940 = vmatprep.subr.mxu0 0.0
    %2941 = vmatpush2.msra.mxu0 0.0
    %2942 = vmatprep.subr.mxu0 0.0
    %2943 = vmatpush2.msra.mxu0 0.0
    %2944 = vmatprep.subr.mxu0 0.0
    %2945 = vmatpush2.msra.mxu0 0.0
    %2946 = vmatprep.subr.mxu0 0.0
    %2947 = vmatpush2.msra.mxu0 0.0
    %2948 = vmatprep.subr.mxu0 0.0
    %2949 = vmatpush2.msra.mxu0 0.0
    %2950 = vmatprep.subr.mxu0 0.0
    %2951 = vmatpush2.msra.mxu0 0.0
    %2952 = vmatprep.subr.mxu0 0.0
    %2953 = vmatpush2.msra.mxu0 0.0
    %2954 = vmatprep.subr.mxu0 0.0
    %2955 = vmatpush2.msra.mxu0 0.0
    %2956 = vmatprep.subr.mxu0 0.0
    %2957 = vmatpush2.msra.mxu0 0.0
    %2958 = vmatprep.subr.mxu0 0.0
    %2959 = vmatpush2.msra.mxu0 0.0
    %2960 = vmatprep.subr.mxu0 0.0
    %2961 = vmatpush2.msra.mxu0 0.0
    %2962 = vmatprep.mubr.f32.mxu0 0.0
    %2963 = vmatmul.mubr.f32.gmra.mxu0 %v2730
    %v2964 = vpop.f32.mrf.mxu0
    %v2965 = vadd.f32 0.0, %v2964
    %v2966 = vpop.f32.mrf.mxu0
    %2967 = vdwg.mxu0
    %2968 = vmatprep.subr.mxu0 %v2777
    %2969 = vmatpush1.msra.mxu0 %v2776
    %2970 = vmatprep.subr.mxu0 %v2774
    %2971 = vmatpush1.msra.mxu0 %v2773
    %2972 = vmatprep.subr.mxu0 %v2771
    %2973 = vmatpush1.msra.mxu0 %v2770
    %2974 = vmatprep.subr.mxu0 %v2768
    %2975 = vmatpush1.msra.mxu0 %v2767
    %2976 = vmatprep.subr.mxu0 %v2765
    %2977 = vmatpush1.msra.mxu0 %v2764
    %2978 = vmatprep.subr.mxu0 %v2762
    %2979 = vmatpush1.msra.mxu0 %v2761
    %2980 = vmatprep.subr.mxu0 %v2759
    %2981 = vmatpush1.msra.mxu0 %v2758
    %2982 = vmatprep.subr.mxu0 %v2756
    %2983 = vmatpush1.msra.mxu0 %v2755
    %2984 = vmatprep.subr.mxu0 %v2753
    %2985 = vmatpush1.msra.mxu0 %v2752
    %2986 = vmatprep.subr.mxu0 %v2750
    %2987 = vmatpush1.msra.mxu0 %v2749
    %2988 = vmatprep.subr.mxu0 %v2747
    %2989 = vmatpush1.msra.mxu0 %v2746
    %2990 = vmatprep.subr.mxu0 %v2744
    %2991 = vmatpush1.msra.mxu0 %v2743
    %2992 = vmatprep.subr.mxu0 %v2741
    %2993 = vmatpush1.msra.mxu0 %v2740
    %2994 = vmatprep.subr.mxu0 %v2738
    %2995 = vmatpush1.msra.mxu0 %v2737
    %2996 = vmatprep.subr.mxu0 %v2735
    %2997 = vmatpush1.msra.mxu0 %v2734
    %2998 = vmatprep.subr.mxu0 %v2732
    %2999 = vmatpush1.msra.mxu0 %v2731
    %3000 = vmatprep.subr.mxu0 0.0
    %3001 = vmatpush2.msra.mxu0 0.0
    %3002 = vmatprep.subr.mxu0 0.0
    %3003 = vmatpush2.msra.mxu0 0.0
    %3004 = vmatprep.subr.mxu0 0.0
    %3005 = vmatpush2.msra.mxu0 0.0
    %3006 = vmatprep.subr.mxu0 0.0
    %3007 = vmatpush2.msra.mxu0 0.0
    %3008 = vmatprep.subr.mxu0 0.0
    %3009 = vmatpush2.msra.mxu0 0.0
    %3010 = vmatprep.subr.mxu0 0.0
    %3011 = vmatpush2.msra.mxu0 0.0
    %3012 = vmatprep.subr.mxu0 0.0
    %3013 = vmatpush2.msra.mxu0 0.0
    %3014 = vmatprep.subr.mxu0 0.0
    %3015 = vmatpush2.msra.mxu0 0.0
    %3016 = vmatprep.subr.mxu0 0.0
    %3017 = vmatpush2.msra.mxu0 0.0
    %3018 = vmatprep.subr.mxu0 0.0
    %3019 = vmatpush2.msra.mxu0 0.0
    %3020 = vmatprep.subr.mxu0 0.0
    %3021 = vmatpush2.msra.mxu0 0.0
    %3022 = vmatprep.subr.mxu0 0.0
    %3023 = vmatpush2.msra.mxu0 0.0
    %3024 = vmatprep.subr.mxu0 0.0
    %3025 = vmatpush2.msra.mxu0 0.0
    %3026 = vmatprep.subr.mxu0 0.0
    %3027 = vmatpush2.msra.mxu0 0.0
    %3028 = vmatprep.subr.mxu0 0.0
    %3029 = vmatpush2.msra.mxu0 0.0
    %3030 = vmatprep.subr.mxu0 0.0
    %3031 = vmatpush2.msra.mxu0 0.0
    %3032 = vmatprep.mubr.f32.mxu0 0.0
    %3033 = vmatmul.mubr.f32.gmra.mxu0 %v659
    %v3034 = vpop.f32.mrf.mxu0
    %v3035 = vadd.f32 %v2894, %v3034
    %v3036 = vpop.f32.mrf.mxu0
    %v3037 = vadd.f32 %v2896, %v3036
    %3038 = vdwg.mxu0
    %3039 = vmatprep.subr.mxu0 0.0
    %3040 = vmatpush1.msra.mxu0 %v2778
    %3041 = vmatprep.subr.mxu0 0.0
    %3042 = vmatpush1.msra.mxu0 %v2775
    %3043 = vmatprep.subr.mxu0 0.0
    %3044 = vmatpush1.msra.mxu0 %v2772
    %3045 = vmatprep.subr.mxu0 0.0
    %3046 = vmatpush1.msra.mxu0 %v2769
    %3047 = vmatprep.subr.mxu0 0.0
    %3048 = vmatpush1.msra.mxu0 %v2766
    %3049 = vmatprep.subr.mxu0 0.0
    %3050 = vmatpush1.msra.mxu0 %v2763
    %3051 = vmatprep.subr.mxu0 0.0
    %3052 = vmatpush1.msra.mxu0 %v2760
    %3053 = vmatprep.subr.mxu0 0.0
    %3054 = vmatpush1.msra.mxu0 %v2757
    %3055 = vmatprep.subr.mxu0 0.0
    %3056 = vmatpush1.msra.mxu0 %v2754
    %3057 = vmatprep.subr.mxu0 0.0
    %3058 = vmatpush1.msra.mxu0 %v2751
    %3059 = vmatprep.subr.mxu0 0.0
    %3060 = vmatpush1.msra.mxu0 %v2748
    %3061 = vmatprep.subr.mxu0 0.0
    %3062 = vmatpush1.msra.mxu0 %v2745
    %3063 = vmatprep.subr.mxu0 0.0
    %3064 = vmatpush1.msra.mxu0 %v2742
    %3065 = vmatprep.subr.mxu0 0.0
    %3066 = vmatpush1.msra.mxu0 %v2739
    %3067 = vmatprep.subr.mxu0 0.0
    %3068 = vmatpush1.msra.mxu0 %v2736
    %3069 = vmatprep.subr.mxu0 0.0
    %3070 = vmatpush1.msra.mxu0 %v2733
    %3071 = vmatprep.subr.mxu0 0.0
    %3072 = vmatpush2.msra.mxu0 0.0
    %3073 = vmatprep.subr.mxu0 0.0
    %3074 = vmatpush2.msra.mxu0 0.0
    %3075 = vmatprep.subr.mxu0 0.0
    %3076 = vmatpush2.msra.mxu0 0.0
    %3077 = vmatprep.subr.mxu0 0.0
    %3078 = vmatpush2.msra.mxu0 0.0
    %3079 = vmatprep.subr.mxu0 0.0
    %3080 = vmatpush2.msra.mxu0 0.0
    %3081 = vmatprep.subr.mxu0 0.0
    %3082 = vmatpush2.msra.mxu0 0.0
    %3083 = vmatprep.subr.mxu0 0.0
    %3084 = vmatpush2.msra.mxu0 0.0
    %3085 = vmatprep.subr.mxu0 0.0
    %3086 = vmatpush2.msra.mxu0 0.0
    %3087 = vmatprep.subr.mxu0 0.0
    %3088 = vmatpush2.msra.mxu0 0.0
    %3089 = vmatprep.subr.mxu0 0.0
    %3090 = vmatpush2.msra.mxu0 0.0
    %3091 = vmatprep.subr.mxu0 0.0
    %3092 = vmatpush2.msra.mxu0 0.0
    %3093 = vmatprep.subr.mxu0 0.0
    %3094 = vmatpush2.msra.mxu0 0.0
    %3095 = vmatprep.subr.mxu0 0.0
    %3096 = vmatpush2.msra.mxu0 0.0
    %3097 = vmatprep.subr.mxu0 0.0
    %3098 = vmatpush2.msra.mxu0 0.0
    %3099 = vmatprep.subr.mxu0 0.0
    %3100 = vmatpush2.msra.mxu0 0.0
    %3101 = vmatprep.subr.mxu0 0.0
    %3102 = vmatpush2.msra.mxu0 0.0
    %3103 = vmatprep.mubr.f32.mxu0 0.0
    %3104 = vmatmul.mubr.f32.gmra.mxu0 %v659
    %v3105 = vpop.f32.mrf.mxu0
    %v3106 = vadd.f32 %v2965, %v3105
    %v3107 = vpop.f32.mrf.mxu0
    %3108 = vdwg.mxu0
    %v3109 = vld [vmem:[#allocation4 + $0x4c0] sm:$0xff]
    %v3110 = vld [vmem:[#allocation4 + $0x4c8] sm:$0xff]
    %v3111 = vld [vmem:[#allocation4 + $0x4d0] sm:$0xff]
    %v3112 = vld [vmem:[#allocation4 + $0x4d8] sm:$0xff]
    %v3114 = vsel %vm851, %v3111, 0
    %v3117 = vsel %vm851, %v3112, 0
    %3119 = vmatprep.subr.mxu0 0.0
    %3120 = vmatpush1.msra.mxu0 0.0
    %3121 = vmatprep.subr.mxu0 0.0
    %3122 = vmatpush1.msra.mxu0 0.0
    %3123 = vmatprep.subr.mxu0 0.0
    %3124 = vmatpush1.msra.mxu0 0.0
    %3125 = vmatprep.subr.mxu0 0.0
    %3126 = vmatpush1.msra.mxu0 0.0
    %3127 = vmatprep.subr.mxu0 0.0
    %3128 = vmatpush1.msra.mxu0 0.0
    %3129 = vmatprep.subr.mxu0 0.0
    %3130 = vmatpush1.msra.mxu0 0.0
    %3131 = vmatprep.subr.mxu0 0.0
    %3132 = vmatpush1.msra.mxu0 0.0
    %3133 = vmatprep.subr.mxu0 0.0
    %3134 = vmatpush1.msra.mxu0 0.0
    %3135 = vmatprep.subr.mxu0 0.0
    %3136 = vmatpush1.msra.mxu0 0.0
    %3137 = vmatprep.subr.mxu0 0.0
    %3138 = vmatpush1.msra.mxu0 0.0
    %3139 = vmatprep.subr.mxu0 0.0
    %3140 = vmatpush1.msra.mxu0 0.0
    %3141 = vmatprep.subr.mxu0 0.0
    %3142 = vmatpush1.msra.mxu0 0.0
    %3143 = vmatprep.subr.mxu0 0.0
    %3144 = vmatpush1.msra.mxu0 0.0
    %3145 = vmatprep.subr.mxu0 0.0
    %3146 = vmatpush1.msra.mxu0 0.0
    %3147 = vmatprep.subr.mxu0 0.0
    %3148 = vmatpush1.msra.mxu0 0.0
    %3149 = vmatprep.subr.mxu0 0.0
    %3150 = vmatpush1.msra.mxu0 %v3037
    %3151 = vmatprep.subr.mxu0 0.0
    %3152 = vmatpush2.msra.mxu0 0.0
    %3153 = vmatprep.subr.mxu0 0.0
    %3154 = vmatpush2.msra.mxu0 0.0
    %3155 = vmatprep.subr.mxu0 0.0
    %3156 = vmatpush2.msra.mxu0 0.0
    %3157 = vmatprep.subr.mxu0 0.0
    %3158 = vmatpush2.msra.mxu0 0.0
    %3159 = vmatprep.subr.mxu0 0.0
    %3160 = vmatpush2.msra.mxu0 0.0
    %3161 = vmatprep.subr.mxu0 0.0
    %3162 = vmatpush2.msra.mxu0 0.0
    %3163 = vmatprep.subr.mxu0 0.0
    %3164 = vmatpush2.msra.mxu0 0.0
    %3165 = vmatprep.subr.mxu0 0.0
    %3166 = vmatpush2.msra.mxu0 0.0
    %3167 = vmatprep.subr.mxu0 0.0
    %3168 = vmatpush2.msra.mxu0 0.0
    %3169 = vmatprep.subr.mxu0 0.0
    %3170 = vmatpush2.msra.mxu0 0.0
    %3171 = vmatprep.subr.mxu0 0.0
    %3172 = vmatpush2.msra.mxu0 0.0
    %3173 = vmatprep.subr.mxu0 0.0
    %3174 = vmatpush2.msra.mxu0 0.0
    %3175 = vmatprep.subr.mxu0 0.0
    %3176 = vmatpush2.msra.mxu0 0.0
    %3177 = vmatprep.subr.mxu0 0.0
    %3178 = vmatpush2.msra.mxu0 0.0
    %3179 = vmatprep.subr.mxu0 0.0
    %3180 = vmatpush2.msra.mxu0 0.0
    %3181 = vmatprep.subr.mxu0 0.0
    %3182 = vmatpush2.msra.mxu0 0.0
    %3183 = vmatprep.mubr.f32.mxu0 0.0
    %3184 = vmatmul.mubr.f32.gmra.mxu0 %v3114
    %v3185 = vpop.f32.mrf.mxu0
    %v3186 = vadd.f32 0.0, %v3185
    %v3187 = vpop.f32.mrf.mxu0
    %3188 = vmatprep.mubr.f32.mxu0 0.0
    %3189 = vmatmul.mubr.f32.gmra.mxu0 %v3117
    %v3190 = vpop.f32.mrf.mxu0
    %v3191 = vadd.f32 0.0, %v3190
    %v3192 = vpop.f32.mrf.mxu0
    %3193 = vdwg.mxu0
    %v3195 = vsel %vm851, %v3109, 0
    %v3198 = vsel %vm851, %v3110, 0
    %3200 = vmatprep.subr.mxu0 0.0
    %3201 = vmatpush1.msra.mxu0 0.0
    %3202 = vmatprep.subr.mxu0 0.0
    %3203 = vmatpush1.msra.mxu0 0.0
    %3204 = vmatprep.subr.mxu0 0.0
    %3205 = vmatpush1.msra.mxu0 0.0
    %3206 = vmatprep.subr.mxu0 0.0
    %3207 = vmatpush1.msra.mxu0 0.0
    %3208 = vmatprep.subr.mxu0 0.0
    %3209 = vmatpush1.msra.mxu0 0.0
    %3210 = vmatprep.subr.mxu0 0.0
    %3211 = vmatpush1.msra.mxu0 0.0
    %3212 = vmatprep.subr.mxu0 0.0
    %3213 = vmatpush1.msra.mxu0 0.0
    %3214 = vmatprep.subr.mxu0 0.0
    %3215 = vmatpush1.msra.mxu0 0.0
    %3216 = vmatprep.subr.mxu0 0.0
    %3217 = vmatpush1.msra.mxu0 0.0
    %3218 = vmatprep.subr.mxu0 0.0
    %3219 = vmatpush1.msra.mxu0 0.0
    %3220 = vmatprep.subr.mxu0 0.0
    %3221 = vmatpush1.msra.mxu0 0.0
    %3222 = vmatprep.subr.mxu0 0.0
    %3223 = vmatpush1.msra.mxu0 0.0
    %3224 = vmatprep.subr.mxu0 0.0
    %3225 = vmatpush1.msra.mxu0 0.0
    %3226 = vmatprep.subr.mxu0 0.0
    %3227 = vmatpush1.msra.mxu0 0.0
    %3228 = vmatprep.subr.mxu0 0.0
    %3229 = vmatpush1.msra.mxu0 0.0
    %3230 = vmatprep.subr.mxu0 0.0
    %3231 = vmatpush1.msra.mxu0 %v3035
    %3232 = vmatprep.subr.mxu0 0.0
    %3233 = vmatpush2.msra.mxu0 0.0
    %3234 = vmatprep.subr.mxu0 0.0
    %3235 = vmatpush2.msra.mxu0 0.0
    %3236 = vmatprep.subr.mxu0 0.0
    %3237 = vmatpush2.msra.mxu0 0.0
    %3238 = vmatprep.subr.mxu0 0.0
    %3239 = vmatpush2.msra.mxu0 0.0
    %3240 = vmatprep.subr.mxu0 0.0
    %3241 = vmatpush2.msra.mxu0 0.0
    %3242 = vmatprep.subr.mxu0 0.0
    %3243 = vmatpush2.msra.mxu0 0.0
    %3244 = vmatprep.subr.mxu0 0.0
    %3245 = vmatpush2.msra.mxu0 0.0
    %3246 = vmatprep.subr.mxu0 0.0
    %3247 = vmatpush2.msra.mxu0 0.0
    %3248 = vmatprep.subr.mxu0 0.0
    %3249 = vmatpush2.msra.mxu0 0.0
    %3250 = vmatprep.subr.mxu0 0.0
    %3251 = vmatpush2.msra.mxu0 0.0
    %3252 = vmatprep.subr.mxu0 0.0
    %3253 = vmatpush2.msra.mxu0 0.0
    %3254 = vmatprep.subr.mxu0 0.0
    %3255 = vmatpush2.msra.mxu0 0.0
    %3256 = vmatprep.subr.mxu0 0.0
    %3257 = vmatpush2.msra.mxu0 0.0
    %3258 = vmatprep.subr.mxu0 0.0
    %3259 = vmatpush2.msra.mxu0 0.0
    %3260 = vmatprep.subr.mxu0 0.0
    %3261 = vmatpush2.msra.mxu0 0.0
    %3262 = vmatprep.subr.mxu0 0.0
    %3263 = vmatpush2.msra.mxu0 0.0
    %3264 = vmatprep.mubr.f32.mxu0 0.0
    %3265 = vmatmul.mubr.f32.gmra.mxu0 %v3195
    %v3266 = vpop.f32.mrf.mxu0
    %v3267 = vadd.f32 %v3186, %v3266
    %v3268 = vpop.f32.mrf.mxu0
    %3269 = vmatprep.mubr.f32.mxu0 0.0
    %3270 = vmatmul.mubr.f32.gmra.mxu0 %v3198
    %v3271 = vpop.f32.mrf.mxu0
    %v3272 = vadd.f32 %v3191, %v3271
    %v3273 = vpop.f32.mrf.mxu0
    %3274 = vdwg.mxu0
    %v3275 = vld [vmem:[#allocation4 + $0x4e0] sm:$0xff]
    %v3276 = vld [vmem:[#allocation4 + $0x4e8] sm:$0xff]
    %v3278 = vsel %vm851, %v3275, 0
    %v3281 = vsel %vm851, %v3276, 0
    %3283 = vmatprep.subr.mxu0 0.0
    %3284 = vmatpush1.msra.mxu0 0.0
    %3285 = vmatprep.subr.mxu0 0.0
    %3286 = vmatpush1.msra.mxu0 0.0
    %3287 = vmatprep.subr.mxu0 0.0
    %3288 = vmatpush1.msra.mxu0 0.0
    %3289 = vmatprep.subr.mxu0 0.0
    %3290 = vmatpush1.msra.mxu0 0.0
    %3291 = vmatprep.subr.mxu0 0.0
    %3292 = vmatpush1.msra.mxu0 0.0
    %3293 = vmatprep.subr.mxu0 0.0
    %3294 = vmatpush1.msra.mxu0 0.0
    %3295 = vmatprep.subr.mxu0 0.0
    %3296 = vmatpush1.msra.mxu0 0.0
    %3297 = vmatprep.subr.mxu0 0.0
    %3298 = vmatpush1.msra.mxu0 0.0
    %3299 = vmatprep.subr.mxu0 0.0
    %3300 = vmatpush1.msra.mxu0 0.0
    %3301 = vmatprep.subr.mxu0 0.0
    %3302 = vmatpush1.msra.mxu0 0.0
    %3303 = vmatprep.subr.mxu0 0.0
    %3304 = vmatpush1.msra.mxu0 0.0
    %3305 = vmatprep.subr.mxu0 0.0
    %3306 = vmatpush1.msra.mxu0 0.0
    %3307 = vmatprep.subr.mxu0 0.0
    %3308 = vmatpush1.msra.mxu0 0.0
    %3309 = vmatprep.subr.mxu0 0.0
    %3310 = vmatpush1.msra.mxu0 0.0
    %3311 = vmatprep.subr.mxu0 0.0
    %3312 = vmatpush1.msra.mxu0 0.0
    %3313 = vmatprep.subr.mxu0 0.0
    %3314 = vmatpush1.msra.mxu0 %v3106
    %3315 = vmatprep.subr.mxu0 0.0
    %3316 = vmatpush2.msra.mxu0 0.0
    %3317 = vmatprep.subr.mxu0 0.0
    %3318 = vmatpush2.msra.mxu0 0.0
    %3319 = vmatprep.subr.mxu0 0.0
    %3320 = vmatpush2.msra.mxu0 0.0
    %3321 = vmatprep.subr.mxu0 0.0
    %3322 = vmatpush2.msra.mxu0 0.0
    %3323 = vmatprep.subr.mxu0 0.0
    %3324 = vmatpush2.msra.mxu0 0.0
    %3325 = vmatprep.subr.mxu0 0.0
    %3326 = vmatpush2.msra.mxu0 0.0
    %3327 = vmatprep.subr.mxu0 0.0
    %3328 = vmatpush2.msra.mxu0 0.0
    %3329 = vmatprep.subr.mxu0 0.0
    %3330 = vmatpush2.msra.mxu0 0.0
    %3331 = vmatprep.subr.mxu0 0.0
    %3332 = vmatpush2.msra.mxu0 0.0
    %3333 = vmatprep.subr.mxu0 0.0
    %3334 = vmatpush2.msra.mxu0 0.0
    %3335 = vmatprep.subr.mxu0 0.0
    %3336 = vmatpush2.msra.mxu0 0.0
    %3337 = vmatprep.subr.mxu0 0.0
    %3338 = vmatpush2.msra.mxu0 0.0
    %3339 = vmatprep.subr.mxu0 0.0
    %3340 = vmatpush2.msra.mxu0 0.0
    %3341 = vmatprep.subr.mxu0 0.0
    %3342 = vmatpush2.msra.mxu0 0.0
    %3343 = vmatprep.subr.mxu0 0.0
    %3344 = vmatpush2.msra.mxu0 0.0
    %3345 = vmatprep.subr.mxu0 0.0
    %3346 = vmatpush2.msra.mxu0 0.0
    %3347 = vmatprep.mubr.f32.mxu0 0.0
    %3348 = vmatmul.mubr.f32.gmra.mxu0 %v3278
    %v3349 = vpop.f32.mrf.mxu0
    %v3350 = vadd.f32 0.0, %v3349
    %v3351 = vpop.f32.mrf.mxu0
    %3352 = vmatprep.mubr.f32.mxu0 0.0
    %3353 = vmatmul.mubr.f32.gmra.mxu0 %v3281
    %v3354 = vpop.f32.mrf.mxu0
    %v3355 = vadd.f32 0.0, %v3354
    %v3356 = vpop.f32.mrf.mxu0
    %3357 = vdwg.mxu0
    %v3358 = vadd.f32 %v3267, %v3350
    %v3359 = vadd.f32 %v3272, %v3355
    %v3360 = vlaneseq
    %v3361 = vshrl.u32 %v3360, 7
    %v3362 = vsub.s32 0, %v3361
    %v3363 = vrot.slane %v42, %v3362
    %v3364 = vadd.f32 %v3358, %v3363
    %v3365 = vadd.f32 %v3359, %v3363
    %v3366 = vsub.f32 0.0, %v3364
    %v3367 = vsub.f32 0.0, %v3365
    %v3368 = vmul.f32 %v3366, 1.442695
    %v3369 = vpow.pop %v3368
    %v3370 = vmul.f32 %v3367, 1.442695
    %v3371 = vpow.pop %v3370
    %v3372 = vadd.f32 %v3369, 1.0
    %v3373 = vadd.f32 %v3371, 1.0
    %v3374 = vrcp.pop %v3372
    %v3375 = vrcp.pop %v3373
    %3376 = vst [vmem:[%s3] sm:$0xff] %v3374
    %3377 = vst [vmem:[%s3 + $0x8] sm:$0xff] %v3375
    %s3378 = scalar_lea.vmem %s0, 16
    %v3379 = vld [vmem:[%s3378] sm:$0xff]
    %v3380 = vld [vmem:[%s3378 + $0x8] sm:$0xff]
    %v3381 = vld [vmem:[#allocation2] sm:$0xff]
    %v3382 = vld [vmem:[#allocation2 + $0x8] sm:$0xff]
    %v3383 = vld [vmem:[#allocation2 + $0x10] sm:$0xff]
    %v3384 = vld [vmem:[#allocation2 + $0x18] sm:$0xff]
    %v3385 = vld [vmem:[#allocation2 + $0x20] sm:$0xff]
    %v3386 = vld [vmem:[#allocation2 + $0x28] sm:$0xff]
    %v3387 = vld [vmem:[#allocation2 + $0x30] sm:$0xff]
    %v3388 = vld [vmem:[#allocation2 + $0x38] sm:$0xff]
    %v3389 = vld [vmem:[#allocation2 + $0x40] sm:$0xff]
    %v3390 = vld [vmem:[#allocation2 + $0x48] sm:$0xff]
    %v3391 = vld [vmem:[#allocation2 + $0x50] sm:$0xff]
    %v3392 = vld [vmem:[#allocation2 + $0x58] sm:$0xff]
    %v3393 = vld [vmem:[#allocation2 + $0x60] sm:$0xff]
    %v3394 = vld [vmem:[#allocation2 + $0x68] sm:$0xff]
    %v3395 = vld [vmem:[#allocation2 + $0x70] sm:$0xff]
    %v3396 = vld [vmem:[#allocation2 + $0x78] sm:$0xff]
    %v3397 = vld [vmem:[#allocation2 + $0x80] sm:$0xff]
    %v3398 = vld [vmem:[#allocation2 + $0x88] sm:$0xff]
    %v3399 = vld [vmem:[#allocation2 + $0x90] sm:$0xff]
    %v3400 = vld [vmem:[#allocation2 + $0x98] sm:$0xff]
    %v3401 = vld [vmem:[#allocation2 + $0xa0] sm:$0xff]
    %v3402 = vld [vmem:[#allocation2 + $0xa8] sm:$0xff]
    %v3403 = vld [vmem:[#allocation2 + $0xb0] sm:$0xff]
    %v3404 = vld [vmem:[#allocation2 + $0xb8] sm:$0xff]
    %v3406 = vsel %vm69, %v3379, 0
    %v3409 = vsel %vm69, %v3380, 0
    %3411 = vmatprep.subr.mxu0 0.0
    %3412 = vmatpush1.msra.mxu0 0.0
    %3413 = vmatprep.subr.mxu0 0.0
    %3414 = vmatpush1.msra.mxu0 0.0
    %3415 = vmatprep.subr.mxu0 0.0
    %3416 = vmatpush1.msra.mxu0 0.0
    %3417 = vmatprep.subr.mxu0 0.0
    %3418 = vmatpush1.msra.mxu0 0.0
    %3419 = vmatprep.subr.mxu0 0.0
    %3420 = vmatpush1.msra.mxu0 0.0
    %3421 = vmatprep.subr.mxu0 0.0
    %3422 = vmatpush1.msra.mxu0 0.0
    %3423 = vmatprep.subr.mxu0 0.0
    %3424 = vmatpush1.msra.mxu0 0.0
    %3425 = vmatprep.subr.mxu0 0.0
    %3426 = vmatpush1.msra.mxu0 0.0
    %3427 = vmatprep.subr.mxu0 %v3403
    %3428 = vmatpush1.msra.mxu0 %v3402
    %3429 = vmatprep.subr.mxu0 %v3400
    %3430 = vmatpush1.msra.mxu0 %v3399
    %3431 = vmatprep.subr.mxu0 %v3397
    %3432 = vmatpush1.msra.mxu0 %v3396
    %3433 = vmatprep.subr.mxu0 %v3394
    %3434 = vmatpush1.msra.mxu0 %v3393
    %3435 = vmatprep.subr.mxu0 %v3391
    %3436 = vmatpush1.msra.mxu0 %v3390
    %3437 = vmatprep.subr.mxu0 %v3388
    %3438 = vmatpush1.msra.mxu0 %v3387
    %3439 = vmatprep.subr.mxu0 %v3385
    %3440 = vmatpush1.msra.mxu0 %v3384
    %3441 = vmatprep.subr.mxu0 %v3382
    %3442 = vmatpush1.msra.mxu0 %v3381
    %3443 = vmatprep.subr.mxu0 0.0
    %3444 = vmatpush2.msra.mxu0 0.0
    %3445 = vmatprep.subr.mxu0 0.0
    %3446 = vmatpush2.msra.mxu0 0.0
    %3447 = vmatprep.subr.mxu0 0.0
    %3448 = vmatpush2.msra.mxu0 0.0
    %3449 = vmatprep.subr.mxu0 0.0
    %3450 = vmatpush2.msra.mxu0 0.0
    %3451 = vmatprep.subr.mxu0 0.0
    %3452 = vmatpush2.msra.mxu0 0.0
    %3453 = vmatprep.subr.mxu0 0.0
    %3454 = vmatpush2.msra.mxu0 0.0
    %3455 = vmatprep.subr.mxu0 0.0
    %3456 = vmatpush2.msra.mxu0 0.0
    %3457 = vmatprep.subr.mxu0 0.0
    %3458 = vmatpush2.msra.mxu0 0.0
    %3459 = vmatprep.subr.mxu0 0.0
    %3460 = vmatpush2.msra.mxu0 0.0
    %3461 = vmatprep.subr.mxu0 0.0
    %3462 = vmatpush2.msra.mxu0 0.0
    %3463 = vmatprep.subr.mxu0 0.0
    %3464 = vmatpush2.msra.mxu0 0.0
    %3465 = vmatprep.subr.mxu0 0.0
    %3466 = vmatpush2.msra.mxu0 0.0
    %3467 = vmatprep.subr.mxu0 0.0
    %3468 = vmatpush2.msra.mxu0 0.0
    %3469 = vmatprep.subr.mxu0 0.0
    %3470 = vmatpush2.msra.mxu0 0.0
    %3471 = vmatprep.subr.mxu0 0.0
    %3472 = vmatpush2.msra.mxu0 0.0
    %3473 = vmatprep.subr.mxu0 0.0
    %3474 = vmatpush2.msra.mxu0 0.0
    %3475 = vmatprep.mubr.f32.mxu0 0.0
    %3476 = vmatmul.mubr.f32.gmra.mxu0 %v3406
    %v3477 = vpop.f32.mrf.mxu0
    %v3478 = vadd.f32 0.0, %v3477
    %v3479 = vpop.f32.mrf.mxu0
    %v3480 = vadd.f32 0.0, %v3479
    %3481 = vmatprep.mubr.f32.mxu0 0.0
    %3482 = vmatmul.mubr.f32.gmra.mxu0 %v3409
    %v3483 = vpop.f32.mrf.mxu0
    %v3484 = vadd.f32 0.0, %v3483
    %v3485 = vpop.f32.mrf.mxu0
    %v3486 = vadd.f32 0.0, %v3485
    %3487 = vdwg.mxu0
    %3488 = vmatprep.subr.mxu0 0.0
    %3489 = vmatpush1.msra.mxu0 0.0
    %3490 = vmatprep.subr.mxu0 0.0
    %3491 = vmatpush1.msra.mxu0 0.0
    %3492 = vmatprep.subr.mxu0 0.0
    %3493 = vmatpush1.msra.mxu0 0.0
    %3494 = vmatprep.subr.mxu0 0.0
    %3495 = vmatpush1.msra.mxu0 0.0
    %3496 = vmatprep.subr.mxu0 0.0
    %3497 = vmatpush1.msra.mxu0 0.0
    %3498 = vmatprep.subr.mxu0 0.0
    %3499 = vmatpush1.msra.mxu0 0.0
    %3500 = vmatprep.subr.mxu0 0.0
    %3501 = vmatpush1.msra.mxu0 0.0
    %3502 = vmatprep.subr.mxu0 0.0
    %3503 = vmatpush1.msra.mxu0 0.0
    %3504 = vmatprep.subr.mxu0 0.0
    %3505 = vmatpush1.msra.mxu0 %v3404
    %3506 = vmatprep.subr.mxu0 0.0
    %3507 = vmatpush1.msra.mxu0 %v3401
    %3508 = vmatprep.subr.mxu0 0.0
    %3509 = vmatpush1.msra.mxu0 %v3398
    %3510 = vmatprep.subr.mxu0 0.0
    %3511 = vmatpush1.msra.mxu0 %v3395
    %3512 = vmatprep.subr.mxu0 0.0
    %3513 = vmatpush1.msra.mxu0 %v3392
    %3514 = vmatprep.subr.mxu0 0.0
    %3515 = vmatpush1.msra.mxu0 %v3389
    %3516 = vmatprep.subr.mxu0 0.0
    %3517 = vmatpush1.msra.mxu0 %v3386
    %3518 = vmatprep.subr.mxu0 0.0
    %3519 = vmatpush1.msra.mxu0 %v3383
    %3520 = vmatprep.subr.mxu0 0.0
    %3521 = vmatpush2.msra.mxu0 0.0
    %3522 = vmatprep.subr.mxu0 0.0
    %3523 = vmatpush2.msra.mxu0 0.0
    %3524 = vmatprep.subr.mxu0 0.0
    %3525 = vmatpush2.msra.mxu0 0.0
    %3526 = vmatprep.subr.mxu0 0.0
    %3527 = vmatpush2.msra.mxu0 0.0
    %3528 = vmatprep.subr.mxu0 0.0
    %3529 = vmatpush2.msra.mxu0 0.0
    %3530 = vmatprep.subr.mxu0 0.0
    %3531 = vmatpush2.msra.mxu0 0.0
    %3532 = vmatprep.subr.mxu0 0.0
    %3533 = vmatpush2.msra.mxu0 0.0
    %3534 = vmatprep.subr.mxu0 0.0
    %3535 = vmatpush2.msra.mxu0 0.0
    %3536 = vmatprep.subr.mxu0 0.0
    %3537 = vmatpush2.msra.mxu0 0.0
    %3538 = vmatprep.subr.mxu0 0.0
    %3539 = vmatpush2.msra.mxu0 0.0
    %3540 = vmatprep.subr.mxu0 0.0
    %3541 = vmatpush2.msra.mxu0 0.0
    %3542 = vmatprep.subr.mxu0 0.0
    %3543 = vmatpush2.msra.mxu0 0.0
    %3544 = vmatprep.subr.mxu0 0.0
    %3545 = vmatpush2.msra.mxu0 0.0
    %3546 = vmatprep.subr.mxu0 0.0
    %3547 = vmatpush2.msra.mxu0 0.0
    %3548 = vmatprep.subr.mxu0 0.0
    %3549 = vmatpush2.msra.mxu0 0.0
    %3550 = vmatprep.subr.mxu0 0.0
    %3551 = vmatpush2.msra.mxu0 0.0
    %3552 = vmatprep.mubr.f32.mxu0 0.0
    %3553 = vmatmul.mubr.f32.gmra.mxu0 %v3406
    %v3554 = vpop.f32.mrf.mxu0
    %v3555 = vadd.f32 0.0, %v3554
    %v3556 = vpop.f32.mrf.mxu0
    %3557 = vmatprep.mubr.f32.mxu0 0.0
    %3558 = vmatmul.mubr.f32.gmra.mxu0 %v3409
    %v3559 = vpop.f32.mrf.mxu0
    %v3560 = vadd.f32 0.0, %v3559
    %v3561 = vpop.f32.mrf.mxu0
    %3562 = vdwg.mxu0
    %v3563 = vld [vmem:[#allocation4 + $0x400] sm:$0xff]
    %v3564 = vld [vmem:[#allocation4 + $0x410] sm:$0xff]
    %v3566 = vsel %vm230, %v3564, 0
    %3568 = vmatprep.subr.mxu0 0.0
    %3569 = vmatpush1.msra.mxu0 0.0
    %3570 = vmatprep.subr.mxu0 0.0
    %3571 = vmatpush1.msra.mxu0 0.0
    %3572 = vmatprep.subr.mxu0 0.0
    %3573 = vmatpush1.msra.mxu0 0.0
    %3574 = vmatprep.subr.mxu0 0.0
    %3575 = vmatpush1.msra.mxu0 0.0
    %3576 = vmatprep.subr.mxu0 0.0
    %3577 = vmatpush1.msra.mxu0 0.0
    %3578 = vmatprep.subr.mxu0 0.0
    %3579 = vmatpush1.msra.mxu0 0.0
    %3580 = vmatprep.subr.mxu0 0.0
    %3581 = vmatpush1.msra.mxu0 0.0
    %3582 = vmatprep.subr.mxu0 0.0
    %3583 = vmatpush1.msra.mxu0 0.0
    %3584 = vmatprep.subr.mxu0 0.0
    %3585 = vmatpush1.msra.mxu0 0.0
    %3586 = vmatprep.subr.mxu0 0.0
    %3587 = vmatpush1.msra.mxu0 0.0
    %3588 = vmatprep.subr.mxu0 0.0
    %3589 = vmatpush1.msra.mxu0 0.0
    %3590 = vmatprep.subr.mxu0 0.0
    %3591 = vmatpush1.msra.mxu0 0.0
    %3592 = vmatprep.subr.mxu0 0.0
    %3593 = vmatpush1.msra.mxu0 0.0
    %3594 = vmatprep.subr.mxu0 0.0
    %3595 = vmatpush1.msra.mxu0 0.0
    %3596 = vmatprep.subr.mxu0 0.0
    %3597 = vmatpush1.msra.mxu0 %v3486
    %3598 = vmatprep.subr.mxu0 0.0
    %3599 = vmatpush1.msra.mxu0 %v3480
    %3600 = vmatprep.subr.mxu0 0.0
    %3601 = vmatpush2.msra.mxu0 0.0
    %3602 = vmatprep.subr.mxu0 0.0
    %3603 = vmatpush2.msra.mxu0 0.0
    %3604 = vmatprep.subr.mxu0 0.0
    %3605 = vmatpush2.msra.mxu0 0.0
    %3606 = vmatprep.subr.mxu0 0.0
    %3607 = vmatpush2.msra.mxu0 0.0
    %3608 = vmatprep.subr.mxu0 0.0
    %3609 = vmatpush2.msra.mxu0 0.0
    %3610 = vmatprep.subr.mxu0 0.0
    %3611 = vmatpush2.msra.mxu0 0.0
    %3612 = vmatprep.subr.mxu0 0.0
    %3613 = vmatpush2.msra.mxu0 0.0
    %3614 = vmatprep.subr.mxu0 0.0
    %3615 = vmatpush2.msra.mxu0 0.0
    %3616 = vmatprep.subr.mxu0 0.0
    %3617 = vmatpush2.msra.mxu0 0.0
    %3618 = vmatprep.subr.mxu0 0.0
    %3619 = vmatpush2.msra.mxu0 0.0
    %3620 = vmatprep.subr.mxu0 0.0
    %3621 = vmatpush2.msra.mxu0 0.0
    %3622 = vmatprep.subr.mxu0 0.0
    %3623 = vmatpush2.msra.mxu0 0.0
    %3624 = vmatprep.subr.mxu0 0.0
    %3625 = vmatpush2.msra.mxu0 0.0
    %3626 = vmatprep.subr.mxu0 0.0
    %3627 = vmatpush2.msra.mxu0 0.0
    %3628 = vmatprep.subr.mxu0 0.0
    %3629 = vmatpush2.msra.mxu0 0.0
    %3630 = vmatprep.subr.mxu0 0.0
    %3631 = vmatpush2.msra.mxu0 0.0
    %3632 = vmatprep.mubr.f32.mxu0 0.0
    %3633 = vmatmul.mubr.f32.gmra.mxu0 %v3566
    %v3634 = vpop.f32.mrf.mxu0
    %v3635 = vadd.f32 0.0, %v3634
    %v3636 = vpop.f32.mrf.mxu0
    %3637 = vdwg.mxu0
    %v3639 = vsel %vm230, %v3563, 0
    %3641 = vmatprep.subr.mxu0 0.0
    %3642 = vmatpush1.msra.mxu0 0.0
    %3643 = vmatprep.subr.mxu0 0.0
    %3644 = vmatpush1.msra.mxu0 0.0
    %3645 = vmatprep.subr.mxu0 0.0
    %3646 = vmatpush1.msra.mxu0 0.0
    %3647 = vmatprep.subr.mxu0 0.0
    %3648 = vmatpush1.msra.mxu0 0.0
    %3649 = vmatprep.subr.mxu0 0.0
    %3650 = vmatpush1.msra.mxu0 0.0
    %3651 = vmatprep.subr.mxu0 0.0
    %3652 = vmatpush1.msra.mxu0 0.0
    %3653 = vmatprep.subr.mxu0 0.0
    %3654 = vmatpush1.msra.mxu0 0.0
    %3655 = vmatprep.subr.mxu0 0.0
    %3656 = vmatpush1.msra.mxu0 0.0
    %3657 = vmatprep.subr.mxu0 0.0
    %3658 = vmatpush1.msra.mxu0 0.0
    %3659 = vmatprep.subr.mxu0 0.0
    %3660 = vmatpush1.msra.mxu0 0.0
    %3661 = vmatprep.subr.mxu0 0.0
    %3662 = vmatpush1.msra.mxu0 0.0
    %3663 = vmatprep.subr.mxu0 0.0
    %3664 = vmatpush1.msra.mxu0 0.0
    %3665 = vmatprep.subr.mxu0 0.0
    %3666 = vmatpush1.msra.mxu0 0.0
    %3667 = vmatprep.subr.mxu0 0.0
    %3668 = vmatpush1.msra.mxu0 0.0
    %3669 = vmatprep.subr.mxu0 0.0
    %3670 = vmatpush1.msra.mxu0 %v3484
    %3671 = vmatprep.subr.mxu0 0.0
    %3672 = vmatpush1.msra.mxu0 %v3478
    %3673 = vmatprep.subr.mxu0 0.0
    %3674 = vmatpush2.msra.mxu0 0.0
    %3675 = vmatprep.subr.mxu0 0.0
    %3676 = vmatpush2.msra.mxu0 0.0
    %3677 = vmatprep.subr.mxu0 0.0
    %3678 = vmatpush2.msra.mxu0 0.0
    %3679 = vmatprep.subr.mxu0 0.0
    %3680 = vmatpush2.msra.mxu0 0.0
    %3681 = vmatprep.subr.mxu0 0.0
    %3682 = vmatpush2.msra.mxu0 0.0
    %3683 = vmatprep.subr.mxu0 0.0
    %3684 = vmatpush2.msra.mxu0 0.0
    %3685 = vmatprep.subr.mxu0 0.0
    %3686 = vmatpush2.msra.mxu0 0.0
    %3687 = vmatprep.subr.mxu0 0.0
    %3688 = vmatpush2.msra.mxu0 0.0
    %3689 = vmatprep.subr.mxu0 0.0
    %3690 = vmatpush2.msra.mxu0 0.0
    %3691 = vmatprep.subr.mxu0 0.0
    %3692 = vmatpush2.msra.mxu0 0.0
    %3693 = vmatprep.subr.mxu0 0.0
    %3694 = vmatpush2.msra.mxu0 0.0
    %3695 = vmatprep.subr.mxu0 0.0
    %3696 = vmatpush2.msra.mxu0 0.0
    %3697 = vmatprep.subr.mxu0 0.0
    %3698 = vmatpush2.msra.mxu0 0.0
    %3699 = vmatprep.subr.mxu0 0.0
    %3700 = vmatpush2.msra.mxu0 0.0
    %3701 = vmatprep.subr.mxu0 0.0
    %3702 = vmatpush2.msra.mxu0 0.0
    %3703 = vmatprep.subr.mxu0 0.0
    %3704 = vmatpush2.msra.mxu0 0.0
    %3705 = vmatprep.mubr.f32.mxu0 0.0
    %3706 = vmatmul.mubr.f32.gmra.mxu0 %v3639
    %v3707 = vpop.f32.mrf.mxu0
    %v3708 = vadd.f32 %v3635, %v3707
    %v3709 = vpop.f32.mrf.mxu0
    %3710 = vdwg.mxu0
    %v3711 = vld [vmem:[#allocation4 + $0x420] sm:$0xff]
    %v3713 = vsel %vm230, %v3711, 0
    %3715 = vmatprep.subr.mxu0 0.0
    %3716 = vmatpush1.msra.mxu0 0.0
    %3717 = vmatprep.subr.mxu0 0.0
    %3718 = vmatpush1.msra.mxu0 0.0
    %3719 = vmatprep.subr.mxu0 0.0
    %3720 = vmatpush1.msra.mxu0 0.0
    %3721 = vmatprep.subr.mxu0 0.0
    %3722 = vmatpush1.msra.mxu0 0.0
    %3723 = vmatprep.subr.mxu0 0.0
    %3724 = vmatpush1.msra.mxu0 0.0
    %3725 = vmatprep.subr.mxu0 0.0
    %3726 = vmatpush1.msra.mxu0 0.0
    %3727 = vmatprep.subr.mxu0 0.0
    %3728 = vmatpush1.msra.mxu0 0.0
    %3729 = vmatprep.subr.mxu0 0.0
    %3730 = vmatpush1.msra.mxu0 0.0
    %3731 = vmatprep.subr.mxu0 0.0
    %3732 = vmatpush1.msra.mxu0 0.0
    %3733 = vmatprep.subr.mxu0 0.0
    %3734 = vmatpush1.msra.mxu0 0.0
    %3735 = vmatprep.subr.mxu0 0.0
    %3736 = vmatpush1.msra.mxu0 0.0
    %3737 = vmatprep.subr.mxu0 0.0
    %3738 = vmatpush1.msra.mxu0 0.0
    %3739 = vmatprep.subr.mxu0 0.0
    %3740 = vmatpush1.msra.mxu0 0.0
    %3741 = vmatprep.subr.mxu0 0.0
    %3742 = vmatpush1.msra.mxu0 0.0
    %3743 = vmatprep.subr.mxu0 0.0
    %3744 = vmatpush1.msra.mxu0 %v3560
    %3745 = vmatprep.subr.mxu0 0.0
    %3746 = vmatpush1.msra.mxu0 %v3555
    %3747 = vmatprep.subr.mxu0 0.0
    %3748 = vmatpush2.msra.mxu0 0.0
    %3749 = vmatprep.subr.mxu0 0.0
    %3750 = vmatpush2.msra.mxu0 0.0
    %3751 = vmatprep.subr.mxu0 0.0
    %3752 = vmatpush2.msra.mxu0 0.0
    %3753 = vmatprep.subr.mxu0 0.0
    %3754 = vmatpush2.msra.mxu0 0.0
    %3755 = vmatprep.subr.mxu0 0.0
    %3756 = vmatpush2.msra.mxu0 0.0
    %3757 = vmatprep.subr.mxu0 0.0
    %3758 = vmatpush2.msra.mxu0 0.0
    %3759 = vmatprep.subr.mxu0 0.0
    %3760 = vmatpush2.msra.mxu0 0.0
    %3761 = vmatprep.subr.mxu0 0.0
    %3762 = vmatpush2.msra.mxu0 0.0
    %3763 = vmatprep.subr.mxu0 0.0
    %3764 = vmatpush2.msra.mxu0 0.0
    %3765 = vmatprep.subr.mxu0 0.0
    %3766 = vmatpush2.msra.mxu0 0.0
    %3767 = vmatprep.subr.mxu0 0.0
    %3768 = vmatpush2.msra.mxu0 0.0
    %3769 = vmatprep.subr.mxu0 0.0
    %3770 = vmatpush2.msra.mxu0 0.0
    %3771 = vmatprep.subr.mxu0 0.0
    %3772 = vmatpush2.msra.mxu0 0.0
    %3773 = vmatprep.subr.mxu0 0.0
    %3774 = vmatpush2.msra.mxu0 0.0
    %3775 = vmatprep.subr.mxu0 0.0
    %3776 = vmatpush2.msra.mxu0 0.0
    %3777 = vmatprep.subr.mxu0 0.0
    %3778 = vmatpush2.msra.mxu0 0.0
    %3779 = vmatprep.mubr.f32.mxu0 0.0
    %3780 = vmatmul.mubr.f32.gmra.mxu0 %v3713
    %v3781 = vpop.f32.mrf.mxu0
    %v3782 = vadd.f32 0.0, %v3781
    %v3783 = vpop.f32.mrf.mxu0
    %3784 = vdwg.mxu0
    %v3785 = vadd.f32 %v3708, %v3782
    %v3786 = vld [vmem:[#allocation4] sm:$0xff]
    %v3787 = vld [vmem:[#allocation4 + $0x8] sm:$0xff]
    %v3788 = vld [vmem:[#allocation4 + $0x10] sm:$0xff]
    %v3789 = vld [vmem:[#allocation4 + $0x18] sm:$0xff]
    %v3790 = vld [vmem:[#allocation4 + $0x20] sm:$0xff]
    %v3791 = vld [vmem:[#allocation4 + $0x28] sm:$0xff]
    %v3792 = vld [vmem:[#allocation4 + $0x30] sm:$0xff]
    %v3793 = vld [vmem:[#allocation4 + $0x38] sm:$0xff]
    %v3794 = vld [vmem:[#allocation4 + $0x40] sm:$0xff]
    %v3795 = vld [vmem:[#allocation4 + $0x48] sm:$0xff]
    %v3796 = vld [vmem:[#allocation4 + $0x50] sm:$0xff]
    %v3797 = vld [vmem:[#allocation4 + $0x58] sm:$0xff]
    %v3798 = vld [vmem:[#allocation4 + $0x60] sm:$0xff]
    %v3799 = vld [vmem:[#allocation4 + $0x68] sm:$0xff]
    %v3800 = vld [vmem:[#allocation4 + $0x70] sm:$0xff]
    %v3801 = vld [vmem:[#allocation4 + $0x78] sm:$0xff]
    %v3802 = vld [vmem:[#allocation4 + $0x200] sm:$0xff]
    %v3803 = vld [vmem:[#allocation4 + $0x208] sm:$0xff]
    %v3804 = vld [vmem:[#allocation4 + $0x210] sm:$0xff]
    %v3805 = vld [vmem:[#allocation4 + $0x218] sm:$0xff]
    %v3806 = vld [vmem:[#allocation4 + $0x220] sm:$0xff]
    %v3807 = vld [vmem:[#allocation4 + $0x228] sm:$0xff]
    %v3808 = vld [vmem:[#allocation4 + $0x230] sm:$0xff]
    %v3809 = vld [vmem:[#allocation4 + $0x238] sm:$0xff]
    %v3810 = vld [vmem:[#allocation4 + $0x240] sm:$0xff]
    %v3811 = vld [vmem:[#allocation4 + $0x248] sm:$0xff]
    %v3812 = vld [vmem:[#allocation4 + $0x250] sm:$0xff]
    %v3813 = vld [vmem:[#allocation4 + $0x258] sm:$0xff]
    %v3814 = vld [vmem:[#allocation4 + $0x260] sm:$0xff]
    %v3815 = vld [vmem:[#allocation4 + $0x268] sm:$0xff]
    %v3816 = vld [vmem:[#allocation4 + $0x270] sm:$0xff]
    %v3817 = vld [vmem:[#allocation4 + $0x278] sm:$0xff]
    %v3818 = vrot.slane %v3785, 4
    %v3819 = vadd.f32 %v3785, %v3818
    %v3820 = vrot.slane %v3819, 2
    %v3821 = vadd.f32 %v3819, %v3820
    %v3822 = vrot.slane %v3821, 1
    %v3823 = vadd.f32 %v3821, %v3822
    %v3824 = vmul.f32 %v3785, %v3785
    %v3825 = vrot.slane %v3824, 4
    %v3826 = vadd.f32 %v3824, %v3825
    %v3827 = vrot.slane %v3826, 2
    %v3828 = vadd.f32 %v3826, %v3827
    %v3829 = vrot.slane %v3828, 1
    %v3830 = vadd.f32 %v3828, %v3829
    %v3831 = vsel %vm497, %v3823, %v3830
    %3832 = vmatprep.subr.mxu0 0.0
    %3833 = vmatpush1.msra.mxu0 %v3801
    %3834 = vmatprep.subr.mxu0 0.0
    %3835 = vmatpush1.msra.mxu0 %v3800
    %3836 = vmatprep.subr.mxu0 0.0
    %3837 = vmatpush1.msra.mxu0 %v3799
    %3838 = vmatprep.subr.mxu0 0.0
    %3839 = vmatpush1.msra.mxu0 %v3798
    %3840 = vmatprep.subr.mxu0 0.0
    %3841 = vmatpush1.msra.mxu0 %v3797
    %3842 = vmatprep.subr.mxu0 0.0
    %3843 = vmatpush1.msra.mxu0 %v3796
    %3844 = vmatprep.subr.mxu0 0.0
    %3845 = vmatpush1.msra.mxu0 %v3795
    %3846 = vmatprep.subr.mxu0 0.0
    %3847 = vmatpush1.msra.mxu0 %v3794
    %3848 = vmatprep.subr.mxu0 0.0
    %3849 = vmatpush1.msra.mxu0 %v3793
    %3850 = vmatprep.subr.mxu0 0.0
    %3851 = vmatpush1.msra.mxu0 %v3792
    %3852 = vmatprep.subr.mxu0 0.0
    %3853 = vmatpush1.msra.mxu0 %v3791
    %3854 = vmatprep.subr.mxu0 0.0
    %3855 = vmatpush1.msra.mxu0 %v3790
    %3856 = vmatprep.subr.mxu0 0.0
    %3857 = vmatpush1.msra.mxu0 %v3789
    %3858 = vmatprep.subr.mxu0 0.0
    %3859 = vmatpush1.msra.mxu0 %v3788
    %3860 = vmatprep.subr.mxu0 0.0
    %3861 = vmatpush1.msra.mxu0 %v3787
    %3862 = vmatprep.subr.mxu0 0.0
    %3863 = vmatpush1.msra.mxu0 %v3786
    %3864 = vmatprep.subr.mxu0 0.0
    %3865 = vmatpush2.msra.mxu0 0.0
    %3866 = vmatprep.subr.mxu0 0.0
    %3867 = vmatpush2.msra.mxu0 0.0
    %3868 = vmatprep.subr.mxu0 0.0
    %3869 = vmatpush2.msra.mxu0 0.0
    %3870 = vmatprep.subr.mxu0 0.0
    %3871 = vmatpush2.msra.mxu0 0.0
    %3872 = vmatprep.subr.mxu0 0.0
    %3873 = vmatpush2.msra.mxu0 0.0
    %3874 = vmatprep.subr.mxu0 0.0
    %3875 = vmatpush2.msra.mxu0 0.0
    %3876 = vmatprep.subr.mxu0 0.0
    %3877 = vmatpush2.msra.mxu0 0.0
    %3878 = vmatprep.subr.mxu0 0.0
    %3879 = vmatpush2.msra.mxu0 0.0
    %3880 = vmatprep.subr.mxu0 0.0
    %3881 = vmatpush2.msra.mxu0 0.0
    %3882 = vmatprep.subr.mxu0 0.0
    %3883 = vmatpush2.msra.mxu0 0.0
    %3884 = vmatprep.subr.mxu0 0.0
    %3885 = vmatpush2.msra.mxu0 0.0
    %3886 = vmatprep.subr.mxu0 0.0
    %3887 = vmatpush2.msra.mxu0 0.0
    %3888 = vmatprep.subr.mxu0 0.0
    %3889 = vmatpush2.msra.mxu0 0.0
    %3890 = vmatprep.subr.mxu0 0.0
    %3891 = vmatpush2.msra.mxu0 0.0
    %3892 = vmatprep.subr.mxu0 0.0
    %3893 = vmatpush2.msra.mxu0 0.0
    %3894 = vmatprep.subr.mxu0 0.0
    %3895 = vmatpush2.msra.mxu0 0.0
    %3896 = vmatprep.mubr.f32.mxu0 0.0
    %3897 = vmatmul.mubr.f32.gmra.mxu0 %v3831
    %v3898 = vpop.f32.mrf.mxu0
    %v3899 = vadd.f32 0.0, %v3898
    %v3900 = vpop.f32.mrf.mxu0
    %3901 = vdwg.mxu0
    %v3902 = vmul.f32 %v3899, 0.015625
    %v3903 = vmul.f32 %v3902, %v3902
    %v3905 = vrot.slane %v3903, 7
    %v3907 = vsub.f32 %v3902, %v3905
    %v3908 = vmax.f32 %v3907, 0.0
    %v3909 = vadd.f32 %v3908, 1e-05
    %v3910 = vrsqrt.pop %v3909
    %v3911 = vsel %vm497, %v3902, %v3910
    %3912 = vmatprep.subr.mxu0 0.0
    %3913 = vmatpush1.msra.mxu0 %v3817
    %3914 = vmatprep.subr.mxu0 0.0
    %3915 = vmatpush1.msra.mxu0 %v3816
    %3916 = vmatprep.subr.mxu0 0.0
    %3917 = vmatpush1.msra.mxu0 %v3815
    %3918 = vmatprep.subr.mxu0 0.0
    %3919 = vmatpush1.msra.mxu0 %v3814
    %3920 = vmatprep.subr.mxu0 0.0
    %3921 = vmatpush1.msra.mxu0 %v3813
    %3922 = vmatprep.subr.mxu0 0.0
    %3923 = vmatpush1.msra.mxu0 %v3812
    %3924 = vmatprep.subr.mxu0 0.0
    %3925 = vmatpush1.msra.mxu0 %v3811
    %3926 = vmatprep.subr.mxu0 0.0
    %3927 = vmatpush1.msra.mxu0 %v3810
    %3928 = vmatprep.subr.mxu0 0.0
    %3929 = vmatpush1.msra.mxu0 %v3809
    %3930 = vmatprep.subr.mxu0 0.0
    %3931 = vmatpush1.msra.mxu0 %v3808
    %3932 = vmatprep.subr.mxu0 0.0
    %3933 = vmatpush1.msra.mxu0 %v3807
    %3934 = vmatprep.subr.mxu0 0.0
    %3935 = vmatpush1.msra.mxu0 %v3806
    %3936 = vmatprep.subr.mxu0 0.0
    %3937 = vmatpush1.msra.mxu0 %v3805
    %3938 = vmatprep.subr.mxu0 0.0
    %3939 = vmatpush1.msra.mxu0 %v3804
    %3940 = vmatprep.subr.mxu0 0.0
    %3941 = vmatpush1.msra.mxu0 %v3803
    %3942 = vmatprep.subr.mxu0 0.0
    %3943 = vmatpush1.msra.mxu0 %v3802
    %3944 = vmatprep.subr.mxu0 0.0
    %3945 = vmatpush2.msra.mxu0 0.0
    %3946 = vmatprep.subr.mxu0 0.0
    %3947 = vmatpush2.msra.mxu0 0.0
    %3948 = vmatprep.subr.mxu0 0.0
    %3949 = vmatpush2.msra.mxu0 0.0
    %3950 = vmatprep.subr.mxu0 0.0
    %3951 = vmatpush2.msra.mxu0 0.0
    %3952 = vmatprep.subr.mxu0 0.0
    %3953 = vmatpush2.msra.mxu0 0.0
    %3954 = vmatprep.subr.mxu0 0.0
    %3955 = vmatpush2.msra.mxu0 0.0
    %3956 = vmatprep.subr.mxu0 0.0
    %3957 = vmatpush2.msra.mxu0 0.0
    %3958 = vmatprep.subr.mxu0 0.0
    %3959 = vmatpush2.msra.mxu0 0.0
    %3960 = vmatprep.subr.mxu0 0.0
    %3961 = vmatpush2.msra.mxu0 0.0
    %3962 = vmatprep.subr.mxu0 0.0
    %3963 = vmatpush2.msra.mxu0 0.0
    %3964 = vmatprep.subr.mxu0 0.0
    %3965 = vmatpush2.msra.mxu0 0.0
    %3966 = vmatprep.subr.mxu0 0.0
    %3967 = vmatpush2.msra.mxu0 0.0
    %3968 = vmatprep.subr.mxu0 0.0
    %3969 = vmatpush2.msra.mxu0 0.0
    %3970 = vmatprep.subr.mxu0 0.0
    %3971 = vmatpush2.msra.mxu0 0.0
    %3972 = vmatprep.subr.mxu0 0.0
    %3973 = vmatpush2.msra.mxu0 0.0
    %3974 = vmatprep.subr.mxu0 0.0
    %3975 = vmatpush2.msra.mxu0 0.0
    %3976 = vmatprep.mubr.f32.mxu0 0.0
    %3977 = vmatmul.mubr.f32.gmra.mxu0 %v3911
    %v3978 = vpop.f32.mrf.mxu0
    %v3979 = vadd.f32 0.0, %v3978
    %v3980 = vpop.f32.mrf.mxu0
    %3981 = vdwg.mxu0
    %v3982 = vlaneseq
    %v3983 = vshrl.u32 %v3982, 7
    %v3984 = vsub.s32 0, %v3983
    %v3985 = vrot.slane %v3979, %v3984
    %v3986 = vsub.f32 %v3785, %v3985
    %v3987 = vlaneseq
    %v3988 = vshrl.u32 %v3987, 7
    %v3989 = vsub.s32 1, %v3988
    %v3990 = vrot.slane %v3979, %v3989
    %v3991 = vmul.f32 %v3986, %v3990
    %v3992 = vmax.f32 %v3991, 0.0
    %v3993 = vld [vmem:[#allocation2 + $0xc0] sm:$0xff]
    %v3994 = vld [vmem:[#allocation2 + $0xc8] sm:$0xff]
    %v3995 = vld [vmem:[#allocation2 + $0xd0] sm:$0xff]
    %v3996 = vld [vmem:[#allocation2 + $0xd8] sm:$0xff]
    %v3997 = vld [vmem:[#allocation2 + $0xe0] sm:$0xff]
    %v3998 = vld [vmem:[#allocation2 + $0xe8] sm:$0xff]
    %v3999 = vld [vmem:[#allocation2 + $0xf0] sm:$0xff]
    %v4000 = vld [vmem:[#allocation2 + $0xf8] sm:$0xff]
    %v4001 = vld [vmem:[#allocation2 + $0x100] sm:$0xff]
    %v4002 = vld [vmem:[#allocation2 + $0x108] sm:$0xff]
    %v4003 = vld [vmem:[#allocation2 + $0x110] sm:$0xff]
    %v4004 = vld [vmem:[#allocation2 + $0x118] sm:$0xff]
    %v4005 = vld [vmem:[#allocation2 + $0x120] sm:$0xff]
    %v4006 = vld [vmem:[#allocation2 + $0x128] sm:$0xff]
    %v4007 = vld [vmem:[#allocation2 + $0x130] sm:$0xff]
    %v4008 = vld [vmem:[#allocation2 + $0x138] sm:$0xff]
    %v4009 = vld [vmem:[#allocation2 + $0x140] sm:$0xff]
    %v4010 = vld [vmem:[#allocation2 + $0x148] sm:$0xff]
    %v4011 = vld [vmem:[#allocation2 + $0x150] sm:$0xff]
    %v4012 = vld [vmem:[#allocation2 + $0x158] sm:$0xff]
    %v4013 = vld [vmem:[#allocation2 + $0x160] sm:$0xff]
    %v4014 = vld [vmem:[#allocation2 + $0x168] sm:$0xff]
    %v4015 = vld [vmem:[#allocation2 + $0x170] sm:$0xff]
    %v4016 = vld [vmem:[#allocation2 + $0x178] sm:$0xff]
    %v4017 = vld [vmem:[#allocation2 + $0x180] sm:$0xff]
    %v4018 = vld [vmem:[#allocation2 + $0x188] sm:$0xff]
    %v4019 = vld [vmem:[#allocation2 + $0x190] sm:$0xff]
    %v4020 = vld [vmem:[#allocation2 + $0x198] sm:$0xff]
    %v4021 = vld [vmem:[#allocation2 + $0x1a0] sm:$0xff]
    %v4022 = vld [vmem:[#allocation2 + $0x1a8] sm:$0xff]
    %v4023 = vld [vmem:[#allocation2 + $0x1b0] sm:$0xff]
    %v4024 = vld [vmem:[#allocation2 + $0x1b8] sm:$0xff]
    %v4025 = vld [vmem:[#allocation2 + $0x1c0] sm:$0xff]
    %v4026 = vld [vmem:[#allocation2 + $0x1c8] sm:$0xff]
    %v4027 = vld [vmem:[#allocation2 + $0x1d0] sm:$0xff]
    %v4028 = vld [vmem:[#allocation2 + $0x1d8] sm:$0xff]
    %v4029 = vld [vmem:[#allocation2 + $0x1e0] sm:$0xff]
    %v4030 = vld [vmem:[#allocation2 + $0x1e8] sm:$0xff]
    %v4031 = vld [vmem:[#allocation2 + $0x1f0] sm:$0xff]
    %v4032 = vld [vmem:[#allocation2 + $0x1f8] sm:$0xff]
    %v4033 = vld [vmem:[#allocation2 + $0x200] sm:$0xff]
    %v4034 = vld [vmem:[#allocation2 + $0x208] sm:$0xff]
    %v4035 = vld [vmem:[#allocation2 + $0x210] sm:$0xff]
    %v4036 = vld [vmem:[#allocation2 + $0x218] sm:$0xff]
    %v4037 = vld [vmem:[#allocation2 + $0x220] sm:$0xff]
    %v4038 = vld [vmem:[#allocation2 + $0x228] sm:$0xff]
    %v4039 = vld [vmem:[#allocation2 + $0x230] sm:$0xff]
    %v4040 = vld [vmem:[#allocation2 + $0x238] sm:$0xff]
    %4041 = vmatprep.subr.mxu0 %v4039
    %4042 = vmatpush1.msra.mxu0 %v4038
    %4043 = vmatprep.subr.mxu0 %v4036
    %4044 = vmatpush1.msra.mxu0 %v4035
    %4045 = vmatprep.subr.mxu0 %v4033
    %4046 = vmatpush1.msra.mxu0 %v4032
    %4047 = vmatprep.subr.mxu0 %v4030
    %4048 = vmatpush1.msra.mxu0 %v4029
    %4049 = vmatprep.subr.mxu0 %v4027
    %4050 = vmatpush1.msra.mxu0 %v4026
    %4051 = vmatprep.subr.mxu0 %v4024
    %4052 = vmatpush1.msra.mxu0 %v4023
    %4053 = vmatprep.subr.mxu0 %v4021
    %4054 = vmatpush1.msra.mxu0 %v4020
    %4055 = vmatprep.subr.mxu0 %v4018
    %4056 = vmatpush1.msra.mxu0 %v4017
    %4057 = vmatprep.subr.mxu0 %v4015
    %4058 = vmatpush1.msra.mxu0 %v4014
    %4059 = vmatprep.subr.mxu0 %v4012
    %4060 = vmatpush1.msra.mxu0 %v4011
    %4061 = vmatprep.subr.mxu0 %v4009
    %4062 = vmatpush1.msra.mxu0 %v4008
    %4063 = vmatprep.subr.mxu0 %v4006
    %4064 = vmatpush1.msra.mxu0 %v4005
    %4065 = vmatprep.subr.mxu0 %v4003
    %4066 = vmatpush1.msra.mxu0 %v4002
    %4067 = vmatprep.subr.mxu0 %v4000
    %4068 = vmatpush1.msra.mxu0 %v3999
    %4069 = vmatprep.subr.mxu0 %v3997
    %4070 = vmatpush1.msra.mxu0 %v3996
    %4071 = vmatprep.subr.mxu0 %v3994
    %4072 = vmatpush1.msra.mxu0 %v3993
    %4073 = vmatprep.subr.mxu0 0.0
    %4074 = vmatpush2.msra.mxu0 0.0
    %4075 = vmatprep.subr.mxu0 0.0
    %4076 = vmatpush2.msra.mxu0 0.0
    %4077 = vmatprep.subr.mxu0 0.0
    %4078 = vmatpush2.msra.mxu0 0.0
    %4079 = vmatprep.subr.mxu0 0.0
    %4080 = vmatpush2.msra.mxu0 0.0
    %4081 = vmatprep.subr.mxu0 0.0
    %4082 = vmatpush2.msra.mxu0 0.0
    %4083 = vmatprep.subr.mxu0 0.0
    %4084 = vmatpush2.msra.mxu0 0.0
    %4085 = vmatprep.subr.mxu0 0.0
    %4086 = vmatpush2.msra.mxu0 0.0
    %4087 = vmatprep.subr.mxu0 0.0
    %4088 = vmatpush2.msra.mxu0 0.0
    %4089 = vmatprep.subr.mxu0 0.0
    %4090 = vmatpush2.msra.mxu0 0.0
    %4091 = vmatprep.subr.mxu0 0.0
    %4092 = vmatpush2.msra.mxu0 0.0
    %4093 = vmatprep.subr.mxu0 0.0
    %4094 = vmatpush2.msra.mxu0 0.0
    %4095 = vmatprep.subr.mxu0 0.0
    %4096 = vmatpush2.msra.mxu0 0.0
    %4097 = vmatprep.subr.mxu0 0.0
    %4098 = vmatpush2.msra.mxu0 0.0
    %4099 = vmatprep.subr.mxu0 0.0
    %4100 = vmatpush2.msra.mxu0 0.0
    %4101 = vmatprep.subr.mxu0 0.0
    %4102 = vmatpush2.msra.mxu0 0.0
    %4103 = vmatprep.subr.mxu0 0.0
    %4104 = vmatpush2.msra.mxu0 0.0
    %4105 = vmatprep.mubr.f32.mxu0 0.0
    %4106 = vmatmul.mubr.f32.gmra.mxu0 %v3992
    %v4107 = vpop.f32.mrf.mxu0
    %v4108 = vadd.f32 0.0, %v4107
    %v4109 = vpop.f32.mrf.mxu0
    %v4110 = vadd.f32 0.0, %v4109
    %4111 = vdwg.mxu0
    %4112 = vmatprep.subr.mxu0 0.0
    %4113 = vmatpush1.msra.mxu0 %v4040
    %4114 = vmatprep.subr.mxu0 0.0
    %4115 = vmatpush1.msra.mxu0 %v4037
    %4116 = vmatprep.subr.mxu0 0.0
    %4117 = vmatpush1.msra.mxu0 %v4034
    %4118 = vmatprep.subr.mxu0 0.0
    %4119 = vmatpush1.msra.mxu0 %v4031
    %4120 = vmatprep.subr.mxu0 0.0
    %4121 = vmatpush1.msra.mxu0 %v4028
    %4122 = vmatprep.subr.mxu0 0.0
    %4123 = vmatpush1.msra.mxu0 %v4025
    %4124 = vmatprep.subr.mxu0 0.0
    %4125 = vmatpush1.msra.mxu0 %v4022
    %4126 = vmatprep.subr.mxu0 0.0
    %4127 = vmatpush1.msra.mxu0 %v4019
    %4128 = vmatprep.subr.mxu0 0.0
    %4129 = vmatpush1.msra.mxu0 %v4016
    %4130 = vmatprep.subr.mxu0 0.0
    %4131 = vmatpush1.msra.mxu0 %v4013
    %4132 = vmatprep.subr.mxu0 0.0
    %4133 = vmatpush1.msra.mxu0 %v4010
    %4134 = vmatprep.subr.mxu0 0.0
    %4135 = vmatpush1.msra.mxu0 %v4007
    %4136 = vmatprep.subr.mxu0 0.0
    %4137 = vmatpush1.msra.mxu0 %v4004
    %4138 = vmatprep.subr.mxu0 0.0
    %4139 = vmatpush1.msra.mxu0 %v4001
    %4140 = vmatprep.subr.mxu0 0.0
    %4141 = vmatpush1.msra.mxu0 %v3998
    %4142 = vmatprep.subr.mxu0 0.0
    %4143 = vmatpush1.msra.mxu0 %v3995
    %4144 = vmatprep.subr.mxu0 0.0
    %4145 = vmatpush2.msra.mxu0 0.0
    %4146 = vmatprep.subr.mxu0 0.0
    %4147 = vmatpush2.msra.mxu0 0.0
    %4148 = vmatprep.subr.mxu0 0.0
    %4149 = vmatpush2.msra.mxu0 0.0
    %4150 = vmatprep.subr.mxu0 0.0
    %4151 = vmatpush2.msra.mxu0 0.0
    %4152 = vmatprep.subr.mxu0 0.0
    %4153 = vmatpush2.msra.mxu0 0.0
    %4154 = vmatprep.subr.mxu0 0.0
    %4155 = vmatpush2.msra.mxu0 0.0
    %4156 = vmatprep.subr.mxu0 0.0
    %4157 = vmatpush2.msra.mxu0 0.0
    %4158 = vmatprep.subr.mxu0 0.0
    %4159 = vmatpush2.msra.mxu0 0.0
    %4160 = vmatprep.subr.mxu0 0.0
    %4161 = vmatpush2.msra.mxu0 0.0
    %4162 = vmatprep.subr.mxu0 0.0
    %4163 = vmatpush2.msra.mxu0 0.0
    %4164 = vmatprep.subr.mxu0 0.0
    %4165 = vmatpush2.msra.mxu0 0.0
    %4166 = vmatprep.subr.mxu0 0.0
    %4167 = vmatpush2.msra.mxu0 0.0
    %4168 = vmatprep.subr.mxu0 0.0
    %4169 = vmatpush2.msra.mxu0 0.0
    %4170 = vmatprep.subr.mxu0 0.0
    %4171 = vmatpush2.msra.mxu0 0.0
    %4172 = vmatprep.subr.mxu0 0.0
    %4173 = vmatpush2.msra.mxu0 0.0
    %4174 = vmatprep.subr.mxu0 0.0
    %4175 = vmatpush2.msra.mxu0 0.0
    %4176 = vmatprep.mubr.f32.mxu0 0.0
    %4177 = vmatmul.mubr.f32.gmra.mxu0 %v3992
    %v4178 = vpop.f32.mrf.mxu0
    %v4179 = vadd.f32 0.0, %v4178
    %v4180 = vpop.f32.mrf.mxu0
    %4181 = vdwg.mxu0
    %v4182 = vld [vmem:[#allocation4 + $0x430] sm:$0xf]
    %v4183 = vld [vmem:[#allocation4 + $0x440] sm:$0xf]
    %v4185 = vsel %vm851, %v4183, 0
    %4187 = vmatprep.subr.mxu0 0.0
    %4188 = vmatpush1.msra.mxu0 0.0
    %4189 = vmatprep.subr.mxu0 0.0
    %4190 = vmatpush1.msra.mxu0 0.0
    %4191 = vmatprep.subr.mxu0 0.0
    %4192 = vmatpush1.msra.mxu0 0.0
    %4193 = vmatprep.subr.mxu0 0.0
    %4194 = vmatpush1.msra.mxu0 0.0
    %4195 = vmatprep.subr.mxu0 0.0
    %4196 = vmatpush1.msra.mxu0 0.0
    %4197 = vmatprep.subr.mxu0 0.0
    %4198 = vmatpush1.msra.mxu0 0.0
    %4199 = vmatprep.subr.mxu0 0.0
    %4200 = vmatpush1.msra.mxu0 0.0
    %4201 = vmatprep.subr.mxu0 0.0
    %4202 = vmatpush1.msra.mxu0 0.0
    %4203 = vmatprep.subr.mxu0 0.0
    %4204 = vmatpush1.msra.mxu0 0.0
    %4205 = vmatprep.subr.mxu0 0.0
    %4206 = vmatpush1.msra.mxu0 0.0
    %4207 = vmatprep.subr.mxu0 0.0
    %4208 = vmatpush1.msra.mxu0 0.0
    %4209 = vmatprep.subr.mxu0 0.0
    %4210 = vmatpush1.msra.mxu0 0.0
    %4211 = vmatprep.subr.mxu0 0.0
    %4212 = vmatpush1.msra.mxu0 0.0
    %4213 = vmatprep.subr.mxu0 0.0
    %4214 = vmatpush1.msra.mxu0 0.0
    %4215 = vmatprep.subr.mxu0 0.0
    %4216 = vmatpush1.msra.mxu0 0.0
    %4217 = vmatprep.subr.mxu0 0.0
    %4218 = vmatpush1.msra.mxu0 %v4110
    %4219 = vmatprep.subr.mxu0 0.0
    %4220 = vmatpush2.msra.mxu0 0.0
    %4221 = vmatprep.subr.mxu0 0.0
    %4222 = vmatpush2.msra.mxu0 0.0
    %4223 = vmatprep.subr.mxu0 0.0
    %4224 = vmatpush2.msra.mxu0 0.0
    %4225 = vmatprep.subr.mxu0 0.0
    %4226 = vmatpush2.msra.mxu0 0.0
    %4227 = vmatprep.subr.mxu0 0.0
    %4228 = vmatpush2.msra.mxu0 0.0
    %4229 = vmatprep.subr.mxu0 0.0
    %4230 = vmatpush2.msra.mxu0 0.0
    %4231 = vmatprep.subr.mxu0 0.0
    %4232 = vmatpush2.msra.mxu0 0.0
    %4233 = vmatprep.subr.mxu0 0.0
    %4234 = vmatpush2.msra.mxu0 0.0
    %4235 = vmatprep.subr.mxu0 0.0
    %4236 = vmatpush2.msra.mxu0 0.0
    %4237 = vmatprep.subr.mxu0 0.0
    %4238 = vmatpush2.msra.mxu0 0.0
    %4239 = vmatprep.subr.mxu0 0.0
    %4240 = vmatpush2.msra.mxu0 0.0
    %4241 = vmatprep.subr.mxu0 0.0
    %4242 = vmatpush2.msra.mxu0 0.0
    %4243 = vmatprep.subr.mxu0 0.0
    %4244 = vmatpush2.msra.mxu0 0.0
    %4245 = vmatprep.subr.mxu0 0.0
    %4246 = vmatpush2.msra.mxu0 0.0
    %4247 = vmatprep.subr.mxu0 0.0
    %4248 = vmatpush2.msra.mxu0 0.0
    %4249 = vmatprep.subr.mxu0 0.0
    %4250 = vmatpush2.msra.mxu0 0.0
    %4251 = vmatprep.mubr.f32.mxu0 0.0
    %4252 = vmatmul.mubr.f32.gmra.mxu0 %v4185
    %v4253 = vpop.f32.mrf.mxu0
    %v4254 = vadd.f32 0.0, %v4253
    %v4255 = vpop.f32.mrf.mxu0
    %4256 = vdwg.mxu0
    %v4258 = vsel %vm851, %v4182, 0
    %4260 = vmatprep.subr.mxu0 0.0
    %4261 = vmatpush1.msra.mxu0 0.0
    %4262 = vmatprep.subr.mxu0 0.0
    %4263 = vmatpush1.msra.mxu0 0.0
    %4264 = vmatprep.subr.mxu0 0.0
    %4265 = vmatpush1.msra.mxu0 0.0
    %4266 = vmatprep.subr.mxu0 0.0
    %4267 = vmatpush1.msra.mxu0 0.0
    %4268 = vmatprep.subr.mxu0 0.0
    %4269 = vmatpush1.msra.mxu0 0.0
    %4270 = vmatprep.subr.mxu0 0.0
    %4271 = vmatpush1.msra.mxu0 0.0
    %4272 = vmatprep.subr.mxu0 0.0
    %4273 = vmatpush1.msra.mxu0 0.0
    %4274 = vmatprep.subr.mxu0 0.0
    %4275 = vmatpush1.msra.mxu0 0.0
    %4276 = vmatprep.subr.mxu0 0.0
    %4277 = vmatpush1.msra.mxu0 0.0
    %4278 = vmatprep.subr.mxu0 0.0
    %4279 = vmatpush1.msra.mxu0 0.0
    %4280 = vmatprep.subr.mxu0 0.0
    %4281 = vmatpush1.msra.mxu0 0.0
    %4282 = vmatprep.subr.mxu0 0.0
    %4283 = vmatpush1.msra.mxu0 0.0
    %4284 = vmatprep.subr.mxu0 0.0
    %4285 = vmatpush1.msra.mxu0 0.0
    %4286 = vmatprep.subr.mxu0 0.0
    %4287 = vmatpush1.msra.mxu0 0.0
    %4288 = vmatprep.subr.mxu0 0.0
    %4289 = vmatpush1.msra.mxu0 0.0
    %4290 = vmatprep.subr.mxu0 0.0
    %4291 = vmatpush1.msra.mxu0 %v4108
    %4292 = vmatprep.subr.mxu0 0.0
    %4293 = vmatpush2.msra.mxu0 0.0
    %4294 = vmatprep.subr.mxu0 0.0
    %4295 = vmatpush2.msra.mxu0 0.0
    %4296 = vmatprep.subr.mxu0 0.0
    %4297 = vmatpush2.msra.mxu0 0.0
    %4298 = vmatprep.subr.mxu0 0.0
    %4299 = vmatpush2.msra.mxu0 0.0
    %4300 = vmatprep.subr.mxu0 0.0
    %4301 = vmatpush2.msra.mxu0 0.0
    %4302 = vmatprep.subr.mxu0 0.0
    %4303 = vmatpush2.msra.mxu0 0.0
    %4304 = vmatprep.subr.mxu0 0.0
    %4305 = vmatpush2.msra.mxu0 0.0
    %4306 = vmatprep.subr.mxu0 0.0
    %4307 = vmatpush2.msra.mxu0 0.0
    %4308 = vmatprep.subr.mxu0 0.0
    %4309 = vmatpush2.msra.mxu0 0.0
    %4310 = vmatprep.subr.mxu0 0.0
    %4311 = vmatpush2.msra.mxu0 0.0
    %4312 = vmatprep.subr.mxu0 0.0
    %4313 = vmatpush2.msra.mxu0 0.0
    %4314 = vmatprep.subr.mxu0 0.0
    %4315 = vmatpush2.msra.mxu0 0.0
    %4316 = vmatprep.subr.mxu0 0.0
    %4317 = vmatpush2.msra.mxu0 0.0
    %4318 = vmatprep.subr.mxu0 0.0
    %4319 = vmatpush2.msra.mxu0 0.0
    %4320 = vmatprep.subr.mxu0 0.0
    %4321 = vmatpush2.msra.mxu0 0.0
    %4322 = vmatprep.subr.mxu0 0.0
    %4323 = vmatpush2.msra.mxu0 0.0
    %4324 = vmatprep.mubr.f32.mxu0 0.0
    %4325 = vmatmul.mubr.f32.gmra.mxu0 %v4258
    %v4326 = vpop.f32.mrf.mxu0
    %v4327 = vadd.f32 %v4254, %v4326
    %v4328 = vpop.f32.mrf.mxu0
    %4329 = vdwg.mxu0
    %v4330 = vld [vmem:[#allocation4 + $0x450] sm:$0xf]
    %v4332 = vsel %vm851, %v4330, 0
    %4334 = vmatprep.subr.mxu0 0.0
    %4335 = vmatpush1.msra.mxu0 0.0
    %4336 = vmatprep.subr.mxu0 0.0
    %4337 = vmatpush1.msra.mxu0 0.0
    %4338 = vmatprep.subr.mxu0 0.0
    %4339 = vmatpush1.msra.mxu0 0.0
    %4340 = vmatprep.subr.mxu0 0.0
    %4341 = vmatpush1.msra.mxu0 0.0
    %4342 = vmatprep.subr.mxu0 0.0
    %4343 = vmatpush1.msra.mxu0 0.0
    %4344 = vmatprep.subr.mxu0 0.0
    %4345 = vmatpush1.msra.mxu0 0.0
    %4346 = vmatprep.subr.mxu0 0.0
    %4347 = vmatpush1.msra.mxu0 0.0
    %4348 = vmatprep.subr.mxu0 0.0
    %4349 = vmatpush1.msra.mxu0 0.0
    %4350 = vmatprep.subr.mxu0 0.0
    %4351 = vmatpush1.msra.mxu0 0.0
    %4352 = vmatprep.subr.mxu0 0.0
    %4353 = vmatpush1.msra.mxu0 0.0
    %4354 = vmatprep.subr.mxu0 0.0
    %4355 = vmatpush1.msra.mxu0 0.0
    %4356 = vmatprep.subr.mxu0 0.0
    %4357 = vmatpush1.msra.mxu0 0.0
    %4358 = vmatprep.subr.mxu0 0.0
    %4359 = vmatpush1.msra.mxu0 0.0
    %4360 = vmatprep.subr.mxu0 0.0
    %4361 = vmatpush1.msra.mxu0 0.0
    %4362 = vmatprep.subr.mxu0 0.0
    %4363 = vmatpush1.msra.mxu0 0.0
    %4364 = vmatprep.subr.mxu0 0.0
    %4365 = vmatpush1.msra.mxu0 %v4179
    %4366 = vmatprep.subr.mxu0 0.0
    %4367 = vmatpush2.msra.mxu0 0.0
    %4368 = vmatprep.subr.mxu0 0.0
    %4369 = vmatpush2.msra.mxu0 0.0
    %4370 = vmatprep.subr.mxu0 0.0
    %4371 = vmatpush2.msra.mxu0 0.0
    %4372 = vmatprep.subr.mxu0 0.0
    %4373 = vmatpush2.msra.mxu0 0.0
    %4374 = vmatprep.subr.mxu0 0.0
    %4375 = vmatpush2.msra.mxu0 0.0
    %4376 = vmatprep.subr.mxu0 0.0
    %4377 = vmatpush2.msra.mxu0 0.0
    %4378 = vmatprep.subr.mxu0 0.0
    %4379 = vmatpush2.msra.mxu0 0.0
    %4380 = vmatprep.subr.mxu0 0.0
    %4381 = vmatpush2.msra.mxu0 0.0
    %4382 = vmatprep.subr.mxu0 0.0
    %4383 = vmatpush2.msra.mxu0 0.0
    %4384 = vmatprep.subr.mxu0 0.0
    %4385 = vmatpush2.msra.mxu0 0.0
    %4386 = vmatprep.subr.mxu0 0.0
    %4387 = vmatpush2.msra.mxu0 0.0
    %4388 = vmatprep.subr.mxu0 0.0
    %4389 = vmatpush2.msra.mxu0 0.0
    %4390 = vmatprep.subr.mxu0 0.0
    %4391 = vmatpush2.msra.mxu0 0.0
    %4392 = vmatprep.subr.mxu0 0.0
    %4393 = vmatpush2.msra.mxu0 0.0
    %4394 = vmatprep.subr.mxu0 0.0
    %4395 = vmatpush2.msra.mxu0 0.0
    %4396 = vmatprep.subr.mxu0 0.0
    %4397 = vmatpush2.msra.mxu0 0.0
    %4398 = vmatprep.mubr.f32.mxu0 0.0
    %4399 = vmatmul.mubr.f32.gmra.mxu0 %v4332
    %v4400 = vpop.f32.mrf.mxu0
    %v4401 = vadd.f32 0.0, %v4400
    %v4402 = vpop.f32.mrf.mxu0
    %4403 = vdwg.mxu0
    %v4404 = vadd.f32 %v4327, %v4401
    %v4405 = vld [vmem:[#allocation4 + $0x80] sm:$0xff]
    %v4406 = vld [vmem:[#allocation4 + $0x88] sm:$0xff]
    %v4407 = vld [vmem:[#allocation4 + $0x90] sm:$0xff]
    %v4408 = vld [vmem:[#allocation4 + $0x98] sm:$0xff]
    %v4409 = vld [vmem:[#allocation4 + $0xa0] sm:$0xff]
    %v4410 = vld [vmem:[#allocation4 + $0xa8] sm:$0xff]
    %v4411 = vld [vmem:[#allocation4 + $0xb0] sm:$0xff]
    %v4412 = vld [vmem:[#allocation4 + $0xb8] sm:$0xff]
    %v4413 = vld [vmem:[#allocation4 + $0xc0] sm:$0xff]
    %v4414 = vld [vmem:[#allocation4 + $0xc8] sm:$0xff]
    %v4415 = vld [vmem:[#allocation4 + $0xd0] sm:$0xff]
    %v4416 = vld [vmem:[#allocation4 + $0xd8] sm:$0xff]
    %v4417 = vld [vmem:[#allocation4 + $0xe0] sm:$0xff]
    %v4418 = vld [vmem:[#allocation4 + $0xe8] sm:$0xff]
    %v4419 = vld [vmem:[#allocation4 + $0xf0] sm:$0xff]
    %v4420 = vld [vmem:[#allocation4 + $0xf8] sm:$0xff]
    %v4421 = vld [vmem:[#allocation4 + $0x280] sm:$0xff]
    %v4422 = vld [vmem:[#allocation4 + $0x288] sm:$0xff]
    %v4423 = vld [vmem:[#allocation4 + $0x290] sm:$0xff]
    %v4424 = vld [vmem:[#allocation4 + $0x298] sm:$0xff]
    %v4425 = vld [vmem:[#allocation4 + $0x2a0] sm:$0xff]
    %v4426 = vld [vmem:[#allocation4 + $0x2a8] sm:$0xff]
    %v4427 = vld [vmem:[#allocation4 + $0x2b0] sm:$0xff]
    %v4428 = vld [vmem:[#allocation4 + $0x2b8] sm:$0xff]
    %v4429 = vld [vmem:[#allocation4 + $0x2c0] sm:$0xff]
    %v4430 = vld [vmem:[#allocation4 + $0x2c8] sm:$0xff]
    %v4431 = vld [vmem:[#allocation4 + $0x2d0] sm:$0xff]
    %v4432 = vld [vmem:[#allocation4 + $0x2d8] sm:$0xff]
    %v4433 = vld [vmem:[#allocation4 + $0x2e0] sm:$0xff]
    %v4434 = vld [vmem:[#allocation4 + $0x2e8] sm:$0xff]
    %v4435 = vld [vmem:[#allocation4 + $0x2f0] sm:$0xff]
    %v4436 = vld [vmem:[#allocation4 + $0x2f8] sm:$0xff]
    %v4437 = vsel %vm1105, %v4404, 0.0
    %v4438 = vrot.slane %v4437, 4
    %v4439 = vadd.f32 %v4437, %v4438
    %v4440 = vrot.slane %v4439, 2
    %v4441 = vadd.f32 %v4439, %v4440
    %v4442 = vrot.slane %v4441, 1
    %v4443 = vadd.f32 %v4441, %v4442
    %v4444 = vmul.f32 %v4404, %v4404
    %v4445 = vsel %vm1105, %v4444, 0.0
    %v4446 = vrot.slane %v4445, 4
    %v4447 = vadd.f32 %v4445, %v4446
    %v4448 = vrot.slane %v4447, 2
    %v4449 = vadd.f32 %v4447, %v4448
    %v4450 = vrot.slane %v4449, 1
    %v4451 = vadd.f32 %v4449, %v4450
    %v4452 = vsel %vm497, %v4443, %v4451
    %4453 = vmatprep.subr.mxu0 0.0
    %4454 = vmatpush1.msra.mxu0 %v4420
    %4455 = vmatprep.subr.mxu0 0.0
    %4456 = vmatpush1.msra.mxu0 %v4419
    %4457 = vmatprep.subr.mxu0 0.0
    %4458 = vmatpush1.msra.mxu0 %v4418
    %4459 = vmatprep.subr.mxu0 0.0
    %4460 = vmatpush1.msra.mxu0 %v4417
    %4461 = vmatprep.subr.mxu0 0.0
    %4462 = vmatpush1.msra.mxu0 %v4416
    %4463 = vmatprep.subr.mxu0 0.0
    %4464 = vmatpush1.msra.mxu0 %v4415
    %4465 = vmatprep.subr.mxu0 0.0
    %4466 = vmatpush1.msra.mxu0 %v4414
    %4467 = vmatprep.subr.mxu0 0.0
    %4468 = vmatpush1.msra.mxu0 %v4413
    %4469 = vmatprep.subr.mxu0 0.0
    %4470 = vmatpush1.msra.mxu0 %v4412
    %4471 = vmatprep.subr.mxu0 0.0
    %4472 = vmatpush1.msra.mxu0 %v4411
    %4473 = vmatprep.subr.mxu0 0.0
    %4474 = vmatpush1.msra.mxu0 %v4410
    %4475 = vmatprep.subr.mxu0 0.0
    %4476 = vmatpush1.msra.mxu0 %v4409
    %4477 = vmatprep.subr.mxu0 0.0
    %4478 = vmatpush1.msra.mxu0 %v4408
    %4479 = vmatprep.subr.mxu0 0.0
    %4480 = vmatpush1.msra.mxu0 %v4407
    %4481 = vmatprep.subr.mxu0 0.0
    %4482 = vmatpush1.msra.mxu0 %v4406
    %4483 = vmatprep.subr.mxu0 0.0
    %4484 = vmatpush1.msra.mxu0 %v4405
    %4485 = vmatprep.subr.mxu0 0.0
    %4486 = vmatpush2.msra.mxu0 0.0
    %4487 = vmatprep.subr.mxu0 0.0
    %4488 = vmatpush2.msra.mxu0 0.0
    %4489 = vmatprep.subr.mxu0 0.0
    %4490 = vmatpush2.msra.mxu0 0.0
    %4491 = vmatprep.subr.mxu0 0.0
    %4492 = vmatpush2.msra.mxu0 0.0
    %4493 = vmatprep.subr.mxu0 0.0
    %4494 = vmatpush2.msra.mxu0 0.0
    %4495 = vmatprep.subr.mxu0 0.0
    %4496 = vmatpush2.msra.mxu0 0.0
    %4497 = vmatprep.subr.mxu0 0.0
    %4498 = vmatpush2.msra.mxu0 0.0
    %4499 = vmatprep.subr.mxu0 0.0
    %4500 = vmatpush2.msra.mxu0 0.0
    %4501 = vmatprep.subr.mxu0 0.0
    %4502 = vmatpush2.msra.mxu0 0.0
    %4503 = vmatprep.subr.mxu0 0.0
    %4504 = vmatpush2.msra.mxu0 0.0
    %4505 = vmatprep.subr.mxu0 0.0
    %4506 = vmatpush2.msra.mxu0 0.0
    %4507 = vmatprep.subr.mxu0 0.0
    %4508 = vmatpush2.msra.mxu0 0.0
    %4509 = vmatprep.subr.mxu0 0.0
    %4510 = vmatpush2.msra.mxu0 0.0
    %4511 = vmatprep.subr.mxu0 0.0
    %4512 = vmatpush2.msra.mxu0 0.0
    %4513 = vmatprep.subr.mxu0 0.0
    %4514 = vmatpush2.msra.mxu0 0.0
    %4515 = vmatprep.subr.mxu0 0.0
    %4516 = vmatpush2.msra.mxu0 0.0
    %4517 = vmatprep.mubr.f32.mxu0 0.0
    %4518 = vmatmul.mubr.f32.gmra.mxu0 %v4452
    %v4519 = vpop.f32.mrf.mxu0
    %v4520 = vadd.f32 0.0, %v4519
    %v4521 = vpop.f32.mrf.mxu0
    %4522 = vdwg.mxu0
    %v4523 = vmul.f32 %v4520, 0.0625
    %v4524 = vmul.f32 %v4523, %v4523
    %v4526 = vrot.slane %v4524, 7
    %v4528 = vsub.f32 %v4523, %v4526
    %v4529 = vmax.f32 %v4528, 0.0
    %v4530 = vadd.f32 %v4529, 1e-05
    %v4531 = vrsqrt.pop %v4530
    %v4532 = vsel %vm497, %v4523, %v4531
    %4533 = vmatprep.subr.mxu0 0.0
    %4534 = vmatpush1.msra.mxu0 %v4436
    %4535 = vmatprep.subr.mxu0 0.0
    %4536 = vmatpush1.msra.mxu0 %v4435
    %4537 = vmatprep.subr.mxu0 0.0
    %4538 = vmatpush1.msra.mxu0 %v4434
    %4539 = vmatprep.subr.mxu0 0.0
    %4540 = vmatpush1.msra.mxu0 %v4433
    %4541 = vmatprep.subr.mxu0 0.0
    %4542 = vmatpush1.msra.mxu0 %v4432
    %4543 = vmatprep.subr.mxu0 0.0
    %4544 = vmatpush1.msra.mxu0 %v4431
    %4545 = vmatprep.subr.mxu0 0.0
    %4546 = vmatpush1.msra.mxu0 %v4430
    %4547 = vmatprep.subr.mxu0 0.0
    %4548 = vmatpush1.msra.mxu0 %v4429
    %4549 = vmatprep.subr.mxu0 0.0
    %4550 = vmatpush1.msra.mxu0 %v4428
    %4551 = vmatprep.subr.mxu0 0.0
    %4552 = vmatpush1.msra.mxu0 %v4427
    %4553 = vmatprep.subr.mxu0 0.0
    %4554 = vmatpush1.msra.mxu0 %v4426
    %4555 = vmatprep.subr.mxu0 0.0
    %4556 = vmatpush1.msra.mxu0 %v4425
    %4557 = vmatprep.subr.mxu0 0.0
    %4558 = vmatpush1.msra.mxu0 %v4424
    %4559 = vmatprep.subr.mxu0 0.0
    %4560 = vmatpush1.msra.mxu0 %v4423
    %4561 = vmatprep.subr.mxu0 0.0
    %4562 = vmatpush1.msra.mxu0 %v4422
    %4563 = vmatprep.subr.mxu0 0.0
    %4564 = vmatpush1.msra.mxu0 %v4421
    %4565 = vmatprep.subr.mxu0 0.0
    %4566 = vmatpush2.msra.mxu0 0.0
    %4567 = vmatprep.subr.mxu0 0.0
    %4568 = vmatpush2.msra.mxu0 0.0
    %4569 = vmatprep.subr.mxu0 0.0
    %4570 = vmatpush2.msra.mxu0 0.0
    %4571 = vmatprep.subr.mxu0 0.0
    %4572 = vmatpush2.msra.mxu0 0.0
    %4573 = vmatprep.subr.mxu0 0.0
    %4574 = vmatpush2.msra.mxu0 0.0
    %4575 = vmatprep.subr.mxu0 0.0
    %4576 = vmatpush2.msra.mxu0 0.0
    %4577 = vmatprep.subr.mxu0 0.0
    %4578 = vmatpush2.msra.mxu0 0.0
    %4579 = vmatprep.subr.mxu0 0.0
    %4580 = vmatpush2.msra.mxu0 0.0
    %4581 = vmatprep.subr.mxu0 0.0
    %4582 = vmatpush2.msra.mxu0 0.0
    %4583 = vmatprep.subr.mxu0 0.0
    %4584 = vmatpush2.msra.mxu0 0.0
    %4585 = vmatprep.subr.mxu0 0.0
    %4586 = vmatpush2.msra.mxu0 0.0
    %4587 = vmatprep.subr.mxu0 0.0
    %4588 = vmatpush2.msra.mxu0 0.0
    %4589 = vmatprep.subr.mxu0 0.0
    %4590 = vmatpush2.msra.mxu0 0.0
    %4591 = vmatprep.subr.mxu0 0.0
    %4592 = vmatpush2.msra.mxu0 0.0
    %4593 = vmatprep.subr.mxu0 0.0
    %4594 = vmatpush2.msra.mxu0 0.0
    %4595 = vmatprep.subr.mxu0 0.0
    %4596 = vmatpush2.msra.mxu0 0.0
    %4597 = vmatprep.mubr.f32.mxu0 0.0
    %4598 = vmatmul.mubr.f32.gmra.mxu0 %v4532
    %v4599 = vpop.f32.mrf.mxu0
    %v4600 = vadd.f32 0.0, %v4599
    %v4601 = vpop.f32.mrf.mxu0
    %4602 = vdwg.mxu0
    %v4603 = vlaneseq
    %v4604 = vshrl.u32 %v4603, 7
    %v4605 = vsub.s32 0, %v4604
    %v4606 = vrot.slane %v4600, %v4605
    %v4607 = vsub.f32 %v4404, %v4606
    %v4608 = vlaneseq
    %v4609 = vshrl.u32 %v4608, 7
    %v4610 = vsub.s32 1, %v4609
    %v4611 = vrot.slane %v4600, %v4610
    %v4612 = vmul.f32 %v4607, %v4611
    %v4613 = vmax.f32 %v4612, 0.0
    %v4614 = vld [vmem:[#allocation2 + $0x240] sm:$0xff]
    %v4615 = vld [vmem:[#allocation2 + $0x248] sm:$0xff]
    %v4616 = vld [vmem:[#allocation2 + $0x250] sm:$0xff]
    %v4617 = vld [vmem:[#allocation2 + $0x258] sm:$0xff]
    %v4618 = vld [vmem:[#allocation2 + $0x260] sm:$0xff]
    %v4619 = vld [vmem:[#allocation2 + $0x268] sm:$0xff]
    %v4620 = vld [vmem:[#allocation2 + $0x270] sm:$0xff]
    %v4621 = vld [vmem:[#allocation2 + $0x278] sm:$0xff]
    %v4622 = vld [vmem:[#allocation2 + $0x280] sm:$0xff]
    %v4623 = vld [vmem:[#allocation2 + $0x288] sm:$0xff]
    %v4624 = vld [vmem:[#allocation2 + $0x290] sm:$0xff]
    %v4625 = vld [vmem:[#allocation2 + $0x298] sm:$0xff]
    %v4626 = vld [vmem:[#allocation2 + $0x2a0] sm:$0xff]
    %v4627 = vld [vmem:[#allocation2 + $0x2a8] sm:$0xff]
    %v4628 = vld [vmem:[#allocation2 + $0x2b0] sm:$0xff]
    %v4629 = vld [vmem:[#allocation2 + $0x2b8] sm:$0xff]
    %v4630 = vld [vmem:[#allocation2 + $0x2c0] sm:$0xff]
    %v4631 = vld [vmem:[#allocation2 + $0x2c8] sm:$0xff]
    %v4632 = vld [vmem:[#allocation2 + $0x2d0] sm:$0xff]
    %v4633 = vld [vmem:[#allocation2 + $0x2d8] sm:$0xff]
    %v4634 = vld [vmem:[#allocation2 + $0x2e0] sm:$0xff]
    %v4635 = vld [vmem:[#allocation2 + $0x2e8] sm:$0xff]
    %v4636 = vld [vmem:[#allocation2 + $0x2f0] sm:$0xff]
    %v4637 = vld [vmem:[#allocation2 + $0x2f8] sm:$0xff]
    %v4638 = vld [vmem:[#allocation2 + $0x300] sm:$0xff]
    %v4639 = vld [vmem:[#allocation2 + $0x308] sm:$0xff]
    %v4640 = vld [vmem:[#allocation2 + $0x310] sm:$0xff]
    %v4641 = vld [vmem:[#allocation2 + $0x318] sm:$0xff]
    %v4642 = vld [vmem:[#allocation2 + $0x320] sm:$0xff]
    %v4643 = vld [vmem:[#allocation2 + $0x328] sm:$0xff]
    %v4644 = vld [vmem:[#allocation2 + $0x330] sm:$0xff]
    %v4645 = vld [vmem:[#allocation2 + $0x338] sm:$0xff]
    %v4646 = vld [vmem:[#allocation2 + $0x340] sm:$0xff]
    %v4647 = vld [vmem:[#allocation2 + $0x348] sm:$0xff]
    %v4648 = vld [vmem:[#allocation2 + $0x350] sm:$0xff]
    %v4649 = vld [vmem:[#allocation2 + $0x358] sm:$0xff]
    %v4650 = vld [vmem:[#allocation2 + $0x360] sm:$0xff]
    %v4651 = vld [vmem:[#allocation2 + $0x368] sm:$0xff]
    %v4652 = vld [vmem:[#allocation2 + $0x370] sm:$0xff]
    %v4653 = vld [vmem:[#allocation2 + $0x378] sm:$0xff]
    %v4654 = vld [vmem:[#allocation2 + $0x380] sm:$0xff]
    %v4655 = vld [vmem:[#allocation2 + $0x388] sm:$0xff]
    %v4656 = vld [vmem:[#allocation2 + $0x390] sm:$0xff]
    %v4657 = vld [vmem:[#allocation2 + $0x398] sm:$0xff]
    %v4658 = vld [vmem:[#allocation2 + $0x3a0] sm:$0xff]
    %v4659 = vld [vmem:[#allocation2 + $0x3a8] sm:$0xff]
    %v4660 = vld [vmem:[#allocation2 + $0x3b0] sm:$0xff]
    %v4661 = vld [vmem:[#allocation2 + $0x3b8] sm:$0xff]
    %4662 = vmatprep.subr.mxu0 %v4660
    %4663 = vmatpush1.msra.mxu0 %v4659
    %4664 = vmatprep.subr.mxu0 %v4657
    %4665 = vmatpush1.msra.mxu0 %v4656
    %4666 = vmatprep.subr.mxu0 %v4654
    %4667 = vmatpush1.msra.mxu0 %v4653
    %4668 = vmatprep.subr.mxu0 %v4651
    %4669 = vmatpush1.msra.mxu0 %v4650
    %4670 = vmatprep.subr.mxu0 %v4648
    %4671 = vmatpush1.msra.mxu0 %v4647
    %4672 = vmatprep.subr.mxu0 %v4645
    %4673 = vmatpush1.msra.mxu0 %v4644
    %4674 = vmatprep.subr.mxu0 %v4642
    %4675 = vmatpush1.msra.mxu0 %v4641
    %4676 = vmatprep.subr.mxu0 %v4639
    %4677 = vmatpush1.msra.mxu0 %v4638
    %4678 = vmatprep.subr.mxu0 %v4636
    %4679 = vmatpush1.msra.mxu0 %v4635
    %4680 = vmatprep.subr.mxu0 %v4633
    %4681 = vmatpush1.msra.mxu0 %v4632
    %4682 = vmatprep.subr.mxu0 %v4630
    %4683 = vmatpush1.msra.mxu0 %v4629
    %4684 = vmatprep.subr.mxu0 %v4627
    %4685 = vmatpush1.msra.mxu0 %v4626
    %4686 = vmatprep.subr.mxu0 %v4624
    %4687 = vmatpush1.msra.mxu0 %v4623
    %4688 = vmatprep.subr.mxu0 %v4621
    %4689 = vmatpush1.msra.mxu0 %v4620
    %4690 = vmatprep.subr.mxu0 %v4618
    %4691 = vmatpush1.msra.mxu0 %v4617
    %4692 = vmatprep.subr.mxu0 %v4615
    %4693 = vmatpush1.msra.mxu0 %v4614
    %4694 = vmatprep.subr.mxu0 0.0
    %4695 = vmatpush2.msra.mxu0 0.0
    %4696 = vmatprep.subr.mxu0 0.0
    %4697 = vmatpush2.msra.mxu0 0.0
    %4698 = vmatprep.subr.mxu0 0.0
    %4699 = vmatpush2.msra.mxu0 0.0
    %4700 = vmatprep.subr.mxu0 0.0
    %4701 = vmatpush2.msra.mxu0 0.0
    %4702 = vmatprep.subr.mxu0 0.0
    %4703 = vmatpush2.msra.mxu0 0.0
    %4704 = vmatprep.subr.mxu0 0.0
    %4705 = vmatpush2.msra.mxu0 0.0
    %4706 = vmatprep.subr.mxu0 0.0
    %4707 = vmatpush2.msra.mxu0 0.0
    %4708 = vmatprep.subr.mxu0 0.0
    %4709 = vmatpush2.msra.mxu0 0.0
    %4710 = vmatprep.subr.mxu0 0.0
    %4711 = vmatpush2.msra.mxu0 0.0
    %4712 = vmatprep.subr.mxu0 0.0
    %4713 = vmatpush2.msra.mxu0 0.0
    %4714 = vmatprep.subr.mxu0 0.0
    %4715 = vmatpush2.msra.mxu0 0.0
    %4716 = vmatprep.subr.mxu0 0.0
    %4717 = vmatpush2.msra.mxu0 0.0
    %4718 = vmatprep.subr.mxu0 0.0
    %4719 = vmatpush2.msra.mxu0 0.0
    %4720 = vmatprep.subr.mxu0 0.0
    %4721 = vmatpush2.msra.mxu0 0.0
    %4722 = vmatprep.subr.mxu0 0.0
    %4723 = vmatpush2.msra.mxu0 0.0
    %4724 = vmatprep.subr.mxu0 0.0
    %4725 = vmatpush2.msra.mxu0 0.0
    %4726 = vmatprep.mubr.f32.mxu0 0.0
    %4727 = vmatmul.mubr.f32.gmra.mxu0 %v4613
    %v4728 = vpop.f32.mrf.mxu0
    %v4729 = vadd.f32 0.0, %v4728
    %v4730 = vpop.f32.mrf.mxu0
    %v4731 = vadd.f32 0.0, %v4730
    %4732 = vdwg.mxu0
    %4733 = vmatprep.subr.mxu0 0.0
    %4734 = vmatpush1.msra.mxu0 %v4661
    %4735 = vmatprep.subr.mxu0 0.0
    %4736 = vmatpush1.msra.mxu0 %v4658
    %4737 = vmatprep.subr.mxu0 0.0
    %4738 = vmatpush1.msra.mxu0 %v4655
    %4739 = vmatprep.subr.mxu0 0.0
    %4740 = vmatpush1.msra.mxu0 %v4652
    %4741 = vmatprep.subr.mxu0 0.0
    %4742 = vmatpush1.msra.mxu0 %v4649
    %4743 = vmatprep.subr.mxu0 0.0
    %4744 = vmatpush1.msra.mxu0 %v4646
    %4745 = vmatprep.subr.mxu0 0.0
    %4746 = vmatpush1.msra.mxu0 %v4643
    %4747 = vmatprep.subr.mxu0 0.0
    %4748 = vmatpush1.msra.mxu0 %v4640
    %4749 = vmatprep.subr.mxu0 0.0
    %4750 = vmatpush1.msra.mxu0 %v4637
    %4751 = vmatprep.subr.mxu0 0.0
    %4752 = vmatpush1.msra.mxu0 %v4634
    %4753 = vmatprep.subr.mxu0 0.0
    %4754 = vmatpush1.msra.mxu0 %v4631
    %4755 = vmatprep.subr.mxu0 0.0
    %4756 = vmatpush1.msra.mxu0 %v4628
    %4757 = vmatprep.subr.mxu0 0.0
    %4758 = vmatpush1.msra.mxu0 %v4625
    %4759 = vmatprep.subr.mxu0 0.0
    %4760 = vmatpush1.msra.mxu0 %v4622
    %4761 = vmatprep.subr.mxu0 0.0
    %4762 = vmatpush1.msra.mxu0 %v4619
    %4763 = vmatprep.subr.mxu0 0.0
    %4764 = vmatpush1.msra.mxu0 %v4616
    %4765 = vmatprep.subr.mxu0 0.0
    %4766 = vmatpush2.msra.mxu0 0.0
    %4767 = vmatprep.subr.mxu0 0.0
    %4768 = vmatpush2.msra.mxu0 0.0
    %4769 = vmatprep.subr.mxu0 0.0
    %4770 = vmatpush2.msra.mxu0 0.0
    %4771 = vmatprep.subr.mxu0 0.0
    %4772 = vmatpush2.msra.mxu0 0.0
    %4773 = vmatprep.subr.mxu0 0.0
    %4774 = vmatpush2.msra.mxu0 0.0
    %4775 = vmatprep.subr.mxu0 0.0
    %4776 = vmatpush2.msra.mxu0 0.0
    %4777 = vmatprep.subr.mxu0 0.0
    %4778 = vmatpush2.msra.mxu0 0.0
    %4779 = vmatprep.subr.mxu0 0.0
    %4780 = vmatpush2.msra.mxu0 0.0
    %4781 = vmatprep.subr.mxu0 0.0
    %4782 = vmatpush2.msra.mxu0 0.0
    %4783 = vmatprep.subr.mxu0 0.0
    %4784 = vmatpush2.msra.mxu0 0.0
    %4785 = vmatprep.subr.mxu0 0.0
    %4786 = vmatpush2.msra.mxu0 0.0
    %4787 = vmatprep.subr.mxu0 0.0
    %4788 = vmatpush2.msra.mxu0 0.0
    %4789 = vmatprep.subr.mxu0 0.0
    %4790 = vmatpush2.msra.mxu0 0.0
    %4791 = vmatprep.subr.mxu0 0.0
    %4792 = vmatpush2.msra.mxu0 0.0
    %4793 = vmatprep.subr.mxu0 0.0
    %4794 = vmatpush2.msra.mxu0 0.0
    %4795 = vmatprep.subr.mxu0 0.0
    %4796 = vmatpush2.msra.mxu0 0.0
    %4797 = vmatprep.mubr.f32.mxu0 0.0
    %4798 = vmatmul.mubr.f32.gmra.mxu0 %v4613
    %v4799 = vpop.f32.mrf.mxu0
    %v4800 = vadd.f32 0.0, %v4799
    %v4801 = vpop.f32.mrf.mxu0
    %4802 = vdwg.mxu0
    %v4803 = vld [vmem:[#allocation4 + $0x460] sm:$0xf]
    %v4804 = vld [vmem:[#allocation4 + $0x470] sm:$0xf]
    %v4806 = vsel %vm1474, %v4804, 0
    %v4809 = vsel %vm1105, %v4731, 0
    %4811 = vmatprep.subr.mxu0 0.0
    %4812 = vmatpush1.msra.mxu0 0.0
    %4813 = vmatprep.subr.mxu0 0.0
    %4814 = vmatpush1.msra.mxu0 0.0
    %4815 = vmatprep.subr.mxu0 0.0
    %4816 = vmatpush1.msra.mxu0 0.0
    %4817 = vmatprep.subr.mxu0 0.0
    %4818 = vmatpush1.msra.mxu0 0.0
    %4819 = vmatprep.subr.mxu0 0.0
    %4820 = vmatpush1.msra.mxu0 0.0
    %4821 = vmatprep.subr.mxu0 0.0
    %4822 = vmatpush1.msra.mxu0 0.0
    %4823 = vmatprep.subr.mxu0 0.0
    %4824 = vmatpush1.msra.mxu0 0.0
    %4825 = vmatprep.subr.mxu0 0.0
    %4826 = vmatpush1.msra.mxu0 0.0
    %4827 = vmatprep.subr.mxu0 0.0
    %4828 = vmatpush1.msra.mxu0 0.0
    %4829 = vmatprep.subr.mxu0 0.0
    %4830 = vmatpush1.msra.mxu0 0.0
    %4831 = vmatprep.subr.mxu0 0.0
    %4832 = vmatpush1.msra.mxu0 0.0
    %4833 = vmatprep.subr.mxu0 0.0
    %4834 = vmatpush1.msra.mxu0 0.0
    %4835 = vmatprep.subr.mxu0 0.0
    %4836 = vmatpush1.msra.mxu0 0.0
    %4837 = vmatprep.subr.mxu0 0.0
    %4838 = vmatpush1.msra.mxu0 0.0
    %4839 = vmatprep.subr.mxu0 0.0
    %4840 = vmatpush1.msra.mxu0 0.0
    %4841 = vmatprep.subr.mxu0 0.0
    %4842 = vmatpush1.msra.mxu0 %v4809
    %4843 = vmatprep.subr.mxu0 0.0
    %4844 = vmatpush2.msra.mxu0 0.0
    %4845 = vmatprep.subr.mxu0 0.0
    %4846 = vmatpush2.msra.mxu0 0.0
    %4847 = vmatprep.subr.mxu0 0.0
    %4848 = vmatpush2.msra.mxu0 0.0
    %4849 = vmatprep.subr.mxu0 0.0
    %4850 = vmatpush2.msra.mxu0 0.0
    %4851 = vmatprep.subr.mxu0 0.0
    %4852 = vmatpush2.msra.mxu0 0.0
    %4853 = vmatprep.subr.mxu0 0.0
    %4854 = vmatpush2.msra.mxu0 0.0
    %4855 = vmatprep.subr.mxu0 0.0
    %4856 = vmatpush2.msra.mxu0 0.0
    %4857 = vmatprep.subr.mxu0 0.0
    %4858 = vmatpush2.msra.mxu0 0.0
    %4859 = vmatprep.subr.mxu0 0.0
    %4860 = vmatpush2.msra.mxu0 0.0
    %4861 = vmatprep.subr.mxu0 0.0
    %4862 = vmatpush2.msra.mxu0 0.0
    %4863 = vmatprep.subr.mxu0 0.0
    %4864 = vmatpush2.msra.mxu0 0.0
    %4865 = vmatprep.subr.mxu0 0.0
    %4866 = vmatpush2.msra.mxu0 0.0
    %4867 = vmatprep.subr.mxu0 0.0
    %4868 = vmatpush2.msra.mxu0 0.0
    %4869 = vmatprep.subr.mxu0 0.0
    %4870 = vmatpush2.msra.mxu0 0.0
    %4871 = vmatprep.subr.mxu0 0.0
    %4872 = vmatpush2.msra.mxu0 0.0
    %4873 = vmatprep.subr.mxu0 0.0
    %4874 = vmatpush2.msra.mxu0 0.0
    %4875 = vmatprep.mubr.f32.mxu0 0.0
    %4876 = vmatmul.mubr.f32.gmra.mxu0 %v4806
    %v4877 = vpop.f32.mrf.mxu0
    %v4878 = vadd.f32 0.0, %v4877
    %v4879 = vpop.f32.mrf.mxu0
    %4880 = vdwg.mxu0
    %v4882 = vsel %vm1474, %v4803, 0
    %v4885 = vsel %vm1105, %v4729, 0
    %4887 = vmatprep.subr.mxu0 0.0
    %4888 = vmatpush1.msra.mxu0 0.0
    %4889 = vmatprep.subr.mxu0 0.0
    %4890 = vmatpush1.msra.mxu0 0.0
    %4891 = vmatprep.subr.mxu0 0.0
    %4892 = vmatpush1.msra.mxu0 0.0
    %4893 = vmatprep.subr.mxu0 0.0
    %4894 = vmatpush1.msra.mxu0 0.0
    %4895 = vmatprep.subr.mxu0 0.0
    %4896 = vmatpush1.msra.mxu0 0.0
    %4897 = vmatprep.subr.mxu0 0.0
    %4898 = vmatpush1.msra.mxu0 0.0
    %4899 = vmatprep.subr.mxu0 0.0
    %4900 = vmatpush1.msra.mxu0 0.0
    %4901 = vmatprep.subr.mxu0 0.0
    %4902 = vmatpush1.msra.mxu0 0.0
    %4903 = vmatprep.subr.mxu0 0.0
    %4904 = vmatpush1.msra.mxu0 0.0
    %4905 = vmatprep.subr.mxu0 0.0
    %4906 = vmatpush1.msra.mxu0 0.0
    %4907 = vmatprep.subr.mxu0 0.0
    %4908 = vmatpush1.msra.mxu0 0.0
    %4909 = vmatprep.subr.mxu0 0.0
    %4910 = vmatpush1.msra.mxu0 0.0
    %4911 = vmatprep.subr.mxu0 0.0
    %4912 = vmatpush1.msra.mxu0 0.0
    %4913 = vmatprep.subr.mxu0 0.0
    %4914 = vmatpush1.msra.mxu0 0.0
    %4915 = vmatprep.subr.mxu0 0.0
    %4916 = vmatpush1.msra.mxu0 0.0
    %4917 = vmatprep.subr.mxu0 0.0
    %4918 = vmatpush1.msra.mxu0 %v4885
    %4919 = vmatprep.subr.mxu0 0.0
    %4920 = vmatpush2.msra.mxu0 0.0
    %4921 = vmatprep.subr.mxu0 0.0
    %4922 = vmatpush2.msra.mxu0 0.0
    %4923 = vmatprep.subr.mxu0 0.0
    %4924 = vmatpush2.msra.mxu0 0.0
    %4925 = vmatprep.subr.mxu0 0.0
    %4926 = vmatpush2.msra.mxu0 0.0
    %4927 = vmatprep.subr.mxu0 0.0
    %4928 = vmatpush2.msra.mxu0 0.0
    %4929 = vmatprep.subr.mxu0 0.0
    %4930 = vmatpush2.msra.mxu0 0.0
    %4931 = vmatprep.subr.mxu0 0.0
    %4932 = vmatpush2.msra.mxu0 0.0
    %4933 = vmatprep.subr.mxu0 0.0
    %4934 = vmatpush2.msra.mxu0 0.0
    %4935 = vmatprep.subr.mxu0 0.0
    %4936 = vmatpush2.msra.mxu0 0.0
    %4937 = vmatprep.subr.mxu0 0.0
    %4938 = vmatpush2.msra.mxu0 0.0
    %4939 = vmatprep.subr.mxu0 0.0
    %4940 = vmatpush2.msra.mxu0 0.0
    %4941 = vmatprep.subr.mxu0 0.0
    %4942 = vmatpush2.msra.mxu0 0.0
    %4943 = vmatprep.subr.mxu0 0.0
    %4944 = vmatpush2.msra.mxu0 0.0
    %4945 = vmatprep.subr.mxu0 0.0
    %4946 = vmatpush2.msra.mxu0 0.0
    %4947 = vmatprep.subr.mxu0 0.0
    %4948 = vmatpush2.msra.mxu0 0.0
    %4949 = vmatprep.subr.mxu0 0.0
    %4950 = vmatpush2.msra.mxu0 0.0
    %4951 = vmatprep.mubr.f32.mxu0 0.0
    %4952 = vmatmul.mubr.f32.gmra.mxu0 %v4882
    %v4953 = vpop.f32.mrf.mxu0
    %v4954 = vadd.f32 %v4878, %v4953
    %v4955 = vpop.f32.mrf.mxu0
    %4956 = vdwg.mxu0
    %v4957 = vld [vmem:[#allocation4 + $0x480] sm:$0xf]
    %v4959 = vsel %vm1474, %v4957, 0
    %v4962 = vsel %vm1105, %v4800, 0
    %4964 = vmatprep.subr.mxu0 0.0
    %4965 = vmatpush1.msra.mxu0 0.0
    %4966 = vmatprep.subr.mxu0 0.0
    %4967 = vmatpush1.msra.mxu0 0.0
    %4968 = vmatprep.subr.mxu0 0.0
    %4969 = vmatpush1.msra.mxu0 0.0
    %4970 = vmatprep.subr.mxu0 0.0
    %4971 = vmatpush1.msra.mxu0 0.0
    %4972 = vmatprep.subr.mxu0 0.0
    %4973 = vmatpush1.msra.mxu0 0.0
    %4974 = vmatprep.subr.mxu0 0.0
    %4975 = vmatpush1.msra.mxu0 0.0
    %4976 = vmatprep.subr.mxu0 0.0
    %4977 = vmatpush1.msra.mxu0 0.0
    %4978 = vmatprep.subr.mxu0 0.0
    %4979 = vmatpush1.msra.mxu0 0.0
    %4980 = vmatprep.subr.mxu0 0.0
    %4981 = vmatpush1.msra.mxu0 0.0
    %4982 = vmatprep.subr.mxu0 0.0
    %4983 = vmatpush1.msra.mxu0 0.0
    %4984 = vmatprep.subr.mxu0 0.0
    %4985 = vmatpush1.msra.mxu0 0.0
    %4986 = vmatprep.subr.mxu0 0.0
    %4987 = vmatpush1.msra.mxu0 0.0
    %4988 = vmatprep.subr.mxu0 0.0
    %4989 = vmatpush1.msra.mxu0 0.0
    %4990 = vmatprep.subr.mxu0 0.0
    %4991 = vmatpush1.msra.mxu0 0.0
    %4992 = vmatprep.subr.mxu0 0.0
    %4993 = vmatpush1.msra.mxu0 0.0
    %4994 = vmatprep.subr.mxu0 0.0
    %4995 = vmatpush1.msra.mxu0 %v4962
    %4996 = vmatprep.subr.mxu0 0.0
    %4997 = vmatpush2.msra.mxu0 0.0
    %4998 = vmatprep.subr.mxu0 0.0
    %4999 = vmatpush2.msra.mxu0 0.0
    %5000 = vmatprep.subr.mxu0 0.0
    %5001 = vmatpush2.msra.mxu0 0.0
    %5002 = vmatprep.subr.mxu0 0.0
    %5003 = vmatpush2.msra.mxu0 0.0
    %5004 = vmatprep.subr.mxu0 0.0
    %5005 = vmatpush2.msra.mxu0 0.0
    %5006 = vmatprep.subr.mxu0 0.0
    %5007 = vmatpush2.msra.mxu0 0.0
    %5008 = vmatprep.subr.mxu0 0.0
    %5009 = vmatpush2.msra.mxu0 0.0
    %5010 = vmatprep.subr.mxu0 0.0
    %5011 = vmatpush2.msra.mxu0 0.0
    %5012 = vmatprep.subr.mxu0 0.0
    %5013 = vmatpush2.msra.mxu0 0.0
    %5014 = vmatprep.subr.mxu0 0.0
    %5015 = vmatpush2.msra.mxu0 0.0
    %5016 = vmatprep.subr.mxu0 0.0
    %5017 = vmatpush2.msra.mxu0 0.0
    %5018 = vmatprep.subr.mxu0 0.0
    %5019 = vmatpush2.msra.mxu0 0.0
    %5020 = vmatprep.subr.mxu0 0.0
    %5021 = vmatpush2.msra.mxu0 0.0
    %5022 = vmatprep.subr.mxu0 0.0
    %5023 = vmatpush2.msra.mxu0 0.0
    %5024 = vmatprep.subr.mxu0 0.0
    %5025 = vmatpush2.msra.mxu0 0.0
    %5026 = vmatprep.subr.mxu0 0.0
    %5027 = vmatpush2.msra.mxu0 0.0
    %5028 = vmatprep.mubr.f32.mxu0 0.0
    %5029 = vmatmul.mubr.f32.gmra.mxu0 %v4959
    %v5030 = vpop.f32.mrf.mxu0
    %v5031 = vadd.f32 0.0, %v5030
    %v5032 = vpop.f32.mrf.mxu0
    %5033 = vdwg.mxu0
    %v5034 = vadd.f32 %v4954, %v5031
    %v5035 = vld [vmem:[#allocation4 + $0x100] sm:$0xff]
    %v5036 = vld [vmem:[#allocation4 + $0x108] sm:$0xff]
    %v5037 = vld [vmem:[#allocation4 + $0x110] sm:$0xff]
    %v5038 = vld [vmem:[#allocation4 + $0x118] sm:$0xff]
    %v5039 = vld [vmem:[#allocation4 + $0x120] sm:$0xff]
    %v5040 = vld [vmem:[#allocation4 + $0x128] sm:$0xff]
    %v5041 = vld [vmem:[#allocation4 + $0x130] sm:$0xff]
    %v5042 = vld [vmem:[#allocation4 + $0x138] sm:$0xff]
    %v5043 = vld [vmem:[#allocation4 + $0x140] sm:$0xff]
    %v5044 = vld [vmem:[#allocation4 + $0x148] sm:$0xff]
    %v5045 = vld [vmem:[#allocation4 + $0x150] sm:$0xff]
    %v5046 = vld [vmem:[#allocation4 + $0x158] sm:$0xff]
    %v5047 = vld [vmem:[#allocation4 + $0x160] sm:$0xff]
    %v5048 = vld [vmem:[#allocation4 + $0x168] sm:$0xff]
    %v5049 = vld [vmem:[#allocation4 + $0x170] sm:$0xff]
    %v5050 = vld [vmem:[#allocation4 + $0x178] sm:$0xff]
    %v5051 = vld [vmem:[#allocation4 + $0x300] sm:$0xff]
    %v5052 = vld [vmem:[#allocation4 + $0x308] sm:$0xff]
    %v5053 = vld [vmem:[#allocation4 + $0x310] sm:$0xff]
    %v5054 = vld [vmem:[#allocation4 + $0x318] sm:$0xff]
    %v5055 = vld [vmem:[#allocation4 + $0x320] sm:$0xff]
    %v5056 = vld [vmem:[#allocation4 + $0x328] sm:$0xff]
    %v5057 = vld [vmem:[#allocation4 + $0x330] sm:$0xff]
    %v5058 = vld [vmem:[#allocation4 + $0x338] sm:$0xff]
    %v5059 = vld [vmem:[#allocation4 + $0x340] sm:$0xff]
    %v5060 = vld [vmem:[#allocation4 + $0x348] sm:$0xff]
    %v5061 = vld [vmem:[#allocation4 + $0x350] sm:$0xff]
    %v5062 = vld [vmem:[#allocation4 + $0x358] sm:$0xff]
    %v5063 = vld [vmem:[#allocation4 + $0x360] sm:$0xff]
    %v5064 = vld [vmem:[#allocation4 + $0x368] sm:$0xff]
    %v5065 = vld [vmem:[#allocation4 + $0x370] sm:$0xff]
    %v5066 = vld [vmem:[#allocation4 + $0x378] sm:$0xff]
    %v5067 = vsel %vm1105, %v5034, 0.0
    %v5068 = vrot.slane %v5067, 4
    %v5069 = vadd.f32 %v5067, %v5068
    %v5070 = vrot.slane %v5069, 2
    %v5071 = vadd.f32 %v5069, %v5070
    %v5072 = vrot.slane %v5071, 1
    %v5073 = vadd.f32 %v5071, %v5072
    %v5074 = vmul.f32 %v5034, %v5034
    %v5075 = vsel %vm1105, %v5074, 0.0
    %v5076 = vrot.slane %v5075, 4
    %v5077 = vadd.f32 %v5075, %v5076
    %v5078 = vrot.slane %v5077, 2
    %v5079 = vadd.f32 %v5077, %v5078
    %v5080 = vrot.slane %v5079, 1
    %v5081 = vadd.f32 %v5079, %v5080
    %v5082 = vsel %vm497, %v5073, %v5081
    %5083 = vmatprep.subr.mxu0 0.0
    %5084 = vmatpush1.msra.mxu0 %v5050
    %5085 = vmatprep.subr.mxu0 0.0
    %5086 = vmatpush1.msra.mxu0 %v5049
    %5087 = vmatprep.subr.mxu0 0.0
    %5088 = vmatpush1.msra.mxu0 %v5048
    %5089 = vmatprep.subr.mxu0 0.0
    %5090 = vmatpush1.msra.mxu0 %v5047
    %5091 = vmatprep.subr.mxu0 0.0
    %5092 = vmatpush1.msra.mxu0 %v5046
    %5093 = vmatprep.subr.mxu0 0.0
    %5094 = vmatpush1.msra.mxu0 %v5045
    %5095 = vmatprep.subr.mxu0 0.0
    %5096 = vmatpush1.msra.mxu0 %v5044
    %5097 = vmatprep.subr.mxu0 0.0
    %5098 = vmatpush1.msra.mxu0 %v5043
    %5099 = vmatprep.subr.mxu0 0.0
    %5100 = vmatpush1.msra.mxu0 %v5042
    %5101 = vmatprep.subr.mxu0 0.0
    %5102 = vmatpush1.msra.mxu0 %v5041
    %5103 = vmatprep.subr.mxu0 0.0
    %5104 = vmatpush1.msra.mxu0 %v5040
    %5105 = vmatprep.subr.mxu0 0.0
    %5106 = vmatpush1.msra.mxu0 %v5039
    %5107 = vmatprep.subr.mxu0 0.0
    %5108 = vmatpush1.msra.mxu0 %v5038
    %5109 = vmatprep.subr.mxu0 0.0
    %5110 = vmatpush1.msra.mxu0 %v5037
    %5111 = vmatprep.subr.mxu0 0.0
    %5112 = vmatpush1.msra.mxu0 %v5036
    %5113 = vmatprep.subr.mxu0 0.0
    %5114 = vmatpush1.msra.mxu0 %v5035
    %5115 = vmatprep.subr.mxu0 0.0
    %5116 = vmatpush2.msra.mxu0 0.0
    %5117 = vmatprep.subr.mxu0 0.0
    %5118 = vmatpush2.msra.mxu0 0.0
    %5119 = vmatprep.subr.mxu0 0.0
    %5120 = vmatpush2.msra.mxu0 0.0
    %5121 = vmatprep.subr.mxu0 0.0
    %5122 = vmatpush2.msra.mxu0 0.0
    %5123 = vmatprep.subr.mxu0 0.0
    %5124 = vmatpush2.msra.mxu0 0.0
    %5125 = vmatprep.subr.mxu0 0.0
    %5126 = vmatpush2.msra.mxu0 0.0
    %5127 = vmatprep.subr.mxu0 0.0
    %5128 = vmatpush2.msra.mxu0 0.0
    %5129 = vmatprep.subr.mxu0 0.0
    %5130 = vmatpush2.msra.mxu0 0.0
    %5131 = vmatprep.subr.mxu0 0.0
    %5132 = vmatpush2.msra.mxu0 0.0
    %5133 = vmatprep.subr.mxu0 0.0
    %5134 = vmatpush2.msra.mxu0 0.0
    %5135 = vmatprep.subr.mxu0 0.0
    %5136 = vmatpush2.msra.mxu0 0.0
    %5137 = vmatprep.subr.mxu0 0.0
    %5138 = vmatpush2.msra.mxu0 0.0
    %5139 = vmatprep.subr.mxu0 0.0
    %5140 = vmatpush2.msra.mxu0 0.0
    %5141 = vmatprep.subr.mxu0 0.0
    %5142 = vmatpush2.msra.mxu0 0.0
    %5143 = vmatprep.subr.mxu0 0.0
    %5144 = vmatpush2.msra.mxu0 0.0
    %5145 = vmatprep.subr.mxu0 0.0
    %5146 = vmatpush2.msra.mxu0 0.0
    %5147 = vmatprep.mubr.f32.mxu0 0.0
    %5148 = vmatmul.mubr.f32.gmra.mxu0 %v5082
    %v5149 = vpop.f32.mrf.mxu0
    %v5150 = vadd.f32 0.0, %v5149
    %v5151 = vpop.f32.mrf.mxu0
    %5152 = vdwg.mxu0
    %v5153 = vmul.f32 %v5150, 0.0625
    %v5154 = vmul.f32 %v5153, %v5153
    %v5156 = vrot.slane %v5154, 7
    %v5158 = vsub.f32 %v5153, %v5156
    %v5159 = vmax.f32 %v5158, 0.0
    %v5160 = vadd.f32 %v5159, 1e-05
    %v5161 = vrsqrt.pop %v5160
    %v5162 = vsel %vm497, %v5153, %v5161
    %5163 = vmatprep.subr.mxu0 0.0
    %5164 = vmatpush1.msra.mxu0 %v5066
    %5165 = vmatprep.subr.mxu0 0.0
    %5166 = vmatpush1.msra.mxu0 %v5065
    %5167 = vmatprep.subr.mxu0 0.0
    %5168 = vmatpush1.msra.mxu0 %v5064
    %5169 = vmatprep.subr.mxu0 0.0
    %5170 = vmatpush1.msra.mxu0 %v5063
    %5171 = vmatprep.subr.mxu0 0.0
    %5172 = vmatpush1.msra.mxu0 %v5062
    %5173 = vmatprep.subr.mxu0 0.0
    %5174 = vmatpush1.msra.mxu0 %v5061
    %5175 = vmatprep.subr.mxu0 0.0
    %5176 = vmatpush1.msra.mxu0 %v5060
    %5177 = vmatprep.subr.mxu0 0.0
    %5178 = vmatpush1.msra.mxu0 %v5059
    %5179 = vmatprep.subr.mxu0 0.0
    %5180 = vmatpush1.msra.mxu0 %v5058
    %5181 = vmatprep.subr.mxu0 0.0
    %5182 = vmatpush1.msra.mxu0 %v5057
    %5183 = vmatprep.subr.mxu0 0.0
    %5184 = vmatpush1.msra.mxu0 %v5056
    %5185 = vmatprep.subr.mxu0 0.0
    %5186 = vmatpush1.msra.mxu0 %v5055
    %5187 = vmatprep.subr.mxu0 0.0
    %5188 = vmatpush1.msra.mxu0 %v5054
    %5189 = vmatprep.subr.mxu0 0.0
    %5190 = vmatpush1.msra.mxu0 %v5053
    %5191 = vmatprep.subr.mxu0 0.0
    %5192 = vmatpush1.msra.mxu0 %v5052
    %5193 = vmatprep.subr.mxu0 0.0
    %5194 = vmatpush1.msra.mxu0 %v5051
    %5195 = vmatprep.subr.mxu0 0.0
    %5196 = vmatpush2.msra.mxu0 0.0
    %5197 = vmatprep.subr.mxu0 0.0
    %5198 = vmatpush2.msra.mxu0 0.0
    %5199 = vmatprep.subr.mxu0 0.0
    %5200 = vmatpush2.msra.mxu0 0.0
    %5201 = vmatprep.subr.mxu0 0.0
    %5202 = vmatpush2.msra.mxu0 0.0
    %5203 = vmatprep.subr.mxu0 0.0
    %5204 = vmatpush2.msra.mxu0 0.0
    %5205 = vmatprep.subr.mxu0 0.0
    %5206 = vmatpush2.msra.mxu0 0.0
    %5207 = vmatprep.subr.mxu0 0.0
    %5208 = vmatpush2.msra.mxu0 0.0
    %5209 = vmatprep.subr.mxu0 0.0
    %5210 = vmatpush2.msra.mxu0 0.0
    %5211 = vmatprep.subr.mxu0 0.0
    %5212 = vmatpush2.msra.mxu0 0.0
    %5213 = vmatprep.subr.mxu0 0.0
    %5214 = vmatpush2.msra.mxu0 0.0
    %5215 = vmatprep.subr.mxu0 0.0
    %5216 = vmatpush2.msra.mxu0 0.0
    %5217 = vmatprep.subr.mxu0 0.0
    %5218 = vmatpush2.msra.mxu0 0.0
    %5219 = vmatprep.subr.mxu0 0.0
    %5220 = vmatpush2.msra.mxu0 0.0
    %5221 = vmatprep.subr.mxu0 0.0
    %5222 = vmatpush2.msra.mxu0 0.0
    %5223 = vmatprep.subr.mxu0 0.0
    %5224 = vmatpush2.msra.mxu0 0.0
    %5225 = vmatprep.subr.mxu0 0.0
    %5226 = vmatpush2.msra.mxu0 0.0
    %5227 = vmatprep.mubr.f32.mxu0 0.0
    %5228 = vmatmul.mubr.f32.gmra.mxu0 %v5162
    %v5229 = vpop.f32.mrf.mxu0
    %v5230 = vadd.f32 0.0, %v5229
    %v5231 = vpop.f32.mrf.mxu0
    %5232 = vdwg.mxu0
    %v5233 = vlaneseq
    %v5234 = vshrl.u32 %v5233, 7
    %v5235 = vsub.s32 0, %v5234
    %v5236 = vrot.slane %v5230, %v5235
    %v5237 = vsub.f32 %v5034, %v5236
    %v5238 = vlaneseq
    %v5239 = vshrl.u32 %v5238, 7
    %v5240 = vsub.s32 1, %v5239
    %v5241 = vrot.slane %v5230, %v5240
    %v5242 = vmul.f32 %v5237, %v5241
    %v5243 = vmax.f32 %v5242, 0.0
    %v5244 = vld [vmem:[#allocation2 + $0x3c0] sm:$0xff]
    %v5245 = vld [vmem:[#allocation2 + $0x3c8] sm:$0xff]
    %v5246 = vld [vmem:[#allocation2 + $0x3d0] sm:$0xff]
    %v5247 = vld [vmem:[#allocation2 + $0x3d8] sm:$0xff]
    %v5248 = vld [vmem:[#allocation2 + $0x3e0] sm:$0xff]
    %v5249 = vld [vmem:[#allocation2 + $0x3e8] sm:$0xff]
    %v5250 = vld [vmem:[#allocation2 + $0x3f0] sm:$0xff]
    %v5251 = vld [vmem:[#allocation2 + $0x3f8] sm:$0xff]
    %v5252 = vld [vmem:[#allocation2 + $0x400] sm:$0xff]
    %v5253 = vld [vmem:[#allocation2 + $0x408] sm:$0xff]
    %v5254 = vld [vmem:[#allocation2 + $0x410] sm:$0xff]
    %v5255 = vld [vmem:[#allocation2 + $0x418] sm:$0xff]
    %v5256 = vld [vmem:[#allocation2 + $0x420] sm:$0xff]
    %v5257 = vld [vmem:[#allocation2 + $0x428] sm:$0xff]
    %v5258 = vld [vmem:[#allocation2 + $0x430] sm:$0xff]
    %v5259 = vld [vmem:[#allocation2 + $0x438] sm:$0xff]
    %v5260 = vld [vmem:[#allocation2 + $0x440] sm:$0xff]
    %v5261 = vld [vmem:[#allocation2 + $0x448] sm:$0xff]
    %v5262 = vld [vmem:[#allocation2 + $0x450] sm:$0xff]
    %v5263 = vld [vmem:[#allocation2 + $0x458] sm:$0xff]
    %v5264 = vld [vmem:[#allocation2 + $0x460] sm:$0xff]
    %v5265 = vld [vmem:[#allocation2 + $0x468] sm:$0xff]
    %v5266 = vld [vmem:[#allocation2 + $0x470] sm:$0xff]
    %v5267 = vld [vmem:[#allocation2 + $0x478] sm:$0xff]
    %v5268 = vld [vmem:[#allocation2 + $0x480] sm:$0xff]
    %v5269 = vld [vmem:[#allocation2 + $0x488] sm:$0xff]
    %v5270 = vld [vmem:[#allocation2 + $0x490] sm:$0xff]
    %v5271 = vld [vmem:[#allocation2 + $0x498] sm:$0xff]
    %v5272 = vld [vmem:[#allocation2 + $0x4a0] sm:$0xff]
    %v5273 = vld [vmem:[#allocation2 + $0x4a8] sm:$0xff]
    %v5274 = vld [vmem:[#allocation2 + $0x4b0] sm:$0xff]
    %v5275 = vld [vmem:[#allocation2 + $0x4b8] sm:$0xff]
    %v5276 = vld [vmem:[#allocation2 + $0x4c0] sm:$0xff]
    %v5277 = vld [vmem:[#allocation2 + $0x4c8] sm:$0xff]
    %v5278 = vld [vmem:[#allocation2 + $0x4d0] sm:$0xff]
    %v5279 = vld [vmem:[#allocation2 + $0x4d8] sm:$0xff]
    %v5280 = vld [vmem:[#allocation2 + $0x4e0] sm:$0xff]
    %v5281 = vld [vmem:[#allocation2 + $0x4e8] sm:$0xff]
    %v5282 = vld [vmem:[#allocation2 + $0x4f0] sm:$0xff]
    %v5283 = vld [vmem:[#allocation2 + $0x4f8] sm:$0xff]
    %v5284 = vld [vmem:[#allocation2 + $0x500] sm:$0xff]
    %v5285 = vld [vmem:[#allocation2 + $0x508] sm:$0xff]
    %v5286 = vld [vmem:[#allocation2 + $0x510] sm:$0xff]
    %v5287 = vld [vmem:[#allocation2 + $0x518] sm:$0xff]
    %v5288 = vld [vmem:[#allocation2 + $0x520] sm:$0xff]
    %v5289 = vld [vmem:[#allocation2 + $0x528] sm:$0xff]
    %v5290 = vld [vmem:[#allocation2 + $0x530] sm:$0xff]
    %v5291 = vld [vmem:[#allocation2 + $0x538] sm:$0xff]
    %v5292 = vld [vmem:[#allocation2 + $0x540] sm:$0xff]
    %v5293 = vld [vmem:[#allocation2 + $0x548] sm:$0xff]
    %v5294 = vld [vmem:[#allocation2 + $0x550] sm:$0xff]
    %v5295 = vld [vmem:[#allocation2 + $0x558] sm:$0xff]
    %v5296 = vld [vmem:[#allocation2 + $0x560] sm:$0xff]
    %v5297 = vld [vmem:[#allocation2 + $0x568] sm:$0xff]
    %v5298 = vld [vmem:[#allocation2 + $0x570] sm:$0xff]
    %v5299 = vld [vmem:[#allocation2 + $0x578] sm:$0xff]
    %v5300 = vld [vmem:[#allocation2 + $0x580] sm:$0xff]
    %v5301 = vld [vmem:[#allocation2 + $0x588] sm:$0xff]
    %v5302 = vld [vmem:[#allocation2 + $0x590] sm:$0xff]
    %v5303 = vld [vmem:[#allocation2 + $0x598] sm:$0xff]
    %v5304 = vld [vmem:[#allocation2 + $0x5a0] sm:$0xff]
    %v5305 = vld [vmem:[#allocation2 + $0x5a8] sm:$0xff]
    %v5306 = vld [vmem:[#allocation2 + $0x5b0] sm:$0xff]
    %v5307 = vld [vmem:[#allocation2 + $0x5b8] sm:$0xff]
    %v5308 = vld [vmem:[#allocation2 + $0x5c0] sm:$0xff]
    %v5309 = vld [vmem:[#allocation2 + $0x5c8] sm:$0xff]
    %v5310 = vld [vmem:[#allocation2 + $0x5d0] sm:$0xff]
    %v5311 = vld [vmem:[#allocation2 + $0x5d8] sm:$0xff]
    %v5312 = vld [vmem:[#allocation2 + $0x5e0] sm:$0xff]
    %v5313 = vld [vmem:[#allocation2 + $0x5e8] sm:$0xff]
    %v5314 = vld [vmem:[#allocation2 + $0x5f0] sm:$0xff]
    %v5315 = vld [vmem:[#allocation2 + $0x5f8] sm:$0xff]
    %v5316 = vld [vmem:[#allocation2 + $0x600] sm:$0xff]
    %v5317 = vld [vmem:[#allocation2 + $0x608] sm:$0xff]
    %v5318 = vld [vmem:[#allocation2 + $0x610] sm:$0xff]
    %v5319 = vld [vmem:[#allocation2 + $0x618] sm:$0xff]
    %v5320 = vld [vmem:[#allocation2 + $0x620] sm:$0xff]
    %v5321 = vld [vmem:[#allocation2 + $0x628] sm:$0xff]
    %v5322 = vld [vmem:[#allocation2 + $0x630] sm:$0xff]
    %v5323 = vld [vmem:[#allocation2 + $0x638] sm:$0xff]
    %v5324 = vld [vmem:[#allocation2 + $0x640] sm:$0xff]
    %v5325 = vld [vmem:[#allocation2 + $0x648] sm:$0xff]
    %v5326 = vld [vmem:[#allocation2 + $0x650] sm:$0xff]
    %v5327 = vld [vmem:[#allocation2 + $0x658] sm:$0xff]
    %v5328 = vld [vmem:[#allocation2 + $0x660] sm:$0xff]
    %v5329 = vld [vmem:[#allocation2 + $0x668] sm:$0xff]
    %v5330 = vld [vmem:[#allocation2 + $0x670] sm:$0xff]
    %v5331 = vld [vmem:[#allocation2 + $0x678] sm:$0xff]
    %v5332 = vld [vmem:[#allocation2 + $0x680] sm:$0xff]
    %v5333 = vld [vmem:[#allocation2 + $0x688] sm:$0xff]
    %v5334 = vld [vmem:[#allocation2 + $0x690] sm:$0xff]
    %v5335 = vld [vmem:[#allocation2 + $0x698] sm:$0xff]
    %v5336 = vld [vmem:[#allocation2 + $0x6a0] sm:$0xff]
    %v5337 = vld [vmem:[#allocation2 + $0x6a8] sm:$0xff]
    %v5338 = vld [vmem:[#allocation2 + $0x6b0] sm:$0xff]
    %v5339 = vld [vmem:[#allocation2 + $0x6b8] sm:$0xff]
    %5340 = vmatprep.subr.mxu0 %v5338
    %5341 = vmatpush1.msra.mxu0 %v5337
    %5342 = vmatprep.subr.mxu0 %v5335
    %5343 = vmatpush1.msra.mxu0 %v5334
    %5344 = vmatprep.subr.mxu0 %v5332
    %5345 = vmatpush1.msra.mxu0 %v5331
    %5346 = vmatprep.subr.mxu0 %v5329
    %5347 = vmatpush1.msra.mxu0 %v5328
    %5348 = vmatprep.subr.mxu0 %v5326
    %5349 = vmatpush1.msra.mxu0 %v5325
    %5350 = vmatprep.subr.mxu0 %v5323
    %5351 = vmatpush1.msra.mxu0 %v5322
    %5352 = vmatprep.subr.mxu0 %v5320
    %5353 = vmatpush1.msra.mxu0 %v5319
    %5354 = vmatprep.subr.mxu0 %v5317
    %5355 = vmatpush1.msra.mxu0 %v5316
    %5356 = vmatprep.subr.mxu0 %v5314
    %5357 = vmatpush1.msra.mxu0 %v5313
    %5358 = vmatprep.subr.mxu0 %v5311
    %5359 = vmatpush1.msra.mxu0 %v5310
    %5360 = vmatprep.subr.mxu0 %v5308
    %5361 = vmatpush1.msra.mxu0 %v5307
    %5362 = vmatprep.subr.mxu0 %v5305
    %5363 = vmatpush1.msra.mxu0 %v5304
    %5364 = vmatprep.subr.mxu0 %v5302
    %5365 = vmatpush1.msra.mxu0 %v5301
    %5366 = vmatprep.subr.mxu0 %v5299
    %5367 = vmatpush1.msra.mxu0 %v5298
    %5368 = vmatprep.subr.mxu0 %v5296
    %5369 = vmatpush1.msra.mxu0 %v5295
    %5370 = vmatprep.subr.mxu0 %v5293
    %5371 = vmatpush1.msra.mxu0 %v5292
    %5372 = vmatprep.subr.mxu0 0.0
    %5373 = vmatpush2.msra.mxu0 0.0
    %5374 = vmatprep.subr.mxu0 0.0
    %5375 = vmatpush2.msra.mxu0 0.0
    %5376 = vmatprep.subr.mxu0 0.0
    %5377 = vmatpush2.msra.mxu0 0.0
    %5378 = vmatprep.subr.mxu0 0.0
    %5379 = vmatpush2.msra.mxu0 0.0
    %5380 = vmatprep.subr.mxu0 0.0
    %5381 = vmatpush2.msra.mxu0 0.0
    %5382 = vmatprep.subr.mxu0 0.0
    %5383 = vmatpush2.msra.mxu0 0.0
    %5384 = vmatprep.subr.mxu0 0.0
    %5385 = vmatpush2.msra.mxu0 0.0
    %5386 = vmatprep.subr.mxu0 0.0
    %5387 = vmatpush2.msra.mxu0 0.0
    %5388 = vmatprep.subr.mxu0 0.0
    %5389 = vmatpush2.msra.mxu0 0.0
    %5390 = vmatprep.subr.mxu0 0.0
    %5391 = vmatpush2.msra.mxu0 0.0
    %5392 = vmatprep.subr.mxu0 0.0
    %5393 = vmatpush2.msra.mxu0 0.0
    %5394 = vmatprep.subr.mxu0 0.0
    %5395 = vmatpush2.msra.mxu0 0.0
    %5396 = vmatprep.subr.mxu0 0.0
    %5397 = vmatpush2.msra.mxu0 0.0
    %5398 = vmatprep.subr.mxu0 0.0
    %5399 = vmatpush2.msra.mxu0 0.0
    %5400 = vmatprep.subr.mxu0 0.0
    %5401 = vmatpush2.msra.mxu0 0.0
    %5402 = vmatprep.subr.mxu0 0.0
    %5403 = vmatpush2.msra.mxu0 0.0
    %5404 = vmatprep.mubr.f32.mxu0 0.0
    %5405 = vmatmul.mubr.f32.gmra.mxu0 %v5243
    %v5406 = vpop.f32.mrf.mxu0
    %v5407 = vadd.f32 0.0, %v5406
    %v5408 = vpop.f32.mrf.mxu0
    %v5409 = vadd.f32 0.0, %v5408
    %5410 = vdwg.mxu0
    %5411 = vmatprep.subr.mxu0 0.0
    %5412 = vmatpush1.msra.mxu0 %v5339
    %5413 = vmatprep.subr.mxu0 0.0
    %5414 = vmatpush1.msra.mxu0 %v5336
    %5415 = vmatprep.subr.mxu0 0.0
    %5416 = vmatpush1.msra.mxu0 %v5333
    %5417 = vmatprep.subr.mxu0 0.0
    %5418 = vmatpush1.msra.mxu0 %v5330
    %5419 = vmatprep.subr.mxu0 0.0
    %5420 = vmatpush1.msra.mxu0 %v5327
    %5421 = vmatprep.subr.mxu0 0.0
    %5422 = vmatpush1.msra.mxu0 %v5324
    %5423 = vmatprep.subr.mxu0 0.0
    %5424 = vmatpush1.msra.mxu0 %v5321
    %5425 = vmatprep.subr.mxu0 0.0
    %5426 = vmatpush1.msra.mxu0 %v5318
    %5427 = vmatprep.subr.mxu0 0.0
    %5428 = vmatpush1.msra.mxu0 %v5315
    %5429 = vmatprep.subr.mxu0 0.0
    %5430 = vmatpush1.msra.mxu0 %v5312
    %5431 = vmatprep.subr.mxu0 0.0
    %5432 = vmatpush1.msra.mxu0 %v5309
    %5433 = vmatprep.subr.mxu0 0.0
    %5434 = vmatpush1.msra.mxu0 %v5306
    %5435 = vmatprep.subr.mxu0 0.0
    %5436 = vmatpush1.msra.mxu0 %v5303
    %5437 = vmatprep.subr.mxu0 0.0
    %5438 = vmatpush1.msra.mxu0 %v5300
    %5439 = vmatprep.subr.mxu0 0.0
    %5440 = vmatpush1.msra.mxu0 %v5297
    %5441 = vmatprep.subr.mxu0 0.0
    %5442 = vmatpush1.msra.mxu0 %v5294
    %5443 = vmatprep.subr.mxu0 0.0
    %5444 = vmatpush2.msra.mxu0 0.0
    %5445 = vmatprep.subr.mxu0 0.0
    %5446 = vmatpush2.msra.mxu0 0.0
    %5447 = vmatprep.subr.mxu0 0.0
    %5448 = vmatpush2.msra.mxu0 0.0
    %5449 = vmatprep.subr.mxu0 0.0
    %5450 = vmatpush2.msra.mxu0 0.0
    %5451 = vmatprep.subr.mxu0 0.0
    %5452 = vmatpush2.msra.mxu0 0.0
    %5453 = vmatprep.subr.mxu0 0.0
    %5454 = vmatpush2.msra.mxu0 0.0
    %5455 = vmatprep.subr.mxu0 0.0
    %5456 = vmatpush2.msra.mxu0 0.0
    %5457 = vmatprep.subr.mxu0 0.0
    %5458 = vmatpush2.msra.mxu0 0.0
    %5459 = vmatprep.subr.mxu0 0.0
    %5460 = vmatpush2.msra.mxu0 0.0
    %5461 = vmatprep.subr.mxu0 0.0
    %5462 = vmatpush2.msra.mxu0 0.0
    %5463 = vmatprep.subr.mxu0 0.0
    %5464 = vmatpush2.msra.mxu0 0.0
    %5465 = vmatprep.subr.mxu0 0.0
    %5466 = vmatpush2.msra.mxu0 0.0
    %5467 = vmatprep.subr.mxu0 0.0
    %5468 = vmatpush2.msra.mxu0 0.0
    %5469 = vmatprep.subr.mxu0 0.0
    %5470 = vmatpush2.msra.mxu0 0.0
    %5471 = vmatprep.subr.mxu0 0.0
    %5472 = vmatpush2.msra.mxu0 0.0
    %5473 = vmatprep.subr.mxu0 0.0
    %5474 = vmatpush2.msra.mxu0 0.0
    %5475 = vmatprep.mubr.f32.mxu0 0.0
    %5476 = vmatmul.mubr.f32.gmra.mxu0 %v5243
    %v5477 = vpop.f32.mrf.mxu0
    %v5478 = vadd.f32 0.0, %v5477
    %v5479 = vpop.f32.mrf.mxu0
    %5480 = vdwg.mxu0
    %5481 = vmatprep.subr.mxu0 %v5290
    %5482 = vmatpush1.msra.mxu0 %v5289
    %5483 = vmatprep.subr.mxu0 %v5287
    %5484 = vmatpush1.msra.mxu0 %v5286
    %5485 = vmatprep.subr.mxu0 %v5284
    %5486 = vmatpush1.msra.mxu0 %v5283
    %5487 = vmatprep.subr.mxu0 %v5281
    %5488 = vmatpush1.msra.mxu0 %v5280
    %5489 = vmatprep.subr.mxu0 %v5278
    %5490 = vmatpush1.msra.mxu0 %v5277
    %5491 = vmatprep.subr.mxu0 %v5275
    %5492 = vmatpush1.msra.mxu0 %v5274
    %5493 = vmatprep.subr.mxu0 %v5272
    %5494 = vmatpush1.msra.mxu0 %v5271
    %5495 = vmatprep.subr.mxu0 %v5269
    %5496 = vmatpush1.msra.mxu0 %v5268
    %5497 = vmatprep.subr.mxu0 %v5266
    %5498 = vmatpush1.msra.mxu0 %v5265
    %5499 = vmatprep.subr.mxu0 %v5263
    %5500 = vmatpush1.msra.mxu0 %v5262
    %5501 = vmatprep.subr.mxu0 %v5260
    %5502 = vmatpush1.msra.mxu0 %v5259
    %5503 = vmatprep.subr.mxu0 %v5257
    %5504 = vmatpush1.msra.mxu0 %v5256
    %5505 = vmatprep.subr.mxu0 %v5254
    %5506 = vmatpush1.msra.mxu0 %v5253
    %5507 = vmatprep.subr.mxu0 %v5251
    %5508 = vmatpush1.msra.mxu0 %v5250
    %5509 = vmatprep.subr.mxu0 %v5248
    %5510 = vmatpush1.msra.mxu0 %v5247
    %5511 = vmatprep.subr.mxu0 %v5245
    %5512 = vmatpush1.msra.mxu0 %v5244
    %5513 = vmatprep.subr.mxu0 0.0
    %5514 = vmatpush2.msra.mxu0 0.0
    %5515 = vmatprep.subr.mxu0 0.0
    %5516 = vmatpush2.msra.mxu0 0.0
    %5517 = vmatprep.subr.mxu0 0.0
    %5518 = vmatpush2.msra.mxu0 0.0
    %5519 = vmatprep.subr.mxu0 0.0
    %5520 = vmatpush2.msra.mxu0 0.0
    %5521 = vmatprep.subr.mxu0 0.0
    %5522 = vmatpush2.msra.mxu0 0.0
    %5523 = vmatprep.subr.mxu0 0.0
    %5524 = vmatpush2.msra.mxu0 0.0
    %5525 = vmatprep.subr.mxu0 0.0
    %5526 = vmatpush2.msra.mxu0 0.0
    %5527 = vmatprep.subr.mxu0 0.0
    %5528 = vmatpush2.msra.mxu0 0.0
    %5529 = vmatprep.subr.mxu0 0.0
    %5530 = vmatpush2.msra.mxu0 0.0
    %5531 = vmatprep.subr.mxu0 0.0
    %5532 = vmatpush2.msra.mxu0 0.0
    %5533 = vmatprep.subr.mxu0 0.0
    %5534 = vmatpush2.msra.mxu0 0.0
    %5535 = vmatprep.subr.mxu0 0.0
    %5536 = vmatpush2.msra.mxu0 0.0
    %5537 = vmatprep.subr.mxu0 0.0
    %5538 = vmatpush2.msra.mxu0 0.0
    %5539 = vmatprep.subr.mxu0 0.0
    %5540 = vmatpush2.msra.mxu0 0.0
    %5541 = vmatprep.subr.mxu0 0.0
    %5542 = vmatpush2.msra.mxu0 0.0
    %5543 = vmatprep.subr.mxu0 0.0
    %5544 = vmatpush2.msra.mxu0 0.0
    %5545 = vmatprep.mubr.f32.mxu0 0.0
    %5546 = vmatmul.mubr.f32.gmra.mxu0 %v4613
    %v5547 = vpop.f32.mrf.mxu0
    %v5548 = vadd.f32 %v5407, %v5547
    %v5549 = vpop.f32.mrf.mxu0
    %v5550 = vadd.f32 %v5409, %v5549
    %5551 = vdwg.mxu0
    %5552 = vmatprep.subr.mxu0 0.0
    %5553 = vmatpush1.msra.mxu0 %v5291
    %5554 = vmatprep.subr.mxu0 0.0
    %5555 = vmatpush1.msra.mxu0 %v5288
    %5556 = vmatprep.subr.mxu0 0.0
    %5557 = vmatpush1.msra.mxu0 %v5285
    %5558 = vmatprep.subr.mxu0 0.0
    %5559 = vmatpush1.msra.mxu0 %v5282
    %5560 = vmatprep.subr.mxu0 0.0
    %5561 = vmatpush1.msra.mxu0 %v5279
    %5562 = vmatprep.subr.mxu0 0.0
    %5563 = vmatpush1.msra.mxu0 %v5276
    %5564 = vmatprep.subr.mxu0 0.0
    %5565 = vmatpush1.msra.mxu0 %v5273
    %5566 = vmatprep.subr.mxu0 0.0
    %5567 = vmatpush1.msra.mxu0 %v5270
    %5568 = vmatprep.subr.mxu0 0.0
    %5569 = vmatpush1.msra.mxu0 %v5267
    %5570 = vmatprep.subr.mxu0 0.0
    %5571 = vmatpush1.msra.mxu0 %v5264
    %5572 = vmatprep.subr.mxu0 0.0
    %5573 = vmatpush1.msra.mxu0 %v5261
    %5574 = vmatprep.subr.mxu0 0.0
    %5575 = vmatpush1.msra.mxu0 %v5258
    %5576 = vmatprep.subr.mxu0 0.0
    %5577 = vmatpush1.msra.mxu0 %v5255
    %5578 = vmatprep.subr.mxu0 0.0
    %5579 = vmatpush1.msra.mxu0 %v5252
    %5580 = vmatprep.subr.mxu0 0.0
    %5581 = vmatpush1.msra.mxu0 %v5249
    %5582 = vmatprep.subr.mxu0 0.0
    %5583 = vmatpush1.msra.mxu0 %v5246
    %5584 = vmatprep.subr.mxu0 0.0
    %5585 = vmatpush2.msra.mxu0 0.0
    %5586 = vmatprep.subr.mxu0 0.0
    %5587 = vmatpush2.msra.mxu0 0.0
    %5588 = vmatprep.subr.mxu0 0.0
    %5589 = vmatpush2.msra.mxu0 0.0
    %5590 = vmatprep.subr.mxu0 0.0
    %5591 = vmatpush2.msra.mxu0 0.0
    %5592 = vmatprep.subr.mxu0 0.0
    %5593 = vmatpush2.msra.mxu0 0.0
    %5594 = vmatprep.subr.mxu0 0.0
    %5595 = vmatpush2.msra.mxu0 0.0
    %5596 = vmatprep.subr.mxu0 0.0
    %5597 = vmatpush2.msra.mxu0 0.0
    %5598 = vmatprep.subr.mxu0 0.0
    %5599 = vmatpush2.msra.mxu0 0.0
    %5600 = vmatprep.subr.mxu0 0.0
    %5601 = vmatpush2.msra.mxu0 0.0
    %5602 = vmatprep.subr.mxu0 0.0
    %5603 = vmatpush2.msra.mxu0 0.0
    %5604 = vmatprep.subr.mxu0 0.0
    %5605 = vmatpush2.msra.mxu0 0.0
    %5606 = vmatprep.subr.mxu0 0.0
    %5607 = vmatpush2.msra.mxu0 0.0
    %5608 = vmatprep.subr.mxu0 0.0
    %5609 = vmatpush2.msra.mxu0 0.0
    %5610 = vmatprep.subr.mxu0 0.0
    %5611 = vmatpush2.msra.mxu0 0.0
    %5612 = vmatprep.subr.mxu0 0.0
    %5613 = vmatpush2.msra.mxu0 0.0
    %5614 = vmatprep.subr.mxu0 0.0
    %5615 = vmatpush2.msra.mxu0 0.0
    %5616 = vmatprep.mubr.f32.mxu0 0.0
    %5617 = vmatmul.mubr.f32.gmra.mxu0 %v4613
    %v5618 = vpop.f32.mrf.mxu0
    %v5619 = vadd.f32 %v5478, %v5618
    %v5620 = vpop.f32.mrf.mxu0
    %5621 = vdwg.mxu0
    %v5622 = vld [vmem:[#allocation4 + $0x490] sm:$0xff]
    %v5623 = vld [vmem:[#allocation4 + $0x4a0] sm:$0xff]
    %v5625 = vsel %vm1474, %v5623, 0
    %v5628 = vsel %vm1105, %v5550, 0
    %5630 = vmatprep.subr.mxu0 0.0
    %5631 = vmatpush1.msra.mxu0 0.0
    %5632 = vmatprep.subr.mxu0 0.0
    %5633 = vmatpush1.msra.mxu0 0.0
    %5634 = vmatprep.subr.mxu0 0.0
    %5635 = vmatpush1.msra.mxu0 0.0
    %5636 = vmatprep.subr.mxu0 0.0
    %5637 = vmatpush1.msra.mxu0 0.0
    %5638 = vmatprep.subr.mxu0 0.0
    %5639 = vmatpush1.msra.mxu0 0.0
    %5640 = vmatprep.subr.mxu0 0.0
    %5641 = vmatpush1.msra.mxu0 0.0
    %5642 = vmatprep.subr.mxu0 0.0
    %5643 = vmatpush1.msra.mxu0 0.0
    %5644 = vmatprep.subr.mxu0 0.0
    %5645 = vmatpush1.msra.mxu0 0.0
    %5646 = vmatprep.subr.mxu0 0.0
    %5647 = vmatpush1.msra.mxu0 0.0
    %5648 = vmatprep.subr.mxu0 0.0
    %5649 = vmatpush1.msra.mxu0 0.0
    %5650 = vmatprep.subr.mxu0 0.0
    %5651 = vmatpush1.msra.mxu0 0.0
    %5652 = vmatprep.subr.mxu0 0.0
    %5653 = vmatpush1.msra.mxu0 0.0
    %5654 = vmatprep.subr.mxu0 0.0
    %5655 = vmatpush1.msra.mxu0 0.0
    %5656 = vmatprep.subr.mxu0 0.0
    %5657 = vmatpush1.msra.mxu0 0.0
    %5658 = vmatprep.subr.mxu0 0.0
    %5659 = vmatpush1.msra.mxu0 0.0
    %5660 = vmatprep.subr.mxu0 0.0
    %5661 = vmatpush1.msra.mxu0 %v5628
    %5662 = vmatprep.subr.mxu0 0.0
    %5663 = vmatpush2.msra.mxu0 0.0
    %5664 = vmatprep.subr.mxu0 0.0
    %5665 = vmatpush2.msra.mxu0 0.0
    %5666 = vmatprep.subr.mxu0 0.0
    %5667 = vmatpush2.msra.mxu0 0.0
    %5668 = vmatprep.subr.mxu0 0.0
    %5669 = vmatpush2.msra.mxu0 0.0
    %5670 = vmatprep.subr.mxu0 0.0
    %5671 = vmatpush2.msra.mxu0 0.0
    %5672 = vmatprep.subr.mxu0 0.0
    %5673 = vmatpush2.msra.mxu0 0.0
    %5674 = vmatprep.subr.mxu0 0.0
    %5675 = vmatpush2.msra.mxu0 0.0
    %5676 = vmatprep.subr.mxu0 0.0
    %5677 = vmatpush2.msra.mxu0 0.0
    %5678 = vmatprep.subr.mxu0 0.0
    %5679 = vmatpush2.msra.mxu0 0.0
    %5680 = vmatprep.subr.mxu0 0.0
    %5681 = vmatpush2.msra.mxu0 0.0
    %5682 = vmatprep.subr.mxu0 0.0
    %5683 = vmatpush2.msra.mxu0 0.0
    %5684 = vmatprep.subr.mxu0 0.0
    %5685 = vmatpush2.msra.mxu0 0.0
    %5686 = vmatprep.subr.mxu0 0.0
    %5687 = vmatpush2.msra.mxu0 0.0
    %5688 = vmatprep.subr.mxu0 0.0
    %5689 = vmatpush2.msra.mxu0 0.0
    %5690 = vmatprep.subr.mxu0 0.0
    %5691 = vmatpush2.msra.mxu0 0.0
    %5692 = vmatprep.subr.mxu0 0.0
    %5693 = vmatpush2.msra.mxu0 0.0
    %5694 = vmatprep.mubr.f32.mxu0 0.0
    %5695 = vmatmul.mubr.f32.gmra.mxu0 %v5625
    %v5696 = vpop.f32.mrf.mxu0
    %v5697 = vadd.f32 0.0, %v5696
    %v5698 = vpop.f32.mrf.mxu0
    %5699 = vdwg.mxu0
    %v5701 = vsel %vm1474, %v5622, 0
    %v5704 = vsel %vm1105, %v5548, 0
    %5706 = vmatprep.subr.mxu0 0.0
    %5707 = vmatpush1.msra.mxu0 0.0
    %5708 = vmatprep.subr.mxu0 0.0
    %5709 = vmatpush1.msra.mxu0 0.0
    %5710 = vmatprep.subr.mxu0 0.0
    %5711 = vmatpush1.msra.mxu0 0.0
    %5712 = vmatprep.subr.mxu0 0.0
    %5713 = vmatpush1.msra.mxu0 0.0
    %5714 = vmatprep.subr.mxu0 0.0
    %5715 = vmatpush1.msra.mxu0 0.0
    %5716 = vmatprep.subr.mxu0 0.0
    %5717 = vmatpush1.msra.mxu0 0.0
    %5718 = vmatprep.subr.mxu0 0.0
    %5719 = vmatpush1.msra.mxu0 0.0
    %5720 = vmatprep.subr.mxu0 0.0
    %5721 = vmatpush1.msra.mxu0 0.0
    %5722 = vmatprep.subr.mxu0 0.0
    %5723 = vmatpush1.msra.mxu0 0.0
    %5724 = vmatprep.subr.mxu0 0.0
    %5725 = vmatpush1.msra.mxu0 0.0
    %5726 = vmatprep.subr.mxu0 0.0
    %5727 = vmatpush1.msra.mxu0 0.0
    %5728 = vmatprep.subr.mxu0 0.0
    %5729 = vmatpush1.msra.mxu0 0.0
    %5730 = vmatprep.subr.mxu0 0.0
    %5731 = vmatpush1.msra.mxu0 0.0
    %5732 = vmatprep.subr.mxu0 0.0
    %5733 = vmatpush1.msra.mxu0 0.0
    %5734 = vmatprep.subr.mxu0 0.0
    %5735 = vmatpush1.msra.mxu0 0.0
    %5736 = vmatprep.subr.mxu0 0.0
    %5737 = vmatpush1.msra.mxu0 %v5704
    %5738 = vmatprep.subr.mxu0 0.0
    %5739 = vmatpush2.msra.mxu0 0.0
    %5740 = vmatprep.subr.mxu0 0.0
    %5741 = vmatpush2.msra.mxu0 0.0
    %5742 = vmatprep.subr.mxu0 0.0
    %5743 = vmatpush2.msra.mxu0 0.0
    %5744 = vmatprep.subr.mxu0 0.0
    %5745 = vmatpush2.msra.mxu0 0.0
    %5746 = vmatprep.subr.mxu0 0.0
    %5747 = vmatpush2.msra.mxu0 0.0
    %5748 = vmatprep.subr.mxu0 0.0
    %5749 = vmatpush2.msra.mxu0 0.0
    %5750 = vmatprep.subr.mxu0 0.0
    %5751 = vmatpush2.msra.mxu0 0.0
    %5752 = vmatprep.subr.mxu0 0.0
    %5753 = vmatpush2.msra.mxu0 0.0
    %5754 = vmatprep.subr.mxu0 0.0
    %5755 = vmatpush2.msra.mxu0 0.0
    %5756 = vmatprep.subr.mxu0 0.0
    %5757 = vmatpush2.msra.mxu0 0.0
    %5758 = vmatprep.subr.mxu0 0.0
    %5759 = vmatpush2.msra.mxu0 0.0
    %5760 = vmatprep.subr.mxu0 0.0
    %5761 = vmatpush2.msra.mxu0 0.0
    %5762 = vmatprep.subr.mxu0 0.0
    %5763 = vmatpush2.msra.mxu0 0.0
    %5764 = vmatprep.subr.mxu0 0.0
    %5765 = vmatpush2.msra.mxu0 0.0
    %5766 = vmatprep.subr.mxu0 0.0
    %5767 = vmatpush2.msra.mxu0 0.0
    %5768 = vmatprep.subr.mxu0 0.0
    %5769 = vmatpush2.msra.mxu0 0.0
    %5770 = vmatprep.mubr.f32.mxu0 0.0
    %5771 = vmatmul.mubr.f32.gmra.mxu0 %v5701
    %v5772 = vpop.f32.mrf.mxu0
    %v5773 = vadd.f32 %v5697, %v5772
    %v5774 = vpop.f32.mrf.mxu0
    %5775 = vdwg.mxu0
    %v5776 = vld [vmem:[#allocation4 + $0x4b0] sm:$0xff]
    %v5778 = vsel %vm1474, %v5776, 0
    %v5781 = vsel %vm1105, %v5619, 0
    %5783 = vmatprep.subr.mxu0 0.0
    %5784 = vmatpush1.msra.mxu0 0.0
    %5785 = vmatprep.subr.mxu0 0.0
    %5786 = vmatpush1.msra.mxu0 0.0
    %5787 = vmatprep.subr.mxu0 0.0
    %5788 = vmatpush1.msra.mxu0 0.0
    %5789 = vmatprep.subr.mxu0 0.0
    %5790 = vmatpush1.msra.mxu0 0.0
    %5791 = vmatprep.subr.mxu0 0.0
    %5792 = vmatpush1.msra.mxu0 0.0
    %5793 = vmatprep.subr.mxu0 0.0
    %5794 = vmatpush1.msra.mxu0 0.0
    %5795 = vmatprep.subr.mxu0 0.0
    %5796 = vmatpush1.msra.mxu0 0.0
    %5797 = vmatprep.subr.mxu0 0.0
    %5798 = vmatpush1.msra.mxu0 0.0
    %5799 = vmatprep.subr.mxu0 0.0
    %5800 = vmatpush1.msra.mxu0 0.0
    %5801 = vmatprep.subr.mxu0 0.0
    %5802 = vmatpush1.msra.mxu0 0.0
    %5803 = vmatprep.subr.mxu0 0.0
    %5804 = vmatpush1.msra.mxu0 0.0
    %5805 = vmatprep.subr.mxu0 0.0
    %5806 = vmatpush1.msra.mxu0 0.0
    %5807 = vmatprep.subr.mxu0 0.0
    %5808 = vmatpush1.msra.mxu0 0.0
    %5809 = vmatprep.subr.mxu0 0.0
    %5810 = vmatpush1.msra.mxu0 0.0
    %5811 = vmatprep.subr.mxu0 0.0
    %5812 = vmatpush1.msra.mxu0 0.0
    %5813 = vmatprep.subr.mxu0 0.0
    %5814 = vmatpush1.msra.mxu0 %v5781
    %5815 = vmatprep.subr.mxu0 0.0
    %5816 = vmatpush2.msra.mxu0 0.0
    %5817 = vmatprep.subr.mxu0 0.0
    %5818 = vmatpush2.msra.mxu0 0.0
    %5819 = vmatprep.subr.mxu0 0.0
    %5820 = vmatpush2.msra.mxu0 0.0
    %5821 = vmatprep.subr.mxu0 0.0
    %5822 = vmatpush2.msra.mxu0 0.0
    %5823 = vmatprep.subr.mxu0 0.0
    %5824 = vmatpush2.msra.mxu0 0.0
    %5825 = vmatprep.subr.mxu0 0.0
    %5826 = vmatpush2.msra.mxu0 0.0
    %5827 = vmatprep.subr.mxu0 0.0
    %5828 = vmatpush2.msra.mxu0 0.0
    %5829 = vmatprep.subr.mxu0 0.0
    %5830 = vmatpush2.msra.mxu0 0.0
    %5831 = vmatprep.subr.mxu0 0.0
    %5832 = vmatpush2.msra.mxu0 0.0
    %5833 = vmatprep.subr.mxu0 0.0
    %5834 = vmatpush2.msra.mxu0 0.0
    %5835 = vmatprep.subr.mxu0 0.0
    %5836 = vmatpush2.msra.mxu0 0.0
    %5837 = vmatprep.subr.mxu0 0.0
    %5838 = vmatpush2.msra.mxu0 0.0
    %5839 = vmatprep.subr.mxu0 0.0
    %5840 = vmatpush2.msra.mxu0 0.0
    %5841 = vmatprep.subr.mxu0 0.0
    %5842 = vmatpush2.msra.mxu0 0.0
    %5843 = vmatprep.subr.mxu0 0.0
    %5844 = vmatpush2.msra.mxu0 0.0
    %5845 = vmatprep.subr.mxu0 0.0
    %5846 = vmatpush2.msra.mxu0 0.0
    %5847 = vmatprep.mubr.f32.mxu0 0.0
    %5848 = vmatmul.mubr.f32.gmra.mxu0 %v5778
    %v5849 = vpop.f32.mrf.mxu0
    %v5850 = vadd.f32 0.0, %v5849
    %v5851 = vpop.f32.mrf.mxu0
    %5852 = vdwg.mxu0
    %v5853 = vadd.f32 %v5773, %v5850
    %v5854 = vld [vmem:[#allocation4 + $0x180] sm:$0xff]
    %v5855 = vld [vmem:[#allocation4 + $0x188] sm:$0xff]
    %v5856 = vld [vmem:[#allocation4 + $0x190] sm:$0xff]
    %v5857 = vld [vmem:[#allocation4 + $0x198] sm:$0xff]
    %v5858 = vld [vmem:[#allocation4 + $0x1a0] sm:$0xff]
    %v5859 = vld [vmem:[#allocation4 + $0x1a8] sm:$0xff]
    %v5860 = vld [vmem:[#allocation4 + $0x1b0] sm:$0xff]
    %v5861 = vld [vmem:[#allocation4 + $0x1b8] sm:$0xff]
    %v5862 = vld [vmem:[#allocation4 + $0x1c0] sm:$0xff]
    %v5863 = vld [vmem:[#allocation4 + $0x1c8] sm:$0xff]
    %v5864 = vld [vmem:[#allocation4 + $0x1d0] sm:$0xff]
    %v5865 = vld [vmem:[#allocation4 + $0x1d8] sm:$0xff]
    %v5866 = vld [vmem:[#allocation4 + $0x1e0] sm:$0xff]
    %v5867 = vld [vmem:[#allocation4 + $0x1e8] sm:$0xff]
    %v5868 = vld [vmem:[#allocation4 + $0x1f0] sm:$0xff]
    %v5869 = vld [vmem:[#allocation4 + $0x1f8] sm:$0xff]
    %v5870 = vld [vmem:[#allocation4 + $0x380] sm:$0xff]
    %v5871 = vld [vmem:[#allocation4 + $0x388] sm:$0xff]
    %v5872 = vld [vmem:[#allocation4 + $0x390] sm:$0xff]
    %v5873 = vld [vmem:[#allocation4 + $0x398] sm:$0xff]
    %v5874 = vld [vmem:[#allocation4 + $0x3a0] sm:$0xff]
    %v5875 = vld [vmem:[#allocation4 + $0x3a8] sm:$0xff]
    %v5876 = vld [vmem:[#allocation4 + $0x3b0] sm:$0xff]
    %v5877 = vld [vmem:[#allocation4 + $0x3b8] sm:$0xff]
    %v5878 = vld [vmem:[#allocation4 + $0x3c0] sm:$0xff]
    %v5879 = vld [vmem:[#allocation4 + $0x3c8] sm:$0xff]
    %v5880 = vld [vmem:[#allocation4 + $0x3d0] sm:$0xff]
    %v5881 = vld [vmem:[#allocation4 + $0x3d8] sm:$0xff]
    %v5882 = vld [vmem:[#allocation4 + $0x3e0] sm:$0xff]
    %v5883 = vld [vmem:[#allocation4 + $0x3e8] sm:$0xff]
    %v5884 = vld [vmem:[#allocation4 + $0x3f0] sm:$0xff]
    %v5885 = vld [vmem:[#allocation4 + $0x3f8] sm:$0xff]
    %v5886 = vrot.slane %v5853, 4
    %v5887 = vadd.f32 %v5853, %v5886
    %v5888 = vrot.slane %v5887, 2
    %v5889 = vadd.f32 %v5887, %v5888
    %v5890 = vrot.slane %v5889, 1
    %v5891 = vadd.f32 %v5889, %v5890
    %v5892 = vmul.f32 %v5853, %v5853
    %v5893 = vrot.slane %v5892, 4
    %v5894 = vadd.f32 %v5892, %v5893
    %v5895 = vrot.slane %v5894, 2
    %v5896 = vadd.f32 %v5894, %v5895
    %v5897 = vrot.slane %v5896, 1
    %v5898 = vadd.f32 %v5896, %v5897
    %v5899 = vsel %vm497, %v5891, %v5898
    %5900 = vmatprep.subr.mxu0 0.0
    %5901 = vmatpush1.msra.mxu0 %v5869
    %5902 = vmatprep.subr.mxu0 0.0
    %5903 = vmatpush1.msra.mxu0 %v5868
    %5904 = vmatprep.subr.mxu0 0.0
    %5905 = vmatpush1.msra.mxu0 %v5867
    %5906 = vmatprep.subr.mxu0 0.0
    %5907 = vmatpush1.msra.mxu0 %v5866
    %5908 = vmatprep.subr.mxu0 0.0
    %5909 = vmatpush1.msra.mxu0 %v5865
    %5910 = vmatprep.subr.mxu0 0.0
    %5911 = vmatpush1.msra.mxu0 %v5864
    %5912 = vmatprep.subr.mxu0 0.0
    %5913 = vmatpush1.msra.mxu0 %v5863
    %5914 = vmatprep.subr.mxu0 0.0
    %5915 = vmatpush1.msra.mxu0 %v5862
    %5916 = vmatprep.subr.mxu0 0.0
    %5917 = vmatpush1.msra.mxu0 %v5861
    %5918 = vmatprep.subr.mxu0 0.0
    %5919 = vmatpush1.msra.mxu0 %v5860
    %5920 = vmatprep.subr.mxu0 0.0
    %5921 = vmatpush1.msra.mxu0 %v5859
    %5922 = vmatprep.subr.mxu0 0.0
    %5923 = vmatpush1.msra.mxu0 %v5858
    %5924 = vmatprep.subr.mxu0 0.0
    %5925 = vmatpush1.msra.mxu0 %v5857
    %5926 = vmatprep.subr.mxu0 0.0
    %5927 = vmatpush1.msra.mxu0 %v5856
    %5928 = vmatprep.subr.mxu0 0.0
    %5929 = vmatpush1.msra.mxu0 %v5855
    %5930 = vmatprep.subr.mxu0 0.0
    %5931 = vmatpush1.msra.mxu0 %v5854
    %5932 = vmatprep.subr.mxu0 0.0
    %5933 = vmatpush2.msra.mxu0 0.0
    %5934 = vmatprep.subr.mxu0 0.0
    %5935 = vmatpush2.msra.mxu0 0.0
    %5936 = vmatprep.subr.mxu0 0.0
    %5937 = vmatpush2.msra.mxu0 0.0
    %5938 = vmatprep.subr.mxu0 0.0
    %5939 = vmatpush2.msra.mxu0 0.0
    %5940 = vmatprep.subr.mxu0 0.0
    %5941 = vmatpush2.msra.mxu0 0.0
    %5942 = vmatprep.subr.mxu0 0.0
    %5943 = vmatpush2.msra.mxu0 0.0
    %5944 = vmatprep.subr.mxu0 0.0
    %5945 = vmatpush2.msra.mxu0 0.0
    %5946 = vmatprep.subr.mxu0 0.0
    %5947 = vmatpush2.msra.mxu0 0.0
    %5948 = vmatprep.subr.mxu0 0.0
    %5949 = vmatpush2.msra.mxu0 0.0
    %5950 = vmatprep.subr.mxu0 0.0
    %5951 = vmatpush2.msra.mxu0 0.0
    %5952 = vmatprep.subr.mxu0 0.0
    %5953 = vmatpush2.msra.mxu0 0.0
    %5954 = vmatprep.subr.mxu0 0.0
    %5955 = vmatpush2.msra.mxu0 0.0
    %5956 = vmatprep.subr.mxu0 0.0
    %5957 = vmatpush2.msra.mxu0 0.0
    %5958 = vmatprep.subr.mxu0 0.0
    %5959 = vmatpush2.msra.mxu0 0.0
    %5960 = vmatprep.subr.mxu0 0.0
    %5961 = vmatpush2.msra.mxu0 0.0
    %5962 = vmatprep.subr.mxu0 0.0
    %5963 = vmatpush2.msra.mxu0 0.0
    %5964 = vmatprep.mubr.f32.mxu0 0.0
    %5965 = vmatmul.mubr.f32.gmra.mxu0 %v5899
    %v5966 = vpop.f32.mrf.mxu0
    %v5967 = vadd.f32 0.0, %v5966
    %v5968 = vpop.f32.mrf.mxu0
    %5969 = vdwg.mxu0
    %v5970 = vmul.f32 %v5967, 0.015625
    %v5971 = vmul.f32 %v5970, %v5970
    %v5973 = vrot.slane %v5971, 7
    %v5975 = vsub.f32 %v5970, %v5973
    %v5976 = vmax.f32 %v5975, 0.0
    %v5977 = vadd.f32 %v5976, 1e-05
    %v5978 = vrsqrt.pop %v5977
    %v5979 = vsel %vm497, %v5970, %v5978
    %5980 = vmatprep.subr.mxu0 0.0
    %5981 = vmatpush1.msra.mxu0 %v5885
    %5982 = vmatprep.subr.mxu0 0.0
    %5983 = vmatpush1.msra.mxu0 %v5884
    %5984 = vmatprep.subr.mxu0 0.0
    %5985 = vmatpush1.msra.mxu0 %v5883
    %5986 = vmatprep.subr.mxu0 0.0
    %5987 = vmatpush1.msra.mxu0 %v5882
    %5988 = vmatprep.subr.mxu0 0.0
    %5989 = vmatpush1.msra.mxu0 %v5881
    %5990 = vmatprep.subr.mxu0 0.0
    %5991 = vmatpush1.msra.mxu0 %v5880
    %5992 = vmatprep.subr.mxu0 0.0
    %5993 = vmatpush1.msra.mxu0 %v5879
    %5994 = vmatprep.subr.mxu0 0.0
    %5995 = vmatpush1.msra.mxu0 %v5878
    %5996 = vmatprep.subr.mxu0 0.0
    %5997 = vmatpush1.msra.mxu0 %v5877
    %5998 = vmatprep.subr.mxu0 0.0
    %5999 = vmatpush1.msra.mxu0 %v5876
    %6000 = vmatprep.subr.mxu0 0.0
    %6001 = vmatpush1.msra.mxu0 %v5875
    %6002 = vmatprep.subr.mxu0 0.0
    %6003 = vmatpush1.msra.mxu0 %v5874
    %6004 = vmatprep.subr.mxu0 0.0
    %6005 = vmatpush1.msra.mxu0 %v5873
    %6006 = vmatprep.subr.mxu0 0.0
    %6007 = vmatpush1.msra.mxu0 %v5872
    %6008 = vmatprep.subr.mxu0 0.0
    %6009 = vmatpush1.msra.mxu0 %v5871
    %6010 = vmatprep.subr.mxu0 0.0
    %6011 = vmatpush1.msra.mxu0 %v5870
    %6012 = vmatprep.subr.mxu0 0.0
    %6013 = vmatpush2.msra.mxu0 0.0
    %6014 = vmatprep.subr.mxu0 0.0
    %6015 = vmatpush2.msra.mxu0 0.0
    %6016 = vmatprep.subr.mxu0 0.0
    %6017 = vmatpush2.msra.mxu0 0.0
    %6018 = vmatprep.subr.mxu0 0.0
    %6019 = vmatpush2.msra.mxu0 0.0
    %6020 = vmatprep.subr.mxu0 0.0
    %6021 = vmatpush2.msra.mxu0 0.0
    %6022 = vmatprep.subr.mxu0 0.0
    %6023 = vmatpush2.msra.mxu0 0.0
    %6024 = vmatprep.subr.mxu0 0.0
    %6025 = vmatpush2.msra.mxu0 0.0
    %6026 = vmatprep.subr.mxu0 0.0
    %6027 = vmatpush2.msra.mxu0 0.0
    %6028 = vmatprep.subr.mxu0 0.0
    %6029 = vmatpush2.msra.mxu0 0.0
    %6030 = vmatprep.subr.mxu0 0.0
    %6031 = vmatpush2.msra.mxu0 0.0
    %6032 = vmatprep.subr.mxu0 0.0
    %6033 = vmatpush2.msra.mxu0 0.0
    %6034 = vmatprep.subr.mxu0 0.0
    %6035 = vmatpush2.msra.mxu0 0.0
    %6036 = vmatprep.subr.mxu0 0.0
    %6037 = vmatpush2.msra.mxu0 0.0
    %6038 = vmatprep.subr.mxu0 0.0
    %6039 = vmatpush2.msra.mxu0 0.0
    %6040 = vmatprep.subr.mxu0 0.0
    %6041 = vmatpush2.msra.mxu0 0.0
    %6042 = vmatprep.subr.mxu0 0.0
    %6043 = vmatpush2.msra.mxu0 0.0
    %6044 = vmatprep.mubr.f32.mxu0 0.0
    %6045 = vmatmul.mubr.f32.gmra.mxu0 %v5979
    %v6046 = vpop.f32.mrf.mxu0
    %v6047 = vadd.f32 0.0, %v6046
    %v6048 = vpop.f32.mrf.mxu0
    %6049 = vdwg.mxu0
    %v6050 = vlaneseq
    %v6051 = vshrl.u32 %v6050, 7
    %v6052 = vsub.s32 0, %v6051
    %v6053 = vrot.slane %v6047, %v6052
    %v6054 = vsub.f32 %v5853, %v6053
    %v6055 = vlaneseq
    %v6056 = vshrl.u32 %v6055, 7
    %v6057 = vsub.s32 1, %v6056
    %v6058 = vrot.slane %v6047, %v6057
    %v6059 = vmul.f32 %v6054, %v6058
    %v6060 = vmax.f32 %v6059, 0.0
    %v6061 = vld [vmem:[#allocation2 + $0x6c0] sm:$0xff]
    %v6062 = vld [vmem:[#allocation2 + $0x6c8] sm:$0xff]
    %v6063 = vld [vmem:[#allocation2 + $0x6d0] sm:$0xff]
    %v6064 = vld [vmem:[#allocation2 + $0x6d8] sm:$0xff]
    %v6065 = vld [vmem:[#allocation2 + $0x6e0] sm:$0xff]
    %v6066 = vld [vmem:[#allocation2 + $0x6e8] sm:$0xff]
    %v6067 = vld [vmem:[#allocation2 + $0x6f0] sm:$0xff]
    %v6068 = vld [vmem:[#allocation2 + $0x6f8] sm:$0xff]
    %v6069 = vld [vmem:[#allocation2 + $0x700] sm:$0xff]
    %v6070 = vld [vmem:[#allocation2 + $0x708] sm:$0xff]
    %v6071 = vld [vmem:[#allocation2 + $0x710] sm:$0xff]
    %v6072 = vld [vmem:[#allocation2 + $0x718] sm:$0xff]
    %v6073 = vld [vmem:[#allocation2 + $0x720] sm:$0xff]
    %v6074 = vld [vmem:[#allocation2 + $0x728] sm:$0xff]
    %v6075 = vld [vmem:[#allocation2 + $0x730] sm:$0xff]
    %v6076 = vld [vmem:[#allocation2 + $0x738] sm:$0xff]
    %v6077 = vld [vmem:[#allocation2 + $0x740] sm:$0xff]
    %v6078 = vld [vmem:[#allocation2 + $0x748] sm:$0xff]
    %v6079 = vld [vmem:[#allocation2 + $0x750] sm:$0xff]
    %v6080 = vld [vmem:[#allocation2 + $0x758] sm:$0xff]
    %v6081 = vld [vmem:[#allocation2 + $0x760] sm:$0xff]
    %v6082 = vld [vmem:[#allocation2 + $0x768] sm:$0xff]
    %v6083 = vld [vmem:[#allocation2 + $0x770] sm:$0xff]
    %v6084 = vld [vmem:[#allocation2 + $0x778] sm:$0xff]
    %v6085 = vld [vmem:[#allocation2 + $0x780] sm:$0xff]
    %v6086 = vld [vmem:[#allocation2 + $0x788] sm:$0xff]
    %v6087 = vld [vmem:[#allocation2 + $0x790] sm:$0xff]
    %v6088 = vld [vmem:[#allocation2 + $0x798] sm:$0xff]
    %v6089 = vld [vmem:[#allocation2 + $0x7a0] sm:$0xff]
    %v6090 = vld [vmem:[#allocation2 + $0x7a8] sm:$0xff]
    %v6091 = vld [vmem:[#allocation2 + $0x7b0] sm:$0xff]
    %v6092 = vld [vmem:[#allocation2 + $0x7b8] sm:$0xff]
    %v6093 = vld [vmem:[#allocation2 + $0x7c0] sm:$0xff]
    %v6094 = vld [vmem:[#allocation2 + $0x7c8] sm:$0xff]
    %v6095 = vld [vmem:[#allocation2 + $0x7d0] sm:$0xff]
    %v6096 = vld [vmem:[#allocation2 + $0x7d8] sm:$0xff]
    %v6097 = vld [vmem:[#allocation2 + $0x7e0] sm:$0xff]
    %v6098 = vld [vmem:[#allocation2 + $0x7e8] sm:$0xff]
    %v6099 = vld [vmem:[#allocation2 + $0x7f0] sm:$0xff]
    %v6100 = vld [vmem:[#allocation2 + $0x7f8] sm:$0xff]
    %v6101 = vld [vmem:[#allocation2 + $0x800] sm:$0xff]
    %v6102 = vld [vmem:[#allocation2 + $0x808] sm:$0xff]
    %v6103 = vld [vmem:[#allocation2 + $0x810] sm:$0xff]
    %v6104 = vld [vmem:[#allocation2 + $0x818] sm:$0xff]
    %v6105 = vld [vmem:[#allocation2 + $0x820] sm:$0xff]
    %v6106 = vld [vmem:[#allocation2 + $0x828] sm:$0xff]
    %v6107 = vld [vmem:[#allocation2 + $0x830] sm:$0xff]
    %v6108 = vld [vmem:[#allocation2 + $0x838] sm:$0xff]
    %v6109 = vld [vmem:[#allocation2 + $0x840] sm:$0xff]
    %v6110 = vld [vmem:[#allocation2 + $0x848] sm:$0xff]
    %v6111 = vld [vmem:[#allocation2 + $0x850] sm:$0xff]
    %v6112 = vld [vmem:[#allocation2 + $0x858] sm:$0xff]
    %v6113 = vld [vmem:[#allocation2 + $0x860] sm:$0xff]
    %v6114 = vld [vmem:[#allocation2 + $0x868] sm:$0xff]
    %v6115 = vld [vmem:[#allocation2 + $0x870] sm:$0xff]
    %v6116 = vld [vmem:[#allocation2 + $0x878] sm:$0xff]
    %v6117 = vld [vmem:[#allocation2 + $0x880] sm:$0xff]
    %v6118 = vld [vmem:[#allocation2 + $0x888] sm:$0xff]
    %v6119 = vld [vmem:[#allocation2 + $0x890] sm:$0xff]
    %v6120 = vld [vmem:[#allocation2 + $0x898] sm:$0xff]
    %v6121 = vld [vmem:[#allocation2 + $0x8a0] sm:$0xff]
    %v6122 = vld [vmem:[#allocation2 + $0x8a8] sm:$0xff]
    %v6123 = vld [vmem:[#allocation2 + $0x8b0] sm:$0xff]
    %v6124 = vld [vmem:[#allocation2 + $0x8b8] sm:$0xff]
    %v6125 = vld [vmem:[#allocation2 + $0x8c0] sm:$0xff]
    %v6126 = vld [vmem:[#allocation2 + $0x8c8] sm:$0xff]
    %v6127 = vld [vmem:[#allocation2 + $0x8d0] sm:$0xff]
    %v6128 = vld [vmem:[#allocation2 + $0x8d8] sm:$0xff]
    %v6129 = vld [vmem:[#allocation2 + $0x8e0] sm:$0xff]
    %v6130 = vld [vmem:[#allocation2 + $0x8e8] sm:$0xff]
    %v6131 = vld [vmem:[#allocation2 + $0x8f0] sm:$0xff]
    %v6132 = vld [vmem:[#allocation2 + $0x8f8] sm:$0xff]
    %v6133 = vld [vmem:[#allocation2 + $0x900] sm:$0xff]
    %v6134 = vld [vmem:[#allocation2 + $0x908] sm:$0xff]
    %v6135 = vld [vmem:[#allocation2 + $0x910] sm:$0xff]
    %v6136 = vld [vmem:[#allocation2 + $0x918] sm:$0xff]
    %v6137 = vld [vmem:[#allocation2 + $0x920] sm:$0xff]
    %v6138 = vld [vmem:[#allocation2 + $0x928] sm:$0xff]
    %v6139 = vld [vmem:[#allocation2 + $0x930] sm:$0xff]
    %v6140 = vld [vmem:[#allocation2 + $0x938] sm:$0xff]
    %v6141 = vld [vmem:[#allocation2 + $0x940] sm:$0xff]
    %v6142 = vld [vmem:[#allocation2 + $0x948] sm:$0xff]
    %v6143 = vld [vmem:[#allocation2 + $0x950] sm:$0xff]
    %v6144 = vld [vmem:[#allocation2 + $0x958] sm:$0xff]
    %v6145 = vld [vmem:[#allocation2 + $0x960] sm:$0xff]
    %v6146 = vld [vmem:[#allocation2 + $0x968] sm:$0xff]
    %v6147 = vld [vmem:[#allocation2 + $0x970] sm:$0xff]
    %v6148 = vld [vmem:[#allocation2 + $0x978] sm:$0xff]
    %v6149 = vld [vmem:[#allocation2 + $0x980] sm:$0xff]
    %v6150 = vld [vmem:[#allocation2 + $0x988] sm:$0xff]
    %v6151 = vld [vmem:[#allocation2 + $0x990] sm:$0xff]
    %v6152 = vld [vmem:[#allocation2 + $0x998] sm:$0xff]
    %v6153 = vld [vmem:[#allocation2 + $0x9a0] sm:$0xff]
    %v6154 = vld [vmem:[#allocation2 + $0x9a8] sm:$0xff]
    %v6155 = vld [vmem:[#allocation2 + $0x9b0] sm:$0xff]
    %v6156 = vld [vmem:[#allocation2 + $0x9b8] sm:$0xff]
    %6157 = vmatprep.subr.mxu0 %v6155
    %6158 = vmatpush1.msra.mxu0 %v6154
    %6159 = vmatprep.subr.mxu0 %v6152
    %6160 = vmatpush1.msra.mxu0 %v6151
    %6161 = vmatprep.subr.mxu0 %v6149
    %6162 = vmatpush1.msra.mxu0 %v6148
    %6163 = vmatprep.subr.mxu0 %v6146
    %6164 = vmatpush1.msra.mxu0 %v6145
    %6165 = vmatprep.subr.mxu0 %v6143
    %6166 = vmatpush1.msra.mxu0 %v6142
    %6167 = vmatprep.subr.mxu0 %v6140
    %6168 = vmatpush1.msra.mxu0 %v6139
    %6169 = vmatprep.subr.mxu0 %v6137
    %6170 = vmatpush1.msra.mxu0 %v6136
    %6171 = vmatprep.subr.mxu0 %v6134
    %6172 = vmatpush1.msra.mxu0 %v6133
    %6173 = vmatprep.subr.mxu0 %v6131
    %6174 = vmatpush1.msra.mxu0 %v6130
    %6175 = vmatprep.subr.mxu0 %v6128
    %6176 = vmatpush1.msra.mxu0 %v6127
    %6177 = vmatprep.subr.mxu0 %v6125
    %6178 = vmatpush1.msra.mxu0 %v6124
    %6179 = vmatprep.subr.mxu0 %v6122
    %6180 = vmatpush1.msra.mxu0 %v6121
    %6181 = vmatprep.subr.mxu0 %v6119
    %6182 = vmatpush1.msra.mxu0 %v6118
    %6183 = vmatprep.subr.mxu0 %v6116
    %6184 = vmatpush1.msra.mxu0 %v6115
    %6185 = vmatprep.subr.mxu0 %v6113
    %6186 = vmatpush1.msra.mxu0 %v6112
    %6187 = vmatprep.subr.mxu0 %v6110
    %6188 = vmatpush1.msra.mxu0 %v6109
    %6189 = vmatprep.subr.mxu0 0.0
    %6190 = vmatpush2.msra.mxu0 0.0
    %6191 = vmatprep.subr.mxu0 0.0
    %6192 = vmatpush2.msra.mxu0 0.0
    %6193 = vmatprep.subr.mxu0 0.0
    %6194 = vmatpush2.msra.mxu0 0.0
    %6195 = vmatprep.subr.mxu0 0.0
    %6196 = vmatpush2.msra.mxu0 0.0
    %6197 = vmatprep.subr.mxu0 0.0
    %6198 = vmatpush2.msra.mxu0 0.0
    %6199 = vmatprep.subr.mxu0 0.0
    %6200 = vmatpush2.msra.mxu0 0.0
    %6201 = vmatprep.subr.mxu0 0.0
    %6202 = vmatpush2.msra.mxu0 0.0
    %6203 = vmatprep.subr.mxu0 0.0
    %6204 = vmatpush2.msra.mxu0 0.0
    %6205 = vmatprep.subr.mxu0 0.0
    %6206 = vmatpush2.msra.mxu0 0.0
    %6207 = vmatprep.subr.mxu0 0.0
    %6208 = vmatpush2.msra.mxu0 0.0
    %6209 = vmatprep.subr.mxu0 0.0
    %6210 = vmatpush2.msra.mxu0 0.0
    %6211 = vmatprep.subr.mxu0 0.0
    %6212 = vmatpush2.msra.mxu0 0.0
    %6213 = vmatprep.subr.mxu0 0.0
    %6214 = vmatpush2.msra.mxu0 0.0
    %6215 = vmatprep.subr.mxu0 0.0
    %6216 = vmatpush2.msra.mxu0 0.0
    %6217 = vmatprep.subr.mxu0 0.0
    %6218 = vmatpush2.msra.mxu0 0.0
    %6219 = vmatprep.subr.mxu0 0.0
    %6220 = vmatpush2.msra.mxu0 0.0
    %6221 = vmatprep.mubr.f32.mxu0 0.0
    %6222 = vmatmul.mubr.f32.gmra.mxu0 %v6060
    %v6223 = vpop.f32.mrf.mxu0
    %v6224 = vadd.f32 0.0, %v6223
    %v6225 = vpop.f32.mrf.mxu0
    %v6226 = vadd.f32 0.0, %v6225
    %6227 = vdwg.mxu0
    %6228 = vmatprep.subr.mxu0 0.0
    %6229 = vmatpush1.msra.mxu0 %v6156
    %6230 = vmatprep.subr.mxu0 0.0
    %6231 = vmatpush1.msra.mxu0 %v6153
    %6232 = vmatprep.subr.mxu0 0.0
    %6233 = vmatpush1.msra.mxu0 %v6150
    %6234 = vmatprep.subr.mxu0 0.0
    %6235 = vmatpush1.msra.mxu0 %v6147
    %6236 = vmatprep.subr.mxu0 0.0
    %6237 = vmatpush1.msra.mxu0 %v6144
    %6238 = vmatprep.subr.mxu0 0.0
    %6239 = vmatpush1.msra.mxu0 %v6141
    %6240 = vmatprep.subr.mxu0 0.0
    %6241 = vmatpush1.msra.mxu0 %v6138
    %6242 = vmatprep.subr.mxu0 0.0
    %6243 = vmatpush1.msra.mxu0 %v6135
    %6244 = vmatprep.subr.mxu0 0.0
    %6245 = vmatpush1.msra.mxu0 %v6132
    %6246 = vmatprep.subr.mxu0 0.0
    %6247 = vmatpush1.msra.mxu0 %v6129
    %6248 = vmatprep.subr.mxu0 0.0
    %6249 = vmatpush1.msra.mxu0 %v6126
    %6250 = vmatprep.subr.mxu0 0.0
    %6251 = vmatpush1.msra.mxu0 %v6123
    %6252 = vmatprep.subr.mxu0 0.0
    %6253 = vmatpush1.msra.mxu0 %v6120
    %6254 = vmatprep.subr.mxu0 0.0
    %6255 = vmatpush1.msra.mxu0 %v6117
    %6256 = vmatprep.subr.mxu0 0.0
    %6257 = vmatpush1.msra.mxu0 %v6114
    %6258 = vmatprep.subr.mxu0 0.0
    %6259 = vmatpush1.msra.mxu0 %v6111
    %6260 = vmatprep.subr.mxu0 0.0
    %6261 = vmatpush2.msra.mxu0 0.0
    %6262 = vmatprep.subr.mxu0 0.0
    %6263 = vmatpush2.msra.mxu0 0.0
    %6264 = vmatprep.subr.mxu0 0.0
    %6265 = vmatpush2.msra.mxu0 0.0
    %6266 = vmatprep.subr.mxu0 0.0
    %6267 = vmatpush2.msra.mxu0 0.0
    %6268 = vmatprep.subr.mxu0 0.0
    %6269 = vmatpush2.msra.mxu0 0.0
    %6270 = vmatprep.subr.mxu0 0.0
    %6271 = vmatpush2.msra.mxu0 0.0
    %6272 = vmatprep.subr.mxu0 0.0
    %6273 = vmatpush2.msra.mxu0 0.0
    %6274 = vmatprep.subr.mxu0 0.0
    %6275 = vmatpush2.msra.mxu0 0.0
    %6276 = vmatprep.subr.mxu0 0.0
    %6277 = vmatpush2.msra.mxu0 0.0
    %6278 = vmatprep.subr.mxu0 0.0
    %6279 = vmatpush2.msra.mxu0 0.0
    %6280 = vmatprep.subr.mxu0 0.0
    %6281 = vmatpush2.msra.mxu0 0.0
    %6282 = vmatprep.subr.mxu0 0.0
    %6283 = vmatpush2.msra.mxu0 0.0
    %6284 = vmatprep.subr.mxu0 0.0
    %6285 = vmatpush2.msra.mxu0 0.0
    %6286 = vmatprep.subr.mxu0 0.0
    %6287 = vmatpush2.msra.mxu0 0.0
    %6288 = vmatprep.subr.mxu0 0.0
    %6289 = vmatpush2.msra.mxu0 0.0
    %6290 = vmatprep.subr.mxu0 0.0
    %6291 = vmatpush2.msra.mxu0 0.0
    %6292 = vmatprep.mubr.f32.mxu0 0.0
    %6293 = vmatmul.mubr.f32.gmra.mxu0 %v6060
    %v6294 = vpop.f32.mrf.mxu0
    %v6295 = vadd.f32 0.0, %v6294
    %v6296 = vpop.f32.mrf.mxu0
    %6297 = vdwg.mxu0
    %6298 = vmatprep.subr.mxu0 %v6107
    %6299 = vmatpush1.msra.mxu0 %v6106
    %6300 = vmatprep.subr.mxu0 %v6104
    %6301 = vmatpush1.msra.mxu0 %v6103
    %6302 = vmatprep.subr.mxu0 %v6101
    %6303 = vmatpush1.msra.mxu0 %v6100
    %6304 = vmatprep.subr.mxu0 %v6098
    %6305 = vmatpush1.msra.mxu0 %v6097
    %6306 = vmatprep.subr.mxu0 %v6095
    %6307 = vmatpush1.msra.mxu0 %v6094
    %6308 = vmatprep.subr.mxu0 %v6092
    %6309 = vmatpush1.msra.mxu0 %v6091
    %6310 = vmatprep.subr.mxu0 %v6089
    %6311 = vmatpush1.msra.mxu0 %v6088
    %6312 = vmatprep.subr.mxu0 %v6086
    %6313 = vmatpush1.msra.mxu0 %v6085
    %6314 = vmatprep.subr.mxu0 %v6083
    %6315 = vmatpush1.msra.mxu0 %v6082
    %6316 = vmatprep.subr.mxu0 %v6080
    %6317 = vmatpush1.msra.mxu0 %v6079
    %6318 = vmatprep.subr.mxu0 %v6077
    %6319 = vmatpush1.msra.mxu0 %v6076
    %6320 = vmatprep.subr.mxu0 %v6074
    %6321 = vmatpush1.msra.mxu0 %v6073
    %6322 = vmatprep.subr.mxu0 %v6071
    %6323 = vmatpush1.msra.mxu0 %v6070
    %6324 = vmatprep.subr.mxu0 %v6068
    %6325 = vmatpush1.msra.mxu0 %v6067
    %6326 = vmatprep.subr.mxu0 %v6065
    %6327 = vmatpush1.msra.mxu0 %v6064
    %6328 = vmatprep.subr.mxu0 %v6062
    %6329 = vmatpush1.msra.mxu0 %v6061
    %6330 = vmatprep.subr.mxu0 0.0
    %6331 = vmatpush2.msra.mxu0 0.0
    %6332 = vmatprep.subr.mxu0 0.0
    %6333 = vmatpush2.msra.mxu0 0.0
    %6334 = vmatprep.subr.mxu0 0.0
    %6335 = vmatpush2.msra.mxu0 0.0
    %6336 = vmatprep.subr.mxu0 0.0
    %6337 = vmatpush2.msra.mxu0 0.0
    %6338 = vmatprep.subr.mxu0 0.0
    %6339 = vmatpush2.msra.mxu0 0.0
    %6340 = vmatprep.subr.mxu0 0.0
    %6341 = vmatpush2.msra.mxu0 0.0
    %6342 = vmatprep.subr.mxu0 0.0
    %6343 = vmatpush2.msra.mxu0 0.0
    %6344 = vmatprep.subr.mxu0 0.0
    %6345 = vmatpush2.msra.mxu0 0.0
    %6346 = vmatprep.subr.mxu0 0.0
    %6347 = vmatpush2.msra.mxu0 0.0
    %6348 = vmatprep.subr.mxu0 0.0
    %6349 = vmatpush2.msra.mxu0 0.0
    %6350 = vmatprep.subr.mxu0 0.0
    %6351 = vmatpush2.msra.mxu0 0.0
    %6352 = vmatprep.subr.mxu0 0.0
    %6353 = vmatpush2.msra.mxu0 0.0
    %6354 = vmatprep.subr.mxu0 0.0
    %6355 = vmatpush2.msra.mxu0 0.0
    %6356 = vmatprep.subr.mxu0 0.0
    %6357 = vmatpush2.msra.mxu0 0.0
    %6358 = vmatprep.subr.mxu0 0.0
    %6359 = vmatpush2.msra.mxu0 0.0
    %6360 = vmatprep.subr.mxu0 0.0
    %6361 = vmatpush2.msra.mxu0 0.0
    %6362 = vmatprep.mubr.f32.mxu0 0.0
    %6363 = vmatmul.mubr.f32.gmra.mxu0 %v3992
    %v6364 = vpop.f32.mrf.mxu0
    %v6365 = vadd.f32 %v6224, %v6364
    %v6366 = vpop.f32.mrf.mxu0
    %v6367 = vadd.f32 %v6226, %v6366
    %6368 = vdwg.mxu0
    %6369 = vmatprep.subr.mxu0 0.0
    %6370 = vmatpush1.msra.mxu0 %v6108
    %6371 = vmatprep.subr.mxu0 0.0
    %6372 = vmatpush1.msra.mxu0 %v6105
    %6373 = vmatprep.subr.mxu0 0.0
    %6374 = vmatpush1.msra.mxu0 %v6102
    %6375 = vmatprep.subr.mxu0 0.0
    %6376 = vmatpush1.msra.mxu0 %v6099
    %6377 = vmatprep.subr.mxu0 0.0
    %6378 = vmatpush1.msra.mxu0 %v6096
    %6379 = vmatprep.subr.mxu0 0.0
    %6380 = vmatpush1.msra.mxu0 %v6093
    %6381 = vmatprep.subr.mxu0 0.0
    %6382 = vmatpush1.msra.mxu0 %v6090
    %6383 = vmatprep.subr.mxu0 0.0
    %6384 = vmatpush1.msra.mxu0 %v6087
    %6385 = vmatprep.subr.mxu0 0.0
    %6386 = vmatpush1.msra.mxu0 %v6084
    %6387 = vmatprep.subr.mxu0 0.0
    %6388 = vmatpush1.msra.mxu0 %v6081
    %6389 = vmatprep.subr.mxu0 0.0
    %6390 = vmatpush1.msra.mxu0 %v6078
    %6391 = vmatprep.subr.mxu0 0.0
    %6392 = vmatpush1.msra.mxu0 %v6075
    %6393 = vmatprep.subr.mxu0 0.0
    %6394 = vmatpush1.msra.mxu0 %v6072
    %6395 = vmatprep.subr.mxu0 0.0
    %6396 = vmatpush1.msra.mxu0 %v6069
    %6397 = vmatprep.subr.mxu0 0.0
    %6398 = vmatpush1.msra.mxu0 %v6066
    %6399 = vmatprep.subr.mxu0 0.0
    %6400 = vmatpush1.msra.mxu0 %v6063
    %6401 = vmatprep.subr.mxu0 0.0
    %6402 = vmatpush2.msra.mxu0 0.0
    %6403 = vmatprep.subr.mxu0 0.0
    %6404 = vmatpush2.msra.mxu0 0.0
    %6405 = vmatprep.subr.mxu0 0.0
    %6406 = vmatpush2.msra.mxu0 0.0
    %6407 = vmatprep.subr.mxu0 0.0
    %6408 = vmatpush2.msra.mxu0 0.0
    %6409 = vmatprep.subr.mxu0 0.0
    %6410 = vmatpush2.msra.mxu0 0.0
    %6411 = vmatprep.subr.mxu0 0.0
    %6412 = vmatpush2.msra.mxu0 0.0
    %6413 = vmatprep.subr.mxu0 0.0
    %6414 = vmatpush2.msra.mxu0 0.0
    %6415 = vmatprep.subr.mxu0 0.0
    %6416 = vmatpush2.msra.mxu0 0.0
    %6417 = vmatprep.subr.mxu0 0.0
    %6418 = vmatpush2.msra.mxu0 0.0
    %6419 = vmatprep.subr.mxu0 0.0
    %6420 = vmatpush2.msra.mxu0 0.0
    %6421 = vmatprep.subr.mxu0 0.0
    %6422 = vmatpush2.msra.mxu0 0.0
    %6423 = vmatprep.subr.mxu0 0.0
    %6424 = vmatpush2.msra.mxu0 0.0
    %6425 = vmatprep.subr.mxu0 0.0
    %6426 = vmatpush2.msra.mxu0 0.0
    %6427 = vmatprep.subr.mxu0 0.0
    %6428 = vmatpush2.msra.mxu0 0.0
    %6429 = vmatprep.subr.mxu0 0.0
    %6430 = vmatpush2.msra.mxu0 0.0
    %6431 = vmatprep.subr.mxu0 0.0
    %6432 = vmatpush2.msra.mxu0 0.0
    %6433 = vmatprep.mubr.f32.mxu0 0.0
    %6434 = vmatmul.mubr.f32.gmra.mxu0 %v3992
    %v6435 = vpop.f32.mrf.mxu0
    %v6436 = vadd.f32 %v6295, %v6435
    %v6437 = vpop.f32.mrf.mxu0
    %6438 = vdwg.mxu0
    %v6439 = vld [vmem:[#allocation4 + $0x4c0] sm:$0xff]
    %v6440 = vld [vmem:[#allocation4 + $0x4c8] sm:$0xff]
    %v6441 = vld [vmem:[#allocation4 + $0x4d0] sm:$0xff]
    %v6442 = vld [vmem:[#allocation4 + $0x4d8] sm:$0xff]
    %v6444 = vsel %vm851, %v6441, 0
    %v6447 = vsel %vm851, %v6442, 0
    %6449 = vmatprep.subr.mxu0 0.0
    %6450 = vmatpush1.msra.mxu0 0.0
    %6451 = vmatprep.subr.mxu0 0.0
    %6452 = vmatpush1.msra.mxu0 0.0
    %6453 = vmatprep.subr.mxu0 0.0
    %6454 = vmatpush1.msra.mxu0 0.0
    %6455 = vmatprep.subr.mxu0 0.0
    %6456 = vmatpush1.msra.mxu0 0.0
    %6457 = vmatprep.subr.mxu0 0.0
    %6458 = vmatpush1.msra.mxu0 0.0
    %6459 = vmatprep.subr.mxu0 0.0
    %6460 = vmatpush1.msra.mxu0 0.0
    %6461 = vmatprep.subr.mxu0 0.0
    %6462 = vmatpush1.msra.mxu0 0.0
    %6463 = vmatprep.subr.mxu0 0.0
    %6464 = vmatpush1.msra.mxu0 0.0
    %6465 = vmatprep.subr.mxu0 0.0
    %6466 = vmatpush1.msra.mxu0 0.0
    %6467 = vmatprep.subr.mxu0 0.0
    %6468 = vmatpush1.msra.mxu0 0.0
    %6469 = vmatprep.subr.mxu0 0.0
    %6470 = vmatpush1.msra.mxu0 0.0
    %6471 = vmatprep.subr.mxu0 0.0
    %6472 = vmatpush1.msra.mxu0 0.0
    %6473 = vmatprep.subr.mxu0 0.0
    %6474 = vmatpush1.msra.mxu0 0.0
    %6475 = vmatprep.subr.mxu0 0.0
    %6476 = vmatpush1.msra.mxu0 0.0
    %6477 = vmatprep.subr.mxu0 0.0
    %6478 = vmatpush1.msra.mxu0 0.0
    %6479 = vmatprep.subr.mxu0 0.0
    %6480 = vmatpush1.msra.mxu0 %v6367
    %6481 = vmatprep.subr.mxu0 0.0
    %6482 = vmatpush2.msra.mxu0 0.0
    %6483 = vmatprep.subr.mxu0 0.0
    %6484 = vmatpush2.msra.mxu0 0.0
    %6485 = vmatprep.subr.mxu0 0.0
    %6486 = vmatpush2.msra.mxu0 0.0
    %6487 = vmatprep.subr.mxu0 0.0
    %6488 = vmatpush2.msra.mxu0 0.0
    %6489 = vmatprep.subr.mxu0 0.0
    %6490 = vmatpush2.msra.mxu0 0.0
    %6491 = vmatprep.subr.mxu0 0.0
    %6492 = vmatpush2.msra.mxu0 0.0
    %6493 = vmatprep.subr.mxu0 0.0
    %6494 = vmatpush2.msra.mxu0 0.0
    %6495 = vmatprep.subr.mxu0 0.0
    %6496 = vmatpush2.msra.mxu0 0.0
    %6497 = vmatprep.subr.mxu0 0.0
    %6498 = vmatpush2.msra.mxu0 0.0
    %6499 = vmatprep.subr.mxu0 0.0
    %6500 = vmatpush2.msra.mxu0 0.0
    %6501 = vmatprep.subr.mxu0 0.0
    %6502 = vmatpush2.msra.mxu0 0.0
    %6503 = vmatprep.subr.mxu0 0.0
    %6504 = vmatpush2.msra.mxu0 0.0
    %6505 = vmatprep.subr.mxu0 0.0
    %6506 = vmatpush2.msra.mxu0 0.0
    %6507 = vmatprep.subr.mxu0 0.0
    %6508 = vmatpush2.msra.mxu0 0.0
    %6509 = vmatprep.subr.mxu0 0.0
    %6510 = vmatpush2.msra.mxu0 0.0
    %6511 = vmatprep.subr.mxu0 0.0
    %6512 = vmatpush2.msra.mxu0 0.0
    %6513 = vmatprep.mubr.f32.mxu0 0.0
    %6514 = vmatmul.mubr.f32.gmra.mxu0 %v6444
    %v6515 = vpop.f32.mrf.mxu0
    %v6516 = vadd.f32 0.0, %v6515
    %v6517 = vpop.f32.mrf.mxu0
    %6518 = vmatprep.mubr.f32.mxu0 0.0
    %6519 = vmatmul.mubr.f32.gmra.mxu0 %v6447
    %v6520 = vpop.f32.mrf.mxu0
    %v6521 = vadd.f32 0.0, %v6520
    %v6522 = vpop.f32.mrf.mxu0
    %6523 = vdwg.mxu0
    %v6525 = vsel %vm851, %v6439, 0
    %v6528 = vsel %vm851, %v6440, 0
    %6530 = vmatprep.subr.mxu0 0.0
    %6531 = vmatpush1.msra.mxu0 0.0
    %6532 = vmatprep.subr.mxu0 0.0
    %6533 = vmatpush1.msra.mxu0 0.0
    %6534 = vmatprep.subr.mxu0 0.0
    %6535 = vmatpush1.msra.mxu0 0.0
    %6536 = vmatprep.subr.mxu0 0.0
    %6537 = vmatpush1.msra.mxu0 0.0
    %6538 = vmatprep.subr.mxu0 0.0
    %6539 = vmatpush1.msra.mxu0 0.0
    %6540 = vmatprep.subr.mxu0 0.0
    %6541 = vmatpush1.msra.mxu0 0.0
    %6542 = vmatprep.subr.mxu0 0.0
    %6543 = vmatpush1.msra.mxu0 0.0
    %6544 = vmatprep.subr.mxu0 0.0
    %6545 = vmatpush1.msra.mxu0 0.0
    %6546 = vmatprep.subr.mxu0 0.0
    %6547 = vmatpush1.msra.mxu0 0.0
    %6548 = vmatprep.subr.mxu0 0.0
    %6549 = vmatpush1.msra.mxu0 0.0
    %6550 = vmatprep.subr.mxu0 0.0
    %6551 = vmatpush1.msra.mxu0 0.0
    %6552 = vmatprep.subr.mxu0 0.0
    %6553 = vmatpush1.msra.mxu0 0.0
    %6554 = vmatprep.subr.mxu0 0.0
    %6555 = vmatpush1.msra.mxu0 0.0
    %6556 = vmatprep.subr.mxu0 0.0
    %6557 = vmatpush1.msra.mxu0 0.0
    %6558 = vmatprep.subr.mxu0 0.0
    %6559 = vmatpush1.msra.mxu0 0.0
    %6560 = vmatprep.subr.mxu0 0.0
    %6561 = vmatpush1.msra.mxu0 %v6365
    %6562 = vmatprep.subr.mxu0 0.0
    %6563 = vmatpush2.msra.mxu0 0.0
    %6564 = vmatprep.subr.mxu0 0.0
    %6565 = vmatpush2.msra.mxu0 0.0
    %6566 = vmatprep.subr.mxu0 0.0
    %6567 = vmatpush2.msra.mxu0 0.0
    %6568 = vmatprep.subr.mxu0 0.0
    %6569 = vmatpush2.msra.mxu0 0.0
    %6570 = vmatprep.subr.mxu0 0.0
    %6571 = vmatpush2.msra.mxu0 0.0
    %6572 = vmatprep.subr.mxu0 0.0
    %6573 = vmatpush2.msra.mxu0 0.0
    %6574 = vmatprep.subr.mxu0 0.0
    %6575 = vmatpush2.msra.mxu0 0.0
    %6576 = vmatprep.subr.mxu0 0.0
    %6577 = vmatpush2.msra.mxu0 0.0
    %6578 = vmatprep.subr.mxu0 0.0
    %6579 = vmatpush2.msra.mxu0 0.0
    %6580 = vmatprep.subr.mxu0 0.0
    %6581 = vmatpush2.msra.mxu0 0.0
    %6582 = vmatprep.subr.mxu0 0.0
    %6583 = vmatpush2.msra.mxu0 0.0
    %6584 = vmatprep.subr.mxu0 0.0
    %6585 = vmatpush2.msra.mxu0 0.0
    %6586 = vmatprep.subr.mxu0 0.0
    %6587 = vmatpush2.msra.mxu0 0.0
    %6588 = vmatprep.subr.mxu0 0.0
    %6589 = vmatpush2.msra.mxu0 0.0
    %6590 = vmatprep.subr.mxu0 0.0
    %6591 = vmatpush2.msra.mxu0 0.0
    %6592 = vmatprep.subr.mxu0 0.0
    %6593 = vmatpush2.msra.mxu0 0.0
    %6594 = vmatprep.mubr.f32.mxu0 0.0
    %6595 = vmatmul.mubr.f32.gmra.mxu0 %v6525
    %v6596 = vpop.f32.mrf.mxu0
    %v6597 = vadd.f32 %v6516, %v6596
    %v6598 = vpop.f32.mrf.mxu0
    %6599 = vmatprep.mubr.f32.mxu0 0.0
    %6600 = vmatmul.mubr.f32.gmra.mxu0 %v6528
    %v6601 = vpop.f32.mrf.mxu0
    %v6602 = vadd.f32 %v6521, %v6601
    %v6603 = vpop.f32.mrf.mxu0
    %6604 = vdwg.mxu0
    %v6605 = vld [vmem:[#allocation4 + $0x4e0] sm:$0xff]
    %v6606 = vld [vmem:[#allocation4 + $0x4e8] sm:$0xff]
    %v6608 = vsel %vm851, %v6605, 0
    %v6611 = vsel %vm851, %v6606, 0
    %6613 = vmatprep.subr.mxu0 0.0
    %6614 = vmatpush1.msra.mxu0 0.0
    %6615 = vmatprep.subr.mxu0 0.0
    %6616 = vmatpush1.msra.mxu0 0.0
    %6617 = vmatprep.subr.mxu0 0.0
    %6618 = vmatpush1.msra.mxu0 0.0
    %6619 = vmatprep.subr.mxu0 0.0
    %6620 = vmatpush1.msra.mxu0 0.0
    %6621 = vmatprep.subr.mxu0 0.0
    %6622 = vmatpush1.msra.mxu0 0.0
    %6623 = vmatprep.subr.mxu0 0.0
    %6624 = vmatpush1.msra.mxu0 0.0
    %6625 = vmatprep.subr.mxu0 0.0
    %6626 = vmatpush1.msra.mxu0 0.0
    %6627 = vmatprep.subr.mxu0 0.0
    %6628 = vmatpush1.msra.mxu0 0.0
    %6629 = vmatprep.subr.mxu0 0.0
    %6630 = vmatpush1.msra.mxu0 0.0
    %6631 = vmatprep.subr.mxu0 0.0
    %6632 = vmatpush1.msra.mxu0 0.0
    %6633 = vmatprep.subr.mxu0 0.0
    %6634 = vmatpush1.msra.mxu0 0.0
    %6635 = vmatprep.subr.mxu0 0.0
    %6636 = vmatpush1.msra.mxu0 0.0
    %6637 = vmatprep.subr.mxu0 0.0
    %6638 = vmatpush1.msra.mxu0 0.0
    %6639 = vmatprep.subr.mxu0 0.0
    %6640 = vmatpush1.msra.mxu0 0.0
    %6641 = vmatprep.subr.mxu0 0.0
    %6642 = vmatpush1.msra.mxu0 0.0
    %6643 = vmatprep.subr.mxu0 0.0
    %6644 = vmatpush1.msra.mxu0 %v6436
    %6645 = vmatprep.subr.mxu0 0.0
    %6646 = vmatpush2.msra.mxu0 0.0
    %6647 = vmatprep.subr.mxu0 0.0
    %6648 = vmatpush2.msra.mxu0 0.0
    %6649 = vmatprep.subr.mxu0 0.0
    %6650 = vmatpush2.msra.mxu0 0.0
    %6651 = vmatprep.subr.mxu0 0.0
    %6652 = vmatpush2.msra.mxu0 0.0
    %6653 = vmatprep.subr.mxu0 0.0
    %6654 = vmatpush2.msra.mxu0 0.0
    %6655 = vmatprep.subr.mxu0 0.0
    %6656 = vmatpush2.msra.mxu0 0.0
    %6657 = vmatprep.subr.mxu0 0.0
    %6658 = vmatpush2.msra.mxu0 0.0
    %6659 = vmatprep.subr.mxu0 0.0
    %6660 = vmatpush2.msra.mxu0 0.0
    %6661 = vmatprep.subr.mxu0 0.0
    %6662 = vmatpush2.msra.mxu0 0.0
    %6663 = vmatprep.subr.mxu0 0.0
    %6664 = vmatpush2.msra.mxu0 0.0
    %6665 = vmatprep.subr.mxu0 0.0
    %6666 = vmatpush2.msra.mxu0 0.0
    %6667 = vmatprep.subr.mxu0 0.0
    %6668 = vmatpush2.msra.mxu0 0.0
    %6669 = vmatprep.subr.mxu0 0.0
    %6670 = vmatpush2.msra.mxu0 0.0
    %6671 = vmatprep.subr.mxu0 0.0
    %6672 = vmatpush2.msra.mxu0 0.0
    %6673 = vmatprep.subr.mxu0 0.0
    %6674 = vmatpush2.msra.mxu0 0.0
    %6675 = vmatprep.subr.mxu0 0.0
    %6676 = vmatpush2.msra.mxu0 0.0
    %6677 = vmatprep.mubr.f32.mxu0 0.0
    %6678 = vmatmul.mubr.f32.gmra.mxu0 %v6608
    %v6679 = vpop.f32.mrf.mxu0
    %v6680 = vadd.f32 0.0, %v6679
    %v6681 = vpop.f32.mrf.mxu0
    %6682 = vmatprep.mubr.f32.mxu0 0.0
    %6683 = vmatmul.mubr.f32.gmra.mxu0 %v6611
    %v6684 = vpop.f32.mrf.mxu0
    %v6685 = vadd.f32 0.0, %v6684
    %v6686 = vpop.f32.mrf.mxu0
    %6687 = vdwg.mxu0
    %v6688 = vadd.f32 %v6597, %v6680
    %v6689 = vadd.f32 %v6602, %v6685
    %v6690 = vadd.f32 %v6688, %v3363
    %v6691 = vadd.f32 %v6689, %v3363
    %v6692 = vsub.f32 0.0, %v6690
    %v6693 = vsub.f32 0.0, %v6691
    %v6694 = vmul.f32 %v6692, 1.442695
    %v6695 = vpow.pop %v6694
    %v6696 = vmul.f32 %v6693, 1.442695
    %v6697 = vpow.pop %v6696
    %v6698 = vadd.f32 %v6695, 1.0
    %v6699 = vadd.f32 %v6697, 1.0
    %v6700 = vrcp.pop %v6698
    %v6701 = vrcp.pop %v6699
    %s6702 = scalar_lea.vmem %s3, 16
    %6703 = vst [vmem:[%s6702] sm:$0xff] %v6700
    %6704 = vst [vmem:[%s6702 + $0x8] sm:$0xff] %v6701
    // Predicated region
    $region22: #{fwd.1} parent=1 // pred_check
      _
    $region23: #{fwd.1} parent=1 // pred_check_branch
      %6706 = sbr.rel (0) target = $region25
    $region24: #{fwd.1} parent=1 // pred_region
      _
    $region25: #{fwd.1} parent=1 // pred_fallthru
      _
    // Predicated region
    $region26: #{fwd.1} parent=1 // pred_check
      _
    $region27: #{fwd.1} parent=1 // pred_check_branch
      %6708 = sbr.rel (0) target = $region29
    $region28: #{fwd.1} parent=1 // pred_region
      _
    $region29: #{fwd.1} parent=1 // pred_fallthru
      _
    %6709 = vsyncpa [#allocation3], 1
    %6710 = vsyncpa [#allocation5], 1

</llo_original>
